<compile_context>
chip_gen: v6e
topology: v6e:2x2x1
jax: 0.10.0
libtpu: 0.0.40
codegen_flags: <defaults>
</compile_context>

<pallas_src>
import math

import jax
import jax.numpy as jnp
from jax.experimental import pallas as pl
from jax.experimental.pallas import tpu as pltpu

# ----------------------------------------------------------------------------
# Hyper-parameters (Node_update defaults)
# ----------------------------------------------------------------------------
D_MSA = 256
D_PAIR = 128
N_HEAD = 8
D_HIDDEN = D_MSA // N_HEAD          # 32
FF_FACTOR = 1
SCALING = 1.0 / math.sqrt(D_HIDDEN)
LN_EPS = 1e-5
NEG_BIG = 1.0e9
MATMUL_DTYPE = jnp.bfloat16          # MXU input dtype (f32 accumulate); set jnp.float32 for exact math
BIAS_DTYPE = jnp.bfloat16            # pair-bias HBM dtype (halves the dominant attention DMA)


# ----------------------------------------------------------------------------
# Generation-aware VMEM / tile budgets
# ----------------------------------------------------------------------------
def _vmem_capacity_bytes():
    try:
        return int(pltpu.get_tpu_info().vmem_capacity_bytes)
    except Exception:
        return 128 * 1024 * 1024


_VMEM_CAP = _vmem_capacity_bytes()
_SMALL_VMEM = _VMEM_CAP <= 96 * 1024 * 1024                 # v7x-class parts: 64 MiB / TC
VMEM_LIMIT = (36 if _SMALL_VMEM else 64) * 1024 * 1024      # scoped-VMEM limit for the big kernels
PAIR_TILE_BUDGET = (6 if _SMALL_VMEM else 16) * 1024 * 1024  # pair LN block bytes (f32)
ATTN_BIAS_BUDGET = (4 if _SMALL_VMEM else 8) * 1024 * 1024   # bias block bytes (bf16)
SCORE_LIVE_CAP = 1 * 1024 * 1024                             # per-head (tq, L) f32 score cap


# ----------------------------------------------------------------------------
# Tiling helpers
# ----------------------------------------------------------------------------
def _largest_tile(n, cap=512):
    for t in (512, 256, 128, 64, 32, 16, 8):
        if t <= cap and n % t == 0:
            return t
    return n                          # TODO(synk): ragged rows fall back to full-extent block


def _divisor_tiles(n, cap):
    c = [t for t in (512, 256, 128, 64, 32, 16, 8) if t <= cap and n % t == 0]
    if n not in c:
        c.append(n)                   # full-extent fallback (block == array dim is always legal)
    return c


def _attn_q_tile(l, with_bias):
    cands = _divisor_tiles(l, 256)

    def ok(t):
        if t * l * 4 > SCORE_LIVE_CAP:                       # bound per-head score live range
            return False
        if with_bias and N_HEAD * t * l * 2 > ATTN_BIAS_BUDGET:
            return False
        return True

    within = [t for t in cands if ok(t)]
    return max(within) if within else min(cands)


def _pair_row_tile(l, dp):
    # tile must keep the flat (H, tp*L) output block legal: tp*L % 128 == 0 or tp == L
    valid = [tp for tp in _divisor_tiles(l, 512) if (tp * l) % 128 == 0 or tp == l]
    if not valid:
        return l
    within = [tp for tp in valid if tp * l * dp * 4 <= PAIR_TILE_BUDGET]
    return max(within) if within else min(valid)


# ----------------------------------------------------------------------------
# In-kernel matmul helpers (bf16 operands, f32 accumulation on the MXU)
# ----------------------------------------------------------------------------
def _mm(a, b):
    return jnp.dot(a.astype(MATMUL_DTYPE), b.astype(MATMUL_DTYPE),
                   preferred_element_type=jnp.float32)


def _mm_t(a, b):  # a (m,k), b (n,k) -> (m,n), contraction on the last dim of both
    return jax.lax.dot_general(a.astype(MATMUL_DTYPE), b.astype(MATMUL_DTYPE),
                               (((1,), (1,)), ((), ())),
                               preferred_element_type=jnp.float32)


def _ln(x, g, b):
    mu = jnp.mean(x, axis=-1, keepdims=True)
    xc = x - mu
    var = jnp.mean(xc * xc, axis=-1, keepdims=True)
    return xc * jax.lax.rsqrt(var + LN_EPS) * g + b


# ----------------------------------------------------------------------------
# Kernels
# ----------------------------------------------------------------------------
def _ln_linear_kernel(x_ref, g_ref, b_ref, w_ref, wb_ref, ln_ref, o_ref):
    # Fused LayerNorm_node + q|k|v|gate projection (two outputs: msa0 and qkvg).
    xn = _ln(x_ref[...], g_ref[...], b_ref[...])
    ln_ref[...] = xn.astype(ln_ref.dtype)
    o_ref[...] = (_mm(xn, w_ref[...]) + wb_ref[...]).astype(o_ref.dtype)


def _linear_kernel(x_ref, w_ref, b_ref, o_ref):
    o_ref[...] = (_mm(x_ref[...], w_ref[...]) + b_ref[...]).astype(o_ref.dtype)


def _gated_out_kernel(base_ref, qkvg_ref, a_ref, w_ref, b_ref, o_ref):
    # base + to_out(sigmoid(gate) * attn)   (residual fused in; gate = lanes [3d:4d] of qkvg)
    gated = jax.nn.sigmoid(qkvg_ref[...]) * a_ref[...]
    o_ref[...] = (base_ref[...] + _mm(gated, w_ref[...]) + b_ref[...]).astype(o_ref.dtype)


def _ff_kernel(x_ref, w1_ref, b1_ref, w2_ref, b2_ref, o_ref):
    # x + W2 @ relu(W1 @ x + b1) + b2   (residual fused in)
    x = x_ref[...]
    h = jnp.maximum(_mm(x, w1_ref[...]) + b1_ref[...], 0.0)
    o_ref[...] = (x + _mm(h, w2_ref[...]) + b2_ref[...]).astype(o_ref.dtype)


def _pair_bias_kernel(pair_ref, g_ref, b_ref, wt_ref, o_ref):
    # LayerNorm over d_pair fused with the (d_pair -> n_head) bias projection.
    # Output is emitted head-major and lane-dense: (H, tp*L) into a flat (B, H, L*L) bf16 buffer.
    tp, l, dp = pair_ref.shape[1], pair_ref.shape[2], pair_ref.shape[3]
    x = pair_ref[0].reshape(tp * l, dp)                      # collapse leading dims only
    xn = _ln(x, g_ref[...], b_ref[...])
    bias_t = _mm_t(wt_ref[...], xn)                          # (H, dp) x (tp*l, dp)^T -> (H, tp*l)
    o_ref[0] = bias_t.astype(o_ref.dtype)                    # single lane-dense store


def _make_attn_kernel(has_bias):
    def kernel(*refs):
        if has_bias:
            q_ref, k_ref, v_ref, bias_ref, mask_ref, o_ref = refs
        else:
            q_ref, k_ref, v_ref, mask_ref, o_ref = refs
        q = q_ref[0]                                         # (tq, H*Dh)  (scale folded into weights)
        k = k_ref[0]                                         # (L,  H*Dh)
        v = v_ref[0]
        neg = (mask_ref[0] - 1.0) * NEG_BIG                  # (1, L): 0 keep, -1e9 masked key
        outs = []
        for h in range(N_HEAD):                              # static unroll; tq keeps (tq,L) <= ~1 MiB
            sl = slice(h * D_HIDDEN, (h + 1) * D_HIDDEN)
            s = _mm_t(q[:, sl], k[:, sl])                    # (tq, L) on the MXU, f32 acc
            if has_bias:
                s = s + bias_ref[0, h].astype(jnp.float32)   # bf16 pair-bias tile -> f32
            s = s + neg
            m = jnp.max(s, axis=-1, keepdims=True)
            e = jnp.exp(s - m)
            r = pl.reciprocal(jnp.sum(e, axis=-1, keepdims=True), approx=True)  # EUP, not VALU
            outs.append(_mm(e * r, v[:, sl]))                # (tq, Dh)
        # single lane-dense 256-wide store instead of eight 32-lane masked stores
        o_ref[0] = jnp.concatenate(outs, axis=-1).astype(o_ref.dtype)
    return kernel


# ----------------------------------------------------------------------------
# pallas_call wrappers
# ----------------------------------------------------------------------------
def ln_linear_rows(x2d, gamma, beta, w, b):
    m, d = x2d.shape
    n = w.shape[1]
    tm = _largest_tile(m)
    return pl.pallas_call(
        _ln_linear_kernel,
        out_shape=(jax.ShapeDtypeStruct((m, d), x2d.dtype),
                   jax.ShapeDtypeStruct((m, n), x2d.dtype)),
        grid=(m // tm,),
        in_specs=[pl.BlockSpec((tm, d), lambda i: (i, 0)),
                  pl.BlockSpec((1, d), lambda i: (0, 0)),
                  pl.BlockSpec((1, d), lambda i: (0, 0)),
                  pl.BlockSpec((d, n), lambda i: (0, 0)),
                  pl.BlockSpec((1, n), lambda i: (0, 0))],
        out_specs=(pl.BlockSpec((tm, d), lambda i: (i, 0)),
                   pl.BlockSpec((tm, n), lambda i: (i, 0))),
        compiler_params=pltpu.CompilerParams(dimension_semantics=("parallel",)),
    )(x2d, gamma.reshape(1, d), beta.reshape(1, d), w, b.reshape(1, n))


def linear_rows(x2d, w, b):
    m, k = x2d.shape
    n = w.shape[1]
    tm = _largest_tile(m)
    return pl.pallas_call(
        _linear_kernel,
        out_shape=jax.ShapeDtypeStruct((m, n), x2d.dtype),
        grid=(m // tm,),
        in_specs=[pl.BlockSpec((tm, k), lambda i: (i, 0)),
                  pl.BlockSpec((k, n), lambda i: (0, 0)),
                  pl.BlockSpec((1, n), lambda i: (0, 0))],
        out_specs=pl.BlockSpec((tm, n), lambda i: (i, 0)),
        compiler_params=pltpu.CompilerParams(dimension_semantics=("parallel",)),
    )(x2d, w, b.reshape(1, n))


def gated_out_rows(base2d, qkvg2d, attn2d, w, b):
    # gate is picked from qkvg2d via a last-dim block index (lanes [3d:4d]) -- no XLA slice copy.
    m, d = base2d.shape
    n = w.shape[1]
    tm = _largest_tile(m)
    return pl.pallas_call(
        _gated_out_kernel,
        out_shape=jax.ShapeDtypeStruct((m, n), base2d.dtype),
        grid=(m // tm,),
        in_specs=[pl.BlockSpec((tm, d), lambda i: (i, 0)),
                  pl.BlockSpec((tm, d), lambda i: (i, 3)),   # gate lane-block of (m, 4d) qkvg
                  pl.BlockSpec((tm, d), lambda i: (i, 0)),
                  pl.BlockSpec((d, n), lambda i: (0, 0)),
                  pl.BlockSpec((1, n), lambda i: (0, 0))],
        out_specs=pl.BlockSpec((tm, n), lambda i: (i, 0)),
        compiler_params=pltpu.CompilerParams(dimension_semantics=("parallel",)),
    )(base2d, qkvg2d, attn2d, w, b.reshape(1, n))


def feed_forward_rows(x2d, w1, b1, w2, b2):
    m, d = x2d.shape
    dh = w1.shape[1]
    tm = _largest_tile(m)
    return pl.pallas_call(
        _ff_kernel,
        out_shape=jax.ShapeDtypeStruct((m, d), x2d.dtype),
        grid=(m // tm,),
        in_specs=[pl.BlockSpec((tm, d), lambda i: (i, 0)),
                  pl.BlockSpec((d, dh), lambda i: (0, 0)),
                  pl.BlockSpec((1, dh), lambda i: (0, 0)),
                  pl.BlockSpec((dh, d), lambda i: (0, 0)),
                  pl.BlockSpec((1, d), lambda i: (0, 0))],
        out_specs=pl.BlockSpec((tm, d), lambda i: (i, 0)),
        compiler_params=pltpu.CompilerParams(dimension_semantics=("parallel",)),
    )(x2d, w1, b1.reshape(1, dh), w2, b2.reshape(1, d))


def pair_bias(pair, gamma, beta, w_b):
    # Fused norm_pair + to_b, emitted head-major (B, H, L*L) in bf16 (lane-dense stores,
    # no XLA transpose afterwards -- only a free row-major reshape to (B, H, L, L)).
    bsz, l, _, dp = pair.shape
    h = w_b.shape[1]
    tp = _pair_row_tile(l, dp)
    w_t = w_b.T                                              # (H, dp), tiny one-time transpose
    out = pl.pallas_call(
        _pair_bias_kernel,
        out_shape=jax.ShapeDtypeStruct((bsz, h, l * l), BIAS_DTYPE),
        grid=(bsz, l // tp),
        in_specs=[pl.BlockSpec((1, tp, l, dp), lambda b, i: (b, i, 0, 0)),
                  pl.BlockSpec((1, dp), lambda b, i: (0, 0)),
                  pl.BlockSpec((1, dp), lambda b, i: (0, 0)),
                  pl.BlockSpec((h, dp), lambda b, i: (0, 0))],
        out_specs=pl.BlockSpec((1, h, tp * l), lambda b, i: (b, 0, i)),
        compiler_params=pltpu.CompilerParams(
            dimension_semantics=("parallel", "parallel"),
            vmem_limit_bytes=VMEM_LIMIT),
    )(pair, gamma.reshape(1, dp), beta.reshape(1, dp), w_t)
    return out.reshape(bsz, h, l, l)                         # free (row-major split) reshape


def attention(qkvg3, mask_row, bias=None):
    # q/k/v are 256-lane sub-blocks of the (B, L, 4*d) fused projection -- no XLA slice copies.
    bsz, l, d4 = qkvg3.shape
    d = d4 // 4
    tq = _attn_q_tile(l, bias is not None)
    in_specs = [pl.BlockSpec((1, tq, d), lambda b, i: (b, i, 0)),   # q
                pl.BlockSpec((1, l, d), lambda b, i: (b, 0, 1)),    # k (whole L, reused across q-tiles)
                pl.BlockSpec((1, l, d), lambda b, i: (b, 0, 2))]    # v
    args = [qkvg3, qkvg3, qkvg3]
    if bias is not None:
        in_specs.append(pl.BlockSpec((1, N_HEAD, tq, l), lambda b, i: (b, 0, i, 0)))
        args.append(bias)
    in_specs.append(pl.BlockSpec((1, 1, l), lambda b, i: (b, 0, 0)))
    args.append(mask_row)
    return pl.pallas_call(
        _make_attn_kernel(bias is not None),
        out_shape=jax.ShapeDtypeStruct((bsz, l, d), qkvg3.dtype),
        grid=(bsz, l // tq),
        in_specs=in_specs,
        out_specs=pl.BlockSpec((1, tq, d), lambda b, i: (b, i, 0)),
        compiler_params=pltpu.CompilerParams(
            dimension_semantics=("parallel", "parallel"),
            vmem_limit_bytes=VMEM_LIMIT),
    )(*args)


# ----------------------------------------------------------------------------
# Deterministic synthetic parameters
# ----------------------------------------------------------------------------
def init_params(key):
    d, h, dp, dff = D_MSA, N_HEAD, D_PAIR, D_MSA * FF_FACTOR
    ks = jax.random.split(key, 8)

    def nrm(k, shape, fan_in):
        return jax.random.normal(k, shape, jnp.float32) / math.sqrt(fan_in)

    def fold_scale(w, b):
        # fold the softmax scaling 1/sqrt(d_hidden) into the q columns (free at runtime)
        return w.at[:, :d].multiply(SCALING), b.at[:d].multiply(SCALING)

    row_w_qkvg, row_b_qkvg = fold_scale(nrm(ks[0], (d, 4 * d), d), jnp.zeros((4 * d,), jnp.float32))
    col_w_qkvg, col_b_qkvg = fold_scale(nrm(ks[3], (d, 4 * d), d), jnp.zeros((4 * d,), jnp.float32))

    p = {
        "ln_node_g": jnp.ones((d,), jnp.float32), "ln_node_b": jnp.zeros((d,), jnp.float32),
        "ln_pair_g": jnp.ones((dp,), jnp.float32), "ln_pair_b": jnp.zeros((dp,), jnp.float32),
        # row attention (with pair bias): fused q|k|v|gate projection, bias projection, output
        "row_w_qkvg": row_w_qkvg, "row_b_qkvg": row_b_qkvg,
        "row_w_b": nrm(ks[1], (dp, h), dp),
        "row_w_out": nrm(ks[2], (d, d), d), "row_b_out": jnp.zeros((d,), jnp.float32),
        # column attention (no bias)
        "col_w_qkvg": col_w_qkvg, "col_b_qkvg": col_b_qkvg,
        "col_w_out": nrm(ks[4], (d, d), d), "col_b_out": jnp.zeros((d,), jnp.float32),
        # feed-forward
        "ff_w1": nrm(ks[5], (d, dff), d), "ff_b1": jnp.zeros((dff,), jnp.float32),
        "ff_w2": nrm(ks[6], (dff, d), dff), "ff_b2": jnp.zeros((d,), jnp.float32),
    }
    return p


# ----------------------------------------------------------------------------
# Node_update forward
# ----------------------------------------------------------------------------
def node_update_forward(params, msa, pair, mask=None):
    bsz, l, d = msa.shape
    if mask is None:
        mask = jnp.ones((bsz, l), dtype=jnp.float32)
    mask_row = mask.reshape(bsz, 1, l).astype(jnp.float32)

    msa_2d = msa.reshape(bsz * l, d)                          # free reshape (merge leading dims)

    # --- norm_node fused with the row q|k|v|gate projection ---
    msa0_2d, qkvg = ln_linear_rows(msa_2d, params["ln_node_g"], params["ln_node_b"],
                                   params["row_w_qkvg"], params["row_b_qkvg"])
    qkvg3 = qkvg.reshape(bsz, l, 4 * d)                       # free reshape

    # --- norm_pair + to_b fused, emitted head-major in bf16 ---
    bias = pair_bias(pair, params["ln_pair_g"], params["ln_pair_b"], params["row_w_b"])

    # --- row attention with pair bias ---
    attn = attention(qkvg3, mask_row, bias=bias)
    msa1_2d = gated_out_rows(msa0_2d, qkvg, attn.reshape(bsz * l, d),
                             params["row_w_out"], params["row_b_out"])
    # drop_row: identity at inference

    # --- column attention (no pair bias) ---
    qkvg2 = linear_rows(msa1_2d, params["col_w_qkvg"], params["col_b_qkvg"])
    attn2 = attention(qkvg2.reshape(bsz, l, 4 * d), mask_row, bias=None)
    msa2_2d = gated_out_rows(msa1_2d, qkvg2, attn2.reshape(bsz * l, d),
                             params["col_w_out"], params["col_b_out"])

    # --- feed-forward ---
    msa3_2d = feed_forward_rows(msa2_2d, params["ff_w1"], params["ff_b1"],
                                params["ff_w2"], params["ff_b2"])
    return msa3_2d.reshape(bsz, l, d)


# ----------------------------------------------------------------------------
if __name__ == "__main__":
    B, L = 2, 8
    key = jax.random.PRNGKey(0)
    kp, km, kpair = jax.random.split(key, 3)

    params = init_params(kp)
    msa = jax.random.normal(km, (B, L, D_MSA), dtype=jnp.float32)
    pair = jax.random.normal(kpair, (B, L, L, D_PAIR), dtype=jnp.float32)

    fwd = jax.jit(node_update_forward)
    out = fwd(params, msa, pair)
    jax.block_until_ready(out)

    assert out.shape == (B, L, D_MSA)
    assert out.dtype == jnp.float32
    assert bool(jnp.all(jnp.isfinite(out)))
    print("KERNEL_OK")
</pallas_src>

<mosaic_0001>
module attributes {stable_mosaic.version = 11 : i64} {
  func.func @_pair_bias_kernel(%arg0: i32, %arg1: i32, %arg2: memref<1x8x8x128xf32, #tpu.memory_space<vmem>>, %arg3: memref<1x128xf32, #tpu.memory_space<vmem>>, %arg4: memref<1x128xf32, #tpu.memory_space<vmem>>, %arg5: memref<8x128xf32, #tpu.memory_space<vmem>>, %arg6: memref<1x8x64xbf16, #tpu.memory_space<vmem>>) attributes {dimension_semantics = [#tpu.dimension_semantics<parallel>, #tpu.dimension_semantics<parallel>], iteration_bounds = array<i64: 2, 1>, scalar_prefetch = 0 : i64, scratch_operands = 0 : i64, tpu.core_type = #tpu.core_type<tc>, window_params = [{transform_indices = @transform_0, window_bounds = array<i64: 1, 8, 8, 128>}, {pipeline_mode = #tpu.pipeline_mode<synchronous>, transform_indices = @transform_1, window_bounds = array<i64: 1, 128>}, {pipeline_mode = #tpu.pipeline_mode<synchronous>, transform_indices = @transform_2, window_bounds = array<i64: 1, 128>}, {pipeline_mode = #tpu.pipeline_mode<synchronous>, transform_indices = @transform_3, window_bounds = array<i64: 8, 128>}, {transform_indices = @transform_4, window_bounds = array<i64: 1, 8, 64>}]} {
    %c0 = arith.constant 0 : index
    %c0_0 = arith.constant 0 : index
    %c0_1 = arith.constant 0 : index
    %c0_2 = arith.constant 0 : index
    %0 = vector.load %arg2[%c0, %c0_0, %c0_1, %c0_2] : memref<1x8x8x128xf32, #tpu.memory_space<vmem>>, vector<1x8x8x128xf32>
    %1 = vector.shape_cast %0 : vector<1x8x8x128xf32> to vector<8x8x128xf32>
    %2 = vector.shape_cast %1 : vector<8x8x128xf32> to vector<64x128xf32>
    %c0_3 = arith.constant 0 : index
    %c0_4 = arith.constant 0 : index
    %3 = vector.load %arg3[%c0_3, %c0_4] : memref<1x128xf32, #tpu.memory_space<vmem>>, vector<1x128xf32>
    %c0_5 = arith.constant 0 : index
    %c0_6 = arith.constant 0 : index
    %4 = vector.load %arg4[%c0_5, %c0_6] : memref<1x128xf32, #tpu.memory_space<vmem>>, vector<1x128xf32>
    %cst = arith.constant dense<0.000000e+00> : vector<64xf32>
    %5 = vector.multi_reduction <add>, %2, %cst [1] : vector<64x128xf32> to vector<64xf32>
    %6 = vector.shape_cast %5 : vector<64xf32> to vector<64x1xf32>
    %cst_7 = arith.constant 1.280000e+02 : f32
    %7 = vector.broadcast %cst_7 : f32 to vector<64x1xf32>
    %8 = arith.divf %6, %7 : vector<64x1xf32>
    %9 = vector.broadcast %8 : vector<64x1xf32> to vector<64x128xf32>
    %10 = arith.subf %2, %9 : vector<64x128xf32>
    %11 = arith.mulf %10, %10 : vector<64x128xf32>
    %cst_8 = arith.constant dense<0.000000e+00> : vector<64xf32>
    %12 = vector.multi_reduction <add>, %11, %cst_8 [1] : vector<64x128xf32> to vector<64xf32>
    %13 = vector.shape_cast %12 : vector<64xf32> to vector<64x1xf32>
    %cst_9 = arith.constant 1.280000e+02 : f32
    %14 = vector.broadcast %cst_9 : f32 to vector<64x1xf32>
    %15 = arith.divf %13, %14 : vector<64x1xf32>
    %cst_10 = arith.constant 9.99999974E-6 : f32
    %16 = vector.broadcast %cst_10 : f32 to vector<64x1xf32>
    %17 = arith.addf %15, %16 : vector<64x1xf32>
    %18 = math.rsqrt %17 : vector<64x1xf32>
    %19 = vector.broadcast %18 : vector<64x1xf32> to vector<64x128xf32>
    %20 = arith.mulf %10, %19 : vector<64x128xf32>
    %21 = vector.broadcast %3 : vector<1x128xf32> to vector<64x128xf32>
    %22 = arith.mulf %20, %21 : vector<64x128xf32>
    %23 = vector.broadcast %4 : vector<1x128xf32> to vector<64x128xf32>
    %24 = arith.addf %22, %23 : vector<64x128xf32>
    %c0_11 = arith.constant 0 : index
    %c0_12 = arith.constant 0 : index
    %25 = vector.load %arg5[%c0_11, %c0_12] : memref<8x128xf32, #tpu.memory_space<vmem>>, vector<8x128xf32>
    %26 = arith.truncf %25 : vector<8x128xf32> to vector<8x128xbf16>
    %27 = arith.truncf %24 : vector<64x128xf32> to vector<64x128xbf16>
    %cst_13 = arith.constant dense<0.000000e+00> : vector<8x64xf32>
    %28 = tpu.matmul %26, %27, %cst_13 {dimension_numbers = #tpu.dot_dimension_numbers<[1], [1], [0], [0], [0, 0, 1, 0], [], []>} : vector<8x128xbf16>, vector<64x128xbf16>, vector<8x64xf32> -> vector<8x64xf32>
    %29 = arith.truncf %28 : vector<8x64xf32> to vector<8x64xbf16>
    %c0_14 = arith.constant 0 : index
    %c0_15 = arith.constant 0 : index
    %c0_16 = arith.constant 0 : index
    %30 = vector.load %arg6[%c0_14, %c0_15, %c0_16] : memref<1x8x64xbf16, #tpu.memory_space<vmem>>, vector<1x8x64xbf16>
    %31 = vector.shape_cast %30 : vector<1x8x64xbf16> to vector<8x64xbf16>
    %32 = vector.shape_cast %29 : vector<8x64xbf16> to vector<1x8x64xbf16>
    tpu.vector_store %arg6[%c0_14, %c0_15, %c0_16], %32 {strides = array<i32>} : memref<1x8x64xbf16, #tpu.memory_space<vmem>>, vector<1x8x64xbf16>,
    return
  }
  func.func @transform_0(%arg0: i32, %arg1: i32) -> (i32, i32, i32, i32) {
    %c0_i32 = arith.constant 0 : i32
    %c0_i32_0 = arith.constant 0 : i32
    %c0_i32_1 = arith.constant 0 : i32
    return %arg0, %arg1, %c0_i32, %c0_i32_0 : i32, i32, i32, i32
  }
  func.func @transform_1(%arg0: i32, %arg1: i32) -> (i32, i32) {
    %c0_i32 = arith.constant 0 : i32
    %c0_i32_0 = arith.constant 0 : i32
    %c0_i32_1 = arith.constant 0 : i32
    return %c0_i32, %c0_i32_0 : i32, i32
  }
  func.func @transform_2(%arg0: i32, %arg1: i32) -> (i32, i32) {
    %c0_i32 = arith.constant 0 : i32
    %c0_i32_0 = arith.constant 0 : i32
    %c0_i32_1 = arith.constant 0 : i32
    return %c0_i32, %c0_i32_0 : i32, i32
  }
  func.func @transform_3(%arg0: i32, %arg1: i32) -> (i32, i32) {
    %c0_i32 = arith.constant 0 : i32
    %c0_i32_0 = arith.constant 0 : i32
    %c0_i32_1 = arith.constant 0 : i32
    return %c0_i32, %c0_i32_0 : i32, i32
  }
  func.func @transform_4(%arg0: i32, %arg1: i32) -> (i32, i32, i32) {
    %c0_i32 = arith.constant 0 : i32
    %c0_i32_0 = arith.constant 0 : i32
    return %arg0, %c0_i32, %arg1 : i32, i32, i32
  }
}

module attributes {stable_mosaic.version = 11 : i64} {
  func.func @_ln_linear_kernel(%arg0: i32, %arg1: memref<16x256xf32, #tpu.memory_space<vmem>>, %arg2: memref<1x256xf32, #tpu.memory_space<vmem>>, %arg3: memref<1x256xf32, #tpu.memory_space<vmem>>, %arg4: memref<256x1024xf32, #tpu.memory_space<vmem>>, %arg5: memref<1x1024xf32, #tpu.memory_space<vmem>>, %arg6: memref<16x256xf32, #tpu.memory_space<vmem>>, %arg7: memref<16x1024xf32, #tpu.memory_space<vmem>>) attributes {dimension_semantics = [#tpu.dimension_semantics<parallel>], iteration_bounds = array<i64: 1>, scalar_prefetch = 0 : i64, scratch_operands = 0 : i64, tpu.core_type = #tpu.core_type<tc>, window_params = [{transform_indices = @transform_0, window_bounds = array<i64: 16, 256>}, {pipeline_mode = #tpu.pipeline_mode<synchronous>, transform_indices = @transform_1, window_bounds = array<i64: 1, 256>}, {pipeline_mode = #tpu.pipeline_mode<synchronous>, transform_indices = @transform_2, window_bounds = array<i64: 1, 256>}, {pipeline_mode = #tpu.pipeline_mode<synchronous>, transform_indices = @transform_3, window_bounds = array<i64: 256, 1024>}, {pipeline_mode = #tpu.pipeline_mode<synchronous>, transform_indices = @transform_4, window_bounds = array<i64: 1, 1024>}, {transform_indices = @transform_5, window_bounds = array<i64: 16, 256>}, {transform_indices = @transform_6, window_bounds = array<i64: 16, 1024>}]} {
    %c0 = arith.constant 0 : index
    %c0_0 = arith.constant 0 : index
    %0 = vector.load %arg1[%c0, %c0_0] : memref<16x256xf32, #tpu.memory_space<vmem>>, vector<16x256xf32>
    %c0_1 = arith.constant 0 : index
    %c0_2 = arith.constant 0 : index
    %1 = vector.load %arg2[%c0_1, %c0_2] : memref<1x256xf32, #tpu.memory_space<vmem>>, vector<1x256xf32>
    %c0_3 = arith.constant 0 : index
    %c0_4 = arith.constant 0 : index
    %2 = vector.load %arg3[%c0_3, %c0_4] : memref<1x256xf32, #tpu.memory_space<vmem>>, vector<1x256xf32>
    %cst = arith.constant dense<0.000000e+00> : vector<16xf32>
    %3 = vector.multi_reduction <add>, %0, %cst [1] : vector<16x256xf32> to vector<16xf32>
    %4 = vector.shape_cast %3 : vector<16xf32> to vector<16x1xf32>
    %cst_5 = arith.constant 2.560000e+02 : f32
    %5 = vector.broadcast %cst_5 : f32 to vector<16x1xf32>
    %6 = arith.divf %4, %5 : vector<16x1xf32>
    %7 = vector.broadcast %6 : vector<16x1xf32> to vector<16x256xf32>
    %8 = arith.subf %0, %7 : vector<16x256xf32>
    %9 = arith.mulf %8, %8 : vector<16x256xf32>
    %cst_6 = arith.constant dense<0.000000e+00> : vector<16xf32>
    %10 = vector.multi_reduction <add>, %9, %cst_6 [1] : vector<16x256xf32> to vector<16xf32>
    %11 = vector.shape_cast %10 : vector<16xf32> to vector<16x1xf32>
    %cst_7 = arith.constant 2.560000e+02 : f32
    %12 = vector.broadcast %cst_7 : f32 to vector<16x1xf32>
    %13 = arith.divf %11, %12 : vector<16x1xf32>
    %cst_8 = arith.constant 9.99999974E-6 : f32
    %14 = vector.broadcast %cst_8 : f32 to vector<16x1xf32>
    %15 = arith.addf %13, %14 : vector<16x1xf32>
    %16 = math.rsqrt %15 : vector<16x1xf32>
    %17 = vector.broadcast %16 : vector<16x1xf32> to vector<16x256xf32>
    %18 = arith.mulf %8, %17 : vector<16x256xf32>
    %19 = vector.broadcast %1 : vector<1x256xf32> to vector<16x256xf32>
    %20 = arith.mulf %18, %19 : vector<16x256xf32>
    %21 = vector.broadcast %2 : vector<1x256xf32> to vector<16x256xf32>
    %22 = arith.addf %20, %21 : vector<16x256xf32>
    %c0_9 = arith.constant 0 : index
    %c0_10 = arith.constant 0 : index
    %23 = vector.load %arg6[%c0_9, %c0_10] : memref<16x256xf32, #tpu.memory_space<vmem>>, vector<16x256xf32>
    tpu.vector_store %arg6[%c0_9, %c0_10], %22 {strides = array<i32>} : memref<16x256xf32, #tpu.memory_space<vmem>>, vector<16x256xf32>,
    %c0_11 = arith.constant 0 : index
    %c0_12 = arith.constant 0 : index
    %24 = vector.load %arg4[%c0_11, %c0_12] : memref<256x1024xf32, #tpu.memory_space<vmem>>, vector<256x1024xf32>
    %25 = arith.truncf %22 : vector<16x256xf32> to vector<16x256xbf16>
    %26 = arith.truncf %24 : vector<256x1024xf32> to vector<256x1024xbf16>
    %cst_13 = arith.constant dense<0.000000e+00> : vector<16x1024xf32>
    %27 = tpu.matmul %25, %26, %cst_13 {dimension_numbers = #tpu.dot_dimension_numbers<[1], [0], [0], [1], [0, 0, 1, 1], [], []>} : vector<16x256xbf16>, vector<256x1024xbf16>, vector<16x1024xf32> -> vector<16x1024xf32>
    %c0_14 = arith.constant 0 : index
    %c0_15 = arith.constant 0 : index
    %28 = vector.load %arg5[%c0_14, %c0_15] : memref<1x1024xf32, #tpu.memory_space<vmem>>, vector<1x1024xf32>
    %29 = vector.broadcast %28 : vector<1x1024xf32> to vector<16x1024xf32>
    %30 = arith.addf %27, %29 : vector<16x1024xf32>
    %c0_16 = arith.constant 0 : index
    %c0_17 = arith.constant 0 : index
    %31 = vector.load %arg7[%c0_16, %c0_17] : memref<16x1024xf32, #tpu.memory_space<vmem>>, vector<16x1024xf32>
    tpu.vector_store %arg7[%c0_16, %c0_17], %30 {strides = array<i32>} : memref<16x1024xf32, #tpu.memory_space<vmem>>, vector<16x1024xf32>,
    return
  }
  func.func @transform_0(%arg0: i32) -> (i32, i32) {
    %c0_i32 = arith.constant 0 : i32
    %c0_i32_0 = arith.constant 0 : i32
    return %arg0, %c0_i32 : i32, i32
  }
  func.func @transform_1(%arg0: i32) -> (i32, i32) {
    %c0_i32 = arith.constant 0 : i32
    %c0_i32_0 = arith.constant 0 : i32
    %c0_i32_1 = arith.constant 0 : i32
    return %c0_i32, %c0_i32_0 : i32, i32
  }
  func.func @transform_2(%arg0: i32) -> (i32, i32) {
    %c0_i32 = arith.constant 0 : i32
    %c0_i32_0 = arith.constant 0 : i32
    %c0_i32_1 = arith.constant 0 : i32
    return %c0_i32, %c0_i32_0 : i32, i32
  }
  func.func @transform_3(%arg0: i32) -> (i32, i32) {
    %c0_i32 = arith.constant 0 : i32
    %c0_i32_0 = arith.constant 0 : i32
    %c0_i32_1 = arith.constant 0 : i32
    return %c0_i32, %c0_i32_0 : i32, i32
  }
  func.func @transform_4(%arg0: i32) -> (i32, i32) {
    %c0_i32 = arith.constant 0 : i32
    %c0_i32_0 = arith.constant 0 : i32
    %c0_i32_1 = arith.constant 0 : i32
    return %c0_i32, %c0_i32_0 : i32, i32
  }
  func.func @transform_5(%arg0: i32) -> (i32, i32) {
    %c0_i32 = arith.constant 0 : i32
    %c0_i32_0 = arith.constant 0 : i32
    return %arg0, %c0_i32 : i32, i32
  }
  func.func @transform_6(%arg0: i32) -> (i32, i32) {
    %c0_i32 = arith.constant 0 : i32
    %c0_i32_0 = arith.constant 0 : i32
    return %arg0, %c0_i32 : i32, i32
  }
}

module attributes {stable_mosaic.version = 11 : i64} {
  func.func @_gated_out_kernel(%arg0: i32, %arg1: memref<16x256xf32, #tpu.memory_space<vmem>>, %arg2: memref<16x256xf32, #tpu.memory_space<vmem>>, %arg3: memref<16x256xf32, #tpu.memory_space<vmem>>, %arg4: memref<256x256xf32, #tpu.memory_space<vmem>>, %arg5: memref<1x256xf32, #tpu.memory_space<vmem>>, %arg6: memref<16x256xf32, #tpu.memory_space<vmem>>) attributes {dimension_semantics = [#tpu.dimension_semantics<parallel>], iteration_bounds = array<i64: 1>, scalar_prefetch = 0 : i64, scratch_operands = 0 : i64, tpu.core_type = #tpu.core_type<tc>, window_params = [{transform_indices = @transform_0, window_bounds = array<i64: 16, 256>}, {transform_indices = @transform_1, window_bounds = array<i64: 16, 256>}, {transform_indices = @transform_2, window_bounds = array<i64: 16, 256>}, {pipeline_mode = #tpu.pipeline_mode<synchronous>, transform_indices = @transform_3, window_bounds = array<i64: 256, 256>}, {pipeline_mode = #tpu.pipeline_mode<synchronous>, transform_indices = @transform_4, window_bounds = array<i64: 1, 256>}, {transform_indices = @transform_5, window_bounds = array<i64: 16, 256>}]} {
    %c0 = arith.constant 0 : index
    %c0_0 = arith.constant 0 : index
    %0 = vector.load %arg2[%c0, %c0_0] : memref<16x256xf32, #tpu.memory_space<vmem>>, vector<16x256xf32>
    %1 = arith.negf %0 : vector<16x256xf32>
    %2 = math.exp %1 : vector<16x256xf32>
    %cst = arith.constant 1.000000e+00 : f32
    %3 = vector.broadcast %cst : f32 to vector<16x256xf32>
    %4 = arith.addf %3, %2 : vector<16x256xf32>
    %5 = arith.divf %3, %4 : vector<16x256xf32>
    %c0_1 = arith.constant 0 : index
    %c0_2 = arith.constant 0 : index
    %6 = vector.load %arg3[%c0_1, %c0_2] : memref<16x256xf32, #tpu.memory_space<vmem>>, vector<16x256xf32>
    %7 = arith.mulf %5, %6 : vector<16x256xf32>
    %c0_3 = arith.constant 0 : index
    %c0_4 = arith.constant 0 : index
    %8 = vector.load %arg1[%c0_3, %c0_4] : memref<16x256xf32, #tpu.memory_space<vmem>>, vector<16x256xf32>
    %c0_5 = arith.constant 0 : index
    %c0_6 = arith.constant 0 : index
    %9 = vector.load %arg4[%c0_5, %c0_6] : memref<256x256xf32, #tpu.memory_space<vmem>>, vector<256x256xf32>
    %10 = arith.truncf %7 : vector<16x256xf32> to vector<16x256xbf16>
    %11 = arith.truncf %9 : vector<256x256xf32> to vector<256x256xbf16>
    %cst_7 = arith.constant dense<0.000000e+00> : vector<16x256xf32>
    %12 = tpu.matmul %10, %11, %cst_7 {dimension_numbers = #tpu.dot_dimension_numbers<[1], [0], [0], [1], [0, 0, 1, 1], [], []>} : vector<16x256xbf16>, vector<256x256xbf16>, vector<16x256xf32> -> vector<16x256xf32>
    %13 = arith.addf %8, %12 : vector<16x256xf32>
    %c0_8 = arith.constant 0 : index
    %c0_9 = arith.constant 0 : index
    %14 = vector.load %arg5[%c0_8, %c0_9] : memref<1x256xf32, #tpu.memory_space<vmem>>, vector<1x256xf32>
    %15 = vector.broadcast %14 : vector<1x256xf32> to vector<16x256xf32>
    %16 = arith.addf %13, %15 : vector<16x256xf32>
    %c0_10 = arith.constant 0 : index
    %c0_11 = arith.constant 0 : index
    %17 = vector.load %arg6[%c0_10, %c0_11] : memref<16x256xf32, #tpu.memory_space<vmem>>, vector<16x256xf32>
    tpu.vector_store %arg6[%c0_10, %c0_11], %16 {strides = array<i32>} : memref<16x256xf32, #tpu.memory_space<vmem>>, vector<16x256xf32>,
    return
  }
  func.func @transform_0(%arg0: i32) -> (i32, i32) {
    %c0_i32 = arith.constant 0 : i32
    %c0_i32_0 = arith.constant 0 : i32
    return %arg0, %c0_i32 : i32, i32
  }
  func.func @transform_1(%arg0: i32) -> (i32, i32) {
    %c3_i32 = arith.constant 3 : i32
    %c0_i32 = arith.constant 0 : i32
    return %arg0, %c3_i32 : i32, i32
  }
  func.func @transform_2(%arg0: i32) -> (i32, i32) {
    %c0_i32 = arith.constant 0 : i32
    %c0_i32_0 = arith.constant 0 : i32
    return %arg0, %c0_i32 : i32, i32
  }
  func.func @transform_3(%arg0: i32) -> (i32, i32) {
    %c0_i32 = arith.constant 0 : i32
    %c0_i32_0 = arith.constant 0 : i32
    %c0_i32_1 = arith.constant 0 : i32
    return %c0_i32, %c0_i32_0 : i32, i32
  }
  func.func @transform_4(%arg0: i32) -> (i32, i32) {
    %c0_i32 = arith.constant 0 : i32
    %c0_i32_0 = arith.constant 0 : i32
    %c0_i32_1 = arith.constant 0 : i32
    return %c0_i32, %c0_i32_0 : i32, i32
  }
  func.func @transform_5(%arg0: i32) -> (i32, i32) {
    %c0_i32 = arith.constant 0 : i32
    %c0_i32_0 = arith.constant 0 : i32
    return %arg0, %c0_i32 : i32, i32
  }
}

module attributes {stable_mosaic.version = 11 : i64} {
  func.func @kernel(%arg0: i32, %arg1: i32, %arg2: memref<1x8x256xf32, #tpu.memory_space<vmem>>, %arg3: memref<1x8x256xf32, #tpu.memory_space<vmem>>, %arg4: memref<1x8x256xf32, #tpu.memory_space<vmem>>, %arg5: memref<1x8x8x8xbf16, #tpu.memory_space<vmem>>, %arg6: memref<1x1x8xf32, #tpu.memory_space<vmem>>, %arg7: memref<1x8x256xf32, #tpu.memory_space<vmem>>) attributes {dimension_semantics = [#tpu.dimension_semantics<parallel>, #tpu.dimension_semantics<parallel>], iteration_bounds = array<i64: 2, 1>, scalar_prefetch = 0 : i64, scratch_operands = 0 : i64, tpu.core_type = #tpu.core_type<tc>, window_params = [{transform_indices = @transform_0, window_bounds = array<i64: 1, 8, 256>}, {transform_indices = @transform_1, window_bounds = array<i64: 1, 8, 256>}, {transform_indices = @transform_2, window_bounds = array<i64: 1, 8, 256>}, {transform_indices = @transform_3, window_bounds = array<i64: 1, 8, 8, 8>}, {transform_indices = @transform_4, window_bounds = array<i64: 1, 1, 8>}, {transform_indices = @transform_5, window_bounds = array<i64: 1, 8, 256>}]} {
    %c0 = arith.constant 0 : index
    %c0_0 = arith.constant 0 : index
    %c0_1 = arith.constant 0 : index
    %0 = vector.load %arg2[%c0, %c0_0, %c0_1] : memref<1x8x256xf32, #tpu.memory_space<vmem>>, vector<1x8x256xf32>
    %1 = vector.shape_cast %0 : vector<1x8x256xf32> to vector<8x256xf32>
    %c0_2 = arith.constant 0 : index
    %c0_3 = arith.constant 0 : index
    %c0_4 = arith.constant 0 : index
    %2 = vector.load %arg3[%c0_2, %c0_3, %c0_4] : memref<1x8x256xf32, #tpu.memory_space<vmem>>, vector<1x8x256xf32>
    %3 = vector.shape_cast %2 : vector<1x8x256xf32> to vector<8x256xf32>
    %c0_5 = arith.constant 0 : index
    %c0_6 = arith.constant 0 : index
    %c0_7 = arith.constant 0 : index
    %4 = vector.load %arg4[%c0_5, %c0_6, %c0_7] : memref<1x8x256xf32, #tpu.memory_space<vmem>>, vector<1x8x256xf32>
    %5 = vector.shape_cast %4 : vector<1x8x256xf32> to vector<8x256xf32>
    %c0_8 = arith.constant 0 : index
    %c0_9 = arith.constant 0 : index
    %c0_10 = arith.constant 0 : index
    %6 = vector.load %arg6[%c0_8, %c0_9, %c0_10] : memref<1x1x8xf32, #tpu.memory_space<vmem>>, vector<1x1x8xf32>
    %7 = vector.shape_cast %6 : vector<1x1x8xf32> to vector<1x8xf32>
    %cst = arith.constant 1.000000e+00 : f32
    %8 = vector.broadcast %cst : f32 to vector<1x8xf32>
    %9 = arith.subf %7, %8 : vector<1x8xf32>
    %cst_11 = arith.constant 1.000000e+09 : f32
    %10 = vector.broadcast %cst_11 : f32 to vector<1x8xf32>
    %11 = arith.mulf %9, %10 : vector<1x8xf32>
    %12 = vector.extract_strided_slice %1 {offsets = [0, 0], sizes = [8, 32], strides = [1, 1]} : vector<8x256xf32> to vector<8x32xf32>
    %13 = vector.extract_strided_slice %3 {offsets = [0, 0], sizes = [8, 32], strides = [1, 1]} : vector<8x256xf32> to vector<8x32xf32>
    %14 = arith.truncf %12 : vector<8x32xf32> to vector<8x32xbf16>
    %15 = arith.truncf %13 : vector<8x32xf32> to vector<8x32xbf16>
    %cst_12 = arith.constant dense<0.000000e+00> : vector<8x8xf32>
    %16 = tpu.matmul %14, %15, %cst_12 {dimension_numbers = #tpu.dot_dimension_numbers<[1], [1], [0], [0], [0, 0, 1, 0], [], []>} : vector<8x32xbf16>, vector<8x32xbf16>, vector<8x8xf32> -> vector<8x8xf32>
    %c0_13 = arith.constant 0 : index
    %c0_14 = arith.constant 0 : index
    %c0_15 = arith.constant 0 : index
    %c0_16 = arith.constant 0 : index
    %17 = vector.load %arg5[%c0_13, %c0_14, %c0_15, %c0_16] : memref<1x8x8x8xbf16, #tpu.memory_space<vmem>>, vector<1x1x8x8xbf16>
    %18 = vector.shape_cast %17 : vector<1x1x8x8xbf16> to vector<8x8xbf16>
    %19 = arith.extf %18 : vector<8x8xbf16> to vector<8x8xf32>
    %20 = arith.addf %16, %19 : vector<8x8xf32>
    %21 = vector.broadcast %11 : vector<1x8xf32> to vector<8x8xf32>
    %22 = arith.addf %20, %21 : vector<8x8xf32>
    %cst_17 = arith.constant dense<0xFF800000> : vector<8xf32>
    %23 = vector.multi_reduction <maximumf>, %22, %cst_17 [1] : vector<8x8xf32> to vector<8xf32>
    %24 = vector.shape_cast %23 : vector<8xf32> to vector<8x1xf32>
    %25 = vector.broadcast %24 : vector<8x1xf32> to vector<8x8xf32>
    %26 = arith.subf %22, %25 : vector<8x8xf32>
    %27 = math.exp %26 : vector<8x8xf32>
    %cst_18 = arith.constant dense<0.000000e+00> : vector<8xf32>
    %28 = vector.multi_reduction <add>, %27, %cst_18 [1] : vector<8x8xf32> to vector<8xf32>
    %29 = vector.shape_cast %28 : vector<8xf32> to vector<8x1xf32>
    %30 = tpu.reciprocal %29 {approx = true} : vector<8x1xf32> -> vector<8x1xf32>
    %31 = vector.broadcast %30 : vector<8x1xf32> to vector<8x8xf32>
    %32 = arith.mulf %27, %31 : vector<8x8xf32>
    %33 = vector.extract_strided_slice %5 {offsets = [0, 0], sizes = [8, 32], strides = [1, 1]} : vector<8x256xf32> to vector<8x32xf32>
    %34 = arith.truncf %32 : vector<8x8xf32> to vector<8x8xbf16>
    %35 = arith.truncf %33 : vector<8x32xf32> to vector<8x32xbf16>
    %cst_19 = arith.constant dense<0.000000e+00> : vector<8x32xf32>
    %36 = tpu.matmul %34, %35, %cst_19 {dimension_numbers = #tpu.dot_dimension_numbers<[1], [0], [0], [1], [0, 0, 1, 1], [], []>} : vector<8x8xbf16>, vector<8x32xbf16>, vector<8x32xf32> -> vector<8x32xf32>
    %37 = vector.extract_strided_slice %1 {offsets = [0, 32], sizes = [8, 32], strides = [1, 1]} : vector<8x256xf32> to vector<8x32xf32>
    %38 = vector.extract_strided_slice %3 {offsets = [0, 32], sizes = [8, 32], strides = [1, 1]} : vector<8x256xf32> to vector<8x32xf32>
    %39 = arith.truncf %37 : vector<8x32xf32> to vector<8x32xbf16>
    %40 = arith.truncf %38 : vector<8x32xf32> to vector<8x32xbf16>
    %cst_20 = arith.constant dense<0.000000e+00> : vector<8x8xf32>
    %41 = tpu.matmul %39, %40, %cst_20 {dimension_numbers = #tpu.dot_dimension_numbers<[1], [1], [0], [0], [0, 0, 1, 0], [], []>} : vector<8x32xbf16>, vector<8x32xbf16>, vector<8x8xf32> -> vector<8x8xf32>
    %c0_21 = arith.constant 0 : index
    %c1 = arith.constant 1 : index
    %c0_22 = arith.constant 0 : index
    %c0_23 = arith.constant 0 : index
    %42 = vector.load %arg5[%c0_21, %c1, %c0_22, %c0_23] : memref<1x8x8x8xbf16, #tpu.memory_space<vmem>>, vector<1x1x8x8xbf16>
    %43 = vector.shape_cast %42 : vector<1x1x8x8xbf16> to vector<8x8xbf16>
    %44 = arith.extf %43 : vector<8x8xbf16> to vector<8x8xf32>
    %45 = arith.addf %41, %44 : vector<8x8xf32>
    %46 = vector.broadcast %11 : vector<1x8xf32> to vector<8x8xf32>
    %47 = arith.addf %45, %46 : vector<8x8xf32>
    %cst_24 = arith.constant dense<0xFF800000> : vector<8xf32>
    %48 = vector.multi_reduction <maximumf>, %47, %cst_24 [1] : vector<8x8xf32> to vector<8xf32>
    %49 = vector.shape_cast %48 : vector<8xf32> to vector<8x1xf32>
    %50 = vector.broadcast %49 : vector<8x1xf32> to vector<8x8xf32>
    %51 = arith.subf %47, %50 : vector<8x8xf32>
    %52 = math.exp %51 : vector<8x8xf32>
    %cst_25 = arith.constant dense<0.000000e+00> : vector<8xf32>
    %53 = vector.multi_reduction <add>, %52, %cst_25 [1] : vector<8x8xf32> to vector<8xf32>
    %54 = vector.shape_cast %53 : vector<8xf32> to vector<8x1xf32>
    %55 = tpu.reciprocal %54 {approx = true} : vector<8x1xf32> -> vector<8x1xf32>
    %56 = vector.broadcast %55 : vector<8x1xf32> to vector<8x8xf32>
    %57 = arith.mulf %52, %56 : vector<8x8xf32>
    %58 = vector.extract_strided_slice %5 {offsets = [0, 32], sizes = [8, 32], strides = [1, 1]} : vector<8x256xf32> to vector<8x32xf32>
    %59 = arith.truncf %57 : vector<8x8xf32> to vector<8x8xbf16>
    %60 = arith.truncf %58 : vector<8x32xf32> to vector<8x32xbf16>
    %cst_26 = arith.constant dense<0.000000e+00> : vector<8x32xf32>
    %61 = tpu.matmul %59, %60, %cst_26 {dimension_numbers = #tpu.dot_dimension_numbers<[1], [0], [0], [1], [0, 0, 1, 1], [], []>} : vector<8x8xbf16>, vector<8x32xbf16>, vector<8x32xf32> -> vector<8x32xf32>
    %62 = vector.extract_strided_slice %1 {offsets = [0, 64], sizes = [8, 32], strides = [1, 1]} : vector<8x256xf32> to vector<8x32xf32>
    %63 = vector.extract_strided_slice %3 {offsets = [0, 64], sizes = [8, 32], strides = [1, 1]} : vector<8x256xf32> to vector<8x32xf32>
    %64 = arith.truncf %62 : vector<8x32xf32> to vector<8x32xbf16>
    %65 = arith.truncf %63 : vector<8x32xf32> to vector<8x32xbf16>
    %cst_27 = arith.constant dense<0.000000e+00> : vector<8x8xf32>
    %66 = tpu.matmul %64, %65, %cst_27 {dimension_numbers = #tpu.dot_dimension_numbers<[1], [1], [0], [0], [0, 0, 1, 0], [], []>} : vector<8x32xbf16>, vector<8x32xbf16>, vector<8x8xf32> -> vector<8x8xf32>
    %c0_28 = arith.constant 0 : index
    %c2 = arith.constant 2 : index
    %c0_29 = arith.constant 0 : index
    %c0_30 = arith.constant 0 : index
    %67 = vector.load %arg5[%c0_28, %c2, %c0_29, %c0_30] : memref<1x8x8x8xbf16, #tpu.memory_space<vmem>>, vector<1x1x8x8xbf16>
    %68 = vector.shape_cast %67 : vector<1x1x8x8xbf16> to vector<8x8xbf16>
    %69 = arith.extf %68 : vector<8x8xbf16> to vector<8x8xf32>
    %70 = arith.addf %66, %69 : vector<8x8xf32>
    %71 = vector.broadcast %11 : vector<1x8xf32> to vector<8x8xf32>
    %72 = arith.addf %70, %71 : vector<8x8xf32>
    %cst_31 = arith.constant dense<0xFF800000> : vector<8xf32>
    %73 = vector.multi_reduction <maximumf>, %72, %cst_31 [1] : vector<8x8xf32> to vector<8xf32>
    %74 = vector.shape_cast %73 : vector<8xf32> to vector<8x1xf32>
    %75 = vector.broadcast %74 : vector<8x1xf32> to vector<8x8xf32>
    %76 = arith.subf %72, %75 : vector<8x8xf32>
    %77 = math.exp %76 : vector<8x8xf32>
    %cst_32 = arith.constant dense<0.000000e+00> : vector<8xf32>
    %78 = vector.multi_reduction <add>, %77, %cst_32 [1] : vector<8x8xf32> to vector<8xf32>
    %79 = vector.shape_cast %78 : vector<8xf32> to vector<8x1xf32>
    %80 = tpu.reciprocal %79 {approx = true} : vector<8x1xf32> -> vector<8x1xf32>
    %81 = vector.broadcast %80 : vector<8x1xf32> to vector<8x8xf32>
    %82 = arith.mulf %77, %81 : vector<8x8xf32>
    %83 = vector.extract_strided_slice %5 {offsets = [0, 64], sizes = [8, 32], strides = [1, 1]} : vector<8x256xf32> to vector<8x32xf32>
    %84 = arith.truncf %82 : vector<8x8xf32> to vector<8x8xbf16>
    %85 = arith.truncf %83 : vector<8x32xf32> to vector<8x32xbf16>
    %cst_33 = arith.constant dense<0.000000e+00> : vector<8x32xf32>
    %86 = tpu.matmul %84, %85, %cst_33 {dimension_numbers = #tpu.dot_dimension_numbers<[1], [0], [0], [1], [0, 0, 1, 1], [], []>} : vector<8x8xbf16>, vector<8x32xbf16>, vector<8x32xf32> -> vector<8x32xf32>
    %87 = vector.extract_strided_slice %1 {offsets = [0, 96], sizes = [8, 32], strides = [1, 1]} : vector<8x256xf32> to vector<8x32xf32>
    %88 = vector.extract_strided_slice %3 {offsets = [0, 96], sizes = [8, 32], strides = [1, 1]} : vector<8x256xf32> to vector<8x32xf32>
    %89 = arith.truncf %87 : vector<8x32xf32> to vector<8x32xbf16>
    %90 = arith.truncf %88 : vector<8x32xf32> to vector<8x32xbf16>
    %cst_34 = arith.constant dense<0.000000e+00> : vector<8x8xf32>
    %91 = tpu.matmul %89, %90, %cst_34 {dimension_numbers = #tpu.dot_dimension_numbers<[1], [1], [0], [0], [0, 0, 1, 0], [], []>} : vector<8x32xbf16>, vector<8x32xbf16>, vector<8x8xf32> -> vector<8x8xf32>
    %c0_35 = arith.constant 0 : index
    %c3 = arith.constant 3 : index
    %c0_36 = arith.constant 0 : index
    %c0_37 = arith.constant 0 : index
    %92 = vector.load %arg5[%c0_35, %c3, %c0_36, %c0_37] : memref<1x8x8x8xbf16, #tpu.memory_space<vmem>>, vector<1x1x8x8xbf16>
    %93 = vector.shape_cast %92 : vector<1x1x8x8xbf16> to vector<8x8xbf16>
    %94 = arith.extf %93 : vector<8x8xbf16> to vector<8x8xf32>
    %95 = arith.addf %91, %94 : vector<8x8xf32>
    %96 = vector.broadcast %11 : vector<1x8xf32> to vector<8x8xf32>
    %97 = arith.addf %95, %96 : vector<8x8xf32>
    %cst_38 = arith.constant dense<0xFF800000> : vector<8xf32>
    %98 = vector.multi_reduction <maximumf>, %97, %cst_38 [1] : vector<8x8xf32> to vector<8xf32>
    %99 = vector.shape_cast %98 : vector<8xf32> to vector<8x1xf32>
    %100 = vector.broadcast %99 : vector<8x1xf32> to vector<8x8xf32>
    %101 = arith.subf %97, %100 : vector<8x8xf32>
    %102 = math.exp %101 : vector<8x8xf32>
    %cst_39 = arith.constant dense<0.000000e+00> : vector<8xf32>
    %103 = vector.multi_reduction <add>, %102, %cst_39 [1] : vector<8x8xf32> to vector<8xf32>
    %104 = vector.shape_cast %103 : vector<8xf32> to vector<8x1xf32>
    %105 = tpu.reciprocal %104 {approx = true} : vector<8x1xf32> -> vector<8x1xf32>
    %106 = vector.broadcast %105 : vector<8x1xf32> to vector<8x8xf32>
    %107 = arith.mulf %102, %106 : vector<8x8xf32>
    %108 = vector.extract_strided_slice %5 {offsets = [0, 96], sizes = [8, 32], strides = [1, 1]} : vector<8x256xf32> to vector<8x32xf32>
    %109 = arith.truncf %107 : vector<8x8xf32> to vector<8x8xbf16>
    %110 = arith.truncf %108 : vector<8x32xf32> to vector<8x32xbf16>
    %cst_40 = arith.constant dense<0.000000e+00> : vector<8x32xf32>
    %111 = tpu.matmul %109, %110, %cst_40 {dimension_numbers = #tpu.dot_dimension_numbers<[1], [0], [0], [1], [0, 0, 1, 1], [], []>} : vector<8x8xbf16>, vector<8x32xbf16>, vector<8x32xf32> -> vector<8x32xf32>
    %112 = vector.extract_strided_slice %1 {offsets = [0, 128], sizes = [8, 32], strides = [1, 1]} : vector<8x256xf32> to vector<8x32xf32>
    %113 = vector.extract_strided_slice %3 {offsets = [0, 128], sizes = [8, 32], strides = [1, 1]} : vector<8x256xf32> to vector<8x32xf32>
    %114 = arith.truncf %112 : vector<8x32xf32> to vector<8x32xbf16>
    %115 = arith.truncf %113 : vector<8x32xf32> to vector<8x32xbf16>
    %cst_41 = arith.constant dense<0.000000e+00> : vector<8x8xf32>
    %116 = tpu.matmul %114, %115, %cst_41 {dimension_numbers = #tpu.dot_dimension_numbers<[1], [1], [0], [0], [0, 0, 1, 0], [], []>} : vector<8x32xbf16>, vector<8x32xbf16>, vector<8x8xf32> -> vector<8x8xf32>
    %c0_42 = arith.constant 0 : index
    %c4 = arith.constant 4 : index
    %c0_43 = arith.constant 0 : index
    %c0_44 = arith.constant 0 : index
    %117 = vector.load %arg5[%c0_42, %c4, %c0_43, %c0_44] : memref<1x8x8x8xbf16, #tpu.memory_space<vmem>>, vector<1x1x8x8xbf16>
    %118 = vector.shape_cast %117 : vector<1x1x8x8xbf16> to vector<8x8xbf16>
    %119 = arith.extf %118 : vector<8x8xbf16> to vector<8x8xf32>
    %120 = arith.addf %116, %119 : vector<8x8xf32>
    %121 = vector.broadcast %11 : vector<1x8xf32> to vector<8x8xf32>
    %122 = arith.addf %120, %121 : vector<8x8xf32>
    %cst_45 = arith.constant dense<0xFF800000> : vector<8xf32>
    %123 = vector.multi_reduction <maximumf>, %122, %cst_45 [1] : vector<8x8xf32> to vector<8xf32>
    %124 = vector.shape_cast %123 : vector<8xf32> to vector<8x1xf32>
    %125 = vector.broadcast %124 : vector<8x1xf32> to vector<8x8xf32>
    %126 = arith.subf %122, %125 : vector<8x8xf32>
    %127 = math.exp %126 : vector<8x8xf32>
    %cst_46 = arith.constant dense<0.000000e+00> : vector<8xf32>
    %128 = vector.multi_reduction <add>, %127, %cst_46 [1] : vector<8x8xf32> to vector<8xf32>
    %129 = vector.shape_cast %128 : vector<8xf32> to vector<8x1xf32>
    %130 = tpu.reciprocal %129 {approx = true} : vector<8x1xf32> -> vector<8x1xf32>
    %131 = vector.broadcast %130 : vector<8x1xf32> to vector<8x8xf32>
    %132 = arith.mulf %127, %131 : vector<8x8xf32>
    %133 = vector.extract_strided_slice %5 {offsets = [0, 128], sizes = [8, 32], strides = [1, 1]} : vector<8x256xf32> to vector<8x32xf32>
    %134 = arith.truncf %132 : vector<8x8xf32> to vector<8x8xbf16>
    %135 = arith.truncf %133 : vector<8x32xf32> to vector<8x32xbf16>
    %cst_47 = arith.constant dense<0.000000e+00> : vector<8x32xf32>
    %136 = tpu.matmul %134, %135, %cst_47 {dimension_numbers = #tpu.dot_dimension_numbers<[1], [0], [0], [1], [0, 0, 1, 1], [], []>} : vector<8x8xbf16>, vector<8x32xbf16>, vector<8x32xf32> -> vector<8x32xf32>
    %137 = vector.extract_strided_slice %1 {offsets = [0, 160], sizes = [8, 32], strides = [1, 1]} : vector<8x256xf32> to vector<8x32xf32>
    %138 = vector.extract_strided_slice %3 {offsets = [0, 160], sizes = [8, 32], strides = [1, 1]} : vector<8x256xf32> to vector<8x32xf32>
    %139 = arith.truncf %137 : vector<8x32xf32> to vector<8x32xbf16>
    %140 = arith.truncf %138 : vector<8x32xf32> to vector<8x32xbf16>
    %cst_48 = arith.constant dense<0.000000e+00> : vector<8x8xf32>
    %141 = tpu.matmul %139, %140, %cst_48 {dimension_numbers = #tpu.dot_dimension_numbers<[1], [1], [0], [0], [0, 0, 1, 0], [], []>} : vector<8x32xbf16>, vector<8x32xbf16>, vector<8x8xf32> -> vector<8x8xf32>
    %c0_49 = arith.constant 0 : index
    %c5 = arith.constant 5 : index
    %c0_50 = arith.constant 0 : index
    %c0_51 = arith.constant 0 : index
    %142 = vector.load %arg5[%c0_49, %c5, %c0_50, %c0_51] : memref<1x8x8x8xbf16, #tpu.memory_space<vmem>>, vector<1x1x8x8xbf16>
    %143 = vector.shape_cast %142 : vector<1x1x8x8xbf16> to vector<8x8xbf16>
    %144 = arith.extf %143 : vector<8x8xbf16> to vector<8x8xf32>
    %145 = arith.addf %141, %144 : vector<8x8xf32>
    %146 = vector.broadcast %11 : vector<1x8xf32> to vector<8x8xf32>
    %147 = arith.addf %145, %146 : vector<8x8xf32>
    %cst_52 = arith.constant dense<0xFF800000> : vector<8xf32>
    %148 = vector.multi_reduction <maximumf>, %147, %cst_52 [1] : vector<8x8xf32> to vector<8xf32>
    %149 = vector.shape_cast %148 : vector<8xf32> to vector<8x1xf32>
    %150 = vector.broadcast %149 : vector<8x1xf32> to vector<8x8xf32>
    %151 = arith.subf %147, %150 : vector<8x8xf32>
    %152 = math.exp %151 : vector<8x8xf32>
    %cst_53 = arith.constant dense<0.000000e+00> : vector<8xf32>
    %153 = vector.multi_reduction <add>, %152, %cst_53 [1] : vector<8x8xf32> to vector<8xf32>
    %154 = vector.shape_cast %153 : vector<8xf32> to vector<8x1xf32>
    %155 = tpu.reciprocal %154 {approx = true} : vector<8x1xf32> -> vector<8x1xf32>
    %156 = vector.broadcast %155 : vector<8x1xf32> to vector<8x8xf32>
    %157 = arith.mulf %152, %156 : vector<8x8xf32>
    %158 = vector.extract_strided_slice %5 {offsets = [0, 160], sizes = [8, 32], strides = [1, 1]} : vector<8x256xf32> to vector<8x32xf32>
    %159 = arith.truncf %157 : vector<8x8xf32> to vector<8x8xbf16>
    %160 = arith.truncf %158 : vector<8x32xf32> to vector<8x32xbf16>
    %cst_54 = arith.constant dense<0.000000e+00> : vector<8x32xf32>
    %161 = tpu.matmul %159, %160, %cst_54 {dimension_numbers = #tpu.dot_dimension_numbers<[1], [0], [0], [1], [0, 0, 1, 1], [], []>} : vector<8x8xbf16>, vector<8x32xbf16>, vector<8x32xf32> -> vector<8x32xf32>
    %162 = vector.extract_strided_slice %1 {offsets = [0, 192], sizes = [8, 32], strides = [1, 1]} : vector<8x256xf32> to vector<8x32xf32>
    %163 = vector.extract_strided_slice %3 {offsets = [0, 192], sizes = [8, 32], strides = [1, 1]} : vector<8x256xf32> to vector<8x32xf32>
    %164 = arith.truncf %162 : vector<8x32xf32> to vector<8x32xbf16>
    %165 = arith.truncf %163 : vector<8x32xf32> to vector<8x32xbf16>
    %cst_55 = arith.constant dense<0.000000e+00> : vector<8x8xf32>
    %166 = tpu.matmul %164, %165, %cst_55 {dimension_numbers = #tpu.dot_dimension_numbers<[1], [1], [0], [0], [0, 0, 1, 0], [], []>} : vector<8x32xbf16>, vector<8x32xbf16>, vector<8x8xf32> -> vector<8x8xf32>
    %c0_56 = arith.constant 0 : index
    %c6 = arith.constant 6 : index
    %c0_57 = arith.constant 0 : index
    %c0_58 = arith.constant 0 : index
    %167 = vector.load %arg5[%c0_56, %c6, %c0_57, %c0_58] : memref<1x8x8x8xbf16, #tpu.memory_space<vmem>>, vector<1x1x8x8xbf16>
    %168 = vector.shape_cast %167 : vector<1x1x8x8xbf16> to vector<8x8xbf16>
    %169 = arith.extf %168 : vector<8x8xbf16> to vector<8x8xf32>
    %170 = arith.addf %166, %169 : vector<8x8xf32>
    %171 = vector.broadcast %11 : vector<1x8xf32> to vector<8x8xf32>
    %172 = arith.addf %170, %171 : vector<8x8xf32>
    %cst_59 = arith.constant dense<0xFF800000> : vector<8xf32>
    %173 = vector.multi_reduction <maximumf>, %172, %cst_59 [1] : vector<8x8xf32> to vector<8xf32>
    %174 = vector.shape_cast %173 : vector<8xf32> to vector<8x1xf32>
    %175 = vector.broadcast %174 : vector<8x1xf32> to vector<8x8xf32>
    %176 = arith.subf %172, %175 : vector<8x8xf32>
    %177 = math.exp %176 : vector<8x8xf32>
    %cst_60 = arith.constant dense<0.000000e+00> : vector<8xf32>
    %178 = vector.multi_reduction <add>, %177, %cst_60 [1] : vector<8x8xf32> to vector<8xf32>
    %179 = vector.shape_cast %178 : vector<8xf32> to vector<8x1xf32>
    %180 = tpu.reciprocal %179 {approx = true} : vector<8x1xf32> -> vector<8x1xf32>
    %181 = vector.broadcast %180 : vector<8x1xf32> to vector<8x8xf32>
    %182 = arith.mulf %177, %181 : vector<8x8xf32>
    %183 = vector.extract_strided_slice %5 {offsets = [0, 192], sizes = [8, 32], strides = [1, 1]} : vector<8x256xf32> to vector<8x32xf32>
    %184 = arith.truncf %182 : vector<8x8xf32> to vector<8x8xbf16>
    %185 = arith.truncf %183 : vector<8x32xf32> to vector<8x32xbf16>
    %cst_61 = arith.constant dense<0.000000e+00> : vector<8x32xf32>
    %186 = tpu.matmul %184, %185, %cst_61 {dimension_numbers = #tpu.dot_dimension_numbers<[1], [0], [0], [1], [0, 0, 1, 1], [], []>} : vector<8x8xbf16>, vector<8x32xbf16>, vector<8x32xf32> -> vector<8x32xf32>
    %187 = vector.extract_strided_slice %1 {offsets = [0, 224], sizes = [8, 32], strides = [1, 1]} : vector<8x256xf32> to vector<8x32xf32>
    %188 = vector.extract_strided_slice %3 {offsets = [0, 224], sizes = [8, 32], strides = [1, 1]} : vector<8x256xf32> to vector<8x32xf32>
    %189 = arith.truncf %187 : vector<8x32xf32> to vector<8x32xbf16>
    %190 = arith.truncf %188 : vector<8x32xf32> to vector<8x32xbf16>
    %cst_62 = arith.constant dense<0.000000e+00> : vector<8x8xf32>
    %191 = tpu.matmul %189, %190, %cst_62 {dimension_numbers = #tpu.dot_dimension_numbers<[1], [1], [0], [0], [0, 0, 1, 0], [], []>} : vector<8x32xbf16>, vector<8x32xbf16>, vector<8x8xf32> -> vector<8x8xf32>
    %c0_63 = arith.constant 0 : index
    %c7 = arith.constant 7 : index
    %c0_64 = arith.constant 0 : index
    %c0_65 = arith.constant 0 : index
    %192 = vector.load %arg5[%c0_63, %c7, %c0_64, %c0_65] : memref<1x8x8x8xbf16, #tpu.memory_space<vmem>>, vector<1x1x8x8xbf16>
    %193 = vector.shape_cast %192 : vector<1x1x8x8xbf16> to vector<8x8xbf16>
    %194 = arith.extf %193 : vector<8x8xbf16> to vector<8x8xf32>
    %195 = arith.addf %191, %194 : vector<8x8xf32>
    %196 = vector.broadcast %11 : vector<1x8xf32> to vector<8x8xf32>
    %197 = arith.addf %195, %196 : vector<8x8xf32>
    %cst_66 = arith.constant dense<0xFF800000> : vector<8xf32>
    %198 = vector.multi_reduction <maximumf>, %197, %cst_66 [1] : vector<8x8xf32> to vector<8xf32>
    %199 = vector.shape_cast %198 : vector<8xf32> to vector<8x1xf32>
    %200 = vector.broadcast %199 : vector<8x1xf32> to vector<8x8xf32>
    %201 = arith.subf %197, %200 : vector<8x8xf32>
    %202 = math.exp %201 : vector<8x8xf32>
    %cst_67 = arith.constant dense<0.000000e+00> : vector<8xf32>
    %203 = vector.multi_reduction <add>, %202, %cst_67 [1] : vector<8x8xf32> to vector<8xf32>
    %204 = vector.shape_cast %203 : vector<8xf32> to vector<8x1xf32>
    %205 = tpu.reciprocal %204 {approx = true} : vector<8x1xf32> -> vector<8x1xf32>
    %206 = vector.broadcast %205 : vector<8x1xf32> to vector<8x8xf32>
    %207 = arith.mulf %202, %206 : vector<8x8xf32>
    %208 = vector.extract_strided_slice %5 {offsets = [0, 224], sizes = [8, 32], strides = [1, 1]} : vector<8x256xf32> to vector<8x32xf32>
    %209 = arith.truncf %207 : vector<8x8xf32> to vector<8x8xbf16>
    %210 = arith.truncf %208 : vector<8x32xf32> to vector<8x32xbf16>
    %cst_68 = arith.constant dense<0.000000e+00> : vector<8x32xf32>
    %211 = tpu.matmul %209, %210, %cst_68 {dimension_numbers = #tpu.dot_dimension_numbers<[1], [0], [0], [1], [0, 0, 1, 1], [], []>} : vector<8x8xbf16>, vector<8x32xbf16>, vector<8x32xf32> -> vector<8x32xf32>
    %212 = tpu.concatenate %36, %61, %86, %111, %136, %161, %186, %211 in 1 : vector<8x32xf32>, vector<8x32xf32>, vector<8x32xf32>, vector<8x32xf32>, vector<8x32xf32>, vector<8x32xf32>, vector<8x32xf32>, vector<8x32xf32> -> vector<8x256xf32>
    %c0_69 = arith.constant 0 : index
    %c0_70 = arith.constant 0 : index
    %c0_71 = arith.constant 0 : index
    %213 = vector.load %arg7[%c0_69, %c0_70, %c0_71] : memref<1x8x256xf32, #tpu.memory_space<vmem>>, vector<1x8x256xf32>
    %214 = vector.shape_cast %213 : vector<1x8x256xf32> to vector<8x256xf32>
    %215 = vector.shape_cast %212 : vector<8x256xf32> to vector<1x8x256xf32>
    tpu.vector_store %arg7[%c0_69, %c0_70, %c0_71], %215 {strides = array<i32>} : memref<1x8x256xf32, #tpu.memory_space<vmem>>, vector<1x8x256xf32>,
    return
  }
  func.func @transform_0(%arg0: i32, %arg1: i32) -> (i32, i32, i32) {
    %c0_i32 = arith.constant 0 : i32
    %c0_i32_0 = arith.constant 0 : i32
    return %arg0, %arg1, %c0_i32 : i32, i32, i32
  }
  func.func @transform_1(%arg0: i32, %arg1: i32) -> (i32, i32, i32) {
    %c0_i32 = arith.constant 0 : i32
    %c1_i32 = arith.constant 1 : i32
    %c0_i32_0 = arith.constant 0 : i32
    return %arg0, %c0_i32, %c1_i32 : i32, i32, i32
  }
  func.func @transform_2(%arg0: i32, %arg1: i32) -> (i32, i32, i32) {
    %c0_i32 = arith.constant 0 : i32
    %c2_i32 = arith.constant 2 : i32
    %c0_i32_0 = arith.constant 0 : i32
    return %arg0, %c0_i32, %c2_i32 : i32, i32, i32
  }
  func.func @transform_3(%arg0: i32, %arg1: i32) -> (i32, i32, i32, i32) {
    %c0_i32 = arith.constant 0 : i32
    %c0_i32_0 = arith.constant 0 : i32
    %c0_i32_1 = arith.constant 0 : i32
    return %arg0, %c0_i32, %arg1, %c0_i32_0 : i32, i32, i32, i32
  }
  func.func @transform_4(%arg0: i32, %arg1: i32) -> (i32, i32, i32) {
    %c0_i32 = arith.constant 0 : i32
    %c0_i32_0 = arith.constant 0 : i32
    %c0_i32_1 = arith.constant 0 : i32
    return %arg0, %c0_i32, %c0_i32_0 : i32, i32, i32
  }
  func.func @transform_5(%arg0: i32, %arg1: i32) -> (i32, i32, i32) {
    %c0_i32 = arith.constant 0 : i32
    %c0_i32_0 = arith.constant 0 : i32
    return %arg0, %arg1, %c0_i32 : i32, i32, i32
  }
}

module attributes {stable_mosaic.version = 11 : i64} {
  func.func @kernel(%arg0: i32, %arg1: i32, %arg2: memref<1x8x256xf32, #tpu.memory_space<vmem>>, %arg3: memref<1x8x256xf32, #tpu.memory_space<vmem>>, %arg4: memref<1x8x256xf32, #tpu.memory_space<vmem>>, %arg5: memref<1x1x8xf32, #tpu.memory_space<vmem>>, %arg6: memref<1x8x256xf32, #tpu.memory_space<vmem>>) attributes {dimension_semantics = [#tpu.dimension_semantics<parallel>, #tpu.dimension_semantics<parallel>], iteration_bounds = array<i64: 2, 1>, scalar_prefetch = 0 : i64, scratch_operands = 0 : i64, tpu.core_type = #tpu.core_type<tc>, window_params = [{transform_indices = @transform_0, window_bounds = array<i64: 1, 8, 256>}, {transform_indices = @transform_1, window_bounds = array<i64: 1, 8, 256>}, {transform_indices = @transform_2, window_bounds = array<i64: 1, 8, 256>}, {transform_indices = @transform_3, window_bounds = array<i64: 1, 1, 8>}, {transform_indices = @transform_4, window_bounds = array<i64: 1, 8, 256>}]} {
    %c0 = arith.constant 0 : index
    %c0_0 = arith.constant 0 : index
    %c0_1 = arith.constant 0 : index
    %0 = vector.load %arg2[%c0, %c0_0, %c0_1] : memref<1x8x256xf32, #tpu.memory_space<vmem>>, vector<1x8x256xf32>
    %1 = vector.shape_cast %0 : vector<1x8x256xf32> to vector<8x256xf32>
    %c0_2 = arith.constant 0 : index
    %c0_3 = arith.constant 0 : index
    %c0_4 = arith.constant 0 : index
    %2 = vector.load %arg3[%c0_2, %c0_3, %c0_4] : memref<1x8x256xf32, #tpu.memory_space<vmem>>, vector<1x8x256xf32>
    %3 = vector.shape_cast %2 : vector<1x8x256xf32> to vector<8x256xf32>
    %c0_5 = arith.constant 0 : index
    %c0_6 = arith.constant 0 : index
    %c0_7 = arith.constant 0 : index
    %4 = vector.load %arg4[%c0_5, %c0_6, %c0_7] : memref<1x8x256xf32, #tpu.memory_space<vmem>>, vector<1x8x256xf32>
    %5 = vector.shape_cast %4 : vector<1x8x256xf32> to vector<8x256xf32>
    %c0_8 = arith.constant 0 : index
    %c0_9 = arith.constant 0 : index
    %c0_10 = arith.constant 0 : index
    %6 = vector.load %arg5[%c0_8, %c0_9, %c0_10] : memref<1x1x8xf32, #tpu.memory_space<vmem>>, vector<1x1x8xf32>
    %7 = vector.shape_cast %6 : vector<1x1x8xf32> to vector<1x8xf32>
    %cst = arith.constant 1.000000e+00 : f32
    %8 = vector.broadcast %cst : f32 to vector<1x8xf32>
    %9 = arith.subf %7, %8 : vector<1x8xf32>
    %cst_11 = arith.constant 1.000000e+09 : f32
    %10 = vector.broadcast %cst_11 : f32 to vector<1x8xf32>
    %11 = arith.mulf %9, %10 : vector<1x8xf32>
    %12 = vector.extract_strided_slice %1 {offsets = [0, 0], sizes = [8, 32], strides = [1, 1]} : vector<8x256xf32> to vector<8x32xf32>
    %13 = vector.extract_strided_slice %3 {offsets = [0, 0], sizes = [8, 32], strides = [1, 1]} : vector<8x256xf32> to vector<8x32xf32>
    %14 = arith.truncf %12 : vector<8x32xf32> to vector<8x32xbf16>
    %15 = arith.truncf %13 : vector<8x32xf32> to vector<8x32xbf16>
    %cst_12 = arith.constant dense<0.000000e+00> : vector<8x8xf32>
    %16 = tpu.matmul %14, %15, %cst_12 {dimension_numbers = #tpu.dot_dimension_numbers<[1], [1], [0], [0], [0, 0, 1, 0], [], []>} : vector<8x32xbf16>, vector<8x32xbf16>, vector<8x8xf32> -> vector<8x8xf32>
    %17 = vector.broadcast %11 : vector<1x8xf32> to vector<8x8xf32>
    %18 = arith.addf %16, %17 : vector<8x8xf32>
    %cst_13 = arith.constant dense<0xFF800000> : vector<8xf32>
    %19 = vector.multi_reduction <maximumf>, %18, %cst_13 [1] : vector<8x8xf32> to vector<8xf32>
    %20 = vector.shape_cast %19 : vector<8xf32> to vector<8x1xf32>
    %21 = vector.broadcast %20 : vector<8x1xf32> to vector<8x8xf32>
    %22 = arith.subf %18, %21 : vector<8x8xf32>
    %23 = math.exp %22 : vector<8x8xf32>
    %cst_14 = arith.constant dense<0.000000e+00> : vector<8xf32>
    %24 = vector.multi_reduction <add>, %23, %cst_14 [1] : vector<8x8xf32> to vector<8xf32>
    %25 = vector.shape_cast %24 : vector<8xf32> to vector<8x1xf32>
    %26 = tpu.reciprocal %25 {approx = true} : vector<8x1xf32> -> vector<8x1xf32>
    %27 = vector.broadcast %26 : vector<8x1xf32> to vector<8x8xf32>
    %28 = arith.mulf %23, %27 : vector<8x8xf32>
    %29 = vector.extract_strided_slice %5 {offsets = [0, 0], sizes = [8, 32], strides = [1, 1]} : vector<8x256xf32> to vector<8x32xf32>
    %30 = arith.truncf %28 : vector<8x8xf32> to vector<8x8xbf16>
    %31 = arith.truncf %29 : vector<8x32xf32> to vector<8x32xbf16>
    %cst_15 = arith.constant dense<0.000000e+00> : vector<8x32xf32>
    %32 = tpu.matmul %30, %31, %cst_15 {dimension_numbers = #tpu.dot_dimension_numbers<[1], [0], [0], [1], [0, 0, 1, 1], [], []>} : vector<8x8xbf16>, vector<8x32xbf16>, vector<8x32xf32> -> vector<8x32xf32>
    %33 = vector.extract_strided_slice %1 {offsets = [0, 32], sizes = [8, 32], strides = [1, 1]} : vector<8x256xf32> to vector<8x32xf32>
    %34 = vector.extract_strided_slice %3 {offsets = [0, 32], sizes = [8, 32], strides = [1, 1]} : vector<8x256xf32> to vector<8x32xf32>
    %35 = arith.truncf %33 : vector<8x32xf32> to vector<8x32xbf16>
    %36 = arith.truncf %34 : vector<8x32xf32> to vector<8x32xbf16>
    %cst_16 = arith.constant dense<0.000000e+00> : vector<8x8xf32>
    %37 = tpu.matmul %35, %36, %cst_16 {dimension_numbers = #tpu.dot_dimension_numbers<[1], [1], [0], [0], [0, 0, 1, 0], [], []>} : vector<8x32xbf16>, vector<8x32xbf16>, vector<8x8xf32> -> vector<8x8xf32>
    %38 = vector.broadcast %11 : vector<1x8xf32> to vector<8x8xf32>
    %39 = arith.addf %37, %38 : vector<8x8xf32>
    %cst_17 = arith.constant dense<0xFF800000> : vector<8xf32>
    %40 = vector.multi_reduction <maximumf>, %39, %cst_17 [1] : vector<8x8xf32> to vector<8xf32>
    %41 = vector.shape_cast %40 : vector<8xf32> to vector<8x1xf32>
    %42 = vector.broadcast %41 : vector<8x1xf32> to vector<8x8xf32>
    %43 = arith.subf %39, %42 : vector<8x8xf32>
    %44 = math.exp %43 : vector<8x8xf32>
    %cst_18 = arith.constant dense<0.000000e+00> : vector<8xf32>
    %45 = vector.multi_reduction <add>, %44, %cst_18 [1] : vector<8x8xf32> to vector<8xf32>
    %46 = vector.shape_cast %45 : vector<8xf32> to vector<8x1xf32>
    %47 = tpu.reciprocal %46 {approx = true} : vector<8x1xf32> -> vector<8x1xf32>
    %48 = vector.broadcast %47 : vector<8x1xf32> to vector<8x8xf32>
    %49 = arith.mulf %44, %48 : vector<8x8xf32>
    %50 = vector.extract_strided_slice %5 {offsets = [0, 32], sizes = [8, 32], strides = [1, 1]} : vector<8x256xf32> to vector<8x32xf32>
    %51 = arith.truncf %49 : vector<8x8xf32> to vector<8x8xbf16>
    %52 = arith.truncf %50 : vector<8x32xf32> to vector<8x32xbf16>
    %cst_19 = arith.constant dense<0.000000e+00> : vector<8x32xf32>
    %53 = tpu.matmul %51, %52, %cst_19 {dimension_numbers = #tpu.dot_dimension_numbers<[1], [0], [0], [1], [0, 0, 1, 1], [], []>} : vector<8x8xbf16>, vector<8x32xbf16>, vector<8x32xf32> -> vector<8x32xf32>
    %54 = vector.extract_strided_slice %1 {offsets = [0, 64], sizes = [8, 32], strides = [1, 1]} : vector<8x256xf32> to vector<8x32xf32>
    %55 = vector.extract_strided_slice %3 {offsets = [0, 64], sizes = [8, 32], strides = [1, 1]} : vector<8x256xf32> to vector<8x32xf32>
    %56 = arith.truncf %54 : vector<8x32xf32> to vector<8x32xbf16>
    %57 = arith.truncf %55 : vector<8x32xf32> to vector<8x32xbf16>
    %cst_20 = arith.constant dense<0.000000e+00> : vector<8x8xf32>
    %58 = tpu.matmul %56, %57, %cst_20 {dimension_numbers = #tpu.dot_dimension_numbers<[1], [1], [0], [0], [0, 0, 1, 0], [], []>} : vector<8x32xbf16>, vector<8x32xbf16>, vector<8x8xf32> -> vector<8x8xf32>
    %59 = vector.broadcast %11 : vector<1x8xf32> to vector<8x8xf32>
    %60 = arith.addf %58, %59 : vector<8x8xf32>
    %cst_21 = arith.constant dense<0xFF800000> : vector<8xf32>
    %61 = vector.multi_reduction <maximumf>, %60, %cst_21 [1] : vector<8x8xf32> to vector<8xf32>
    %62 = vector.shape_cast %61 : vector<8xf32> to vector<8x1xf32>
    %63 = vector.broadcast %62 : vector<8x1xf32> to vector<8x8xf32>
    %64 = arith.subf %60, %63 : vector<8x8xf32>
    %65 = math.exp %64 : vector<8x8xf32>
    %cst_22 = arith.constant dense<0.000000e+00> : vector<8xf32>
    %66 = vector.multi_reduction <add>, %65, %cst_22 [1] : vector<8x8xf32> to vector<8xf32>
    %67 = vector.shape_cast %66 : vector<8xf32> to vector<8x1xf32>
    %68 = tpu.reciprocal %67 {approx = true} : vector<8x1xf32> -> vector<8x1xf32>
    %69 = vector.broadcast %68 : vector<8x1xf32> to vector<8x8xf32>
    %70 = arith.mulf %65, %69 : vector<8x8xf32>
    %71 = vector.extract_strided_slice %5 {offsets = [0, 64], sizes = [8, 32], strides = [1, 1]} : vector<8x256xf32> to vector<8x32xf32>
    %72 = arith.truncf %70 : vector<8x8xf32> to vector<8x8xbf16>
    %73 = arith.truncf %71 : vector<8x32xf32> to vector<8x32xbf16>
    %cst_23 = arith.constant dense<0.000000e+00> : vector<8x32xf32>
    %74 = tpu.matmul %72, %73, %cst_23 {dimension_numbers = #tpu.dot_dimension_numbers<[1], [0], [0], [1], [0, 0, 1, 1], [], []>} : vector<8x8xbf16>, vector<8x32xbf16>, vector<8x32xf32> -> vector<8x32xf32>
    %75 = vector.extract_strided_slice %1 {offsets = [0, 96], sizes = [8, 32], strides = [1, 1]} : vector<8x256xf32> to vector<8x32xf32>
    %76 = vector.extract_strided_slice %3 {offsets = [0, 96], sizes = [8, 32], strides = [1, 1]} : vector<8x256xf32> to vector<8x32xf32>
    %77 = arith.truncf %75 : vector<8x32xf32> to vector<8x32xbf16>
    %78 = arith.truncf %76 : vector<8x32xf32> to vector<8x32xbf16>
    %cst_24 = arith.constant dense<0.000000e+00> : vector<8x8xf32>
    %79 = tpu.matmul %77, %78, %cst_24 {dimension_numbers = #tpu.dot_dimension_numbers<[1], [1], [0], [0], [0, 0, 1, 0], [], []>} : vector<8x32xbf16>, vector<8x32xbf16>, vector<8x8xf32> -> vector<8x8xf32>
    %80 = vector.broadcast %11 : vector<1x8xf32> to vector<8x8xf32>
    %81 = arith.addf %79, %80 : vector<8x8xf32>
    %cst_25 = arith.constant dense<0xFF800000> : vector<8xf32>
    %82 = vector.multi_reduction <maximumf>, %81, %cst_25 [1] : vector<8x8xf32> to vector<8xf32>
    %83 = vector.shape_cast %82 : vector<8xf32> to vector<8x1xf32>
    %84 = vector.broadcast %83 : vector<8x1xf32> to vector<8x8xf32>
    %85 = arith.subf %81, %84 : vector<8x8xf32>
    %86 = math.exp %85 : vector<8x8xf32>
    %cst_26 = arith.constant dense<0.000000e+00> : vector<8xf32>
    %87 = vector.multi_reduction <add>, %86, %cst_26 [1] : vector<8x8xf32> to vector<8xf32>
    %88 = vector.shape_cast %87 : vector<8xf32> to vector<8x1xf32>
    %89 = tpu.reciprocal %88 {approx = true} : vector<8x1xf32> -> vector<8x1xf32>
    %90 = vector.broadcast %89 : vector<8x1xf32> to vector<8x8xf32>
    %91 = arith.mulf %86, %90 : vector<8x8xf32>
    %92 = vector.extract_strided_slice %5 {offsets = [0, 96], sizes = [8, 32], strides = [1, 1]} : vector<8x256xf32> to vector<8x32xf32>
    %93 = arith.truncf %91 : vector<8x8xf32> to vector<8x8xbf16>
    %94 = arith.truncf %92 : vector<8x32xf32> to vector<8x32xbf16>
    %cst_27 = arith.constant dense<0.000000e+00> : vector<8x32xf32>
    %95 = tpu.matmul %93, %94, %cst_27 {dimension_numbers = #tpu.dot_dimension_numbers<[1], [0], [0], [1], [0, 0, 1, 1], [], []>} : vector<8x8xbf16>, vector<8x32xbf16>, vector<8x32xf32> -> vector<8x32xf32>
    %96 = vector.extract_strided_slice %1 {offsets = [0, 128], sizes = [8, 32], strides = [1, 1]} : vector<8x256xf32> to vector<8x32xf32>
    %97 = vector.extract_strided_slice %3 {offsets = [0, 128], sizes = [8, 32], strides = [1, 1]} : vector<8x256xf32> to vector<8x32xf32>
    %98 = arith.truncf %96 : vector<8x32xf32> to vector<8x32xbf16>
    %99 = arith.truncf %97 : vector<8x32xf32> to vector<8x32xbf16>
    %cst_28 = arith.constant dense<0.000000e+00> : vector<8x8xf32>
    %100 = tpu.matmul %98, %99, %cst_28 {dimension_numbers = #tpu.dot_dimension_numbers<[1], [1], [0], [0], [0, 0, 1, 0], [], []>} : vector<8x32xbf16>, vector<8x32xbf16>, vector<8x8xf32> -> vector<8x8xf32>
    %101 = vector.broadcast %11 : vector<1x8xf32> to vector<8x8xf32>
    %102 = arith.addf %100, %101 : vector<8x8xf32>
    %cst_29 = arith.constant dense<0xFF800000> : vector<8xf32>
    %103 = vector.multi_reduction <maximumf>, %102, %cst_29 [1] : vector<8x8xf32> to vector<8xf32>
    %104 = vector.shape_cast %103 : vector<8xf32> to vector<8x1xf32>
    %105 = vector.broadcast %104 : vector<8x1xf32> to vector<8x8xf32>
    %106 = arith.subf %102, %105 : vector<8x8xf32>
    %107 = math.exp %106 : vector<8x8xf32>
    %cst_30 = arith.constant dense<0.000000e+00> : vector<8xf32>
    %108 = vector.multi_reduction <add>, %107, %cst_30 [1] : vector<8x8xf32> to vector<8xf32>
    %109 = vector.shape_cast %108 : vector<8xf32> to vector<8x1xf32>
    %110 = tpu.reciprocal %109 {approx = true} : vector<8x1xf32> -> vector<8x1xf32>
    %111 = vector.broadcast %110 : vector<8x1xf32> to vector<8x8xf32>
    %112 = arith.mulf %107, %111 : vector<8x8xf32>
    %113 = vector.extract_strided_slice %5 {offsets = [0, 128], sizes = [8, 32], strides = [1, 1]} : vector<8x256xf32> to vector<8x32xf32>
    %114 = arith.truncf %112 : vector<8x8xf32> to vector<8x8xbf16>
    %115 = arith.truncf %113 : vector<8x32xf32> to vector<8x32xbf16>
    %cst_31 = arith.constant dense<0.000000e+00> : vector<8x32xf32>
    %116 = tpu.matmul %114, %115, %cst_31 {dimension_numbers = #tpu.dot_dimension_numbers<[1], [0], [0], [1], [0, 0, 1, 1], [], []>} : vector<8x8xbf16>, vector<8x32xbf16>, vector<8x32xf32> -> vector<8x32xf32>
    %117 = vector.extract_strided_slice %1 {offsets = [0, 160], sizes = [8, 32], strides = [1, 1]} : vector<8x256xf32> to vector<8x32xf32>
    %118 = vector.extract_strided_slice %3 {offsets = [0, 160], sizes = [8, 32], strides = [1, 1]} : vector<8x256xf32> to vector<8x32xf32>
    %119 = arith.truncf %117 : vector<8x32xf32> to vector<8x32xbf16>
    %120 = arith.truncf %118 : vector<8x32xf32> to vector<8x32xbf16>
    %cst_32 = arith.constant dense<0.000000e+00> : vector<8x8xf32>
    %121 = tpu.matmul %119, %120, %cst_32 {dimension_numbers = #tpu.dot_dimension_numbers<[1], [1], [0], [0], [0, 0, 1, 0], [], []>} : vector<8x32xbf16>, vector<8x32xbf16>, vector<8x8xf32> -> vector<8x8xf32>
    %122 = vector.broadcast %11 : vector<1x8xf32> to vector<8x8xf32>
    %123 = arith.addf %121, %122 : vector<8x8xf32>
    %cst_33 = arith.constant dense<0xFF800000> : vector<8xf32>
    %124 = vector.multi_reduction <maximumf>, %123, %cst_33 [1] : vector<8x8xf32> to vector<8xf32>
    %125 = vector.shape_cast %124 : vector<8xf32> to vector<8x1xf32>
    %126 = vector.broadcast %125 : vector<8x1xf32> to vector<8x8xf32>
    %127 = arith.subf %123, %126 : vector<8x8xf32>
    %128 = math.exp %127 : vector<8x8xf32>
    %cst_34 = arith.constant dense<0.000000e+00> : vector<8xf32>
    %129 = vector.multi_reduction <add>, %128, %cst_34 [1] : vector<8x8xf32> to vector<8xf32>
    %130 = vector.shape_cast %129 : vector<8xf32> to vector<8x1xf32>
    %131 = tpu.reciprocal %130 {approx = true} : vector<8x1xf32> -> vector<8x1xf32>
    %132 = vector.broadcast %131 : vector<8x1xf32> to vector<8x8xf32>
    %133 = arith.mulf %128, %132 : vector<8x8xf32>
    %134 = vector.extract_strided_slice %5 {offsets = [0, 160], sizes = [8, 32], strides = [1, 1]} : vector<8x256xf32> to vector<8x32xf32>
    %135 = arith.truncf %133 : vector<8x8xf32> to vector<8x8xbf16>
    %136 = arith.truncf %134 : vector<8x32xf32> to vector<8x32xbf16>
    %cst_35 = arith.constant dense<0.000000e+00> : vector<8x32xf32>
    %137 = tpu.matmul %135, %136, %cst_35 {dimension_numbers = #tpu.dot_dimension_numbers<[1], [0], [0], [1], [0, 0, 1, 1], [], []>} : vector<8x8xbf16>, vector<8x32xbf16>, vector<8x32xf32> -> vector<8x32xf32>
    %138 = vector.extract_strided_slice %1 {offsets = [0, 192], sizes = [8, 32], strides = [1, 1]} : vector<8x256xf32> to vector<8x32xf32>
    %139 = vector.extract_strided_slice %3 {offsets = [0, 192], sizes = [8, 32], strides = [1, 1]} : vector<8x256xf32> to vector<8x32xf32>
    %140 = arith.truncf %138 : vector<8x32xf32> to vector<8x32xbf16>
    %141 = arith.truncf %139 : vector<8x32xf32> to vector<8x32xbf16>
    %cst_36 = arith.constant dense<0.000000e+00> : vector<8x8xf32>
    %142 = tpu.matmul %140, %141, %cst_36 {dimension_numbers = #tpu.dot_dimension_numbers<[1], [1], [0], [0], [0, 0, 1, 0], [], []>} : vector<8x32xbf16>, vector<8x32xbf16>, vector<8x8xf32> -> vector<8x8xf32>
    %143 = vector.broadcast %11 : vector<1x8xf32> to vector<8x8xf32>
    %144 = arith.addf %142, %143 : vector<8x8xf32>
    %cst_37 = arith.constant dense<0xFF800000> : vector<8xf32>
    %145 = vector.multi_reduction <maximumf>, %144, %cst_37 [1] : vector<8x8xf32> to vector<8xf32>
    %146 = vector.shape_cast %145 : vector<8xf32> to vector<8x1xf32>
    %147 = vector.broadcast %146 : vector<8x1xf32> to vector<8x8xf32>
    %148 = arith.subf %144, %147 : vector<8x8xf32>
    %149 = math.exp %148 : vector<8x8xf32>
    %cst_38 = arith.constant dense<0.000000e+00> : vector<8xf32>
    %150 = vector.multi_reduction <add>, %149, %cst_38 [1] : vector<8x8xf32> to vector<8xf32>
    %151 = vector.shape_cast %150 : vector<8xf32> to vector<8x1xf32>
    %152 = tpu.reciprocal %151 {approx = true} : vector<8x1xf32> -> vector<8x1xf32>
    %153 = vector.broadcast %152 : vector<8x1xf32> to vector<8x8xf32>
    %154 = arith.mulf %149, %153 : vector<8x8xf32>
    %155 = vector.extract_strided_slice %5 {offsets = [0, 192], sizes = [8, 32], strides = [1, 1]} : vector<8x256xf32> to vector<8x32xf32>
    %156 = arith.truncf %154 : vector<8x8xf32> to vector<8x8xbf16>
    %157 = arith.truncf %155 : vector<8x32xf32> to vector<8x32xbf16>
    %cst_39 = arith.constant dense<0.000000e+00> : vector<8x32xf32>
    %158 = tpu.matmul %156, %157, %cst_39 {dimension_numbers = #tpu.dot_dimension_numbers<[1], [0], [0], [1], [0, 0, 1, 1], [], []>} : vector<8x8xbf16>, vector<8x32xbf16>, vector<8x32xf32> -> vector<8x32xf32>
    %159 = vector.extract_strided_slice %1 {offsets = [0, 224], sizes = [8, 32], strides = [1, 1]} : vector<8x256xf32> to vector<8x32xf32>
    %160 = vector.extract_strided_slice %3 {offsets = [0, 224], sizes = [8, 32], strides = [1, 1]} : vector<8x256xf32> to vector<8x32xf32>
    %161 = arith.truncf %159 : vector<8x32xf32> to vector<8x32xbf16>
    %162 = arith.truncf %160 : vector<8x32xf32> to vector<8x32xbf16>
    %cst_40 = arith.constant dense<0.000000e+00> : vector<8x8xf32>
    %163 = tpu.matmul %161, %162, %cst_40 {dimension_numbers = #tpu.dot_dimension_numbers<[1], [1], [0], [0], [0, 0, 1, 0], [], []>} : vector<8x32xbf16>, vector<8x32xbf16>, vector<8x8xf32> -> vector<8x8xf32>
    %164 = vector.broadcast %11 : vector<1x8xf32> to vector<8x8xf32>
    %165 = arith.addf %163, %164 : vector<8x8xf32>
    %cst_41 = arith.constant dense<0xFF800000> : vector<8xf32>
    %166 = vector.multi_reduction <maximumf>, %165, %cst_41 [1] : vector<8x8xf32> to vector<8xf32>
    %167 = vector.shape_cast %166 : vector<8xf32> to vector<8x1xf32>
    %168 = vector.broadcast %167 : vector<8x1xf32> to vector<8x8xf32>
    %169 = arith.subf %165, %168 : vector<8x8xf32>
    %170 = math.exp %169 : vector<8x8xf32>
    %cst_42 = arith.constant dense<0.000000e+00> : vector<8xf32>
    %171 = vector.multi_reduction <add>, %170, %cst_42 [1] : vector<8x8xf32> to vector<8xf32>
    %172 = vector.shape_cast %171 : vector<8xf32> to vector<8x1xf32>
    %173 = tpu.reciprocal %172 {approx = true} : vector<8x1xf32> -> vector<8x1xf32>
    %174 = vector.broadcast %173 : vector<8x1xf32> to vector<8x8xf32>
    %175 = arith.mulf %170, %174 : vector<8x8xf32>
    %176 = vector.extract_strided_slice %5 {offsets = [0, 224], sizes = [8, 32], strides = [1, 1]} : vector<8x256xf32> to vector<8x32xf32>
    %177 = arith.truncf %175 : vector<8x8xf32> to vector<8x8xbf16>
    %178 = arith.truncf %176 : vector<8x32xf32> to vector<8x32xbf16>
    %cst_43 = arith.constant dense<0.000000e+00> : vector<8x32xf32>
    %179 = tpu.matmul %177, %178, %cst_43 {dimension_numbers = #tpu.dot_dimension_numbers<[1], [0], [0], [1], [0, 0, 1, 1], [], []>} : vector<8x8xbf16>, vector<8x32xbf16>, vector<8x32xf32> -> vector<8x32xf32>
    %180 = tpu.concatenate %32, %53, %74, %95, %116, %137, %158, %179 in 1 : vector<8x32xf32>, vector<8x32xf32>, vector<8x32xf32>, vector<8x32xf32>, vector<8x32xf32>, vector<8x32xf32>, vector<8x32xf32>, vector<8x32xf32> -> vector<8x256xf32>
    %c0_44 = arith.constant 0 : index
    %c0_45 = arith.constant 0 : index
    %c0_46 = arith.constant 0 : index
    %181 = vector.load %arg6[%c0_44, %c0_45, %c0_46] : memref<1x8x256xf32, #tpu.memory_space<vmem>>, vector<1x8x256xf32>
    %182 = vector.shape_cast %181 : vector<1x8x256xf32> to vector<8x256xf32>
    %183 = vector.shape_cast %180 : vector<8x256xf32> to vector<1x8x256xf32>
    tpu.vector_store %arg6[%c0_44, %c0_45, %c0_46], %183 {strides = array<i32>} : memref<1x8x256xf32, #tpu.memory_space<vmem>>, vector<1x8x256xf32>,
    return
  }
  func.func @transform_0(%arg0: i32, %arg1: i32) -> (i32, i32, i32) {
    %c0_i32 = arith.constant 0 : i32
    %c0_i32_0 = arith.constant 0 : i32
    return %arg0, %arg1, %c0_i32 : i32, i32, i32
  }
  func.func @transform_1(%arg0: i32, %arg1: i32) -> (i32, i32, i32) {
    %c0_i32 = arith.constant 0 : i32
    %c1_i32 = arith.constant 1 : i32
    %c0_i32_0 = arith.constant 0 : i32
    return %arg0, %c0_i32, %c1_i32 : i32, i32, i32
  }
  func.func @transform_2(%arg0: i32, %arg1: i32) -> (i32, i32, i32) {
    %c0_i32 = arith.constant 0 : i32
    %c2_i32 = arith.constant 2 : i32
    %c0_i32_0 = arith.constant 0 : i32
    return %arg0, %c0_i32, %c2_i32 : i32, i32, i32
  }
  func.func @transform_3(%arg0: i32, %arg1: i32) -> (i32, i32, i32) {
    %c0_i32 = arith.constant 0 : i32
    %c0_i32_0 = arith.constant 0 : i32
    %c0_i32_1 = arith.constant 0 : i32
    return %arg0, %c0_i32, %c0_i32_0 : i32, i32, i32
  }
  func.func @transform_4(%arg0: i32, %arg1: i32) -> (i32, i32, i32) {
    %c0_i32 = arith.constant 0 : i32
    %c0_i32_0 = arith.constant 0 : i32
    return %arg0, %arg1, %c0_i32 : i32, i32, i32
  }
}

module attributes {stable_mosaic.version = 11 : i64} {
  func.func @_linear_kernel(%arg0: i32, %arg1: memref<16x256xf32, #tpu.memory_space<vmem>>, %arg2: memref<256x1024xf32, #tpu.memory_space<vmem>>, %arg3: memref<1x1024xf32, #tpu.memory_space<vmem>>, %arg4: memref<16x1024xf32, #tpu.memory_space<vmem>>) attributes {dimension_semantics = [#tpu.dimension_semantics<parallel>], iteration_bounds = array<i64: 1>, scalar_prefetch = 0 : i64, scratch_operands = 0 : i64, tpu.core_type = #tpu.core_type<tc>, window_params = [{transform_indices = @transform_0, window_bounds = array<i64: 16, 256>}, {pipeline_mode = #tpu.pipeline_mode<synchronous>, transform_indices = @transform_1, window_bounds = array<i64: 256, 1024>}, {pipeline_mode = #tpu.pipeline_mode<synchronous>, transform_indices = @transform_2, window_bounds = array<i64: 1, 1024>}, {transform_indices = @transform_3, window_bounds = array<i64: 16, 1024>}]} {
    %c0 = arith.constant 0 : index
    %c0_0 = arith.constant 0 : index
    %0 = vector.load %arg1[%c0, %c0_0] : memref<16x256xf32, #tpu.memory_space<vmem>>, vector<16x256xf32>
    %c0_1 = arith.constant 0 : index
    %c0_2 = arith.constant 0 : index
    %1 = vector.load %arg2[%c0_1, %c0_2] : memref<256x1024xf32, #tpu.memory_space<vmem>>, vector<256x1024xf32>
    %2 = arith.truncf %0 : vector<16x256xf32> to vector<16x256xbf16>
    %3 = arith.truncf %1 : vector<256x1024xf32> to vector<256x1024xbf16>
    %cst = arith.constant dense<0.000000e+00> : vector<16x1024xf32>
    %4 = tpu.matmul %2, %3, %cst {dimension_numbers = #tpu.dot_dimension_numbers<[1], [0], [0], [1], [0, 0, 1, 1], [], []>} : vector<16x256xbf16>, vector<256x1024xbf16>, vector<16x1024xf32> -> vector<16x1024xf32>
    %c0_3 = arith.constant 0 : index
    %c0_4 = arith.constant 0 : index
    %5 = vector.load %arg3[%c0_3, %c0_4] : memref<1x1024xf32, #tpu.memory_space<vmem>>, vector<1x1024xf32>
    %6 = vector.broadcast %5 : vector<1x1024xf32> to vector<16x1024xf32>
    %7 = arith.addf %4, %6 : vector<16x1024xf32>
    %c0_5 = arith.constant 0 : index
    %c0_6 = arith.constant 0 : index
    %8 = vector.load %arg4[%c0_5, %c0_6] : memref<16x1024xf32, #tpu.memory_space<vmem>>, vector<16x1024xf32>
    tpu.vector_store %arg4[%c0_5, %c0_6], %7 {strides = array<i32>} : memref<16x1024xf32, #tpu.memory_space<vmem>>, vector<16x1024xf32>,
    return
  }
  func.func @transform_0(%arg0: i32) -> (i32, i32) {
    %c0_i32 = arith.constant 0 : i32
    %c0_i32_0 = arith.constant 0 : i32
    return %arg0, %c0_i32 : i32, i32
  }
  func.func @transform_1(%arg0: i32) -> (i32, i32) {
    %c0_i32 = arith.constant 0 : i32
    %c0_i32_0 = arith.constant 0 : i32
    %c0_i32_1 = arith.constant 0 : i32
    return %c0_i32, %c0_i32_0 : i32, i32
  }
  func.func @transform_2(%arg0: i32) -> (i32, i32) {
    %c0_i32 = arith.constant 0 : i32
    %c0_i32_0 = arith.constant 0 : i32
    %c0_i32_1 = arith.constant 0 : i32
    return %c0_i32, %c0_i32_0 : i32, i32
  }
  func.func @transform_3(%arg0: i32) -> (i32, i32) {
    %c0_i32 = arith.constant 0 : i32
    %c0_i32_0 = arith.constant 0 : i32
    return %arg0, %c0_i32 : i32, i32
  }
}

module attributes {stable_mosaic.version = 11 : i64} {
  func.func @_ff_kernel(%arg0: i32, %arg1: memref<16x256xf32, #tpu.memory_space<vmem>>, %arg2: memref<256x256xf32, #tpu.memory_space<vmem>>, %arg3: memref<1x256xf32, #tpu.memory_space<vmem>>, %arg4: memref<256x256xf32, #tpu.memory_space<vmem>>, %arg5: memref<1x256xf32, #tpu.memory_space<vmem>>, %arg6: memref<16x256xf32, #tpu.memory_space<vmem>>) attributes {dimension_semantics = [#tpu.dimension_semantics<parallel>], iteration_bounds = array<i64: 1>, scalar_prefetch = 0 : i64, scratch_operands = 0 : i64, tpu.core_type = #tpu.core_type<tc>, window_params = [{transform_indices = @transform_0, window_bounds = array<i64: 16, 256>}, {pipeline_mode = #tpu.pipeline_mode<synchronous>, transform_indices = @transform_1, window_bounds = array<i64: 256, 256>}, {pipeline_mode = #tpu.pipeline_mode<synchronous>, transform_indices = @transform_2, window_bounds = array<i64: 1, 256>}, {pipeline_mode = #tpu.pipeline_mode<synchronous>, transform_indices = @transform_3, window_bounds = array<i64: 256, 256>}, {pipeline_mode = #tpu.pipeline_mode<synchronous>, transform_indices = @transform_4, window_bounds = array<i64: 1, 256>}, {transform_indices = @transform_5, window_bounds = array<i64: 16, 256>}]} {
    %c0 = arith.constant 0 : index
    %c0_0 = arith.constant 0 : index
    %0 = vector.load %arg1[%c0, %c0_0] : memref<16x256xf32, #tpu.memory_space<vmem>>, vector<16x256xf32>
    %c0_1 = arith.constant 0 : index
    %c0_2 = arith.constant 0 : index
    %1 = vector.load %arg2[%c0_1, %c0_2] : memref<256x256xf32, #tpu.memory_space<vmem>>, vector<256x256xf32>
    %2 = arith.truncf %0 : vector<16x256xf32> to vector<16x256xbf16>
    %3 = arith.truncf %1 : vector<256x256xf32> to vector<256x256xbf16>
    %cst = arith.constant dense<0.000000e+00> : vector<16x256xf32>
    %4 = tpu.matmul %2, %3, %cst {dimension_numbers = #tpu.dot_dimension_numbers<[1], [0], [0], [1], [0, 0, 1, 1], [], []>} : vector<16x256xbf16>, vector<256x256xbf16>, vector<16x256xf32> -> vector<16x256xf32>
    %c0_3 = arith.constant 0 : index
    %c0_4 = arith.constant 0 : index
    %5 = vector.load %arg3[%c0_3, %c0_4] : memref<1x256xf32, #tpu.memory_space<vmem>>, vector<1x256xf32>
    %6 = vector.broadcast %5 : vector<1x256xf32> to vector<16x256xf32>
    %7 = arith.addf %4, %6 : vector<16x256xf32>
    %cst_5 = arith.constant 0.000000e+00 : f32
    %8 = vector.broadcast %cst_5 : f32 to vector<16x256xf32>
    %9 = arith.maximumf %7, %8 : vector<16x256xf32>
    %c0_6 = arith.constant 0 : index
    %c0_7 = arith.constant 0 : index
    %10 = vector.load %arg4[%c0_6, %c0_7] : memref<256x256xf32, #tpu.memory_space<vmem>>, vector<256x256xf32>
    %11 = arith.truncf %9 : vector<16x256xf32> to vector<16x256xbf16>
    %12 = arith.truncf %10 : vector<256x256xf32> to vector<256x256xbf16>
    %cst_8 = arith.constant dense<0.000000e+00> : vector<16x256xf32>
    %13 = tpu.matmul %11, %12, %cst_8 {dimension_numbers = #tpu.dot_dimension_numbers<[1], [0], [0], [1], [0, 0, 1, 1], [], []>} : vector<16x256xbf16>, vector<256x256xbf16>, vector<16x256xf32> -> vector<16x256xf32>
    %14 = arith.addf %0, %13 : vector<16x256xf32>
    %c0_9 = arith.constant 0 : index
    %c0_10 = arith.constant 0 : index
    %15 = vector.load %arg5[%c0_9, %c0_10] : memref<1x256xf32, #tpu.memory_space<vmem>>, vector<1x256xf32>
    %16 = vector.broadcast %15 : vector<1x256xf32> to vector<16x256xf32>
    %17 = arith.addf %14, %16 : vector<16x256xf32>
    %c0_11 = arith.constant 0 : index
    %c0_12 = arith.constant 0 : index
    %18 = vector.load %arg6[%c0_11, %c0_12] : memref<16x256xf32, #tpu.memory_space<vmem>>, vector<16x256xf32>
    tpu.vector_store %arg6[%c0_11, %c0_12], %17 {strides = array<i32>} : memref<16x256xf32, #tpu.memory_space<vmem>>, vector<16x256xf32>,
    return
  }
  func.func @transform_0(%arg0: i32) -> (i32, i32) {
    %c0_i32 = arith.constant 0 : i32
    %c0_i32_0 = arith.constant 0 : i32
    return %arg0, %c0_i32 : i32, i32
  }
  func.func @transform_1(%arg0: i32) -> (i32, i32) {
    %c0_i32 = arith.constant 0 : i32
    %c0_i32_0 = arith.constant 0 : i32
    %c0_i32_1 = arith.constant 0 : i32
    return %c0_i32, %c0_i32_0 : i32, i32
  }
  func.func @transform_2(%arg0: i32) -> (i32, i32) {
    %c0_i32 = arith.constant 0 : i32
    %c0_i32_0 = arith.constant 0 : i32
    %c0_i32_1 = arith.constant 0 : i32
    return %c0_i32, %c0_i32_0 : i32, i32
  }
  func.func @transform_3(%arg0: i32) -> (i32, i32) {
    %c0_i32 = arith.constant 0 : i32
    %c0_i32_0 = arith.constant 0 : i32
    %c0_i32_1 = arith.constant 0 : i32
    return %c0_i32, %c0_i32_0 : i32, i32
  }
  func.func @transform_4(%arg0: i32) -> (i32, i32) {
    %c0_i32 = arith.constant 0 : i32
    %c0_i32_0 = arith.constant 0 : i32
    %c0_i32_1 = arith.constant 0 : i32
    return %c0_i32, %c0_i32_0 : i32, i32
  }
  func.func @transform_5(%arg0: i32) -> (i32, i32) {
    %c0_i32 = arith.constant 0 : i32
    %c0_i32_0 = arith.constant 0 : i32
    return %arg0, %c0_i32 : i32, i32
  }
}

</mosaic_0001>

<llo_original>
// kernel: node_update_forward.9
$region0: #{node_update_forward.9}
  #allocation0 [shape = 'u32[]', space=smem, size = 0x4, offset = 0x4, fixed_abs, tag = 'smem constant byte address 0x4 - core index']
  #allocation1 [shape = 'u32[144,128]{1,0:T(1,128)}', space=vmem, size = 0x12000, scoped, tag = 'internal scratch']
  %s0 = inlined_call_operand.hbm [shape: f32[2,8,8,128], index: 0, kind: input, shape index: {}]
  %s1 = inlined_call_operand.vmem [shape: f32[1,128], index: 1, kind: input, shape index: {}]
  %s2 = inlined_call_operand.vmem [shape: f32[1,128], index: 2, kind: input, shape index: {}]
  %s3 = inlined_call_operand.vmem [shape: f32[8,128], index: 3, kind: input, shape index: {}]
  %s4 = inlined_call_operand.vmem [shape: bf16[2,8,64], index: 4, kind: output, shape index: {}]
  %s5 = sld [smem:[#allocation0]]
  $region53: #{node_update_forward.9} parent=0
    _
  %s7 = ssub.s32 1, %s5
  %s8 = scalar_select 0, %s7, %s5
  $region1: #{node_update_forward.9} parent=0
    #allocation2 [shape = 'u8[65536]{0}', space=vmem, size = 0x10000, scoped, tag = 'input window, operand 0']
    #allocation3 [shape = 's32[2]{0}', space=sflag, size = 0x8, scoped, tag = 'scoped memory for node_update_forward.9']
    %9 = vsyncpa [#allocation3], 0
    %s10 = scalar_lea.sflag [#allocation3], 1
    %11 = vsyncpa %s10, 0
    loop: start=0, step=1, limit=4
    $region2: #{node_update_forward.9} parent=1 // loop_pre_header
      _
    $region3: #{node_update_forward.9} parent=1 // loop_header
      %s13 = sphi 0, %s17
      %p14 = scmp.ge.s32.totalorder %s13, 4
      %s20 = sphi 0, %s32
      %s21 = sphi 0, %s28
      %s22 = sphi 0, %s20
      %s23 = sphi 0, %s21
      %s24 = sphi 0, %s22
      %s25 = sphi 0, %s23
      %s37 = sphi 0, %s39
      %s40 = sphi 0, %s37
      %s41 = sphi 0, %s40
      %s57 = sphi 0, %s41
      %s61 = sphi 0, %s61
      %s63 = sphi 0, %s61
      %s64 = sphi 0, %s63
      %s78 = sphi 0, %s64
      %s82 = sphi 0, %s82
      %s84 = sphi 0, %s82
      %s85 = sphi 0, %s84
      %s99 = sphi 0, %s85
      %s103 = sphi 0, %s103
      %s105 = sphi 0, %s103
      %s106 = sphi 0, %s105
      %s120 = sphi 0, %s106
      %s128 = sphi 0, %s130
      %s131 = sphi 0, %s128
      %s132 = sphi 0, %s131
      %s148 = sphi 0, %s132
    $region4: #{node_update_forward.9} parent=1 // loop_header_branch
      %16 = sbr.rel (%p14) target = $region8
    $region5: #{node_update_forward.9} parent=1 // loop_body
      %s18 = ssub.s32 %s13, 1
      %s19 = ssub.s32 %s13, 2
      %s26 = sadd.s32 1, %s21
      %p27 = scmp.ge.s32.totalorder %s26, 1
      %s28 = scalar_select %p27, 0, %s26
      %s29 = sadd.s32 1, %s20
      %s30 = scalar_select %p27, %s29, %s20
      %p31 = scmp.ge.s32.totalorder %s30, 2
      %s32 = scalar_select %p31, 0, %s30
      %s33 = ssub.s32 %s20, %s32
      %s34 = ssub.s32 %s21, %s28
      %s35 = sor.u32 %s33, %s34
      %p36 = scmp.eq.s32.totalorder %s35, 0
      %s38 = sadd.s32 %s37, 1
      %s39 = scalar_select %p36, %s37, %s38
      %p42 = pneg %p36
      %p43 = scmp.eq.s32.totalorder %s13, 1
      %p44 = por %p42, %p43
      %p45 = scmp.ne.s32.totalorder %s37, %s40
      %p46 = scmp.eq.s32.totalorder %s13, 0
      %p47 = por %p45, %p46
      %p48 = scmp.ne.s32.totalorder %s37, %s40
      %p49 = scmp.eq.s32.totalorder %s18, 1
      %p50 = por %p48, %p49
      %p51 = scmp.ne.s32.totalorder %s40, %s41
      %p52 = scmp.eq.s32.totalorder %s18, 0
      %p53 = por %p51, %p52
      %p54 = scmp.ne.s32.totalorder %s40, %s41
      %p55 = scmp.eq.s32.totalorder %s19, 1
      %p56 = por %p54, %p55
      %p58 = scmp.ne.s32.totalorder %s41, %s57
      %p59 = scmp.eq.s32.totalorder %s19, 0
      %p60 = por %p58, %p59
      %s62 = sadd.s32 %s61, 1
      %p65 = scmp.eq.s32.totalorder %s13, 1
      %p66 = scmp.ne.s32.totalorder %s61, %s63
      %p67 = scmp.eq.s32.totalorder %s13, 0
      %p68 = por %p66, %p67
      %p69 = scmp.ne.s32.totalorder %s61, %s63
      %p70 = scmp.eq.s32.totalorder %s18, 1
      %p71 = por %p69, %p70
      %p72 = scmp.ne.s32.totalorder %s63, %s64
      %p73 = scmp.eq.s32.totalorder %s18, 0
      %p74 = por %p72, %p73
      %p75 = scmp.ne.s32.totalorder %s63, %s64
      %p76 = scmp.eq.s32.totalorder %s19, 1
      %p77 = por %p75, %p76
      %p79 = scmp.ne.s32.totalorder %s64, %s78
      %p80 = scmp.eq.s32.totalorder %s19, 0
      %p81 = por %p79, %p80
      %s83 = sadd.s32 %s82, 1
      %p86 = scmp.eq.s32.totalorder %s13, 1
      %p87 = scmp.ne.s32.totalorder %s82, %s84
      %p88 = scmp.eq.s32.totalorder %s13, 0
      %p89 = por %p87, %p88
      %p90 = scmp.ne.s32.totalorder %s82, %s84
      %p91 = scmp.eq.s32.totalorder %s18, 1
      %p92 = por %p90, %p91
      %p93 = scmp.ne.s32.totalorder %s84, %s85
      %p94 = scmp.eq.s32.totalorder %s18, 0
      %p95 = por %p93, %p94
      %p96 = scmp.ne.s32.totalorder %s84, %s85
      %p97 = scmp.eq.s32.totalorder %s19, 1
      %p98 = por %p96, %p97
      %p100 = scmp.ne.s32.totalorder %s85, %s99
      %p101 = scmp.eq.s32.totalorder %s19, 0
      %p102 = por %p100, %p101
      %s104 = sadd.s32 %s103, 1
      %p107 = scmp.eq.s32.totalorder %s13, 1
      %p108 = scmp.ne.s32.totalorder %s103, %s105
      %p109 = scmp.eq.s32.totalorder %s13, 0
      %p110 = por %p108, %p109
      %p111 = scmp.ne.s32.totalorder %s103, %s105
      %p112 = scmp.eq.s32.totalorder %s18, 1
      %p113 = por %p111, %p112
      %p114 = scmp.ne.s32.totalorder %s105, %s106
      %p115 = scmp.eq.s32.totalorder %s18, 0
      %p116 = por %p114, %p115
      %p117 = scmp.ne.s32.totalorder %s105, %s106
      %p118 = scmp.eq.s32.totalorder %s19, 1
      %p119 = por %p117, %p118
      %p121 = scmp.ne.s32.totalorder %s106, %s120
      %p122 = scmp.eq.s32.totalorder %s19, 0
      %p123 = por %p121, %p122
      %s124 = ssub.s32 %s20, %s32
      %s125 = ssub.s32 %s21, %s28
      %s126 = sor.u32 %s124, %s125
      %p127 = scmp.eq.s32.totalorder %s126, 0
      %s129 = sadd.s32 %s128, 1
      %s130 = scalar_select %p127, %s128, %s129
      %p133 = pneg %p127
      %p134 = scmp.eq.s32.totalorder %s13, 1
      %p135 = por %p133, %p134
      %p136 = scmp.ne.s32.totalorder %s128, %s131
      %p137 = scmp.eq.s32.totalorder %s13, 0
      %p138 = por %p136, %p137
      %p139 = scmp.ne.s32.totalorder %s128, %s131
      %p140 = scmp.eq.s32.totalorder %s18, 1
      %p141 = por %p139, %p140
      %p142 = scmp.ne.s32.totalorder %s131, %s132
      %p143 = scmp.eq.s32.totalorder %s18, 0
      %p144 = por %p142, %p143
      %p145 = scmp.ne.s32.totalorder %s131, %s132
      %p146 = scmp.eq.s32.totalorder %s19, 1
      %p147 = por %p145, %p146
      %p149 = scmp.ne.s32.totalorder %s132, %s148
      %p150 = scmp.eq.s32.totalorder %s19, 0
      %p151 = por %p149, %p150
      %p152 = scmp.le.s32.totalorder 1, %s13
      %p153 = scmp.lt.s32.totalorder %s13, 3
      %p154 = pnand %p152, %p153
      %p155 = pneg %p154
      // Predicated region
      $region9: #{node_update_forward.9} parent=5 // pred_check
        _
      $region10: #{node_update_forward.9} parent=5 // pred_check_branch
        %157 = sbr.rel (%p154) target = $region12
      $region11: #{node_update_forward.9} parent=5 // pred_region
        %s158 = ssub.s32 %s13, 1
        // Predicated region
        $region13: #{node_update_forward.9} parent=11 // pred_check
          %p159 = pneg %p74
        $region14: #{node_update_forward.9} parent=11 // pred_check_branch
          %161 = sbr.rel (%p159) target = $region16
        $region15: #{node_update_forward.9} parent=11 // pred_region
          _
        $region16: #{node_update_forward.9} parent=11 // pred_fallthru
          _
        // Predicated region
        $region17: #{node_update_forward.9} parent=11 // pred_check
          %p162 = pneg %p95
        $region18: #{node_update_forward.9} parent=11 // pred_check_branch
          %164 = sbr.rel (%p162) target = $region20
        $region19: #{node_update_forward.9} parent=11 // pred_region
          _
        $region20: #{node_update_forward.9} parent=11 // pred_fallthru
          _
        // Predicated region
        $region21: #{node_update_forward.9} parent=11 // pred_check
          %p165 = pneg %p116
        $region22: #{node_update_forward.9} parent=11 // pred_check_branch
          %167 = sbr.rel (%p165) target = $region24
        $region23: #{node_update_forward.9} parent=11 // pred_region
          _
        $region24: #{node_update_forward.9} parent=11 // pred_fallthru
          _
      $region12: #{node_update_forward.9} parent=5 // pred_fallthru
        _
      %p168 = scmp.lt.s32.totalorder %s13, 2
      // Predicated region
      $region25: #{node_update_forward.9} parent=5 // pred_check
        %p169 = pneg %p168
      $region26: #{node_update_forward.9} parent=5 // pred_check_branch
        %171 = sbr.rel (%p169) target = $region28
      $region27: #{node_update_forward.9} parent=5 // pred_region
        // Predicated region
        $region29: #{node_update_forward.9} parent=27 // pred_check
          %p172 = pneg %p47
        $region30: #{node_update_forward.9} parent=27 // pred_check_branch
          %174 = sbr.rel (%p172) target = $region32
        $region31: #{node_update_forward.9} parent=27 // pred_region
          %s175 = sand.u32 %s37, 1
          %s176 = scalar_lea.sflag [#allocation3], %s175
          %s177 = sand.u32 %s37, 1
          %s178 = smul.addr %s177, 64
          %s179 = scalar_lea.vmem [#allocation2], %s178
          %s180 = smul.u32 8, %s21
          %s182 = ssub.s32 1024, 1024
          %183 = vsyncadd %s176, %s182
          %s184 = smul.addr %s20, 8
          %s185 = sadd.s32 %s180, %s184
          %s186 = smul.addr %s185, 128
          %s187 = scalar_lea.hbm %s0, %s186
          %s188 = sshll.u32 %s179, 4
          %s189 = int_to_ptr.vmem [resolvable:$true] %s188
          %194 = dma.hbm_to_vmem [thread:$0]  %s187, 1024, %s189, %s176, 128, 128, 8
        $region32: #{node_update_forward.9} parent=27 // pred_fallthru
          _
      $region28: #{node_update_forward.9} parent=5 // pred_fallthru
        _
      %p195 = scmp.le.s32.totalorder 1, %s13
      %p196 = scmp.lt.s32.totalorder %s13, 3
      %p197 = pnand %p195, %p196
      %p198 = pneg %p197
      // Predicated region
      $region33: #{node_update_forward.9} parent=5 // pred_check
        _
      $region34: #{node_update_forward.9} parent=5 // pred_check_branch
        %200 = sbr.rel (%p197) target = $region36
      $region35: #{node_update_forward.9} parent=5 // pred_region
        %s201 = ssub.s32 %s13, 1
        %s202 = sand.u32 %s40, 1
        %s203 = scalar_lea.sflag [#allocation3], %s202
        %s204 = sand.u32 %s40, 1
        %s205 = smul.addr %s204, 64
        %s206 = scalar_lea.vmem [#allocation2], %s205
        // Predicated region
        $region37: #{node_update_forward.9} parent=35 // pred_check
          %p207 = pneg %p53
        $region38: #{node_update_forward.9} parent=35 // pred_check_branch
          %209 = sbr.rel (%p207) target = $region40
        $region39: #{node_update_forward.9} parent=35 // pred_region
          %210 = dma.done %s203, 1024
        $region40: #{node_update_forward.9} parent=35 // pred_fallthru
          _
        %s211 = sand.u32 %s40, 1
        %s212 = scalar_lea.sflag [#allocation3], %s211
        %s213 = sand.u32 %s40, 1
        %s214 = smul.addr %s213, 64
        %s215 = scalar_lea.vmem [#allocation2], %s214
        %p216 = pneg %p53
        %p217 = pneg %p50
        %p218 = pneg %p74
        %p219 = pneg %p71
        %p220 = pneg %p95
        %p221 = pneg %p92
        %p222 = pneg %p116
        %p223 = pneg %p113
        %p224 = pneg %p144
        %p225 = pneg %p141
        %p226 = scmp.lt.s32.totalorder %s22, 1
        %s227 = scalar_select %p226, %s22, 1
        %p228 = scmp.lt.s32.totalorder %s23, 0
        %s229 = scalar_select %p228, %s23, 0
        %s230 = sadd.s32 %s229, %s227
        %s231 = smul.addr %s230, 4
        %s232 = scalar_lea.vmem %s4, %s231
        %s233 = smul.u32 8, %s23
        %p234 = scmp.lt.s32.totalorder %s22, 1
        %s235 = scalar_select %p234, %s22, 1
        %p236 = scmp.lt.s32.totalorder %s23, 0
        %s237 = scalar_select %p236, %s23, 0
        %s238 = sadd.s32 %s237, %s235
        %s239 = smul.addr %s238, 4
        %s240 = scalar_lea.vmem %s4, %s239
        %v242 = vld [vmem:[%s206] sm:$0xff]
        %v243 = vld [vmem:[%s206 + $0x8] sm:$0xff]
        %v244 = vld [vmem:[%s206 + $0x10] sm:$0xff]
        %v245 = vld [vmem:[%s206 + $0x18] sm:$0xff]
        %v246 = vld [vmem:[%s206 + $0x20] sm:$0xff]
        %v247 = vld [vmem:[%s206 + $0x28] sm:$0xff]
        %v248 = vld [vmem:[%s206 + $0x30] sm:$0xff]
        %v249 = vld [vmem:[%s206 + $0x38] sm:$0xff]
        %v250 = vld [vmem:[%s1] sm:$0x1]
        %v251 = vld [vmem:[%s2] sm:$0x1]
        %252 = vadd.xlane.f32.xlu0 %v242
        %v253 = vpop.xlane.xlu0 %252
        %254 = vadd.xlane.f32.xlu0 %v243
        %v255 = vpop.xlane.xlu0 %254
        %256 = vadd.xlane.f32.xlu0 %v244
        %v257 = vpop.xlane.xlu0 %256
        %258 = vadd.xlane.f32.xlu0 %v245
        %v259 = vpop.xlane.xlu0 %258
        %260 = vadd.xlane.f32.xlu0 %v246
        %v261 = vpop.xlane.xlu0 %260
        %262 = vadd.xlane.f32.xlu0 %v247
        %v263 = vpop.xlane.xlu0 %262
        %264 = vadd.xlane.f32.xlu0 %v248
        %v265 = vpop.xlane.xlu0 %264
        %266 = vadd.xlane.f32.xlu0 %v249
        %v267 = vpop.xlane.xlu0 %266
        %v268 = vrcp.pop 128.0
        %v269 = vmul.f32 %v253, %v268
        %v270 = vmul.f32 %v255, %v268
        %v271 = vmul.f32 %v257, %v268
        %v272 = vmul.f32 %v259, %v268
        %v273 = vmul.f32 %v261, %v268
        %v274 = vmul.f32 %v263, %v268
        %v275 = vmul.f32 %v265, %v268
        %v276 = vmul.f32 %v267, %v268
        %v277 = vsub.f32 %v242, %v269
        %v278 = vsub.f32 %v243, %v270
        %v279 = vsub.f32 %v244, %v271
        %v280 = vsub.f32 %v245, %v272
        %v281 = vsub.f32 %v246, %v273
        %v282 = vsub.f32 %v247, %v274
        %v283 = vsub.f32 %v248, %v275
        %v284 = vsub.f32 %v249, %v276
        %v285 = vmul.f32 %v277, %v277
        %v286 = vmul.f32 %v278, %v278
        %v287 = vmul.f32 %v279, %v279
        %v288 = vmul.f32 %v280, %v280
        %v289 = vmul.f32 %v281, %v281
        %v290 = vmul.f32 %v282, %v282
        %v291 = vmul.f32 %v283, %v283
        %v292 = vmul.f32 %v284, %v284
        %293 = vadd.xlane.f32.xlu0 %v285
        %v294 = vpop.xlane.xlu0 %293
        %295 = vadd.xlane.f32.xlu0 %v286
        %v296 = vpop.xlane.xlu0 %295
        %297 = vadd.xlane.f32.xlu0 %v287
        %v298 = vpop.xlane.xlu0 %297
        %299 = vadd.xlane.f32.xlu0 %v288
        %v300 = vpop.xlane.xlu0 %299
        %301 = vadd.xlane.f32.xlu0 %v289
        %v302 = vpop.xlane.xlu0 %301
        %303 = vadd.xlane.f32.xlu0 %v290
        %v304 = vpop.xlane.xlu0 %303
        %305 = vadd.xlane.f32.xlu0 %v291
        %v306 = vpop.xlane.xlu0 %305
        %307 = vadd.xlane.f32.xlu0 %v292
        %v308 = vpop.xlane.xlu0 %307
        %v309 = vmul.f32 %v294, %v268
        %v310 = vmul.f32 %v296, %v268
        %v311 = vmul.f32 %v298, %v268
        %v312 = vmul.f32 %v300, %v268
        %v313 = vmul.f32 %v302, %v268
        %v314 = vmul.f32 %v304, %v268
        %v315 = vmul.f32 %v306, %v268
        %v316 = vmul.f32 %v308, %v268
        %v317 = vadd.f32 %v309, 1e-05
        %v318 = vadd.f32 %v310, 1e-05
        %v319 = vadd.f32 %v311, 1e-05
        %v320 = vadd.f32 %v312, 1e-05
        %v321 = vadd.f32 %v313, 1e-05
        %v322 = vadd.f32 %v314, 1e-05
        %v323 = vadd.f32 %v315, 1e-05
        %v324 = vadd.f32 %v316, 1e-05
        %v325 = vrsqrt.pop %v317
        %v326 = vrsqrt.pop %v318
        %v327 = vrsqrt.pop %v319
        %v328 = vrsqrt.pop %v320
        %v329 = vrsqrt.pop %v321
        %v330 = vrsqrt.pop %v322
        %v331 = vrsqrt.pop %v323
        %v332 = vrsqrt.pop %v324
        %v333 = vmul.f32 %v277, %v325
        %v334 = vmul.f32 %v278, %v326
        %v335 = vmul.f32 %v279, %v327
        %v336 = vmul.f32 %v280, %v328
        %v337 = vmul.f32 %v281, %v329
        %v338 = vmul.f32 %v282, %v330
        %v339 = vmul.f32 %v283, %v331
        %v340 = vmul.f32 %v284, %v332
        %v342 = vlaneseq
        %v343 = vshrl.u32 %v342, 7
        %v344 = vsub.s32 0, %v343
        %v345 = vrot.slane %v250, %v344
        %v347 = vmul.f32 %v333, %v345
        %v348 = vmul.f32 %v334, %v345
        %v349 = vmul.f32 %v335, %v345
        %v350 = vmul.f32 %v336, %v345
        %v351 = vmul.f32 %v337, %v345
        %v352 = vmul.f32 %v338, %v345
        %v353 = vmul.f32 %v339, %v345
        %v354 = vmul.f32 %v340, %v345
        %v356 = vlaneseq
        %v357 = vshrl.u32 %v356, 7
        %v358 = vsub.s32 0, %v357
        %v359 = vrot.slane %v251, %v358
        %v361 = vadd.f32 %v347, %v359
        %v362 = vadd.f32 %v348, %v359
        %v363 = vadd.f32 %v349, %v359
        %v364 = vadd.f32 %v350, %v359
        %v365 = vadd.f32 %v351, %v359
        %v366 = vadd.f32 %v352, %v359
        %v367 = vadd.f32 %v353, %v359
        %v368 = vadd.f32 %v354, %v359
        %v369 = vld [vmem:[%s3] sm:$0xff]
        %v370 = vpack.c.bf16 %v369, %v369
        %v371 = vpack.c.bf16 %v362, %v361
        %v372 = vpack.c.bf16 %v364, %v363
        %v373 = vpack.c.bf16 %v366, %v365
        %v374 = vpack.c.bf16 %v368, %v367
        %375 = vmatprep.subr.bf16.mxu0 0
        %376 = vmatpush1.bf16.xpose.msra.mxu0 0
        %377 = vmatprep.subr.bf16.mxu0 0
        %378 = vmatpush1.bf16.xpose.msra.mxu0 0
        %379 = vmatprep.subr.bf16.mxu0 0
        %380 = vmatpush1.bf16.xpose.msra.mxu0 0
        %381 = vmatprep.subr.bf16.mxu0 0
        %382 = vmatpush1.bf16.xpose.msra.mxu0 0
        %383 = vmatprep.subr.bf16.mxu0 0
        %384 = vmatpush1.bf16.xpose.msra.mxu0 %v374
        %385 = vmatprep.subr.bf16.mxu0 0
        %386 = vmatpush1.bf16.xpose.msra.mxu0 %v373
        %387 = vmatprep.subr.bf16.mxu0 0
        %388 = vmatpush1.bf16.xpose.msra.mxu0 %v372
        %389 = vmatprep.subr.bf16.mxu0 0
        %390 = vmatpush1.bf16.xpose.msra.mxu0 %v371
        %391 = vmatprep.subr.bf16.mxu0 0
        %392 = vmatpush2.bf16.xpose.msra.mxu0 0
        %393 = vmatprep.subr.bf16.mxu0 0
        %394 = vmatpush2.bf16.xpose.msra.mxu0 0
        %395 = vmatprep.subr.bf16.mxu0 0
        %396 = vmatpush2.bf16.xpose.msra.mxu0 0
        %397 = vmatprep.subr.bf16.mxu0 0
        %398 = vmatpush2.bf16.xpose.msra.mxu0 0
        %399 = vmatprep.subr.bf16.mxu0 0
        %400 = vmatpush2.bf16.xpose.msra.mxu0 0
        %401 = vmatprep.subr.bf16.mxu0 0
        %402 = vmatpush2.bf16.xpose.msra.mxu0 0
        %403 = vmatprep.subr.bf16.mxu0 0
        %404 = vmatpush2.bf16.xpose.msra.mxu0 0
        %405 = vmatprep.subr.bf16.mxu0 0
        %406 = vmatpush2.bf16.xpose.msra.mxu0 0
        %407 = vmatprep.mubr.bf16.mxu0 0
        %408 = vmatmul.mubr.bf16.gmra.mxu0 %v370
        %v409 = vpop.f32.mrf.mxu0
        %v410 = vadd.f32 0.0, %v409
        %v411 = vpop.f32.mrf.mxu0
        %v412 = vpop.f32.mrf.mxu0
        %v413 = vpop.f32.mrf.mxu0
        %414 = vdwg.mxu0
        %v415 = vpack.c.bf16 %v410, %v410
        %vm416 = vcmask 519168
        %417 = vst.msk [vmem:[%s240] sm:$0xf] %vm416, %v415
        %p418 = scmp.lt.s32.totalorder %s22, 1
        %s419 = scalar_select %p418, %s22, 1
        %p420 = scmp.lt.s32.totalorder %s23, 0
        %s421 = scalar_select %p420, %s23, 0
        %s422 = sadd.s32 %s421, %s419
        %s423 = smul.addr %s422, 4
        %s424 = scalar_lea.vmem %s4, %s423
        // Predicated region
        $region41: #{node_update_forward.9} parent=35 // pred_check
          %p425 = pneg %p141
        $region42: #{node_update_forward.9} parent=35 // pred_check_branch
          %427 = sbr.rel (%p425) target = $region44
        $region43: #{node_update_forward.9} parent=35 // pred_region
          _
        $region44: #{node_update_forward.9} parent=35 // pred_fallthru
          _
      $region36: #{node_update_forward.9} parent=5 // pred_fallthru
        _
      %p428 = scmp.le.s32.totalorder 2, %s13
      // Predicated region
      $region45: #{node_update_forward.9} parent=5 // pred_check
        %p429 = pneg %p428
      $region46: #{node_update_forward.9} parent=5 // pred_check_branch
        %431 = sbr.rel (%p429) target = $region48
      $region47: #{node_update_forward.9} parent=5 // pred_region
        %s432 = ssub.s32 %s13, 2
        // Predicated region
        $region49: #{node_update_forward.9} parent=47 // pred_check
          %p433 = pneg %p147
        $region50: #{node_update_forward.9} parent=47 // pred_check_branch
          %435 = sbr.rel (%p433) target = $region52
        $region51: #{node_update_forward.9} parent=47 // pred_region
          %p436 = scmp.lt.s32.totalorder %s24, 1
          %s437 = scalar_select %p436, %s24, 1
          %p438 = scmp.lt.s32.totalorder %s25, 0
          %s439 = scalar_select %p438, %s25, 0
          %s440 = sadd.s32 %s439, %s437
          %s441 = smul.addr %s440, 4
          %s442 = scalar_lea.vmem %s4, %s441
        $region52: #{node_update_forward.9} parent=47 // pred_fallthru
          _
      $region48: #{node_update_forward.9} parent=5 // pred_fallthru
        _
    $region6: #{node_update_forward.9} parent=1 // loop_footer
      %s17 = sadd.s32 1, %s13
    $region7: #{node_update_forward.9} parent=1 // loop_footer_branch
      %12 = sbr.rel target = $region3
    $region8: #{node_update_forward.9} parent=1 // loop_exit
      _
    %443 = vsyncpa [#allocation3], 1
    %s444 = scalar_lea.sflag [#allocation3], 1
    %445 = vsyncpa %s444, 1

// kernel: node_update_forward.11
$region0: #{node_update_forward.11}
  #allocation0 [shape = 'u32[]', space=smem, size = 0x4, offset = 0x4, fixed_abs, tag = 'smem constant byte address 0x4 - core index']
  #allocation1 [shape = 'u32[144,128]{1,0:T(1,128)}', space=vmem, size = 0x12000, scoped, tag = 'internal scratch']
  %s0 = inlined_call_operand.vmem [shape: f32[16,256], index: 0, kind: input, shape index: {}]
  %s1 = inlined_call_operand.vmem [shape: f32[16,1024], index: 1, kind: input, shape index: {}]
  %s2 = inlined_call_operand.vmem [shape: f32[16,256], index: 2, kind: input, shape index: {}]
  %s3 = inlined_call_operand.vmem [shape: f32[256,256], index: 3, kind: input, shape index: {}]
  %s4 = inlined_call_operand.vmem [shape: f32[1,256], index: 4, kind: input, shape index: {}]
  %s5 = inlined_call_operand.vmem [shape: f32[16,256], index: 5, kind: output, shape index: {}]
  %s6 = sld [smem:[#allocation0]]
  $region53: #{node_update_forward.11} parent=0
    _
  %s8 = ssub.s32 1, %s6
  %s9 = scalar_select 0, %s8, %s6
  $region1: #{node_update_forward.11} parent=0
    #allocation2 [shape = 'u8[16384]{0}', space=vmem, size = 0x4000, scoped, tag = 'input window, operand 1, single buffered']
    // Predicated region
    $region2: #{node_update_forward.11} parent=1 // pred_check
      _
    $region3: #{node_update_forward.11} parent=1 // pred_check_branch
      %11 = sbr.rel (0) target = $region5
    $region4: #{node_update_forward.11} parent=1 // pred_region
      _
    $region5: #{node_update_forward.11} parent=1 // pred_fallthru
      _
    // Predicated region
    $region6: #{node_update_forward.11} parent=1 // pred_check
      _
    $region7: #{node_update_forward.11} parent=1 // pred_check_branch
      %13 = sbr.rel (0) target = $region9
    $region8: #{node_update_forward.11} parent=1 // pred_region
      %s14 = scalar_lea.vmem %s1, 48
      // Predicated region
      $region10: #{node_update_forward.11} parent=8 // pred_check
        _
      $region11: #{node_update_forward.11} parent=8 // pred_check_branch
        %16 = sbr.rel (0) target = $region13
      $region12: #{node_update_forward.11} parent=8 // pred_region
        // Predicated region
        $region14: #{node_update_forward.11} parent=12 // pred_check
          _
        $region15: #{node_update_forward.11} parent=12 // pred_check_branch
          %18 = sbr.rel (0) target = $region17
        $region16: #{node_update_forward.11} parent=12 // pred_region
          loop: start=0, step=1, limit=1
          $region18: #{node_update_forward.11} parent=16 // loop_pre_header
            _
          $region19: #{node_update_forward.11} parent=16 // loop_header
            %s20 = sphi 0, %s24
            %p21 = scmp.ge.s32.totalorder %s20, 1
            %s25 = sphi %s14, %s14
            %s26 = sphi [#allocation2], [#allocation2]
          $region20: #{node_update_forward.11} parent=16 // loop_header_branch
            %23 = sbr.rel (%p21) target = $region24
          $region21: #{node_update_forward.11} parent=16 // loop_body
            %v27 = vld [vmem:[%s25] sm:$0xff]
            %28 = vst [vmem:[%s26] sm:$0xff] %v27
            %v29 = vld [vmem:[%s25 + $0x8] sm:$0xff]
            %30 = vst [vmem:[%s26 + $0x8] sm:$0xff] %v29
            %v31 = vld [vmem:[%s25 + $0x40] sm:$0xff]
            %32 = vst [vmem:[%s26 + $0x10] sm:$0xff] %v31
            %v33 = vld [vmem:[%s25 + $0x48] sm:$0xff]
            %34 = vst [vmem:[%s26 + $0x18] sm:$0xff] %v33
          $region22: #{node_update_forward.11} parent=16 // loop_footer
            %s24 = sadd.s32 1, %s20
          $region23: #{node_update_forward.11} parent=16 // loop_footer_branch
            %19 = sbr.rel target = $region19
          $region24: #{node_update_forward.11} parent=16 // loop_exit
            _
        $region17: #{node_update_forward.11} parent=12 // pred_fallthru
          _
        // Predicated region
        $region25: #{node_update_forward.11} parent=12 // pred_check
          _
        $region26: #{node_update_forward.11} parent=12 // pred_check_branch
          %36 = sbr.rel target = $region28
        $region27: #{node_update_forward.11} parent=12 // pred_region
          _
        $region28: #{node_update_forward.11} parent=12 // pred_fallthru
          _
      $region13: #{node_update_forward.11} parent=8 // pred_fallthru
        _
      %37 = vnop
    $region9: #{node_update_forward.11} parent=1 // pred_fallthru
      _
    // Predicated region
    $region29: #{node_update_forward.11} parent=1 // pred_check
      _
    $region30: #{node_update_forward.11} parent=1 // pred_check_branch
      %39 = sbr.rel (0) target = $region32
    $region31: #{node_update_forward.11} parent=1 // pred_region
      _
    $region32: #{node_update_forward.11} parent=1 // pred_fallthru
      _
    // Predicated region
    $region33: #{node_update_forward.11} parent=1 // pred_check
      _
    $region34: #{node_update_forward.11} parent=1 // pred_check_branch
      %41 = sbr.rel (0) target = $region36
    $region35: #{node_update_forward.11} parent=1 // pred_region
      _
    $region36: #{node_update_forward.11} parent=1 // pred_fallthru
      _
    // Predicated region
    $region37: #{node_update_forward.11} parent=1 // pred_check
      _
    $region38: #{node_update_forward.11} parent=1 // pred_check_branch
      %43 = sbr.rel (0) target = $region40
    $region39: #{node_update_forward.11} parent=1 // pred_region
      _
    $region40: #{node_update_forward.11} parent=1 // pred_fallthru
      _
    // Predicated region
    $region41: #{node_update_forward.11} parent=1 // pred_check
      _
    $region42: #{node_update_forward.11} parent=1 // pred_check_branch
      %45 = sbr.rel (0) target = $region44
    $region43: #{node_update_forward.11} parent=1 // pred_region
      _
    $region44: #{node_update_forward.11} parent=1 // pred_fallthru
      _
    %v46 = vld [vmem:[#allocation2] sm:$0xff]
    %v47 = vld [vmem:[#allocation2 + $0x8] sm:$0xff]
    %v48 = vld [vmem:[#allocation2 + $0x10] sm:$0xff]
    %v49 = vld [vmem:[#allocation2 + $0x18] sm:$0xff]
    %v50 = vxor.u32 %v46, 2147483648
    %v51 = vxor.u32 %v47, 2147483648
    %v52 = vxor.u32 %v48, 2147483648
    %v53 = vxor.u32 %v49, 2147483648
    %v54 = vmul.f32 %v50, 1.442695
    %v55 = vpow.pop %v54
    %v56 = vmul.f32 %v51, 1.442695
    %v57 = vpow.pop %v56
    %v58 = vmul.f32 %v52, 1.442695
    %v59 = vpow.pop %v58
    %v60 = vmul.f32 %v53, 1.442695
    %v61 = vpow.pop %v60
    %v62 = vadd.f32 %v55, 1.0
    %v63 = vadd.f32 %v57, 1.0
    %v64 = vadd.f32 %v59, 1.0
    %v65 = vadd.f32 %v61, 1.0
    %v66 = vrcp.pop %v62
    %v67 = vmul.f32 1.0, %v66
    %v68 = vrcp.pop %v63
    %v69 = vmul.f32 1.0, %v68
    %v70 = vrcp.pop %v64
    %v71 = vmul.f32 1.0, %v70
    %v72 = vrcp.pop %v65
    %v73 = vmul.f32 1.0, %v72
    %v74 = vld [vmem:[%s2] sm:$0xff]
    %v75 = vld [vmem:[%s2 + $0x8] sm:$0xff]
    %v76 = vld [vmem:[%s2 + $0x10] sm:$0xff]
    %v77 = vld [vmem:[%s2 + $0x18] sm:$0xff]
    %v78 = vmul.f32 %v67, %v74
    %v79 = vmul.f32 %v69, %v75
    %v80 = vmul.f32 %v71, %v76
    %v81 = vmul.f32 %v73, %v77
    %v82 = vld [vmem:[%s0] sm:$0xff]
    %v83 = vld [vmem:[%s0 + $0x8] sm:$0xff]
    %v84 = vld [vmem:[%s0 + $0x10] sm:$0xff]
    %v85 = vld [vmem:[%s0 + $0x18] sm:$0xff]
    %v86 = vld [vmem:[%s3] sm:$0xff]
    %v87 = vld [vmem:[%s3 + $0x8] sm:$0xff]
    %v88 = vld [vmem:[%s3 + $0x10] sm:$0xff]
    %v89 = vld [vmem:[%s3 + $0x18] sm:$0xff]
    %v90 = vld [vmem:[%s3 + $0x20] sm:$0xff]
    %v91 = vld [vmem:[%s3 + $0x28] sm:$0xff]
    %v92 = vld [vmem:[%s3 + $0x30] sm:$0xff]
    %v93 = vld [vmem:[%s3 + $0x38] sm:$0xff]
    %v94 = vld [vmem:[%s3 + $0x40] sm:$0xff]
    %v95 = vld [vmem:[%s3 + $0x48] sm:$0xff]
    %v96 = vld [vmem:[%s3 + $0x50] sm:$0xff]
    %v97 = vld [vmem:[%s3 + $0x58] sm:$0xff]
    %v98 = vld [vmem:[%s3 + $0x60] sm:$0xff]
    %v99 = vld [vmem:[%s3 + $0x68] sm:$0xff]
    %v100 = vld [vmem:[%s3 + $0x70] sm:$0xff]
    %v101 = vld [vmem:[%s3 + $0x78] sm:$0xff]
    %v102 = vld [vmem:[%s3 + $0x80] sm:$0xff]
    %v103 = vld [vmem:[%s3 + $0x88] sm:$0xff]
    %v104 = vld [vmem:[%s3 + $0x90] sm:$0xff]
    %v105 = vld [vmem:[%s3 + $0x98] sm:$0xff]
    %v106 = vld [vmem:[%s3 + $0xa0] sm:$0xff]
    %v107 = vld [vmem:[%s3 + $0xa8] sm:$0xff]
    %v108 = vld [vmem:[%s3 + $0xb0] sm:$0xff]
    %v109 = vld [vmem:[%s3 + $0xb8] sm:$0xff]
    %v110 = vld [vmem:[%s3 + $0xc0] sm:$0xff]
    %v111 = vld [vmem:[%s3 + $0xc8] sm:$0xff]
    %v112 = vld [vmem:[%s3 + $0xd0] sm:$0xff]
    %v113 = vld [vmem:[%s3 + $0xd8] sm:$0xff]
    %v114 = vld [vmem:[%s3 + $0xe0] sm:$0xff]
    %v115 = vld [vmem:[%s3 + $0xe8] sm:$0xff]
    %v116 = vld [vmem:[%s3 + $0xf0] sm:$0xff]
    %v117 = vld [vmem:[%s3 + $0xf8] sm:$0xff]
    %v118 = vld [vmem:[%s3 + $0x100] sm:$0xff]
    %v119 = vld [vmem:[%s3 + $0x108] sm:$0xff]
    %v120 = vld [vmem:[%s3 + $0x110] sm:$0xff]
    %v121 = vld [vmem:[%s3 + $0x118] sm:$0xff]
    %v122 = vld [vmem:[%s3 + $0x120] sm:$0xff]
    %v123 = vld [vmem:[%s3 + $0x128] sm:$0xff]
    %v124 = vld [vmem:[%s3 + $0x130] sm:$0xff]
    %v125 = vld [vmem:[%s3 + $0x138] sm:$0xff]
    %v126 = vld [vmem:[%s3 + $0x140] sm:$0xff]
    %v127 = vld [vmem:[%s3 + $0x148] sm:$0xff]
    %v128 = vld [vmem:[%s3 + $0x150] sm:$0xff]
    %v129 = vld [vmem:[%s3 + $0x158] sm:$0xff]
    %v130 = vld [vmem:[%s3 + $0x160] sm:$0xff]
    %v131 = vld [vmem:[%s3 + $0x168] sm:$0xff]
    %v132 = vld [vmem:[%s3 + $0x170] sm:$0xff]
    %v133 = vld [vmem:[%s3 + $0x178] sm:$0xff]
    %v134 = vld [vmem:[%s3 + $0x180] sm:$0xff]
    %v135 = vld [vmem:[%s3 + $0x188] sm:$0xff]
    %v136 = vld [vmem:[%s3 + $0x190] sm:$0xff]
    %v137 = vld [vmem:[%s3 + $0x198] sm:$0xff]
    %v138 = vld [vmem:[%s3 + $0x1a0] sm:$0xff]
    %v139 = vld [vmem:[%s3 + $0x1a8] sm:$0xff]
    %v140 = vld [vmem:[%s3 + $0x1b0] sm:$0xff]
    %v141 = vld [vmem:[%s3 + $0x1b8] sm:$0xff]
    %v142 = vld [vmem:[%s3 + $0x1c0] sm:$0xff]
    %v143 = vld [vmem:[%s3 + $0x1c8] sm:$0xff]
    %v144 = vld [vmem:[%s3 + $0x1d0] sm:$0xff]
    %v145 = vld [vmem:[%s3 + $0x1d8] sm:$0xff]
    %v146 = vld [vmem:[%s3 + $0x1e0] sm:$0xff]
    %v147 = vld [vmem:[%s3 + $0x1e8] sm:$0xff]
    %v148 = vld [vmem:[%s3 + $0x1f0] sm:$0xff]
    %v149 = vld [vmem:[%s3 + $0x1f8] sm:$0xff]
    %v150 = vpack.c.bf16 %v80, %v78
    %v151 = vpack.c.bf16 %v81, %v79
    %v152 = vpack.c.bf16 %v88, %v86
    %v153 = vpack.c.bf16 %v89, %v87
    %v154 = vpack.c.bf16 %v92, %v90
    %v155 = vpack.c.bf16 %v93, %v91
    %v156 = vpack.c.bf16 %v96, %v94
    %v157 = vpack.c.bf16 %v97, %v95
    %v158 = vpack.c.bf16 %v100, %v98
    %v159 = vpack.c.bf16 %v101, %v99
    %v160 = vpack.c.bf16 %v104, %v102
    %v161 = vpack.c.bf16 %v105, %v103
    %v162 = vpack.c.bf16 %v108, %v106
    %v163 = vpack.c.bf16 %v109, %v107
    %v164 = vpack.c.bf16 %v112, %v110
    %v165 = vpack.c.bf16 %v113, %v111
    %v166 = vpack.c.bf16 %v116, %v114
    %v167 = vpack.c.bf16 %v117, %v115
    %v168 = vpack.c.bf16 %v120, %v118
    %v169 = vpack.c.bf16 %v121, %v119
    %v170 = vpack.c.bf16 %v124, %v122
    %v171 = vpack.c.bf16 %v125, %v123
    %v172 = vpack.c.bf16 %v128, %v126
    %v173 = vpack.c.bf16 %v129, %v127
    %v174 = vpack.c.bf16 %v132, %v130
    %v175 = vpack.c.bf16 %v133, %v131
    %v176 = vpack.c.bf16 %v136, %v134
    %v177 = vpack.c.bf16 %v137, %v135
    %v178 = vpack.c.bf16 %v140, %v138
    %v179 = vpack.c.bf16 %v141, %v139
    %v180 = vpack.c.bf16 %v144, %v142
    %v181 = vpack.c.bf16 %v145, %v143
    %v182 = vpack.c.bf16 %v148, %v146
    %v183 = vpack.c.bf16 %v149, %v147
    %184 = vmatprep.subr.bf16.mxu0 %v167
    %185 = vmatpush1.bf16.msra.mxu0 %v166
    %186 = vmatprep.subr.bf16.mxu0 %v165
    %187 = vmatpush1.bf16.msra.mxu0 %v164
    %188 = vmatprep.subr.bf16.mxu0 %v163
    %189 = vmatpush1.bf16.msra.mxu0 %v162
    %190 = vmatprep.subr.bf16.mxu0 %v161
    %191 = vmatpush1.bf16.msra.mxu0 %v160
    %192 = vmatprep.subr.bf16.mxu0 %v159
    %193 = vmatpush1.bf16.msra.mxu0 %v158
    %194 = vmatprep.subr.bf16.mxu0 %v157
    %195 = vmatpush1.bf16.msra.mxu0 %v156
    %196 = vmatprep.subr.bf16.mxu0 %v155
    %197 = vmatpush1.bf16.msra.mxu0 %v154
    %198 = vmatprep.subr.bf16.mxu0 %v153
    %199 = vmatpush1.bf16.msra.mxu0 %v152
    %200 = vmatprep.subr.bf16.mxu0 %v183
    %201 = vmatpush2.bf16.msra.mxu0 %v182
    %202 = vmatprep.subr.bf16.mxu0 %v181
    %203 = vmatpush2.bf16.msra.mxu0 %v180
    %204 = vmatprep.subr.bf16.mxu0 %v179
    %205 = vmatpush2.bf16.msra.mxu0 %v178
    %206 = vmatprep.subr.bf16.mxu0 %v177
    %207 = vmatpush2.bf16.msra.mxu0 %v176
    %208 = vmatprep.subr.bf16.mxu0 %v175
    %209 = vmatpush2.bf16.msra.mxu0 %v174
    %210 = vmatprep.subr.bf16.mxu0 %v173
    %211 = vmatpush2.bf16.msra.mxu0 %v172
    %212 = vmatprep.subr.bf16.mxu0 %v171
    %213 = vmatpush2.bf16.msra.mxu0 %v170
    %214 = vmatprep.subr.bf16.mxu0 %v169
    %215 = vmatpush2.bf16.msra.mxu0 %v168
    %216 = vmatprep.mubr.bf16.mxu0 %v151
    %217 = vmatmul.mubr.bf16.gmra.mxu0 %v150
    %v218 = vpop.f32.mrf.mxu0
    %v219 = vadd.f32 0.0, %v218
    %v220 = vpop.f32.mrf.mxu0
    %v221 = vadd.f32 0.0, %v220
    %v222 = vpop.f32.mrf.mxu0
    %v223 = vadd.f32 0.0, %v222
    %v224 = vpop.f32.mrf.mxu0
    %v225 = vadd.f32 0.0, %v224
    %226 = vdwg.mxu0
    %v227 = vadd.f32 %v82, %v219
    %v228 = vadd.f32 %v83, %v221
    %v229 = vadd.f32 %v84, %v223
    %v230 = vadd.f32 %v85, %v225
    %v231 = vld [vmem:[%s4] sm:$0x3]
    %v233 = vlaneseq
    %v234 = vshrl.u32 %v233, 7
    %v235 = vsub.s32 0, %v234
    %v236 = vrot.slane %v231, %v235
    %v237 = vlaneseq
    %v238 = vshrl.u32 %v237, 7
    %v239 = vsub.s32 1, %v238
    %v240 = vrot.slane %v231, %v239
    %v243 = vadd.f32 %v227, %v236
    %v244 = vadd.f32 %v228, %v240
    %v245 = vadd.f32 %v229, %v236
    %v246 = vadd.f32 %v230, %v240
    %247 = vst [vmem:[%s5] sm:$0xff] %v243
    %248 = vst [vmem:[%s5 + $0x8] sm:$0xff] %v244
    %249 = vst [vmem:[%s5 + $0x10] sm:$0xff] %v245
    %250 = vst [vmem:[%s5 + $0x18] sm:$0xff] %v246
    // Predicated region
    $region45: #{node_update_forward.11} parent=1 // pred_check
      _
    $region46: #{node_update_forward.11} parent=1 // pred_check_branch
      %252 = sbr.rel (0) target = $region48
    $region47: #{node_update_forward.11} parent=1 // pred_region
      _
    $region48: #{node_update_forward.11} parent=1 // pred_fallthru
      _
    // Predicated region
    $region49: #{node_update_forward.11} parent=1 // pred_check
      _
    $region50: #{node_update_forward.11} parent=1 // pred_check_branch
      %254 = sbr.rel (0) target = $region52
    $region51: #{node_update_forward.11} parent=1 // pred_region
      _
    $region52: #{node_update_forward.11} parent=1 // pred_fallthru
      _

// kernel: node_update_forward.8
$region0: #{node_update_forward.8}
  #allocation0 [shape = 'u32[]', space=smem, size = 0x4, offset = 0x4, fixed_abs, tag = 'smem constant byte address 0x4 - core index']
  #allocation1 [shape = 'u32[144,128]{1,0:T(1,128)}', space=vmem, size = 0x12000, scoped, tag = 'internal scratch']
  %s0 = inlined_call_operand.vmem [shape: f32[16,256], index: 0, kind: input, shape index: {}]
  %s1 = inlined_call_operand.vmem [shape: f32[1,256], index: 1, kind: input, shape index: {}]
  %s2 = inlined_call_operand.vmem [shape: f32[1,256], index: 2, kind: input, shape index: {}]
  %s3 = inlined_call_operand.hbm [shape: f32[256,1024], index: 3, kind: input, shape index: {}]
  %s4 = inlined_call_operand.vmem [shape: f32[1,1024], index: 4, kind: input, shape index: {}]
  %s5 = inlined_call_operand.vmem [shape: f32[16,256], index: 5, kind: output, shape index: {0}]
  %s6 = inlined_call_operand.vmem [shape: f32[16,1024], index: 6, kind: output, shape index: {1}]
  %7 = xla_tuple %s5, %s6
  %s8 = sld [smem:[#allocation0]]
  $region42: #{node_update_forward.8} parent=0
    _
  %s10 = ssub.s32 1, %s8
  %s11 = scalar_select 0, %s10, %s8
  $region1: #{node_update_forward.8} parent=0
    #allocation2 [shape = 'u8[1048576]{0}', space=vmem, size = 0x100000, scoped, tag = 'input window, operand 3, single buffered']
    #allocation3 [shape = 's32[1]{0}', space=sflag, size = 0x4, scoped, tag = 'scoped memory for node_update_forward.8']
    %12 = vsyncpa [#allocation3], 0
    // Predicated region
    $region2: #{node_update_forward.8} parent=1 // pred_check
      _
    $region3: #{node_update_forward.8} parent=1 // pred_check_branch
      %14 = sbr.rel (0) target = $region5
    $region4: #{node_update_forward.8} parent=1 // pred_region
      _
    $region5: #{node_update_forward.8} parent=1 // pred_fallthru
      _
    // Predicated region
    $region6: #{node_update_forward.8} parent=1 // pred_check
      _
    $region7: #{node_update_forward.8} parent=1 // pred_check_branch
      %16 = sbr.rel (0) target = $region9
    $region8: #{node_update_forward.8} parent=1 // pred_region
      _
    $region9: #{node_update_forward.8} parent=1 // pred_fallthru
      _
    // Predicated region
    $region10: #{node_update_forward.8} parent=1 // pred_check
      _
    $region11: #{node_update_forward.8} parent=1 // pred_check_branch
      %18 = sbr.rel (0) target = $region13
    $region12: #{node_update_forward.8} parent=1 // pred_region
      _
    $region13: #{node_update_forward.8} parent=1 // pred_fallthru
      _
    // Predicated region
    $region14: #{node_update_forward.8} parent=1 // pred_check
      _
    $region15: #{node_update_forward.8} parent=1 // pred_check_branch
      %20 = sbr.rel (0) target = $region17
    $region16: #{node_update_forward.8} parent=1 // pred_region
      %s22 = ssub.s32 32768, 32768
      %23 = vsyncadd [#allocation3], %s22
      %s24 = sshll.u32 [#allocation2], 4
      %s25 = int_to_ptr.vmem [resolvable:$true] %s24
      %30 = dma.hbm_to_vmem [thread:$0]  %s3, 32768, %s25, [#allocation3], 1024, 1024, 64
    $region17: #{node_update_forward.8} parent=1 // pred_fallthru
      _
    // Predicated region
    $region18: #{node_update_forward.8} parent=1 // pred_check
      _
    $region19: #{node_update_forward.8} parent=1 // pred_check_branch
      %32 = sbr.rel (0) target = $region21
    $region20: #{node_update_forward.8} parent=1 // pred_region
      _
    $region21: #{node_update_forward.8} parent=1 // pred_fallthru
      _
    // Predicated region
    $region22: #{node_update_forward.8} parent=1 // pred_check
      _
    $region23: #{node_update_forward.8} parent=1 // pred_check_branch
      %34 = sbr.rel (0) target = $region25
    $region24: #{node_update_forward.8} parent=1 // pred_region
      %35 = dma.done [#allocation3], 32768
    $region25: #{node_update_forward.8} parent=1 // pred_fallthru
      _
    %v36 = vld [vmem:[%s0] sm:$0xff]
    %v37 = vld [vmem:[%s0 + $0x8] sm:$0xff]
    %v38 = vld [vmem:[%s0 + $0x10] sm:$0xff]
    %v39 = vld [vmem:[%s0 + $0x18] sm:$0xff]
    %v40 = vld [vmem:[%s1] sm:$0x3]
    %v41 = vld [vmem:[%s2] sm:$0x3]
    %v42 = vadd.f32 %v36, %v37
    %43 = vadd.xlane.f32.xlu0 %v42
    %v44 = vpop.xlane.xlu0 %43
    %v45 = vadd.f32 %v38, %v39
    %46 = vadd.xlane.f32.xlu0 %v45
    %v47 = vpop.xlane.xlu0 %46
    %v48 = vrcp.pop 256.0
    %v49 = vmul.f32 %v44, %v48
    %v50 = vmul.f32 %v47, %v48
    %v51 = vsub.f32 %v36, %v49
    %v52 = vsub.f32 %v37, %v49
    %v53 = vsub.f32 %v38, %v50
    %v54 = vsub.f32 %v39, %v50
    %v55 = vmul.f32 %v51, %v51
    %v56 = vmul.f32 %v52, %v52
    %v57 = vmul.f32 %v53, %v53
    %v58 = vmul.f32 %v54, %v54
    %v59 = vadd.f32 %v55, %v56
    %60 = vadd.xlane.f32.xlu0 %v59
    %v61 = vpop.xlane.xlu0 %60
    %v62 = vadd.f32 %v57, %v58
    %63 = vadd.xlane.f32.xlu0 %v62
    %v64 = vpop.xlane.xlu0 %63
    %v65 = vmul.f32 %v61, %v48
    %v66 = vmul.f32 %v64, %v48
    %v67 = vadd.f32 %v65, 1e-05
    %v68 = vadd.f32 %v66, 1e-05
    %v69 = vrsqrt.pop %v67
    %v70 = vrsqrt.pop %v68
    %v71 = vmul.f32 %v51, %v69
    %v72 = vmul.f32 %v52, %v69
    %v73 = vmul.f32 %v53, %v70
    %v74 = vmul.f32 %v54, %v70
    %v76 = vlaneseq
    %v77 = vshrl.u32 %v76, 7
    %v78 = vsub.s32 0, %v77
    %v79 = vrot.slane %v40, %v78
    %v80 = vlaneseq
    %v81 = vshrl.u32 %v80, 7
    %v82 = vsub.s32 1, %v81
    %v83 = vrot.slane %v40, %v82
    %v86 = vmul.f32 %v71, %v79
    %v87 = vmul.f32 %v72, %v83
    %v88 = vmul.f32 %v73, %v79
    %v89 = vmul.f32 %v74, %v83
    %v91 = vlaneseq
    %v92 = vshrl.u32 %v91, 7
    %v93 = vsub.s32 0, %v92
    %v94 = vrot.slane %v41, %v93
    %v95 = vlaneseq
    %v96 = vshrl.u32 %v95, 7
    %v97 = vsub.s32 1, %v96
    %v98 = vrot.slane %v41, %v97
    %v101 = vadd.f32 %v86, %v94
    %v102 = vadd.f32 %v87, %v98
    %v103 = vadd.f32 %v88, %v94
    %v104 = vadd.f32 %v89, %v98
    %105 = vst [vmem:[%s5] sm:$0xff] %v101
    %106 = vst [vmem:[%s5 + $0x8] sm:$0xff] %v102
    %107 = vst [vmem:[%s5 + $0x10] sm:$0xff] %v103
    %108 = vst [vmem:[%s5 + $0x18] sm:$0xff] %v104
    %v109 = vld [vmem:[#allocation2] sm:$0xff]
    %v110 = vld [vmem:[#allocation2 + $0x8] sm:$0xff]
    %v111 = vld [vmem:[#allocation2 + $0x10] sm:$0xff]
    %v112 = vld [vmem:[#allocation2 + $0x18] sm:$0xff]
    %v113 = vld [vmem:[#allocation2 + $0x20] sm:$0xff]
    %v114 = vld [vmem:[#allocation2 + $0x28] sm:$0xff]
    %v115 = vld [vmem:[#allocation2 + $0x30] sm:$0xff]
    %v116 = vld [vmem:[#allocation2 + $0x38] sm:$0xff]
    %v117 = vld [vmem:[#allocation2 + $0x40] sm:$0xff]
    %v118 = vld [vmem:[#allocation2 + $0x48] sm:$0xff]
    %v119 = vld [vmem:[#allocation2 + $0x50] sm:$0xff]
    %v120 = vld [vmem:[#allocation2 + $0x58] sm:$0xff]
    %v121 = vld [vmem:[#allocation2 + $0x60] sm:$0xff]
    %v122 = vld [vmem:[#allocation2 + $0x68] sm:$0xff]
    %v123 = vld [vmem:[#allocation2 + $0x70] sm:$0xff]
    %v124 = vld [vmem:[#allocation2 + $0x78] sm:$0xff]
    %v125 = vld [vmem:[#allocation2 + $0x80] sm:$0xff]
    %v126 = vld [vmem:[#allocation2 + $0x88] sm:$0xff]
    %v127 = vld [vmem:[#allocation2 + $0x90] sm:$0xff]
    %v128 = vld [vmem:[#allocation2 + $0x98] sm:$0xff]
    %v129 = vld [vmem:[#allocation2 + $0xa0] sm:$0xff]
    %v130 = vld [vmem:[#allocation2 + $0xa8] sm:$0xff]
    %v131 = vld [vmem:[#allocation2 + $0xb0] sm:$0xff]
    %v132 = vld [vmem:[#allocation2 + $0xb8] sm:$0xff]
    %v133 = vld [vmem:[#allocation2 + $0xc0] sm:$0xff]
    %v134 = vld [vmem:[#allocation2 + $0xc8] sm:$0xff]
    %v135 = vld [vmem:[#allocation2 + $0xd0] sm:$0xff]
    %v136 = vld [vmem:[#allocation2 + $0xd8] sm:$0xff]
    %v137 = vld [vmem:[#allocation2 + $0xe0] sm:$0xff]
    %v138 = vld [vmem:[#allocation2 + $0xe8] sm:$0xff]
    %v139 = vld [vmem:[#allocation2 + $0xf0] sm:$0xff]
    %v140 = vld [vmem:[#allocation2 + $0xf8] sm:$0xff]
    %v141 = vld [vmem:[#allocation2 + $0x100] sm:$0xff]
    %v142 = vld [vmem:[#allocation2 + $0x108] sm:$0xff]
    %v143 = vld [vmem:[#allocation2 + $0x110] sm:$0xff]
    %v144 = vld [vmem:[#allocation2 + $0x118] sm:$0xff]
    %v145 = vld [vmem:[#allocation2 + $0x120] sm:$0xff]
    %v146 = vld [vmem:[#allocation2 + $0x128] sm:$0xff]
    %v147 = vld [vmem:[#allocation2 + $0x130] sm:$0xff]
    %v148 = vld [vmem:[#allocation2 + $0x138] sm:$0xff]
    %v149 = vld [vmem:[#allocation2 + $0x140] sm:$0xff]
    %v150 = vld [vmem:[#allocation2 + $0x148] sm:$0xff]
    %v151 = vld [vmem:[#allocation2 + $0x150] sm:$0xff]
    %v152 = vld [vmem:[#allocation2 + $0x158] sm:$0xff]
    %v153 = vld [vmem:[#allocation2 + $0x160] sm:$0xff]
    %v154 = vld [vmem:[#allocation2 + $0x168] sm:$0xff]
    %v155 = vld [vmem:[#allocation2 + $0x170] sm:$0xff]
    %v156 = vld [vmem:[#allocation2 + $0x178] sm:$0xff]
    %v157 = vld [vmem:[#allocation2 + $0x180] sm:$0xff]
    %v158 = vld [vmem:[#allocation2 + $0x188] sm:$0xff]
    %v159 = vld [vmem:[#allocation2 + $0x190] sm:$0xff]
    %v160 = vld [vmem:[#allocation2 + $0x198] sm:$0xff]
    %v161 = vld [vmem:[#allocation2 + $0x1a0] sm:$0xff]
    %v162 = vld [vmem:[#allocation2 + $0x1a8] sm:$0xff]
    %v163 = vld [vmem:[#allocation2 + $0x1b0] sm:$0xff]
    %v164 = vld [vmem:[#allocation2 + $0x1b8] sm:$0xff]
    %v165 = vld [vmem:[#allocation2 + $0x1c0] sm:$0xff]
    %v166 = vld [vmem:[#allocation2 + $0x1c8] sm:$0xff]
    %v167 = vld [vmem:[#allocation2 + $0x1d0] sm:$0xff]
    %v168 = vld [vmem:[#allocation2 + $0x1d8] sm:$0xff]
    %v169 = vld [vmem:[#allocation2 + $0x1e0] sm:$0xff]
    %v170 = vld [vmem:[#allocation2 + $0x1e8] sm:$0xff]
    %v171 = vld [vmem:[#allocation2 + $0x1f0] sm:$0xff]
    %v172 = vld [vmem:[#allocation2 + $0x1f8] sm:$0xff]
    %v173 = vld [vmem:[#allocation2 + $0x200] sm:$0xff]
    %v174 = vld [vmem:[#allocation2 + $0x208] sm:$0xff]
    %v175 = vld [vmem:[#allocation2 + $0x210] sm:$0xff]
    %v176 = vld [vmem:[#allocation2 + $0x218] sm:$0xff]
    %v177 = vld [vmem:[#allocation2 + $0x220] sm:$0xff]
    %v178 = vld [vmem:[#allocation2 + $0x228] sm:$0xff]
    %v179 = vld [vmem:[#allocation2 + $0x230] sm:$0xff]
    %v180 = vld [vmem:[#allocation2 + $0x238] sm:$0xff]
    %v181 = vld [vmem:[#allocation2 + $0x240] sm:$0xff]
    %v182 = vld [vmem:[#allocation2 + $0x248] sm:$0xff]
    %v183 = vld [vmem:[#allocation2 + $0x250] sm:$0xff]
    %v184 = vld [vmem:[#allocation2 + $0x258] sm:$0xff]
    %v185 = vld [vmem:[#allocation2 + $0x260] sm:$0xff]
    %v186 = vld [vmem:[#allocation2 + $0x268] sm:$0xff]
    %v187 = vld [vmem:[#allocation2 + $0x270] sm:$0xff]
    %v188 = vld [vmem:[#allocation2 + $0x278] sm:$0xff]
    %v189 = vld [vmem:[#allocation2 + $0x280] sm:$0xff]
    %v190 = vld [vmem:[#allocation2 + $0x288] sm:$0xff]
    %v191 = vld [vmem:[#allocation2 + $0x290] sm:$0xff]
    %v192 = vld [vmem:[#allocation2 + $0x298] sm:$0xff]
    %v193 = vld [vmem:[#allocation2 + $0x2a0] sm:$0xff]
    %v194 = vld [vmem:[#allocation2 + $0x2a8] sm:$0xff]
    %v195 = vld [vmem:[#allocation2 + $0x2b0] sm:$0xff]
    %v196 = vld [vmem:[#allocation2 + $0x2b8] sm:$0xff]
    %v197 = vld [vmem:[#allocation2 + $0x2c0] sm:$0xff]
    %v198 = vld [vmem:[#allocation2 + $0x2c8] sm:$0xff]
    %v199 = vld [vmem:[#allocation2 + $0x2d0] sm:$0xff]
    %v200 = vld [vmem:[#allocation2 + $0x2d8] sm:$0xff]
    %v201 = vld [vmem:[#allocation2 + $0x2e0] sm:$0xff]
    %v202 = vld [vmem:[#allocation2 + $0x2e8] sm:$0xff]
    %v203 = vld [vmem:[#allocation2 + $0x2f0] sm:$0xff]
    %v204 = vld [vmem:[#allocation2 + $0x2f8] sm:$0xff]
    %v205 = vld [vmem:[#allocation2 + $0x300] sm:$0xff]
    %v206 = vld [vmem:[#allocation2 + $0x308] sm:$0xff]
    %v207 = vld [vmem:[#allocation2 + $0x310] sm:$0xff]
    %v208 = vld [vmem:[#allocation2 + $0x318] sm:$0xff]
    %v209 = vld [vmem:[#allocation2 + $0x320] sm:$0xff]
    %v210 = vld [vmem:[#allocation2 + $0x328] sm:$0xff]
    %v211 = vld [vmem:[#allocation2 + $0x330] sm:$0xff]
    %v212 = vld [vmem:[#allocation2 + $0x338] sm:$0xff]
    %v213 = vld [vmem:[#allocation2 + $0x340] sm:$0xff]
    %v214 = vld [vmem:[#allocation2 + $0x348] sm:$0xff]
    %v215 = vld [vmem:[#allocation2 + $0x350] sm:$0xff]
    %v216 = vld [vmem:[#allocation2 + $0x358] sm:$0xff]
    %v217 = vld [vmem:[#allocation2 + $0x360] sm:$0xff]
    %v218 = vld [vmem:[#allocation2 + $0x368] sm:$0xff]
    %v219 = vld [vmem:[#allocation2 + $0x370] sm:$0xff]
    %v220 = vld [vmem:[#allocation2 + $0x378] sm:$0xff]
    %v221 = vld [vmem:[#allocation2 + $0x380] sm:$0xff]
    %v222 = vld [vmem:[#allocation2 + $0x388] sm:$0xff]
    %v223 = vld [vmem:[#allocation2 + $0x390] sm:$0xff]
    %v224 = vld [vmem:[#allocation2 + $0x398] sm:$0xff]
    %v225 = vld [vmem:[#allocation2 + $0x3a0] sm:$0xff]
    %v226 = vld [vmem:[#allocation2 + $0x3a8] sm:$0xff]
    %v227 = vld [vmem:[#allocation2 + $0x3b0] sm:$0xff]
    %v228 = vld [vmem:[#allocation2 + $0x3b8] sm:$0xff]
    %v229 = vld [vmem:[#allocation2 + $0x3c0] sm:$0xff]
    %v230 = vld [vmem:[#allocation2 + $0x3c8] sm:$0xff]
    %v231 = vld [vmem:[#allocation2 + $0x3d0] sm:$0xff]
    %v232 = vld [vmem:[#allocation2 + $0x3d8] sm:$0xff]
    %v233 = vld [vmem:[#allocation2 + $0x3e0] sm:$0xff]
    %v234 = vld [vmem:[#allocation2 + $0x3e8] sm:$0xff]
    %v235 = vld [vmem:[#allocation2 + $0x3f0] sm:$0xff]
    %v236 = vld [vmem:[#allocation2 + $0x3f8] sm:$0xff]
    %v237 = vld [vmem:[#allocation2 + $0x400] sm:$0xff]
    %v238 = vld [vmem:[#allocation2 + $0x408] sm:$0xff]
    %v239 = vld [vmem:[#allocation2 + $0x410] sm:$0xff]
    %v240 = vld [vmem:[#allocation2 + $0x418] sm:$0xff]
    %v241 = vld [vmem:[#allocation2 + $0x420] sm:$0xff]
    %v242 = vld [vmem:[#allocation2 + $0x428] sm:$0xff]
    %v243 = vld [vmem:[#allocation2 + $0x430] sm:$0xff]
    %v244 = vld [vmem:[#allocation2 + $0x438] sm:$0xff]
    %v245 = vld [vmem:[#allocation2 + $0x440] sm:$0xff]
    %v246 = vld [vmem:[#allocation2 + $0x448] sm:$0xff]
    %v247 = vld [vmem:[#allocation2 + $0x450] sm:$0xff]
    %v248 = vld [vmem:[#allocation2 + $0x458] sm:$0xff]
    %v249 = vld [vmem:[#allocation2 + $0x460] sm:$0xff]
    %v250 = vld [vmem:[#allocation2 + $0x468] sm:$0xff]
    %v251 = vld [vmem:[#allocation2 + $0x470] sm:$0xff]
    %v252 = vld [vmem:[#allocation2 + $0x478] sm:$0xff]
    %v253 = vld [vmem:[#allocation2 + $0x480] sm:$0xff]
    %v254 = vld [vmem:[#allocation2 + $0x488] sm:$0xff]
    %v255 = vld [vmem:[#allocation2 + $0x490] sm:$0xff]
    %v256 = vld [vmem:[#allocation2 + $0x498] sm:$0xff]
    %v257 = vld [vmem:[#allocation2 + $0x4a0] sm:$0xff]
    %v258 = vld [vmem:[#allocation2 + $0x4a8] sm:$0xff]
    %v259 = vld [vmem:[#allocation2 + $0x4b0] sm:$0xff]
    %v260 = vld [vmem:[#allocation2 + $0x4b8] sm:$0xff]
    %v261 = vld [vmem:[#allocation2 + $0x4c0] sm:$0xff]
    %v262 = vld [vmem:[#allocation2 + $0x4c8] sm:$0xff]
    %v263 = vld [vmem:[#allocation2 + $0x4d0] sm:$0xff]
    %v264 = vld [vmem:[#allocation2 + $0x4d8] sm:$0xff]
    %v265 = vld [vmem:[#allocation2 + $0x4e0] sm:$0xff]
    %v266 = vld [vmem:[#allocation2 + $0x4e8] sm:$0xff]
    %v267 = vld [vmem:[#allocation2 + $0x4f0] sm:$0xff]
    %v268 = vld [vmem:[#allocation2 + $0x4f8] sm:$0xff]
    %v269 = vld [vmem:[#allocation2 + $0x500] sm:$0xff]
    %v270 = vld [vmem:[#allocation2 + $0x508] sm:$0xff]
    %v271 = vld [vmem:[#allocation2 + $0x510] sm:$0xff]
    %v272 = vld [vmem:[#allocation2 + $0x518] sm:$0xff]
    %v273 = vld [vmem:[#allocation2 + $0x520] sm:$0xff]
    %v274 = vld [vmem:[#allocation2 + $0x528] sm:$0xff]
    %v275 = vld [vmem:[#allocation2 + $0x530] sm:$0xff]
    %v276 = vld [vmem:[#allocation2 + $0x538] sm:$0xff]
    %v277 = vld [vmem:[#allocation2 + $0x540] sm:$0xff]
    %v278 = vld [vmem:[#allocation2 + $0x548] sm:$0xff]
    %v279 = vld [vmem:[#allocation2 + $0x550] sm:$0xff]
    %v280 = vld [vmem:[#allocation2 + $0x558] sm:$0xff]
    %v281 = vld [vmem:[#allocation2 + $0x560] sm:$0xff]
    %v282 = vld [vmem:[#allocation2 + $0x568] sm:$0xff]
    %v283 = vld [vmem:[#allocation2 + $0x570] sm:$0xff]
    %v284 = vld [vmem:[#allocation2 + $0x578] sm:$0xff]
    %v285 = vld [vmem:[#allocation2 + $0x580] sm:$0xff]
    %v286 = vld [vmem:[#allocation2 + $0x588] sm:$0xff]
    %v287 = vld [vmem:[#allocation2 + $0x590] sm:$0xff]
    %v288 = vld [vmem:[#allocation2 + $0x598] sm:$0xff]
    %v289 = vld [vmem:[#allocation2 + $0x5a0] sm:$0xff]
    %v290 = vld [vmem:[#allocation2 + $0x5a8] sm:$0xff]
    %v291 = vld [vmem:[#allocation2 + $0x5b0] sm:$0xff]
    %v292 = vld [vmem:[#allocation2 + $0x5b8] sm:$0xff]
    %v293 = vld [vmem:[#allocation2 + $0x5c0] sm:$0xff]
    %v294 = vld [vmem:[#allocation2 + $0x5c8] sm:$0xff]
    %v295 = vld [vmem:[#allocation2 + $0x5d0] sm:$0xff]
    %v296 = vld [vmem:[#allocation2 + $0x5d8] sm:$0xff]
    %v297 = vld [vmem:[#allocation2 + $0x5e0] sm:$0xff]
    %v298 = vld [vmem:[#allocation2 + $0x5e8] sm:$0xff]
    %v299 = vld [vmem:[#allocation2 + $0x5f0] sm:$0xff]
    %v300 = vld [vmem:[#allocation2 + $0x5f8] sm:$0xff]
    %v301 = vld [vmem:[#allocation2 + $0x600] sm:$0xff]
    %v302 = vld [vmem:[#allocation2 + $0x608] sm:$0xff]
    %v303 = vld [vmem:[#allocation2 + $0x610] sm:$0xff]
    %v304 = vld [vmem:[#allocation2 + $0x618] sm:$0xff]
    %v305 = vld [vmem:[#allocation2 + $0x620] sm:$0xff]
    %v306 = vld [vmem:[#allocation2 + $0x628] sm:$0xff]
    %v307 = vld [vmem:[#allocation2 + $0x630] sm:$0xff]
    %v308 = vld [vmem:[#allocation2 + $0x638] sm:$0xff]
    %v309 = vld [vmem:[#allocation2 + $0x640] sm:$0xff]
    %v310 = vld [vmem:[#allocation2 + $0x648] sm:$0xff]
    %v311 = vld [vmem:[#allocation2 + $0x650] sm:$0xff]
    %v312 = vld [vmem:[#allocation2 + $0x658] sm:$0xff]
    %v313 = vld [vmem:[#allocation2 + $0x660] sm:$0xff]
    %v314 = vld [vmem:[#allocation2 + $0x668] sm:$0xff]
    %v315 = vld [vmem:[#allocation2 + $0x670] sm:$0xff]
    %v316 = vld [vmem:[#allocation2 + $0x678] sm:$0xff]
    %v317 = vld [vmem:[#allocation2 + $0x680] sm:$0xff]
    %v318 = vld [vmem:[#allocation2 + $0x688] sm:$0xff]
    %v319 = vld [vmem:[#allocation2 + $0x690] sm:$0xff]
    %v320 = vld [vmem:[#allocation2 + $0x698] sm:$0xff]
    %v321 = vld [vmem:[#allocation2 + $0x6a0] sm:$0xff]
    %v322 = vld [vmem:[#allocation2 + $0x6a8] sm:$0xff]
    %v323 = vld [vmem:[#allocation2 + $0x6b0] sm:$0xff]
    %v324 = vld [vmem:[#allocation2 + $0x6b8] sm:$0xff]
    %v325 = vld [vmem:[#allocation2 + $0x6c0] sm:$0xff]
    %v326 = vld [vmem:[#allocation2 + $0x6c8] sm:$0xff]
    %v327 = vld [vmem:[#allocation2 + $0x6d0] sm:$0xff]
    %v328 = vld [vmem:[#allocation2 + $0x6d8] sm:$0xff]
    %v329 = vld [vmem:[#allocation2 + $0x6e0] sm:$0xff]
    %v330 = vld [vmem:[#allocation2 + $0x6e8] sm:$0xff]
    %v331 = vld [vmem:[#allocation2 + $0x6f0] sm:$0xff]
    %v332 = vld [vmem:[#allocation2 + $0x6f8] sm:$0xff]
    %v333 = vld [vmem:[#allocation2 + $0x700] sm:$0xff]
    %v334 = vld [vmem:[#allocation2 + $0x708] sm:$0xff]
    %v335 = vld [vmem:[#allocation2 + $0x710] sm:$0xff]
    %v336 = vld [vmem:[#allocation2 + $0x718] sm:$0xff]
    %v337 = vld [vmem:[#allocation2 + $0x720] sm:$0xff]
    %v338 = vld [vmem:[#allocation2 + $0x728] sm:$0xff]
    %v339 = vld [vmem:[#allocation2 + $0x730] sm:$0xff]
    %v340 = vld [vmem:[#allocation2 + $0x738] sm:$0xff]
    %v341 = vld [vmem:[#allocation2 + $0x740] sm:$0xff]
    %v342 = vld [vmem:[#allocation2 + $0x748] sm:$0xff]
    %v343 = vld [vmem:[#allocation2 + $0x750] sm:$0xff]
    %v344 = vld [vmem:[#allocation2 + $0x758] sm:$0xff]
    %v345 = vld [vmem:[#allocation2 + $0x760] sm:$0xff]
    %v346 = vld [vmem:[#allocation2 + $0x768] sm:$0xff]
    %v347 = vld [vmem:[#allocation2 + $0x770] sm:$0xff]
    %v348 = vld [vmem:[#allocation2 + $0x778] sm:$0xff]
    %v349 = vld [vmem:[#allocation2 + $0x780] sm:$0xff]
    %v350 = vld [vmem:[#allocation2 + $0x788] sm:$0xff]
    %v351 = vld [vmem:[#allocation2 + $0x790] sm:$0xff]
    %v352 = vld [vmem:[#allocation2 + $0x798] sm:$0xff]
    %v353 = vld [vmem:[#allocation2 + $0x7a0] sm:$0xff]
    %v354 = vld [vmem:[#allocation2 + $0x7a8] sm:$0xff]
    %v355 = vld [vmem:[#allocation2 + $0x7b0] sm:$0xff]
    %v356 = vld [vmem:[#allocation2 + $0x7b8] sm:$0xff]
    %v357 = vld [vmem:[#allocation2 + $0x7c0] sm:$0xff]
    %v358 = vld [vmem:[#allocation2 + $0x7c8] sm:$0xff]
    %v359 = vld [vmem:[#allocation2 + $0x7d0] sm:$0xff]
    %v360 = vld [vmem:[#allocation2 + $0x7d8] sm:$0xff]
    %v361 = vld [vmem:[#allocation2 + $0x7e0] sm:$0xff]
    %v362 = vld [vmem:[#allocation2 + $0x7e8] sm:$0xff]
    %v363 = vld [vmem:[#allocation2 + $0x7f0] sm:$0xff]
    %v364 = vld [vmem:[#allocation2 + $0x7f8] sm:$0xff]
    %v365 = vpack.c.bf16 %v103, %v101
    %v366 = vpack.c.bf16 %v104, %v102
    %v367 = vpack.c.bf16 %v117, %v109
    %v368 = vpack.c.bf16 %v118, %v110
    %v369 = vpack.c.bf16 %v119, %v111
    %v370 = vpack.c.bf16 %v120, %v112
    %v371 = vpack.c.bf16 %v121, %v113
    %v372 = vpack.c.bf16 %v122, %v114
    %v373 = vpack.c.bf16 %v123, %v115
    %v374 = vpack.c.bf16 %v124, %v116
    %v375 = vpack.c.bf16 %v133, %v125
    %v376 = vpack.c.bf16 %v134, %v126
    %v377 = vpack.c.bf16 %v135, %v127
    %v378 = vpack.c.bf16 %v136, %v128
    %v379 = vpack.c.bf16 %v137, %v129
    %v380 = vpack.c.bf16 %v138, %v130
    %v381 = vpack.c.bf16 %v139, %v131
    %v382 = vpack.c.bf16 %v140, %v132
    %v383 = vpack.c.bf16 %v149, %v141
    %v384 = vpack.c.bf16 %v150, %v142
    %v385 = vpack.c.bf16 %v151, %v143
    %v386 = vpack.c.bf16 %v152, %v144
    %v387 = vpack.c.bf16 %v153, %v145
    %v388 = vpack.c.bf16 %v154, %v146
    %v389 = vpack.c.bf16 %v155, %v147
    %v390 = vpack.c.bf16 %v156, %v148
    %v391 = vpack.c.bf16 %v165, %v157
    %v392 = vpack.c.bf16 %v166, %v158
    %v393 = vpack.c.bf16 %v167, %v159
    %v394 = vpack.c.bf16 %v168, %v160
    %v395 = vpack.c.bf16 %v169, %v161
    %v396 = vpack.c.bf16 %v170, %v162
    %v397 = vpack.c.bf16 %v171, %v163
    %v398 = vpack.c.bf16 %v172, %v164
    %v399 = vpack.c.bf16 %v181, %v173
    %v400 = vpack.c.bf16 %v182, %v174
    %v401 = vpack.c.bf16 %v183, %v175
    %v402 = vpack.c.bf16 %v184, %v176
    %v403 = vpack.c.bf16 %v185, %v177
    %v404 = vpack.c.bf16 %v186, %v178
    %v405 = vpack.c.bf16 %v187, %v179
    %v406 = vpack.c.bf16 %v188, %v180
    %v407 = vpack.c.bf16 %v197, %v189
    %v408 = vpack.c.bf16 %v198, %v190
    %v409 = vpack.c.bf16 %v199, %v191
    %v410 = vpack.c.bf16 %v200, %v192
    %v411 = vpack.c.bf16 %v201, %v193
    %v412 = vpack.c.bf16 %v202, %v194
    %v413 = vpack.c.bf16 %v203, %v195
    %v414 = vpack.c.bf16 %v204, %v196
    %v415 = vpack.c.bf16 %v213, %v205
    %v416 = vpack.c.bf16 %v214, %v206
    %v417 = vpack.c.bf16 %v215, %v207
    %v418 = vpack.c.bf16 %v216, %v208
    %v419 = vpack.c.bf16 %v217, %v209
    %v420 = vpack.c.bf16 %v218, %v210
    %v421 = vpack.c.bf16 %v219, %v211
    %v422 = vpack.c.bf16 %v220, %v212
    %v423 = vpack.c.bf16 %v229, %v221
    %v424 = vpack.c.bf16 %v230, %v222
    %v425 = vpack.c.bf16 %v231, %v223
    %v426 = vpack.c.bf16 %v232, %v224
    %v427 = vpack.c.bf16 %v233, %v225
    %v428 = vpack.c.bf16 %v234, %v226
    %v429 = vpack.c.bf16 %v235, %v227
    %v430 = vpack.c.bf16 %v236, %v228
    %v431 = vpack.c.bf16 %v245, %v237
    %v432 = vpack.c.bf16 %v246, %v238
    %v433 = vpack.c.bf16 %v247, %v239
    %v434 = vpack.c.bf16 %v248, %v240
    %v435 = vpack.c.bf16 %v249, %v241
    %v436 = vpack.c.bf16 %v250, %v242
    %v437 = vpack.c.bf16 %v251, %v243
    %v438 = vpack.c.bf16 %v252, %v244
    %v439 = vpack.c.bf16 %v261, %v253
    %v440 = vpack.c.bf16 %v262, %v254
    %v441 = vpack.c.bf16 %v263, %v255
    %v442 = vpack.c.bf16 %v264, %v256
    %v443 = vpack.c.bf16 %v265, %v257
    %v444 = vpack.c.bf16 %v266, %v258
    %v445 = vpack.c.bf16 %v267, %v259
    %v446 = vpack.c.bf16 %v268, %v260
    %v447 = vpack.c.bf16 %v277, %v269
    %v448 = vpack.c.bf16 %v278, %v270
    %v449 = vpack.c.bf16 %v279, %v271
    %v450 = vpack.c.bf16 %v280, %v272
    %v451 = vpack.c.bf16 %v281, %v273
    %v452 = vpack.c.bf16 %v282, %v274
    %v453 = vpack.c.bf16 %v283, %v275
    %v454 = vpack.c.bf16 %v284, %v276
    %v455 = vpack.c.bf16 %v293, %v285
    %v456 = vpack.c.bf16 %v294, %v286
    %v457 = vpack.c.bf16 %v295, %v287
    %v458 = vpack.c.bf16 %v296, %v288
    %v459 = vpack.c.bf16 %v297, %v289
    %v460 = vpack.c.bf16 %v298, %v290
    %v461 = vpack.c.bf16 %v299, %v291
    %v462 = vpack.c.bf16 %v300, %v292
    %v463 = vpack.c.bf16 %v309, %v301
    %v464 = vpack.c.bf16 %v310, %v302
    %v465 = vpack.c.bf16 %v311, %v303
    %v466 = vpack.c.bf16 %v312, %v304
    %v467 = vpack.c.bf16 %v313, %v305
    %v468 = vpack.c.bf16 %v314, %v306
    %v469 = vpack.c.bf16 %v315, %v307
    %v470 = vpack.c.bf16 %v316, %v308
    %v471 = vpack.c.bf16 %v325, %v317
    %v472 = vpack.c.bf16 %v326, %v318
    %v473 = vpack.c.bf16 %v327, %v319
    %v474 = vpack.c.bf16 %v328, %v320
    %v475 = vpack.c.bf16 %v329, %v321
    %v476 = vpack.c.bf16 %v330, %v322
    %v477 = vpack.c.bf16 %v331, %v323
    %v478 = vpack.c.bf16 %v332, %v324
    %v479 = vpack.c.bf16 %v341, %v333
    %v480 = vpack.c.bf16 %v342, %v334
    %v481 = vpack.c.bf16 %v343, %v335
    %v482 = vpack.c.bf16 %v344, %v336
    %v483 = vpack.c.bf16 %v345, %v337
    %v484 = vpack.c.bf16 %v346, %v338
    %v485 = vpack.c.bf16 %v347, %v339
    %v486 = vpack.c.bf16 %v348, %v340
    %v487 = vpack.c.bf16 %v357, %v349
    %v488 = vpack.c.bf16 %v358, %v350
    %v489 = vpack.c.bf16 %v359, %v351
    %v490 = vpack.c.bf16 %v360, %v352
    %v491 = vpack.c.bf16 %v361, %v353
    %v492 = vpack.c.bf16 %v362, %v354
    %v493 = vpack.c.bf16 %v363, %v355
    %v494 = vpack.c.bf16 %v364, %v356
    %v495 = vld [vmem:[%s4] sm:$0xff]
    %v497 = vlaneseq
    %v498 = vshrl.u32 %v497, 7
    %v499 = vsub.s32 0, %v498
    %v500 = vrot.slane %v495, %v499
    %v501 = vlaneseq
    %v502 = vshrl.u32 %v501, 7
    %v503 = vsub.s32 1, %v502
    %v504 = vrot.slane %v495, %v503
    %v505 = vlaneseq
    %v506 = vshrl.u32 %v505, 7
    %v507 = vsub.s32 2, %v506
    %v508 = vrot.slane %v495, %v507
    %v509 = vlaneseq
    %v510 = vshrl.u32 %v509, 7
    %v511 = vsub.s32 3, %v510
    %v512 = vrot.slane %v495, %v511
    %v513 = vlaneseq
    %v514 = vshrl.u32 %v513, 7
    %v515 = vsub.s32 4, %v514
    %v516 = vrot.slane %v495, %v515
    %v517 = vlaneseq
    %v518 = vshrl.u32 %v517, 7
    %v519 = vsub.s32 5, %v518
    %v520 = vrot.slane %v495, %v519
    %v521 = vlaneseq
    %v522 = vshrl.u32 %v521, 7
    %v523 = vsub.s32 6, %v522
    %v524 = vrot.slane %v495, %v523
    %v525 = vlaneseq
    %v526 = vshrl.u32 %v525, 7
    %v527 = vsub.s32 7, %v526
    %v528 = vrot.slane %v495, %v527
    %537 = vmatprep.subr.bf16.mxu0 %v424
    %538 = vmatpush1.bf16.msra.mxu0 %v423
    %539 = vmatprep.subr.bf16.mxu0 %v416
    %540 = vmatpush1.bf16.msra.mxu0 %v415
    %541 = vmatprep.subr.bf16.mxu0 %v408
    %542 = vmatpush1.bf16.msra.mxu0 %v407
    %543 = vmatprep.subr.bf16.mxu0 %v400
    %544 = vmatpush1.bf16.msra.mxu0 %v399
    %545 = vmatprep.subr.bf16.mxu0 %v392
    %546 = vmatpush1.bf16.msra.mxu0 %v391
    %547 = vmatprep.subr.bf16.mxu0 %v384
    %548 = vmatpush1.bf16.msra.mxu0 %v383
    %549 = vmatprep.subr.bf16.mxu0 %v376
    %550 = vmatpush1.bf16.msra.mxu0 %v375
    %551 = vmatprep.subr.bf16.mxu0 %v368
    %552 = vmatpush1.bf16.msra.mxu0 %v367
    %553 = vmatprep.subr.bf16.mxu0 %v488
    %554 = vmatpush2.bf16.msra.mxu0 %v487
    %555 = vmatprep.subr.bf16.mxu0 %v480
    %556 = vmatpush2.bf16.msra.mxu0 %v479
    %557 = vmatprep.subr.bf16.mxu0 %v472
    %558 = vmatpush2.bf16.msra.mxu0 %v471
    %559 = vmatprep.subr.bf16.mxu0 %v464
    %560 = vmatpush2.bf16.msra.mxu0 %v463
    %561 = vmatprep.subr.bf16.mxu0 %v456
    %562 = vmatpush2.bf16.msra.mxu0 %v455
    %563 = vmatprep.subr.bf16.mxu0 %v448
    %564 = vmatpush2.bf16.msra.mxu0 %v447
    %565 = vmatprep.subr.bf16.mxu0 %v440
    %566 = vmatpush2.bf16.msra.mxu0 %v439
    %567 = vmatprep.subr.bf16.mxu0 %v432
    %568 = vmatpush2.bf16.msra.mxu0 %v431
    %569 = vmatprep.mubr.bf16.mxu0 %v366
    %570 = vmatmul.mubr.bf16.gmra.mxu0 %v365
    %v571 = vpop.f32.mrf.mxu0
    %v572 = vadd.f32 %v500, %v571
    %v573 = vpop.f32.mrf.mxu0
    %v574 = vadd.f32 %v504, %v573
    %v575 = vpop.f32.mrf.mxu0
    %v576 = vadd.f32 %v500, %v575
    %v577 = vpop.f32.mrf.mxu0
    %v578 = vadd.f32 %v504, %v577
    %579 = vdwg.mxu0
    %580 = vmatprep.subr.bf16.mxu0 %v426
    %581 = vmatpush1.bf16.msra.mxu0 %v425
    %582 = vmatprep.subr.bf16.mxu0 %v418
    %583 = vmatpush1.bf16.msra.mxu0 %v417
    %584 = vmatprep.subr.bf16.mxu0 %v410
    %585 = vmatpush1.bf16.msra.mxu0 %v409
    %586 = vmatprep.subr.bf16.mxu0 %v402
    %587 = vmatpush1.bf16.msra.mxu0 %v401
    %588 = vmatprep.subr.bf16.mxu0 %v394
    %589 = vmatpush1.bf16.msra.mxu0 %v393
    %590 = vmatprep.subr.bf16.mxu0 %v386
    %591 = vmatpush1.bf16.msra.mxu0 %v385
    %592 = vmatprep.subr.bf16.mxu0 %v378
    %593 = vmatpush1.bf16.msra.mxu0 %v377
    %594 = vmatprep.subr.bf16.mxu0 %v370
    %595 = vmatpush1.bf16.msra.mxu0 %v369
    %596 = vmatprep.subr.bf16.mxu0 %v490
    %597 = vmatpush2.bf16.msra.mxu0 %v489
    %598 = vmatprep.subr.bf16.mxu0 %v482
    %599 = vmatpush2.bf16.msra.mxu0 %v481
    %600 = vmatprep.subr.bf16.mxu0 %v474
    %601 = vmatpush2.bf16.msra.mxu0 %v473
    %602 = vmatprep.subr.bf16.mxu0 %v466
    %603 = vmatpush2.bf16.msra.mxu0 %v465
    %604 = vmatprep.subr.bf16.mxu0 %v458
    %605 = vmatpush2.bf16.msra.mxu0 %v457
    %606 = vmatprep.subr.bf16.mxu0 %v450
    %607 = vmatpush2.bf16.msra.mxu0 %v449
    %608 = vmatprep.subr.bf16.mxu0 %v442
    %609 = vmatpush2.bf16.msra.mxu0 %v441
    %610 = vmatprep.subr.bf16.mxu0 %v434
    %611 = vmatpush2.bf16.msra.mxu0 %v433
    %612 = vmatprep.mubr.bf16.mxu0 %v366
    %613 = vmatmul.mubr.bf16.gmra.mxu0 %v365
    %v614 = vpop.f32.mrf.mxu0
    %v615 = vadd.f32 %v508, %v614
    %v616 = vpop.f32.mrf.mxu0
    %v617 = vadd.f32 %v512, %v616
    %v618 = vpop.f32.mrf.mxu0
    %v619 = vadd.f32 %v508, %v618
    %v620 = vpop.f32.mrf.mxu0
    %v621 = vadd.f32 %v512, %v620
    %622 = vdwg.mxu0
    %623 = vmatprep.subr.bf16.mxu0 %v428
    %624 = vmatpush1.bf16.msra.mxu0 %v427
    %625 = vmatprep.subr.bf16.mxu0 %v420
    %626 = vmatpush1.bf16.msra.mxu0 %v419
    %627 = vmatprep.subr.bf16.mxu0 %v412
    %628 = vmatpush1.bf16.msra.mxu0 %v411
    %629 = vmatprep.subr.bf16.mxu0 %v404
    %630 = vmatpush1.bf16.msra.mxu0 %v403
    %631 = vmatprep.subr.bf16.mxu0 %v396
    %632 = vmatpush1.bf16.msra.mxu0 %v395
    %633 = vmatprep.subr.bf16.mxu0 %v388
    %634 = vmatpush1.bf16.msra.mxu0 %v387
    %635 = vmatprep.subr.bf16.mxu0 %v380
    %636 = vmatpush1.bf16.msra.mxu0 %v379
    %637 = vmatprep.subr.bf16.mxu0 %v372
    %638 = vmatpush1.bf16.msra.mxu0 %v371
    %639 = vmatprep.subr.bf16.mxu0 %v492
    %640 = vmatpush2.bf16.msra.mxu0 %v491
    %641 = vmatprep.subr.bf16.mxu0 %v484
    %642 = vmatpush2.bf16.msra.mxu0 %v483
    %643 = vmatprep.subr.bf16.mxu0 %v476
    %644 = vmatpush2.bf16.msra.mxu0 %v475
    %645 = vmatprep.subr.bf16.mxu0 %v468
    %646 = vmatpush2.bf16.msra.mxu0 %v467
    %647 = vmatprep.subr.bf16.mxu0 %v460
    %648 = vmatpush2.bf16.msra.mxu0 %v459
    %649 = vmatprep.subr.bf16.mxu0 %v452
    %650 = vmatpush2.bf16.msra.mxu0 %v451
    %651 = vmatprep.subr.bf16.mxu0 %v444
    %652 = vmatpush2.bf16.msra.mxu0 %v443
    %653 = vmatprep.subr.bf16.mxu0 %v436
    %654 = vmatpush2.bf16.msra.mxu0 %v435
    %655 = vmatprep.mubr.bf16.mxu0 %v366
    %656 = vmatmul.mubr.bf16.gmra.mxu0 %v365
    %v657 = vpop.f32.mrf.mxu0
    %v658 = vadd.f32 %v516, %v657
    %v659 = vpop.f32.mrf.mxu0
    %v660 = vadd.f32 %v520, %v659
    %v661 = vpop.f32.mrf.mxu0
    %v662 = vadd.f32 %v516, %v661
    %v663 = vpop.f32.mrf.mxu0
    %v664 = vadd.f32 %v520, %v663
    %665 = vdwg.mxu0
    %666 = vmatprep.subr.bf16.mxu0 %v430
    %667 = vmatpush1.bf16.msra.mxu0 %v429
    %668 = vmatprep.subr.bf16.mxu0 %v422
    %669 = vmatpush1.bf16.msra.mxu0 %v421
    %670 = vmatprep.subr.bf16.mxu0 %v414
    %671 = vmatpush1.bf16.msra.mxu0 %v413
    %672 = vmatprep.subr.bf16.mxu0 %v406
    %673 = vmatpush1.bf16.msra.mxu0 %v405
    %674 = vmatprep.subr.bf16.mxu0 %v398
    %675 = vmatpush1.bf16.msra.mxu0 %v397
    %676 = vmatprep.subr.bf16.mxu0 %v390
    %677 = vmatpush1.bf16.msra.mxu0 %v389
    %678 = vmatprep.subr.bf16.mxu0 %v382
    %679 = vmatpush1.bf16.msra.mxu0 %v381
    %680 = vmatprep.subr.bf16.mxu0 %v374
    %681 = vmatpush1.bf16.msra.mxu0 %v373
    %682 = vmatprep.subr.bf16.mxu0 %v494
    %683 = vmatpush2.bf16.msra.mxu0 %v493
    %684 = vmatprep.subr.bf16.mxu0 %v486
    %685 = vmatpush2.bf16.msra.mxu0 %v485
    %686 = vmatprep.subr.bf16.mxu0 %v478
    %687 = vmatpush2.bf16.msra.mxu0 %v477
    %688 = vmatprep.subr.bf16.mxu0 %v470
    %689 = vmatpush2.bf16.msra.mxu0 %v469
    %690 = vmatprep.subr.bf16.mxu0 %v462
    %691 = vmatpush2.bf16.msra.mxu0 %v461
    %692 = vmatprep.subr.bf16.mxu0 %v454
    %693 = vmatpush2.bf16.msra.mxu0 %v453
    %694 = vmatprep.subr.bf16.mxu0 %v446
    %695 = vmatpush2.bf16.msra.mxu0 %v445
    %696 = vmatprep.subr.bf16.mxu0 %v438
    %697 = vmatpush2.bf16.msra.mxu0 %v437
    %698 = vmatprep.mubr.bf16.mxu0 %v366
    %699 = vmatmul.mubr.bf16.gmra.mxu0 %v365
    %v700 = vpop.f32.mrf.mxu0
    %v701 = vadd.f32 %v524, %v700
    %v702 = vpop.f32.mrf.mxu0
    %v703 = vadd.f32 %v528, %v702
    %v704 = vpop.f32.mrf.mxu0
    %v705 = vadd.f32 %v524, %v704
    %v706 = vpop.f32.mrf.mxu0
    %v707 = vadd.f32 %v528, %v706
    %708 = vdwg.mxu0
    %709 = vst [vmem:[%s6] sm:$0xff] %v572
    %710 = vst [vmem:[%s6 + $0x8] sm:$0xff] %v574
    %711 = vst [vmem:[%s6 + $0x10] sm:$0xff] %v615
    %712 = vst [vmem:[%s6 + $0x18] sm:$0xff] %v617
    %713 = vst [vmem:[%s6 + $0x20] sm:$0xff] %v658
    %714 = vst [vmem:[%s6 + $0x28] sm:$0xff] %v660
    %715 = vst [vmem:[%s6 + $0x30] sm:$0xff] %v701
    %716 = vst [vmem:[%s6 + $0x38] sm:$0xff] %v703
    %717 = vst [vmem:[%s6 + $0x40] sm:$0xff] %v576
    %718 = vst [vmem:[%s6 + $0x48] sm:$0xff] %v578
    %719 = vst [vmem:[%s6 + $0x50] sm:$0xff] %v619
    %720 = vst [vmem:[%s6 + $0x58] sm:$0xff] %v621
    %721 = vst [vmem:[%s6 + $0x60] sm:$0xff] %v662
    %722 = vst [vmem:[%s6 + $0x68] sm:$0xff] %v664
    %723 = vst [vmem:[%s6 + $0x70] sm:$0xff] %v705
    %724 = vst [vmem:[%s6 + $0x78] sm:$0xff] %v707
    // Predicated region
    $region26: #{node_update_forward.8} parent=1 // pred_check
      _
    $region27: #{node_update_forward.8} parent=1 // pred_check_branch
      %726 = sbr.rel (0) target = $region29
    $region28: #{node_update_forward.8} parent=1 // pred_region
      _
    $region29: #{node_update_forward.8} parent=1 // pred_fallthru
      _
    // Predicated region
    $region30: #{node_update_forward.8} parent=1 // pred_check
      _
    $region31: #{node_update_forward.8} parent=1 // pred_check_branch
      %728 = sbr.rel (0) target = $region33
    $region32: #{node_update_forward.8} parent=1 // pred_region
      _
    $region33: #{node_update_forward.8} parent=1 // pred_fallthru
      _
    // Predicated region
    $region34: #{node_update_forward.8} parent=1 // pred_check
      _
    $region35: #{node_update_forward.8} parent=1 // pred_check_branch
      %730 = sbr.rel (0) target = $region37
    $region36: #{node_update_forward.8} parent=1 // pred_region
      _
    $region37: #{node_update_forward.8} parent=1 // pred_fallthru
      _
    // Predicated region
    $region38: #{node_update_forward.8} parent=1 // pred_check
      _
    $region39: #{node_update_forward.8} parent=1 // pred_check_branch
      %732 = sbr.rel (0) target = $region41
    $region40: #{node_update_forward.8} parent=1 // pred_region
      _
    $region41: #{node_update_forward.8} parent=1 // pred_fallthru
      _
    %733 = vsyncpa [#allocation3], 1

// kernel: node_update_forward.10
$region0: #{node_update_forward.10}
  #allocation0 [shape = 'u32[]', space=smem, size = 0x4, offset = 0x4, fixed_abs, tag = 'smem constant byte address 0x4 - core index']
  #allocation1 [shape = 'u32[144,128]{1,0:T(1,128)}', space=vmem, size = 0x12000, scoped, tag = 'internal scratch']
  %s0 = inlined_call_operand.vmem [shape: f32[2,8,1024], index: 0, kind: input, shape index: {}, may-alias: {0,1,2}]
  %s1 = inlined_call_operand.vmem [shape: f32[2,8,1024], index: 1, kind: input, shape index: {}, may-alias: {0,1,2}]
  %s2 = inlined_call_operand.vmem [shape: f32[2,8,1024], index: 2, kind: input, shape index: {}, may-alias: {0,1,2}]
  %s3 = inlined_call_operand.vmem [shape: bf16[2,8,8,8], index: 3, kind: input, shape index: {}]
  %s4 = inlined_call_operand.vmem [shape: f32[2,1,8], index: 4, kind: input, shape index: {}]
  %s5 = inlined_call_operand.vmem [shape: f32[2,8,256], index: 5, kind: output, shape index: {}]
  %s6 = sld [smem:[#allocation0]]
  $region53: #{node_update_forward.10} parent=0
    _
  %s8 = ssub.s32 1, %s6
  %s9 = scalar_select 0, %s8, %s6
  loop: start=0, step=1, limit=4
  $region2: #{node_update_forward.10} parent=0 // loop_pre_header
    _
  $region3: #{node_update_forward.10} parent=0 // loop_header
    %s11 = sphi 0, %s15
    %p12 = scmp.ge.s32.totalorder %s11, 4
    %s18 = sphi 0, %s30
    %s19 = sphi 0, %s26
    %s20 = sphi 0, %s18
    %s21 = sphi 0, %s19
    %s22 = sphi 0, %s20
    %s23 = sphi 0, %s21
    %s35 = sphi 0, %s37
    %s38 = sphi 0, %s35
    %s39 = sphi 0, %s38
    %s55 = sphi 0, %s39
    %s61 = sphi 0, %s63
    %s64 = sphi 0, %s61
    %s65 = sphi 0, %s64
    %s81 = sphi 0, %s65
    %s87 = sphi 0, %s89
    %s90 = sphi 0, %s87
    %s91 = sphi 0, %s90
    %s107 = sphi 0, %s91
    %s115 = sphi 0, %s117
    %s118 = sphi 0, %s115
    %s119 = sphi 0, %s118
    %s135 = sphi 0, %s119
    %s141 = sphi 0, %s143
    %s144 = sphi 0, %s141
    %s145 = sphi 0, %s144
    %s161 = sphi 0, %s145
    %s169 = sphi 0, %s171
    %s172 = sphi 0, %s169
    %s173 = sphi 0, %s172
    %s189 = sphi 0, %s173
  $region4: #{node_update_forward.10} parent=0 // loop_header_branch
    %14 = sbr.rel (%p12) target = $region8
  $region5: #{node_update_forward.10} parent=0 // loop_body
    %s16 = ssub.s32 %s11, 1
    %s17 = ssub.s32 %s11, 2
    %s24 = sadd.s32 1, %s19
    %p25 = scmp.ge.s32.totalorder %s24, 1
    %s26 = scalar_select %p25, 0, %s24
    %s27 = sadd.s32 1, %s18
    %s28 = scalar_select %p25, %s27, %s18
    %p29 = scmp.ge.s32.totalorder %s28, 2
    %s30 = scalar_select %p29, 0, %s28
    %s31 = ssub.s32 %s18, %s30
    %s32 = ssub.s32 %s19, %s26
    %s33 = sor.u32 %s31, %s32
    %p34 = scmp.eq.s32.totalorder %s33, 0
    %s36 = sadd.s32 %s35, 1
    %s37 = scalar_select %p34, %s35, %s36
    %p40 = pneg %p34
    %p41 = scmp.eq.s32.totalorder %s11, 1
    %p42 = por %p40, %p41
    %p43 = scmp.ne.s32.totalorder %s35, %s38
    %p44 = scmp.eq.s32.totalorder %s11, 0
    %p45 = por %p43, %p44
    %p46 = scmp.ne.s32.totalorder %s35, %s38
    %p47 = scmp.eq.s32.totalorder %s16, 1
    %p48 = por %p46, %p47
    %p49 = scmp.ne.s32.totalorder %s38, %s39
    %p50 = scmp.eq.s32.totalorder %s16, 0
    %p51 = por %p49, %p50
    %p52 = scmp.ne.s32.totalorder %s38, %s39
    %p53 = scmp.eq.s32.totalorder %s17, 1
    %p54 = por %p52, %p53
    %p56 = scmp.ne.s32.totalorder %s39, %s55
    %p57 = scmp.eq.s32.totalorder %s17, 0
    %p58 = por %p56, %p57
    %s59 = ssub.s32 %s18, %s30
    %p60 = scmp.eq.s32.totalorder %s59, 0
    %s62 = sadd.s32 %s61, 1
    %s63 = scalar_select %p60, %s61, %s62
    %p66 = pneg %p60
    %p67 = scmp.eq.s32.totalorder %s11, 1
    %p68 = por %p66, %p67
    %p69 = scmp.ne.s32.totalorder %s61, %s64
    %p70 = scmp.eq.s32.totalorder %s11, 0
    %p71 = por %p69, %p70
    %p72 = scmp.ne.s32.totalorder %s61, %s64
    %p73 = scmp.eq.s32.totalorder %s16, 1
    %p74 = por %p72, %p73
    %p75 = scmp.ne.s32.totalorder %s64, %s65
    %p76 = scmp.eq.s32.totalorder %s16, 0
    %p77 = por %p75, %p76
    %p78 = scmp.ne.s32.totalorder %s64, %s65
    %p79 = scmp.eq.s32.totalorder %s17, 1
    %p80 = por %p78, %p79
    %p82 = scmp.ne.s32.totalorder %s65, %s81
    %p83 = scmp.eq.s32.totalorder %s17, 0
    %p84 = por %p82, %p83
    %s85 = ssub.s32 %s18, %s30
    %p86 = scmp.eq.s32.totalorder %s85, 0
    %s88 = sadd.s32 %s87, 1
    %s89 = scalar_select %p86, %s87, %s88
    %p92 = pneg %p86
    %p93 = scmp.eq.s32.totalorder %s11, 1
    %p94 = por %p92, %p93
    %p95 = scmp.ne.s32.totalorder %s87, %s90
    %p96 = scmp.eq.s32.totalorder %s11, 0
    %p97 = por %p95, %p96
    %p98 = scmp.ne.s32.totalorder %s87, %s90
    %p99 = scmp.eq.s32.totalorder %s16, 1
    %p100 = por %p98, %p99
    %p101 = scmp.ne.s32.totalorder %s90, %s91
    %p102 = scmp.eq.s32.totalorder %s16, 0
    %p103 = por %p101, %p102
    %p104 = scmp.ne.s32.totalorder %s90, %s91
    %p105 = scmp.eq.s32.totalorder %s17, 1
    %p106 = por %p104, %p105
    %p108 = scmp.ne.s32.totalorder %s91, %s107
    %p109 = scmp.eq.s32.totalorder %s17, 0
    %p110 = por %p108, %p109
    %s111 = ssub.s32 %s18, %s30
    %s112 = ssub.s32 %s19, %s26
    %s113 = sor.u32 %s111, %s112
    %p114 = scmp.eq.s32.totalorder %s113, 0
    %s116 = sadd.s32 %s115, 1
    %s117 = scalar_select %p114, %s115, %s116
    %p120 = pneg %p114
    %p121 = scmp.eq.s32.totalorder %s11, 1
    %p122 = por %p120, %p121
    %p123 = scmp.ne.s32.totalorder %s115, %s118
    %p124 = scmp.eq.s32.totalorder %s11, 0
    %p125 = por %p123, %p124
    %p126 = scmp.ne.s32.totalorder %s115, %s118
    %p127 = scmp.eq.s32.totalorder %s16, 1
    %p128 = por %p126, %p127
    %p129 = scmp.ne.s32.totalorder %s118, %s119
    %p130 = scmp.eq.s32.totalorder %s16, 0
    %p131 = por %p129, %p130
    %p132 = scmp.ne.s32.totalorder %s118, %s119
    %p133 = scmp.eq.s32.totalorder %s17, 1
    %p134 = por %p132, %p133
    %p136 = scmp.ne.s32.totalorder %s119, %s135
    %p137 = scmp.eq.s32.totalorder %s17, 0
    %p138 = por %p136, %p137
    %s139 = ssub.s32 %s18, %s30
    %p140 = scmp.eq.s32.totalorder %s139, 0
    %s142 = sadd.s32 %s141, 1
    %s143 = scalar_select %p140, %s141, %s142
    %p146 = pneg %p140
    %p147 = scmp.eq.s32.totalorder %s11, 1
    %p148 = por %p146, %p147
    %p149 = scmp.ne.s32.totalorder %s141, %s144
    %p150 = scmp.eq.s32.totalorder %s11, 0
    %p151 = por %p149, %p150
    %p152 = scmp.ne.s32.totalorder %s141, %s144
    %p153 = scmp.eq.s32.totalorder %s16, 1
    %p154 = por %p152, %p153
    %p155 = scmp.ne.s32.totalorder %s144, %s145
    %p156 = scmp.eq.s32.totalorder %s16, 0
    %p157 = por %p155, %p156
    %p158 = scmp.ne.s32.totalorder %s144, %s145
    %p159 = scmp.eq.s32.totalorder %s17, 1
    %p160 = por %p158, %p159
    %p162 = scmp.ne.s32.totalorder %s145, %s161
    %p163 = scmp.eq.s32.totalorder %s17, 0
    %p164 = por %p162, %p163
    %s165 = ssub.s32 %s18, %s30
    %s166 = ssub.s32 %s19, %s26
    %s167 = sor.u32 %s165, %s166
    %p168 = scmp.eq.s32.totalorder %s167, 0
    %s170 = sadd.s32 %s169, 1
    %s171 = scalar_select %p168, %s169, %s170
    %p174 = pneg %p168
    %p175 = scmp.eq.s32.totalorder %s11, 1
    %p176 = por %p174, %p175
    %p177 = scmp.ne.s32.totalorder %s169, %s172
    %p178 = scmp.eq.s32.totalorder %s11, 0
    %p179 = por %p177, %p178
    %p180 = scmp.ne.s32.totalorder %s169, %s172
    %p181 = scmp.eq.s32.totalorder %s16, 1
    %p182 = por %p180, %p181
    %p183 = scmp.ne.s32.totalorder %s172, %s173
    %p184 = scmp.eq.s32.totalorder %s16, 0
    %p185 = por %p183, %p184
    %p186 = scmp.ne.s32.totalorder %s172, %s173
    %p187 = scmp.eq.s32.totalorder %s17, 1
    %p188 = por %p186, %p187
    %p190 = scmp.ne.s32.totalorder %s173, %s189
    %p191 = scmp.eq.s32.totalorder %s17, 0
    %p192 = por %p190, %p191
    %p193 = scmp.le.s32.totalorder 1, %s11
    %p194 = scmp.lt.s32.totalorder %s11, 3
    %p195 = pnand %p193, %p194
    %p196 = pneg %p195
    // Predicated region
    $region9: #{node_update_forward.10} parent=5 // pred_check
      _
    $region10: #{node_update_forward.10} parent=5 // pred_check_branch
      %198 = sbr.rel (%p195) target = $region12
    $region11: #{node_update_forward.10} parent=5 // pred_region
      %s199 = ssub.s32 %s11, 1
    $region12: #{node_update_forward.10} parent=5 // pred_fallthru
      _
    %p200 = scmp.lt.s32.totalorder %s11, 2
    // Predicated region
    $region13: #{node_update_forward.10} parent=5 // pred_check
      %p201 = pneg %p200
    $region14: #{node_update_forward.10} parent=5 // pred_check_branch
      %203 = sbr.rel (%p201) target = $region16
    $region15: #{node_update_forward.10} parent=5 // pred_region
      // Predicated region
      $region17: #{node_update_forward.10} parent=15 // pred_check
        %p204 = pneg %p45
      $region18: #{node_update_forward.10} parent=15 // pred_check_branch
        %206 = sbr.rel (%p204) target = $region20
      $region19: #{node_update_forward.10} parent=15 // pred_region
        %p207 = scmp.lt.s32.totalorder %s18, 1
        %s208 = scalar_select %p207, %s18, 1
        %p209 = scmp.lt.s32.totalorder %s19, 0
        %s210 = scalar_select %p209, %s19, 0
        %s211 = smul.addr %s210, 8
        %s212 = smul.addr %s208, 8
        %s213 = sadd.s32 %s211, %s212
        %s214 = smul.addr %s213, 8
        %s215 = scalar_lea.vmem %s0, %s214
      $region20: #{node_update_forward.10} parent=15 // pred_fallthru
        _
      // Predicated region
      $region21: #{node_update_forward.10} parent=15 // pred_check
        %p216 = pneg %p71
      $region22: #{node_update_forward.10} parent=15 // pred_check_branch
        %218 = sbr.rel (%p216) target = $region24
      $region23: #{node_update_forward.10} parent=15 // pred_region
        %p219 = scmp.lt.s32.totalorder %s18, 1
        %s220 = scalar_select %p219, %s18, 1
        %s221 = smul.addr %s220, 8
        %s222 = sadd.s32 2, %s221
        %s223 = smul.addr %s222, 8
        %s224 = scalar_lea.vmem %s1, %s223
      $region24: #{node_update_forward.10} parent=15 // pred_fallthru
        _
      // Predicated region
      $region25: #{node_update_forward.10} parent=15 // pred_check
        %p225 = pneg %p97
      $region26: #{node_update_forward.10} parent=15 // pred_check_branch
        %227 = sbr.rel (%p225) target = $region28
      $region27: #{node_update_forward.10} parent=15 // pred_region
        %p228 = scmp.lt.s32.totalorder %s18, 1
        %s229 = scalar_select %p228, %s18, 1
        %s230 = smul.addr %s229, 8
        %s231 = sadd.s32 4, %s230
        %s232 = smul.addr %s231, 8
        %s233 = scalar_lea.vmem %s2, %s232
      $region28: #{node_update_forward.10} parent=15 // pred_fallthru
        _
      // Predicated region
      $region29: #{node_update_forward.10} parent=15 // pred_check
        %p234 = pneg %p125
      $region30: #{node_update_forward.10} parent=15 // pred_check_branch
        %236 = sbr.rel (%p234) target = $region32
      $region31: #{node_update_forward.10} parent=15 // pred_region
        %p237 = scmp.lt.s32.totalorder %s18, 1
        %s238 = scalar_select %p237, %s18, 1
        %p239 = scmp.lt.s32.totalorder %s19, 0
        %s240 = scalar_select %p239, %s19, 0
        %s241 = smul.addr %s238, 8
        %s242 = sadd.s32 %s240, %s241
        %s243 = smul.addr %s242, 4
        %s244 = scalar_lea.vmem %s3, %s243
      $region32: #{node_update_forward.10} parent=15 // pred_fallthru
        _
      // Predicated region
      $region33: #{node_update_forward.10} parent=15 // pred_check
        %p245 = pneg %p151
      $region34: #{node_update_forward.10} parent=15 // pred_check_branch
        %247 = sbr.rel (%p245) target = $region36
      $region35: #{node_update_forward.10} parent=15 // pred_region
        %p248 = scmp.lt.s32.totalorder %s18, 1
        %s249 = scalar_select %p248, %s18, 1
        %s250 = scalar_lea.vmem %s4, %s249
      $region36: #{node_update_forward.10} parent=15 // pred_fallthru
        _
    $region16: #{node_update_forward.10} parent=5 // pred_fallthru
      _
    %p251 = scmp.le.s32.totalorder 1, %s11
    %p252 = scmp.lt.s32.totalorder %s11, 3
    %p253 = pnand %p251, %p252
    %p254 = pneg %p253
    // Predicated region
    $region37: #{node_update_forward.10} parent=5 // pred_check
      _
    $region38: #{node_update_forward.10} parent=5 // pred_check_branch
      %256 = sbr.rel (%p253) target = $region40
    $region39: #{node_update_forward.10} parent=5 // pred_region
      %s257 = ssub.s32 %s11, 1
      %p258 = scmp.lt.s32.totalorder %s20, 1
      %s259 = scalar_select %p258, %s20, 1
      %p260 = scmp.lt.s32.totalorder %s21, 0
      %s261 = scalar_select %p260, %s21, 0
      %s262 = smul.addr %s261, 8
      %s263 = smul.addr %s259, 8
      %s264 = sadd.s32 %s262, %s263
      %s265 = smul.addr %s264, 8
      %s266 = scalar_lea.vmem %s0, %s265
      %p267 = pneg %p51
      %p268 = pneg %p48
      %p269 = scmp.lt.s32.totalorder %s20, 1
      %s270 = scalar_select %p269, %s20, 1
      %s271 = smul.addr %s270, 8
      %s272 = sadd.s32 2, %s271
      %s273 = smul.addr %s272, 8
      %s274 = scalar_lea.vmem %s1, %s273
      %p275 = pneg %p77
      %p276 = pneg %p74
      %p277 = scmp.lt.s32.totalorder %s20, 1
      %s278 = scalar_select %p277, %s20, 1
      %s279 = smul.addr %s278, 8
      %s280 = sadd.s32 4, %s279
      %s281 = smul.addr %s280, 8
      %s282 = scalar_lea.vmem %s2, %s281
      %p283 = pneg %p103
      %p284 = pneg %p100
      %p285 = scmp.lt.s32.totalorder %s20, 1
      %s286 = scalar_select %p285, %s20, 1
      %p287 = scmp.lt.s32.totalorder %s21, 0
      %s288 = scalar_select %p287, %s21, 0
      %s289 = smul.addr %s286, 8
      %s290 = sadd.s32 %s288, %s289
      %s291 = smul.addr %s290, 4
      %s292 = scalar_lea.vmem %s3, %s291
      %p293 = pneg %p131
      %p294 = pneg %p128
      %p295 = scmp.lt.s32.totalorder %s20, 1
      %s296 = scalar_select %p295, %s20, 1
      %s297 = scalar_lea.vmem %s4, %s296
      %p298 = pneg %p157
      %p299 = pneg %p154
      %p300 = pneg %p185
      %p301 = pneg %p182
      %p302 = scmp.lt.s32.totalorder %s20, 1
      %s303 = scalar_select %p302, %s20, 1
      %p304 = scmp.lt.s32.totalorder %s21, 0
      %s305 = scalar_select %p304, %s21, 0
      %s306 = smul.addr %s305, 2
      %s307 = smul.addr %s303, 2
      %s308 = sadd.s32 %s306, %s307
      %s309 = smul.addr %s308, 8
      %s310 = scalar_lea.vmem %s5, %s309
      %p311 = scmp.lt.s32.totalorder %s20, 1
      %s312 = scalar_select %p311, %s20, 1
      %p313 = scmp.lt.s32.totalorder %s21, 0
      %s314 = scalar_select %p313, %s21, 0
      %s315 = smul.addr %s314, 8
      %s316 = smul.addr %s312, 8
      %s317 = sadd.s32 %s315, %s316
      %s318 = smul.addr %s317, 8
      %s319 = scalar_lea.vmem %s0, %s318
      %p320 = scmp.lt.s32.totalorder %s20, 1
      %s321 = scalar_select %p320, %s20, 1
      %s322 = smul.addr %s321, 8
      %s323 = sadd.s32 2, %s322
      %s324 = smul.addr %s323, 8
      %s325 = scalar_lea.vmem %s1, %s324
      %p326 = scmp.lt.s32.totalorder %s20, 1
      %s327 = scalar_select %p326, %s20, 1
      %s328 = smul.addr %s327, 8
      %s329 = sadd.s32 4, %s328
      %s330 = smul.addr %s329, 8
      %s331 = scalar_lea.vmem %s2, %s330
      %p332 = scmp.lt.s32.totalorder %s20, 1
      %s333 = scalar_select %p332, %s20, 1
      %p334 = scmp.lt.s32.totalorder %s21, 0
      %s335 = scalar_select %p334, %s21, 0
      %s336 = smul.addr %s333, 8
      %s337 = sadd.s32 %s335, %s336
      %s338 = smul.addr %s337, 4
      %s339 = scalar_lea.vmem %s3, %s338
      %p340 = scmp.lt.s32.totalorder %s20, 1
      %s341 = scalar_select %p340, %s20, 1
      %s342 = scalar_lea.vmem %s4, %s341
      %p343 = scmp.lt.s32.totalorder %s20, 1
      %s344 = scalar_select %p343, %s20, 1
      %p345 = scmp.lt.s32.totalorder %s21, 0
      %s346 = scalar_select %p345, %s21, 0
      %s347 = smul.addr %s346, 2
      %s348 = smul.addr %s344, 2
      %s349 = sadd.s32 %s347, %s348
      %s350 = smul.addr %s349, 8
      %s351 = scalar_lea.vmem %s5, %s350
      %v353 = vld [vmem:[%s319] sm:$0xff]
      %v354 = vld [vmem:[%s319 + $0x8] sm:$0xff]
      %v355 = vld [vmem:[%s325] sm:$0xff]
      %v356 = vld [vmem:[%s325 + $0x8] sm:$0xff]
      %v357 = vld [vmem:[%s331] sm:$0xff]
      %v358 = vld [vmem:[%s331 + $0x8] sm:$0xff]
      %v359 = vld [vmem:[%s342] sm:$0x1]
      %v360 = vsub.f32 %v359, 1.0
      %v361 = vmul.f32 %v360, 1e+09
      %v362 = vpack.c.bf16 %v353, %v353
      %v363 = vpack.c.bf16 %v355, %v355
      %v364 = vld [vmem:[%s339] sm:$0xf]
      %v365 = vunpack.c.l.bf16 %v364
      %vm366 = vcmask 261120
      %v368 = vsel %vm366, %v362, 0
      %v371 = vsel %vm366, %v363, 0
      %373 = vmatprep.subr.bf16.mxu0 0
      %374 = vmatpush1.bf16.xpose.msra.mxu0 0
      %375 = vmatprep.subr.bf16.mxu0 0
      %376 = vmatpush1.bf16.xpose.msra.mxu0 0
      %377 = vmatprep.subr.bf16.mxu0 0
      %378 = vmatpush1.bf16.xpose.msra.mxu0 0
      %379 = vmatprep.subr.bf16.mxu0 0
      %380 = vmatpush1.bf16.xpose.msra.mxu0 0
      %381 = vmatprep.subr.bf16.mxu0 0
      %382 = vmatpush1.bf16.xpose.msra.mxu0 0
      %383 = vmatprep.subr.bf16.mxu0 0
      %384 = vmatpush1.bf16.xpose.msra.mxu0 0
      %385 = vmatprep.subr.bf16.mxu0 0
      %386 = vmatpush1.bf16.xpose.msra.mxu0 0
      %387 = vmatprep.subr.bf16.mxu0 0
      %388 = vmatpush1.bf16.xpose.msra.mxu0 %v371
      %389 = vmatprep.subr.bf16.mxu0 0
      %390 = vmatpush2.bf16.xpose.msra.mxu0 0
      %391 = vmatprep.subr.bf16.mxu0 0
      %392 = vmatpush2.bf16.xpose.msra.mxu0 0
      %393 = vmatprep.subr.bf16.mxu0 0
      %394 = vmatpush2.bf16.xpose.msra.mxu0 0
      %395 = vmatprep.subr.bf16.mxu0 0
      %396 = vmatpush2.bf16.xpose.msra.mxu0 0
      %397 = vmatprep.subr.bf16.mxu0 0
      %398 = vmatpush2.bf16.xpose.msra.mxu0 0
      %399 = vmatprep.subr.bf16.mxu0 0
      %400 = vmatpush2.bf16.xpose.msra.mxu0 0
      %401 = vmatprep.subr.bf16.mxu0 0
      %402 = vmatpush2.bf16.xpose.msra.mxu0 0
      %403 = vmatprep.subr.bf16.mxu0 0
      %404 = vmatpush2.bf16.xpose.msra.mxu0 0
      %405 = vmatprep.mubr.bf16.mxu0 0
      %406 = vmatmul.mubr.bf16.gmra.mxu0 %v368
      %v407 = vpop.f32.mrf.mxu0
      %v408 = vadd.f32 %v365, %v407
      %v409 = vpop.f32.mrf.mxu0
      %v410 = vpop.f32.mrf.mxu0
      %v411 = vpop.f32.mrf.mxu0
      %412 = vdwg.mxu0
      %v414 = vlaneseq
      %v415 = vshrl.u32 %v414, 7
      %v416 = vsub.s32 0, %v415
      %v417 = vrot.slane %v361, %v416
      %v419 = vadd.f32 %v408, %v417
      %vm420 = vcmask 64512
      %v421 = vsel %vm420, %v419, -inf
      %422 = vmax.xlane.f32.xlu0 %v421
      %v423 = vpop.xlane.xlu0 %422
      %v424 = vsub.f32 %v419, %v423
      %v425 = vmul.f32 %v424, 1.442695
      %v426 = vpow.pop %v425
      %v427 = vsel %vm420, %v426, 0.0
      %428 = vadd.xlane.f32.xlu0 %v427
      %v429 = vpop.xlane.xlu0 %428
      %v430 = vrcp.pop %v429
      %v431 = vmul.f32 %v426, %v430
      %v432 = vpack.c.bf16 %v431, %v431
      %v433 = vpack.c.bf16 %v357, %v357
      %v435 = vsel %vm420, %v432, 0
      %vm437 = vcmask 1043456
      %v439 = vsel %vm437, %v433, 0
      %441 = vmatprep.subr.bf16.mxu0 0
      %442 = vmatpush1.bf16.msra.mxu0 0
      %443 = vmatprep.subr.bf16.mxu0 0
      %444 = vmatpush1.bf16.msra.mxu0 0
      %445 = vmatprep.subr.bf16.mxu0 0
      %446 = vmatpush1.bf16.msra.mxu0 0
      %447 = vmatprep.subr.bf16.mxu0 0
      %448 = vmatpush1.bf16.msra.mxu0 0
      %449 = vmatprep.subr.bf16.mxu0 0
      %450 = vmatpush1.bf16.msra.mxu0 0
      %451 = vmatprep.subr.bf16.mxu0 0
      %452 = vmatpush1.bf16.msra.mxu0 0
      %453 = vmatprep.subr.bf16.mxu0 0
      %454 = vmatpush1.bf16.msra.mxu0 0
      %455 = vmatprep.subr.bf16.mxu0 0
      %456 = vmatpush1.bf16.msra.mxu0 %v439
      %457 = vmatprep.subr.bf16.mxu0 0
      %458 = vmatpush2.bf16.msra.mxu0 0
      %459 = vmatprep.subr.bf16.mxu0 0
      %460 = vmatpush2.bf16.msra.mxu0 0
      %461 = vmatprep.subr.bf16.mxu0 0
      %462 = vmatpush2.bf16.msra.mxu0 0
      %463 = vmatprep.subr.bf16.mxu0 0
      %464 = vmatpush2.bf16.msra.mxu0 0
      %465 = vmatprep.subr.bf16.mxu0 0
      %466 = vmatpush2.bf16.msra.mxu0 0
      %467 = vmatprep.subr.bf16.mxu0 0
      %468 = vmatpush2.bf16.msra.mxu0 0
      %469 = vmatprep.subr.bf16.mxu0 0
      %470 = vmatpush2.bf16.msra.mxu0 0
      %471 = vmatprep.subr.bf16.mxu0 0
      %472 = vmatpush2.bf16.msra.mxu0 0
      %473 = vmatprep.mubr.bf16.mxu0 0
      %474 = vmatmul.mubr.bf16.gmra.mxu0 %v435
      %v475 = vpop.f32.mrf.mxu0
      %v476 = vadd.f32 0.0, %v475
      %v477 = vpop.f32.mrf.mxu0
      %v478 = vpop.f32.mrf.mxu0
      %v479 = vpop.f32.mrf.mxu0
      %480 = vdwg.mxu0
      %s481 = scalar_lea.vmem %s339, 4
      %v482 = vld [vmem:[%s481] sm:$0xf]
      %v483 = vunpack.c.l.bf16 %v482
      %485 = vrot.lane.b32.xlu0 %v362, 96
      %v486 = vpop.permute.xlu0 %485
      %488 = vrot.lane.b32.xlu0 %v363, 96
      %v489 = vpop.permute.xlu0 %488
      %v491 = vsel %vm366, %v486, 0
      %v494 = vsel %vm366, %v489, 0
      %496 = vmatprep.subr.bf16.mxu0 0
      %497 = vmatpush1.bf16.xpose.msra.mxu0 0
      %498 = vmatprep.subr.bf16.mxu0 0
      %499 = vmatpush1.bf16.xpose.msra.mxu0 0
      %500 = vmatprep.subr.bf16.mxu0 0
      %501 = vmatpush1.bf16.xpose.msra.mxu0 0
      %502 = vmatprep.subr.bf16.mxu0 0
      %503 = vmatpush1.bf16.xpose.msra.mxu0 0
      %504 = vmatprep.subr.bf16.mxu0 0
      %505 = vmatpush1.bf16.xpose.msra.mxu0 0
      %506 = vmatprep.subr.bf16.mxu0 0
      %507 = vmatpush1.bf16.xpose.msra.mxu0 0
      %508 = vmatprep.subr.bf16.mxu0 0
      %509 = vmatpush1.bf16.xpose.msra.mxu0 0
      %510 = vmatprep.subr.bf16.mxu0 0
      %511 = vmatpush1.bf16.xpose.msra.mxu0 %v494
      %512 = vmatprep.subr.bf16.mxu0 0
      %513 = vmatpush2.bf16.xpose.msra.mxu0 0
      %514 = vmatprep.subr.bf16.mxu0 0
      %515 = vmatpush2.bf16.xpose.msra.mxu0 0
      %516 = vmatprep.subr.bf16.mxu0 0
      %517 = vmatpush2.bf16.xpose.msra.mxu0 0
      %518 = vmatprep.subr.bf16.mxu0 0
      %519 = vmatpush2.bf16.xpose.msra.mxu0 0
      %520 = vmatprep.subr.bf16.mxu0 0
      %521 = vmatpush2.bf16.xpose.msra.mxu0 0
      %522 = vmatprep.subr.bf16.mxu0 0
      %523 = vmatpush2.bf16.xpose.msra.mxu0 0
      %524 = vmatprep.subr.bf16.mxu0 0
      %525 = vmatpush2.bf16.xpose.msra.mxu0 0
      %526 = vmatprep.subr.bf16.mxu0 0
      %527 = vmatpush2.bf16.xpose.msra.mxu0 0
      %528 = vmatprep.mubr.bf16.mxu0 0
      %529 = vmatmul.mubr.bf16.gmra.mxu0 %v491
      %v530 = vpop.f32.mrf.mxu0
      %v531 = vadd.f32 %v483, %v530
      %v532 = vpop.f32.mrf.mxu0
      %v533 = vpop.f32.mrf.mxu0
      %v534 = vpop.f32.mrf.mxu0
      %535 = vdwg.mxu0
      %v536 = vadd.f32 %v531, %v417
      %v537 = vsel %vm420, %v536, -inf
      %538 = vmax.xlane.f32.xlu0 %v537
      %v539 = vpop.xlane.xlu0 %538
      %v540 = vsub.f32 %v536, %v539
      %v541 = vmul.f32 %v540, 1.442695
      %v542 = vpow.pop %v541
      %v543 = vsel %vm420, %v542, 0.0
      %544 = vadd.xlane.f32.xlu0 %v543
      %v545 = vpop.xlane.xlu0 %544
      %v546 = vrcp.pop %v545
      %v547 = vmul.f32 %v542, %v546
      %v548 = vpack.c.bf16 %v547, %v547
      %550 = vrot.lane.b32.xlu0 %v433, 96
      %v551 = vpop.permute.xlu0 %550
      %v553 = vsel %vm420, %v548, 0
      %v556 = vsel %vm437, %v551, 0
      %558 = vmatprep.subr.bf16.mxu0 0
      %559 = vmatpush1.bf16.msra.mxu0 0
      %560 = vmatprep.subr.bf16.mxu0 0
      %561 = vmatpush1.bf16.msra.mxu0 0
      %562 = vmatprep.subr.bf16.mxu0 0
      %563 = vmatpush1.bf16.msra.mxu0 0
      %564 = vmatprep.subr.bf16.mxu0 0
      %565 = vmatpush1.bf16.msra.mxu0 0
      %566 = vmatprep.subr.bf16.mxu0 0
      %567 = vmatpush1.bf16.msra.mxu0 0
      %568 = vmatprep.subr.bf16.mxu0 0
      %569 = vmatpush1.bf16.msra.mxu0 0
      %570 = vmatprep.subr.bf16.mxu0 0
      %571 = vmatpush1.bf16.msra.mxu0 0
      %572 = vmatprep.subr.bf16.mxu0 0
      %573 = vmatpush1.bf16.msra.mxu0 %v556
      %574 = vmatprep.subr.bf16.mxu0 0
      %575 = vmatpush2.bf16.msra.mxu0 0
      %576 = vmatprep.subr.bf16.mxu0 0
      %577 = vmatpush2.bf16.msra.mxu0 0
      %578 = vmatprep.subr.bf16.mxu0 0
      %579 = vmatpush2.bf16.msra.mxu0 0
      %580 = vmatprep.subr.bf16.mxu0 0
      %581 = vmatpush2.bf16.msra.mxu0 0
      %582 = vmatprep.subr.bf16.mxu0 0
      %583 = vmatpush2.bf16.msra.mxu0 0
      %584 = vmatprep.subr.bf16.mxu0 0
      %585 = vmatpush2.bf16.msra.mxu0 0
      %586 = vmatprep.subr.bf16.mxu0 0
      %587 = vmatpush2.bf16.msra.mxu0 0
      %588 = vmatprep.subr.bf16.mxu0 0
      %589 = vmatpush2.bf16.msra.mxu0 0
      %590 = vmatprep.mubr.bf16.mxu0 0
      %591 = vmatmul.mubr.bf16.gmra.mxu0 %v553
      %v592 = vpop.f32.mrf.mxu0
      %v593 = vadd.f32 0.0, %v592
      %v594 = vpop.f32.mrf.mxu0
      %v595 = vpop.f32.mrf.mxu0
      %v596 = vpop.f32.mrf.mxu0
      %597 = vdwg.mxu0
      %s598 = scalar_lea.vmem %s339, 8
      %v599 = vld [vmem:[%s598] sm:$0xf]
      %v600 = vunpack.c.l.bf16 %v599
      %601 = vrot.lane.b32.xlu0 %v362, 64
      %v602 = vpop.permute.xlu0 %601
      %603 = vrot.lane.b32.xlu0 %v363, 64
      %v604 = vpop.permute.xlu0 %603
      %v606 = vsel %vm366, %v602, 0
      %v609 = vsel %vm366, %v604, 0
      %611 = vmatprep.subr.bf16.mxu0 0
      %612 = vmatpush1.bf16.xpose.msra.mxu0 0
      %613 = vmatprep.subr.bf16.mxu0 0
      %614 = vmatpush1.bf16.xpose.msra.mxu0 0
      %615 = vmatprep.subr.bf16.mxu0 0
      %616 = vmatpush1.bf16.xpose.msra.mxu0 0
      %617 = vmatprep.subr.bf16.mxu0 0
      %618 = vmatpush1.bf16.xpose.msra.mxu0 0
      %619 = vmatprep.subr.bf16.mxu0 0
      %620 = vmatpush1.bf16.xpose.msra.mxu0 0
      %621 = vmatprep.subr.bf16.mxu0 0
      %622 = vmatpush1.bf16.xpose.msra.mxu0 0
      %623 = vmatprep.subr.bf16.mxu0 0
      %624 = vmatpush1.bf16.xpose.msra.mxu0 0
      %625 = vmatprep.subr.bf16.mxu0 0
      %626 = vmatpush1.bf16.xpose.msra.mxu0 %v609
      %627 = vmatprep.subr.bf16.mxu0 0
      %628 = vmatpush2.bf16.xpose.msra.mxu0 0
      %629 = vmatprep.subr.bf16.mxu0 0
      %630 = vmatpush2.bf16.xpose.msra.mxu0 0
      %631 = vmatprep.subr.bf16.mxu0 0
      %632 = vmatpush2.bf16.xpose.msra.mxu0 0
      %633 = vmatprep.subr.bf16.mxu0 0
      %634 = vmatpush2.bf16.xpose.msra.mxu0 0
      %635 = vmatprep.subr.bf16.mxu0 0
      %636 = vmatpush2.bf16.xpose.msra.mxu0 0
      %637 = vmatprep.subr.bf16.mxu0 0
      %638 = vmatpush2.bf16.xpose.msra.mxu0 0
      %639 = vmatprep.subr.bf16.mxu0 0
      %640 = vmatpush2.bf16.xpose.msra.mxu0 0
      %641 = vmatprep.subr.bf16.mxu0 0
      %642 = vmatpush2.bf16.xpose.msra.mxu0 0
      %643 = vmatprep.mubr.bf16.mxu0 0
      %644 = vmatmul.mubr.bf16.gmra.mxu0 %v606
      %v645 = vpop.f32.mrf.mxu0
      %v646 = vadd.f32 %v600, %v645
      %v647 = vpop.f32.mrf.mxu0
      %v648 = vpop.f32.mrf.mxu0
      %v649 = vpop.f32.mrf.mxu0
      %650 = vdwg.mxu0
      %v651 = vadd.f32 %v646, %v417
      %v652 = vsel %vm420, %v651, -inf
      %653 = vmax.xlane.f32.xlu0 %v652
      %v654 = vpop.xlane.xlu0 %653
      %v655 = vsub.f32 %v651, %v654
      %v656 = vmul.f32 %v655, 1.442695
      %v657 = vpow.pop %v656
      %v658 = vsel %vm420, %v657, 0.0
      %659 = vadd.xlane.f32.xlu0 %v658
      %v660 = vpop.xlane.xlu0 %659
      %v661 = vrcp.pop %v660
      %v662 = vmul.f32 %v657, %v661
      %v663 = vpack.c.bf16 %v662, %v662
      %664 = vrot.lane.b32.xlu0 %v433, 64
      %v665 = vpop.permute.xlu0 %664
      %v667 = vsel %vm420, %v663, 0
      %v670 = vsel %vm437, %v665, 0
      %672 = vmatprep.subr.bf16.mxu0 0
      %673 = vmatpush1.bf16.msra.mxu0 0
      %674 = vmatprep.subr.bf16.mxu0 0
      %675 = vmatpush1.bf16.msra.mxu0 0
      %676 = vmatprep.subr.bf16.mxu0 0
      %677 = vmatpush1.bf16.msra.mxu0 0
      %678 = vmatprep.subr.bf16.mxu0 0
      %679 = vmatpush1.bf16.msra.mxu0 0
      %680 = vmatprep.subr.bf16.mxu0 0
      %681 = vmatpush1.bf16.msra.mxu0 0
      %682 = vmatprep.subr.bf16.mxu0 0
      %683 = vmatpush1.bf16.msra.mxu0 0
      %684 = vmatprep.subr.bf16.mxu0 0
      %685 = vmatpush1.bf16.msra.mxu0 0
      %686 = vmatprep.subr.bf16.mxu0 0
      %687 = vmatpush1.bf16.msra.mxu0 %v670
      %688 = vmatprep.subr.bf16.mxu0 0
      %689 = vmatpush2.bf16.msra.mxu0 0
      %690 = vmatprep.subr.bf16.mxu0 0
      %691 = vmatpush2.bf16.msra.mxu0 0
      %692 = vmatprep.subr.bf16.mxu0 0
      %693 = vmatpush2.bf16.msra.mxu0 0
      %694 = vmatprep.subr.bf16.mxu0 0
      %695 = vmatpush2.bf16.msra.mxu0 0
      %696 = vmatprep.subr.bf16.mxu0 0
      %697 = vmatpush2.bf16.msra.mxu0 0
      %698 = vmatprep.subr.bf16.mxu0 0
      %699 = vmatpush2.bf16.msra.mxu0 0
      %700 = vmatprep.subr.bf16.mxu0 0
      %701 = vmatpush2.bf16.msra.mxu0 0
      %702 = vmatprep.subr.bf16.mxu0 0
      %703 = vmatpush2.bf16.msra.mxu0 0
      %704 = vmatprep.mubr.bf16.mxu0 0
      %705 = vmatmul.mubr.bf16.gmra.mxu0 %v667
      %v706 = vpop.f32.mrf.mxu0
      %v707 = vadd.f32 0.0, %v706
      %v708 = vpop.f32.mrf.mxu0
      %v709 = vpop.f32.mrf.mxu0
      %v710 = vpop.f32.mrf.mxu0
      %711 = vdwg.mxu0
      %s712 = scalar_lea.vmem %s339, 12
      %v713 = vld [vmem:[%s712] sm:$0xf]
      %v714 = vunpack.c.l.bf16 %v713
      %715 = vrot.lane.b32.xlu0 %v362, 32
      %v716 = vpop.permute.xlu0 %715
      %717 = vrot.lane.b32.xlu0 %v363, 32
      %v718 = vpop.permute.xlu0 %717
      %v720 = vsel %vm366, %v716, 0
      %v723 = vsel %vm366, %v718, 0
      %725 = vmatprep.subr.bf16.mxu0 0
      %726 = vmatpush1.bf16.xpose.msra.mxu0 0
      %727 = vmatprep.subr.bf16.mxu0 0
      %728 = vmatpush1.bf16.xpose.msra.mxu0 0
      %729 = vmatprep.subr.bf16.mxu0 0
      %730 = vmatpush1.bf16.xpose.msra.mxu0 0
      %731 = vmatprep.subr.bf16.mxu0 0
      %732 = vmatpush1.bf16.xpose.msra.mxu0 0
      %733 = vmatprep.subr.bf16.mxu0 0
      %734 = vmatpush1.bf16.xpose.msra.mxu0 0
      %735 = vmatprep.subr.bf16.mxu0 0
      %736 = vmatpush1.bf16.xpose.msra.mxu0 0
      %737 = vmatprep.subr.bf16.mxu0 0
      %738 = vmatpush1.bf16.xpose.msra.mxu0 0
      %739 = vmatprep.subr.bf16.mxu0 0
      %740 = vmatpush1.bf16.xpose.msra.mxu0 %v723
      %741 = vmatprep.subr.bf16.mxu0 0
      %742 = vmatpush2.bf16.xpose.msra.mxu0 0
      %743 = vmatprep.subr.bf16.mxu0 0
      %744 = vmatpush2.bf16.xpose.msra.mxu0 0
      %745 = vmatprep.subr.bf16.mxu0 0
      %746 = vmatpush2.bf16.xpose.msra.mxu0 0
      %747 = vmatprep.subr.bf16.mxu0 0
      %748 = vmatpush2.bf16.xpose.msra.mxu0 0
      %749 = vmatprep.subr.bf16.mxu0 0
      %750 = vmatpush2.bf16.xpose.msra.mxu0 0
      %751 = vmatprep.subr.bf16.mxu0 0
      %752 = vmatpush2.bf16.xpose.msra.mxu0 0
      %753 = vmatprep.subr.bf16.mxu0 0
      %754 = vmatpush2.bf16.xpose.msra.mxu0 0
      %755 = vmatprep.subr.bf16.mxu0 0
      %756 = vmatpush2.bf16.xpose.msra.mxu0 0
      %757 = vmatprep.mubr.bf16.mxu0 0
      %758 = vmatmul.mubr.bf16.gmra.mxu0 %v720
      %v759 = vpop.f32.mrf.mxu0
      %v760 = vadd.f32 %v714, %v759
      %v761 = vpop.f32.mrf.mxu0
      %v762 = vpop.f32.mrf.mxu0
      %v763 = vpop.f32.mrf.mxu0
      %764 = vdwg.mxu0
      %v765 = vadd.f32 %v760, %v417
      %v766 = vsel %vm420, %v765, -inf
      %767 = vmax.xlane.f32.xlu0 %v766
      %v768 = vpop.xlane.xlu0 %767
      %v769 = vsub.f32 %v765, %v768
      %v770 = vmul.f32 %v769, 1.442695
      %v771 = vpow.pop %v770
      %v772 = vsel %vm420, %v771, 0.0
      %773 = vadd.xlane.f32.xlu0 %v772
      %v774 = vpop.xlane.xlu0 %773
      %v775 = vrcp.pop %v774
      %v776 = vmul.f32 %v771, %v775
      %v777 = vpack.c.bf16 %v776, %v776
      %778 = vrot.lane.b32.xlu0 %v433, 32
      %v779 = vpop.permute.xlu0 %778
      %v781 = vsel %vm420, %v777, 0
      %v784 = vsel %vm437, %v779, 0
      %786 = vmatprep.subr.bf16.mxu0 0
      %787 = vmatpush1.bf16.msra.mxu0 0
      %788 = vmatprep.subr.bf16.mxu0 0
      %789 = vmatpush1.bf16.msra.mxu0 0
      %790 = vmatprep.subr.bf16.mxu0 0
      %791 = vmatpush1.bf16.msra.mxu0 0
      %792 = vmatprep.subr.bf16.mxu0 0
      %793 = vmatpush1.bf16.msra.mxu0 0
      %794 = vmatprep.subr.bf16.mxu0 0
      %795 = vmatpush1.bf16.msra.mxu0 0
      %796 = vmatprep.subr.bf16.mxu0 0
      %797 = vmatpush1.bf16.msra.mxu0 0
      %798 = vmatprep.subr.bf16.mxu0 0
      %799 = vmatpush1.bf16.msra.mxu0 0
      %800 = vmatprep.subr.bf16.mxu0 0
      %801 = vmatpush1.bf16.msra.mxu0 %v784
      %802 = vmatprep.subr.bf16.mxu0 0
      %803 = vmatpush2.bf16.msra.mxu0 0
      %804 = vmatprep.subr.bf16.mxu0 0
      %805 = vmatpush2.bf16.msra.mxu0 0
      %806 = vmatprep.subr.bf16.mxu0 0
      %807 = vmatpush2.bf16.msra.mxu0 0
      %808 = vmatprep.subr.bf16.mxu0 0
      %809 = vmatpush2.bf16.msra.mxu0 0
      %810 = vmatprep.subr.bf16.mxu0 0
      %811 = vmatpush2.bf16.msra.mxu0 0
      %812 = vmatprep.subr.bf16.mxu0 0
      %813 = vmatpush2.bf16.msra.mxu0 0
      %814 = vmatprep.subr.bf16.mxu0 0
      %815 = vmatpush2.bf16.msra.mxu0 0
      %816 = vmatprep.subr.bf16.mxu0 0
      %817 = vmatpush2.bf16.msra.mxu0 0
      %818 = vmatprep.mubr.bf16.mxu0 0
      %819 = vmatmul.mubr.bf16.gmra.mxu0 %v781
      %v820 = vpop.f32.mrf.mxu0
      %v821 = vadd.f32 0.0, %v820
      %v822 = vpop.f32.mrf.mxu0
      %v823 = vpop.f32.mrf.mxu0
      %v824 = vpop.f32.mrf.mxu0
      %825 = vdwg.mxu0
      %v826 = vpack.c.bf16 %v354, %v354
      %v827 = vpack.c.bf16 %v356, %v356
      %s828 = scalar_lea.vmem %s339, 16
      %v829 = vld [vmem:[%s828] sm:$0xf]
      %v830 = vunpack.c.l.bf16 %v829
      %v832 = vsel %vm366, %v826, 0
      %v835 = vsel %vm366, %v827, 0
      %837 = vmatprep.subr.bf16.mxu0 0
      %838 = vmatpush1.bf16.xpose.msra.mxu0 0
      %839 = vmatprep.subr.bf16.mxu0 0
      %840 = vmatpush1.bf16.xpose.msra.mxu0 0
      %841 = vmatprep.subr.bf16.mxu0 0
      %842 = vmatpush1.bf16.xpose.msra.mxu0 0
      %843 = vmatprep.subr.bf16.mxu0 0
      %844 = vmatpush1.bf16.xpose.msra.mxu0 0
      %845 = vmatprep.subr.bf16.mxu0 0
      %846 = vmatpush1.bf16.xpose.msra.mxu0 0
      %847 = vmatprep.subr.bf16.mxu0 0
      %848 = vmatpush1.bf16.xpose.msra.mxu0 0
      %849 = vmatprep.subr.bf16.mxu0 0
      %850 = vmatpush1.bf16.xpose.msra.mxu0 0
      %851 = vmatprep.subr.bf16.mxu0 0
      %852 = vmatpush1.bf16.xpose.msra.mxu0 %v835
      %853 = vmatprep.subr.bf16.mxu0 0
      %854 = vmatpush2.bf16.xpose.msra.mxu0 0
      %855 = vmatprep.subr.bf16.mxu0 0
      %856 = vmatpush2.bf16.xpose.msra.mxu0 0
      %857 = vmatprep.subr.bf16.mxu0 0
      %858 = vmatpush2.bf16.xpose.msra.mxu0 0
      %859 = vmatprep.subr.bf16.mxu0 0
      %860 = vmatpush2.bf16.xpose.msra.mxu0 0
      %861 = vmatprep.subr.bf16.mxu0 0
      %862 = vmatpush2.bf16.xpose.msra.mxu0 0
      %863 = vmatprep.subr.bf16.mxu0 0
      %864 = vmatpush2.bf16.xpose.msra.mxu0 0
      %865 = vmatprep.subr.bf16.mxu0 0
      %866 = vmatpush2.bf16.xpose.msra.mxu0 0
      %867 = vmatprep.subr.bf16.mxu0 0
      %868 = vmatpush2.bf16.xpose.msra.mxu0 0
      %869 = vmatprep.mubr.bf16.mxu0 0
      %870 = vmatmul.mubr.bf16.gmra.mxu0 %v832
      %v871 = vpop.f32.mrf.mxu0
      %v872 = vadd.f32 %v830, %v871
      %v873 = vpop.f32.mrf.mxu0
      %v874 = vpop.f32.mrf.mxu0
      %v875 = vpop.f32.mrf.mxu0
      %876 = vdwg.mxu0
      %v877 = vadd.f32 %v872, %v417
      %v878 = vsel %vm420, %v877, -inf
      %879 = vmax.xlane.f32.xlu0 %v878
      %v880 = vpop.xlane.xlu0 %879
      %v881 = vsub.f32 %v877, %v880
      %v882 = vmul.f32 %v881, 1.442695
      %v883 = vpow.pop %v882
      %v884 = vsel %vm420, %v883, 0.0
      %885 = vadd.xlane.f32.xlu0 %v884
      %v886 = vpop.xlane.xlu0 %885
      %v887 = vrcp.pop %v886
      %v888 = vmul.f32 %v883, %v887
      %v889 = vpack.c.bf16 %v888, %v888
      %v890 = vpack.c.bf16 %v358, %v358
      %v892 = vsel %vm420, %v889, 0
      %v895 = vsel %vm437, %v890, 0
      %897 = vmatprep.subr.bf16.mxu0 0
      %898 = vmatpush1.bf16.msra.mxu0 0
      %899 = vmatprep.subr.bf16.mxu0 0
      %900 = vmatpush1.bf16.msra.mxu0 0
      %901 = vmatprep.subr.bf16.mxu0 0
      %902 = vmatpush1.bf16.msra.mxu0 0
      %903 = vmatprep.subr.bf16.mxu0 0
      %904 = vmatpush1.bf16.msra.mxu0 0
      %905 = vmatprep.subr.bf16.mxu0 0
      %906 = vmatpush1.bf16.msra.mxu0 0
      %907 = vmatprep.subr.bf16.mxu0 0
      %908 = vmatpush1.bf16.msra.mxu0 0
      %909 = vmatprep.subr.bf16.mxu0 0
      %910 = vmatpush1.bf16.msra.mxu0 0
      %911 = vmatprep.subr.bf16.mxu0 0
      %912 = vmatpush1.bf16.msra.mxu0 %v895
      %913 = vmatprep.subr.bf16.mxu0 0
      %914 = vmatpush2.bf16.msra.mxu0 0
      %915 = vmatprep.subr.bf16.mxu0 0
      %916 = vmatpush2.bf16.msra.mxu0 0
      %917 = vmatprep.subr.bf16.mxu0 0
      %918 = vmatpush2.bf16.msra.mxu0 0
      %919 = vmatprep.subr.bf16.mxu0 0
      %920 = vmatpush2.bf16.msra.mxu0 0
      %921 = vmatprep.subr.bf16.mxu0 0
      %922 = vmatpush2.bf16.msra.mxu0 0
      %923 = vmatprep.subr.bf16.mxu0 0
      %924 = vmatpush2.bf16.msra.mxu0 0
      %925 = vmatprep.subr.bf16.mxu0 0
      %926 = vmatpush2.bf16.msra.mxu0 0
      %927 = vmatprep.subr.bf16.mxu0 0
      %928 = vmatpush2.bf16.msra.mxu0 0
      %929 = vmatprep.mubr.bf16.mxu0 0
      %930 = vmatmul.mubr.bf16.gmra.mxu0 %v892
      %v931 = vpop.f32.mrf.mxu0
      %v932 = vadd.f32 0.0, %v931
      %v933 = vpop.f32.mrf.mxu0
      %v934 = vpop.f32.mrf.mxu0
      %v935 = vpop.f32.mrf.mxu0
      %936 = vdwg.mxu0
      %s937 = scalar_lea.vmem %s339, 20
      %v938 = vld [vmem:[%s937] sm:$0xf]
      %v939 = vunpack.c.l.bf16 %v938
      %941 = vrot.lane.b32.xlu0 %v826, 96
      %v942 = vpop.permute.xlu0 %941
      %944 = vrot.lane.b32.xlu0 %v827, 96
      %v945 = vpop.permute.xlu0 %944
      %v947 = vsel %vm366, %v942, 0
      %v950 = vsel %vm366, %v945, 0
      %952 = vmatprep.subr.bf16.mxu0 0
      %953 = vmatpush1.bf16.xpose.msra.mxu0 0
      %954 = vmatprep.subr.bf16.mxu0 0
      %955 = vmatpush1.bf16.xpose.msra.mxu0 0
      %956 = vmatprep.subr.bf16.mxu0 0
      %957 = vmatpush1.bf16.xpose.msra.mxu0 0
      %958 = vmatprep.subr.bf16.mxu0 0
      %959 = vmatpush1.bf16.xpose.msra.mxu0 0
      %960 = vmatprep.subr.bf16.mxu0 0
      %961 = vmatpush1.bf16.xpose.msra.mxu0 0
      %962 = vmatprep.subr.bf16.mxu0 0
      %963 = vmatpush1.bf16.xpose.msra.mxu0 0
      %964 = vmatprep.subr.bf16.mxu0 0
      %965 = vmatpush1.bf16.xpose.msra.mxu0 0
      %966 = vmatprep.subr.bf16.mxu0 0
      %967 = vmatpush1.bf16.xpose.msra.mxu0 %v950
      %968 = vmatprep.subr.bf16.mxu0 0
      %969 = vmatpush2.bf16.xpose.msra.mxu0 0
      %970 = vmatprep.subr.bf16.mxu0 0
      %971 = vmatpush2.bf16.xpose.msra.mxu0 0
      %972 = vmatprep.subr.bf16.mxu0 0
      %973 = vmatpush2.bf16.xpose.msra.mxu0 0
      %974 = vmatprep.subr.bf16.mxu0 0
      %975 = vmatpush2.bf16.xpose.msra.mxu0 0
      %976 = vmatprep.subr.bf16.mxu0 0
      %977 = vmatpush2.bf16.xpose.msra.mxu0 0
      %978 = vmatprep.subr.bf16.mxu0 0
      %979 = vmatpush2.bf16.xpose.msra.mxu0 0
      %980 = vmatprep.subr.bf16.mxu0 0
      %981 = vmatpush2.bf16.xpose.msra.mxu0 0
      %982 = vmatprep.subr.bf16.mxu0 0
      %983 = vmatpush2.bf16.xpose.msra.mxu0 0
      %984 = vmatprep.mubr.bf16.mxu0 0
      %985 = vmatmul.mubr.bf16.gmra.mxu0 %v947
      %v986 = vpop.f32.mrf.mxu0
      %v987 = vadd.f32 %v939, %v986
      %v988 = vpop.f32.mrf.mxu0
      %v989 = vpop.f32.mrf.mxu0
      %v990 = vpop.f32.mrf.mxu0
      %991 = vdwg.mxu0
      %v992 = vadd.f32 %v987, %v417
      %v993 = vsel %vm420, %v992, -inf
      %994 = vmax.xlane.f32.xlu0 %v993
      %v995 = vpop.xlane.xlu0 %994
      %v996 = vsub.f32 %v992, %v995
      %v997 = vmul.f32 %v996, 1.442695
      %v998 = vpow.pop %v997
      %v999 = vsel %vm420, %v998, 0.0
      %1000 = vadd.xlane.f32.xlu0 %v999
      %v1001 = vpop.xlane.xlu0 %1000
      %v1002 = vrcp.pop %v1001
      %v1003 = vmul.f32 %v998, %v1002
      %v1004 = vpack.c.bf16 %v1003, %v1003
      %1006 = vrot.lane.b32.xlu0 %v890, 96
      %v1007 = vpop.permute.xlu0 %1006
      %v1009 = vsel %vm420, %v1004, 0
      %v1012 = vsel %vm437, %v1007, 0
      %1014 = vmatprep.subr.bf16.mxu0 0
      %1015 = vmatpush1.bf16.msra.mxu0 0
      %1016 = vmatprep.subr.bf16.mxu0 0
      %1017 = vmatpush1.bf16.msra.mxu0 0
      %1018 = vmatprep.subr.bf16.mxu0 0
      %1019 = vmatpush1.bf16.msra.mxu0 0
      %1020 = vmatprep.subr.bf16.mxu0 0
      %1021 = vmatpush1.bf16.msra.mxu0 0
      %1022 = vmatprep.subr.bf16.mxu0 0
      %1023 = vmatpush1.bf16.msra.mxu0 0
      %1024 = vmatprep.subr.bf16.mxu0 0
      %1025 = vmatpush1.bf16.msra.mxu0 0
      %1026 = vmatprep.subr.bf16.mxu0 0
      %1027 = vmatpush1.bf16.msra.mxu0 0
      %1028 = vmatprep.subr.bf16.mxu0 0
      %1029 = vmatpush1.bf16.msra.mxu0 %v1012
      %1030 = vmatprep.subr.bf16.mxu0 0
      %1031 = vmatpush2.bf16.msra.mxu0 0
      %1032 = vmatprep.subr.bf16.mxu0 0
      %1033 = vmatpush2.bf16.msra.mxu0 0
      %1034 = vmatprep.subr.bf16.mxu0 0
      %1035 = vmatpush2.bf16.msra.mxu0 0
      %1036 = vmatprep.subr.bf16.mxu0 0
      %1037 = vmatpush2.bf16.msra.mxu0 0
      %1038 = vmatprep.subr.bf16.mxu0 0
      %1039 = vmatpush2.bf16.msra.mxu0 0
      %1040 = vmatprep.subr.bf16.mxu0 0
      %1041 = vmatpush2.bf16.msra.mxu0 0
      %1042 = vmatprep.subr.bf16.mxu0 0
      %1043 = vmatpush2.bf16.msra.mxu0 0
      %1044 = vmatprep.subr.bf16.mxu0 0
      %1045 = vmatpush2.bf16.msra.mxu0 0
      %1046 = vmatprep.mubr.bf16.mxu0 0
      %1047 = vmatmul.mubr.bf16.gmra.mxu0 %v1009
      %v1048 = vpop.f32.mrf.mxu0
      %v1049 = vadd.f32 0.0, %v1048
      %v1050 = vpop.f32.mrf.mxu0
      %v1051 = vpop.f32.mrf.mxu0
      %v1052 = vpop.f32.mrf.mxu0
      %1053 = vdwg.mxu0
      %s1054 = scalar_lea.vmem %s339, 24
      %v1055 = vld [vmem:[%s1054] sm:$0xf]
      %v1056 = vunpack.c.l.bf16 %v1055
      %1057 = vrot.lane.b32.xlu0 %v826, 64
      %v1058 = vpop.permute.xlu0 %1057
      %1059 = vrot.lane.b32.xlu0 %v827, 64
      %v1060 = vpop.permute.xlu0 %1059
      %v1062 = vsel %vm366, %v1058, 0
      %v1065 = vsel %vm366, %v1060, 0
      %1067 = vmatprep.subr.bf16.mxu0 0
      %1068 = vmatpush1.bf16.xpose.msra.mxu0 0
      %1069 = vmatprep.subr.bf16.mxu0 0
      %1070 = vmatpush1.bf16.xpose.msra.mxu0 0
      %1071 = vmatprep.subr.bf16.mxu0 0
      %1072 = vmatpush1.bf16.xpose.msra.mxu0 0
      %1073 = vmatprep.subr.bf16.mxu0 0
      %1074 = vmatpush1.bf16.xpose.msra.mxu0 0
      %1075 = vmatprep.subr.bf16.mxu0 0
      %1076 = vmatpush1.bf16.xpose.msra.mxu0 0
      %1077 = vmatprep.subr.bf16.mxu0 0
      %1078 = vmatpush1.bf16.xpose.msra.mxu0 0
      %1079 = vmatprep.subr.bf16.mxu0 0
      %1080 = vmatpush1.bf16.xpose.msra.mxu0 0
      %1081 = vmatprep.subr.bf16.mxu0 0
      %1082 = vmatpush1.bf16.xpose.msra.mxu0 %v1065
      %1083 = vmatprep.subr.bf16.mxu0 0
      %1084 = vmatpush2.bf16.xpose.msra.mxu0 0
      %1085 = vmatprep.subr.bf16.mxu0 0
      %1086 = vmatpush2.bf16.xpose.msra.mxu0 0
      %1087 = vmatprep.subr.bf16.mxu0 0
      %1088 = vmatpush2.bf16.xpose.msra.mxu0 0
      %1089 = vmatprep.subr.bf16.mxu0 0
      %1090 = vmatpush2.bf16.xpose.msra.mxu0 0
      %1091 = vmatprep.subr.bf16.mxu0 0
      %1092 = vmatpush2.bf16.xpose.msra.mxu0 0
      %1093 = vmatprep.subr.bf16.mxu0 0
      %1094 = vmatpush2.bf16.xpose.msra.mxu0 0
      %1095 = vmatprep.subr.bf16.mxu0 0
      %1096 = vmatpush2.bf16.xpose.msra.mxu0 0
      %1097 = vmatprep.subr.bf16.mxu0 0
      %1098 = vmatpush2.bf16.xpose.msra.mxu0 0
      %1099 = vmatprep.mubr.bf16.mxu0 0
      %1100 = vmatmul.mubr.bf16.gmra.mxu0 %v1062
      %v1101 = vpop.f32.mrf.mxu0
      %v1102 = vadd.f32 %v1056, %v1101
      %v1103 = vpop.f32.mrf.mxu0
      %v1104 = vpop.f32.mrf.mxu0
      %v1105 = vpop.f32.mrf.mxu0
      %1106 = vdwg.mxu0
      %v1107 = vadd.f32 %v1102, %v417
      %v1108 = vsel %vm420, %v1107, -inf
      %1109 = vmax.xlane.f32.xlu0 %v1108
      %v1110 = vpop.xlane.xlu0 %1109
      %v1111 = vsub.f32 %v1107, %v1110
      %v1112 = vmul.f32 %v1111, 1.442695
      %v1113 = vpow.pop %v1112
      %v1114 = vsel %vm420, %v1113, 0.0
      %1115 = vadd.xlane.f32.xlu0 %v1114
      %v1116 = vpop.xlane.xlu0 %1115
      %v1117 = vrcp.pop %v1116
      %v1118 = vmul.f32 %v1113, %v1117
      %v1119 = vpack.c.bf16 %v1118, %v1118
      %1120 = vrot.lane.b32.xlu0 %v890, 64
      %v1121 = vpop.permute.xlu0 %1120
      %v1123 = vsel %vm420, %v1119, 0
      %v1126 = vsel %vm437, %v1121, 0
      %1128 = vmatprep.subr.bf16.mxu0 0
      %1129 = vmatpush1.bf16.msra.mxu0 0
      %1130 = vmatprep.subr.bf16.mxu0 0
      %1131 = vmatpush1.bf16.msra.mxu0 0
      %1132 = vmatprep.subr.bf16.mxu0 0
      %1133 = vmatpush1.bf16.msra.mxu0 0
      %1134 = vmatprep.subr.bf16.mxu0 0
      %1135 = vmatpush1.bf16.msra.mxu0 0
      %1136 = vmatprep.subr.bf16.mxu0 0
      %1137 = vmatpush1.bf16.msra.mxu0 0
      %1138 = vmatprep.subr.bf16.mxu0 0
      %1139 = vmatpush1.bf16.msra.mxu0 0
      %1140 = vmatprep.subr.bf16.mxu0 0
      %1141 = vmatpush1.bf16.msra.mxu0 0
      %1142 = vmatprep.subr.bf16.mxu0 0
      %1143 = vmatpush1.bf16.msra.mxu0 %v1126
      %1144 = vmatprep.subr.bf16.mxu0 0
      %1145 = vmatpush2.bf16.msra.mxu0 0
      %1146 = vmatprep.subr.bf16.mxu0 0
      %1147 = vmatpush2.bf16.msra.mxu0 0
      %1148 = vmatprep.subr.bf16.mxu0 0
      %1149 = vmatpush2.bf16.msra.mxu0 0
      %1150 = vmatprep.subr.bf16.mxu0 0
      %1151 = vmatpush2.bf16.msra.mxu0 0
      %1152 = vmatprep.subr.bf16.mxu0 0
      %1153 = vmatpush2.bf16.msra.mxu0 0
      %1154 = vmatprep.subr.bf16.mxu0 0
      %1155 = vmatpush2.bf16.msra.mxu0 0
      %1156 = vmatprep.subr.bf16.mxu0 0
      %1157 = vmatpush2.bf16.msra.mxu0 0
      %1158 = vmatprep.subr.bf16.mxu0 0
      %1159 = vmatpush2.bf16.msra.mxu0 0
      %1160 = vmatprep.mubr.bf16.mxu0 0
      %1161 = vmatmul.mubr.bf16.gmra.mxu0 %v1123
      %v1162 = vpop.f32.mrf.mxu0
      %v1163 = vadd.f32 0.0, %v1162
      %v1164 = vpop.f32.mrf.mxu0
      %v1165 = vpop.f32.mrf.mxu0
      %v1166 = vpop.f32.mrf.mxu0
      %1167 = vdwg.mxu0
      %s1168 = scalar_lea.vmem %s339, 28
      %v1169 = vld [vmem:[%s1168] sm:$0xf]
      %v1170 = vunpack.c.l.bf16 %v1169
      %1171 = vrot.lane.b32.xlu0 %v826, 32
      %v1172 = vpop.permute.xlu0 %1171
      %1173 = vrot.lane.b32.xlu0 %v827, 32
      %v1174 = vpop.permute.xlu0 %1173
      %v1176 = vsel %vm366, %v1172, 0
      %v1179 = vsel %vm366, %v1174, 0
      %1181 = vmatprep.subr.bf16.mxu0 0
      %1182 = vmatpush1.bf16.xpose.msra.mxu0 0
      %1183 = vmatprep.subr.bf16.mxu0 0
      %1184 = vmatpush1.bf16.xpose.msra.mxu0 0
      %1185 = vmatprep.subr.bf16.mxu0 0
      %1186 = vmatpush1.bf16.xpose.msra.mxu0 0
      %1187 = vmatprep.subr.bf16.mxu0 0
      %1188 = vmatpush1.bf16.xpose.msra.mxu0 0
      %1189 = vmatprep.subr.bf16.mxu0 0
      %1190 = vmatpush1.bf16.xpose.msra.mxu0 0
      %1191 = vmatprep.subr.bf16.mxu0 0
      %1192 = vmatpush1.bf16.xpose.msra.mxu0 0
      %1193 = vmatprep.subr.bf16.mxu0 0
      %1194 = vmatpush1.bf16.xpose.msra.mxu0 0
      %1195 = vmatprep.subr.bf16.mxu0 0
      %1196 = vmatpush1.bf16.xpose.msra.mxu0 %v1179
      %1197 = vmatprep.subr.bf16.mxu0 0
      %1198 = vmatpush2.bf16.xpose.msra.mxu0 0
      %1199 = vmatprep.subr.bf16.mxu0 0
      %1200 = vmatpush2.bf16.xpose.msra.mxu0 0
      %1201 = vmatprep.subr.bf16.mxu0 0
      %1202 = vmatpush2.bf16.xpose.msra.mxu0 0
      %1203 = vmatprep.subr.bf16.mxu0 0
      %1204 = vmatpush2.bf16.xpose.msra.mxu0 0
      %1205 = vmatprep.subr.bf16.mxu0 0
      %1206 = vmatpush2.bf16.xpose.msra.mxu0 0
      %1207 = vmatprep.subr.bf16.mxu0 0
      %1208 = vmatpush2.bf16.xpose.msra.mxu0 0
      %1209 = vmatprep.subr.bf16.mxu0 0
      %1210 = vmatpush2.bf16.xpose.msra.mxu0 0
      %1211 = vmatprep.subr.bf16.mxu0 0
      %1212 = vmatpush2.bf16.xpose.msra.mxu0 0
      %1213 = vmatprep.mubr.bf16.mxu0 0
      %1214 = vmatmul.mubr.bf16.gmra.mxu0 %v1176
      %v1215 = vpop.f32.mrf.mxu0
      %v1216 = vadd.f32 %v1170, %v1215
      %v1217 = vpop.f32.mrf.mxu0
      %v1218 = vpop.f32.mrf.mxu0
      %v1219 = vpop.f32.mrf.mxu0
      %1220 = vdwg.mxu0
      %v1221 = vadd.f32 %v1216, %v417
      %v1222 = vsel %vm420, %v1221, -inf
      %1223 = vmax.xlane.f32.xlu0 %v1222
      %v1224 = vpop.xlane.xlu0 %1223
      %v1225 = vsub.f32 %v1221, %v1224
      %v1226 = vmul.f32 %v1225, 1.442695
      %v1227 = vpow.pop %v1226
      %v1228 = vsel %vm420, %v1227, 0.0
      %1229 = vadd.xlane.f32.xlu0 %v1228
      %v1230 = vpop.xlane.xlu0 %1229
      %v1231 = vrcp.pop %v1230
      %v1232 = vmul.f32 %v1227, %v1231
      %v1233 = vpack.c.bf16 %v1232, %v1232
      %1234 = vrot.lane.b32.xlu0 %v890, 32
      %v1235 = vpop.permute.xlu0 %1234
      %v1237 = vsel %vm420, %v1233, 0
      %v1240 = vsel %vm437, %v1235, 0
      %1242 = vmatprep.subr.bf16.mxu0 0
      %1243 = vmatpush1.bf16.msra.mxu0 0
      %1244 = vmatprep.subr.bf16.mxu0 0
      %1245 = vmatpush1.bf16.msra.mxu0 0
      %1246 = vmatprep.subr.bf16.mxu0 0
      %1247 = vmatpush1.bf16.msra.mxu0 0
      %1248 = vmatprep.subr.bf16.mxu0 0
      %1249 = vmatpush1.bf16.msra.mxu0 0
      %1250 = vmatprep.subr.bf16.mxu0 0
      %1251 = vmatpush1.bf16.msra.mxu0 0
      %1252 = vmatprep.subr.bf16.mxu0 0
      %1253 = vmatpush1.bf16.msra.mxu0 0
      %1254 = vmatprep.subr.bf16.mxu0 0
      %1255 = vmatpush1.bf16.msra.mxu0 0
      %1256 = vmatprep.subr.bf16.mxu0 0
      %1257 = vmatpush1.bf16.msra.mxu0 %v1240
      %1258 = vmatprep.subr.bf16.mxu0 0
      %1259 = vmatpush2.bf16.msra.mxu0 0
      %1260 = vmatprep.subr.bf16.mxu0 0
      %1261 = vmatpush2.bf16.msra.mxu0 0
      %1262 = vmatprep.subr.bf16.mxu0 0
      %1263 = vmatpush2.bf16.msra.mxu0 0
      %1264 = vmatprep.subr.bf16.mxu0 0
      %1265 = vmatpush2.bf16.msra.mxu0 0
      %1266 = vmatprep.subr.bf16.mxu0 0
      %1267 = vmatpush2.bf16.msra.mxu0 0
      %1268 = vmatprep.subr.bf16.mxu0 0
      %1269 = vmatpush2.bf16.msra.mxu0 0
      %1270 = vmatprep.subr.bf16.mxu0 0
      %1271 = vmatpush2.bf16.msra.mxu0 0
      %1272 = vmatprep.subr.bf16.mxu0 0
      %1273 = vmatpush2.bf16.msra.mxu0 0
      %1274 = vmatprep.mubr.bf16.mxu0 0
      %1275 = vmatmul.mubr.bf16.gmra.mxu0 %v1237
      %v1276 = vpop.f32.mrf.mxu0
      %v1277 = vadd.f32 0.0, %v1276
      %v1278 = vpop.f32.mrf.mxu0
      %v1279 = vpop.f32.mrf.mxu0
      %v1280 = vpop.f32.mrf.mxu0
      %1281 = vdwg.mxu0
      %1283 = vrot.lane.b32.xlu0 %v593, 32
      %v1284 = vpop.permute.xlu0 %1283
      %1287 = vrot.lane.b32.xlu0 %v707, 64
      %v1288 = vpop.permute.xlu0 %1287
      %1291 = vrot.lane.b32.xlu0 %v821, 96
      %v1292 = vpop.permute.xlu0 %1291
      %1295 = vrot.lane.b32.xlu0 %v1049, 32
      %v1296 = vpop.permute.xlu0 %1295
      %1299 = vrot.lane.b32.xlu0 %v1163, 64
      %v1300 = vpop.permute.xlu0 %1299
      %1303 = vrot.lane.b32.xlu0 %v1277, 96
      %v1304 = vpop.permute.xlu0 %1303
      %v1306 = vsel %vm366, %v476, %v1284
      %vm1307 = vcmask 523264
      %v1308 = vsel %vm1307, %v1306, %v1288
      %vm1309 = vcmask 785408
      %v1310 = vsel %vm1309, %v1308, %v1292
      %v1311 = vsel %vm366, %v932, %v1296
      %v1312 = vsel %vm1307, %v1311, %v1300
      %v1313 = vsel %vm1309, %v1312, %v1304
      %1314 = vst [vmem:[%s351] sm:$0xff] %v1310
      %1315 = vst [vmem:[%s351 + $0x8] sm:$0xff] %v1313
      %p1316 = scmp.lt.s32.totalorder %s20, 1
      %s1317 = scalar_select %p1316, %s20, 1
      %p1318 = scmp.lt.s32.totalorder %s21, 0
      %s1319 = scalar_select %p1318, %s21, 0
      %s1320 = smul.addr %s1319, 2
      %s1321 = smul.addr %s1317, 2
      %s1322 = sadd.s32 %s1320, %s1321
      %s1323 = smul.addr %s1322, 8
      %s1324 = scalar_lea.vmem %s5, %s1323
      // Predicated region
      $region41: #{node_update_forward.10} parent=39 // pred_check
        %p1325 = pneg %p182
      $region42: #{node_update_forward.10} parent=39 // pred_check_branch
        %1327 = sbr.rel (%p1325) target = $region44
      $region43: #{node_update_forward.10} parent=39 // pred_region
        _
      $region44: #{node_update_forward.10} parent=39 // pred_fallthru
        _
    $region40: #{node_update_forward.10} parent=5 // pred_fallthru
      _
    %p1328 = scmp.le.s32.totalorder 2, %s11
    // Predicated region
    $region45: #{node_update_forward.10} parent=5 // pred_check
      %p1329 = pneg %p1328
    $region46: #{node_update_forward.10} parent=5 // pred_check_branch
      %1331 = sbr.rel (%p1329) target = $region48
    $region47: #{node_update_forward.10} parent=5 // pred_region
      %s1332 = ssub.s32 %s11, 2
      // Predicated region
      $region49: #{node_update_forward.10} parent=47 // pred_check
        %p1333 = pneg %p188
      $region50: #{node_update_forward.10} parent=47 // pred_check_branch
        %1335 = sbr.rel (%p1333) target = $region52
      $region51: #{node_update_forward.10} parent=47 // pred_region
        %p1336 = scmp.lt.s32.totalorder %s22, 1
        %s1337 = scalar_select %p1336, %s22, 1
        %p1338 = scmp.lt.s32.totalorder %s23, 0
        %s1339 = scalar_select %p1338, %s23, 0
        %s1340 = smul.addr %s1339, 2
        %s1341 = smul.addr %s1337, 2
        %s1342 = sadd.s32 %s1340, %s1341
        %s1343 = smul.addr %s1342, 8
        %s1344 = scalar_lea.vmem %s5, %s1343
      $region52: #{node_update_forward.10} parent=47 // pred_fallthru
        _
    $region48: #{node_update_forward.10} parent=5 // pred_fallthru
      _
  $region6: #{node_update_forward.10} parent=0 // loop_footer
    %s15 = sadd.s32 1, %s11
  $region7: #{node_update_forward.10} parent=0 // loop_footer_branch
    %10 = sbr.rel target = $region3
  $region8: #{node_update_forward.10} parent=0 // loop_exit
    _

// kernel: node_update_forward.13
$region0: #{node_update_forward.13}
  #allocation0 [shape = 'u32[]', space=smem, size = 0x4, offset = 0x4, fixed_abs, tag = 'smem constant byte address 0x4 - core index']
  #allocation1 [shape = 'u32[144,128]{1,0:T(1,128)}', space=vmem, size = 0x12000, scoped, tag = 'internal scratch']
  %s0 = inlined_call_operand.vmem [shape: f32[2,8,1024], index: 0, kind: input, shape index: {}, may-alias: {0,1,2}]
  %s1 = inlined_call_operand.vmem [shape: f32[2,8,1024], index: 1, kind: input, shape index: {}, may-alias: {0,1,2}]
  %s2 = inlined_call_operand.vmem [shape: f32[2,8,1024], index: 2, kind: input, shape index: {}, may-alias: {0,1,2}]
  %s3 = inlined_call_operand.vmem [shape: f32[2,1,8], index: 3, kind: input, shape index: {}]
  %s4 = inlined_call_operand.vmem [shape: f32[2,8,256], index: 4, kind: output, shape index: {}]
  %s5 = sld [smem:[#allocation0]]
  $region49: #{node_update_forward.13} parent=0
    _
  %s7 = ssub.s32 1, %s5
  %s8 = scalar_select 0, %s7, %s5
  loop: start=0, step=1, limit=4
  $region2: #{node_update_forward.13} parent=0 // loop_pre_header
    _
  $region3: #{node_update_forward.13} parent=0 // loop_header
    %s10 = sphi 0, %s14
    %p11 = scmp.ge.s32.totalorder %s10, 4
    %s17 = sphi 0, %s29
    %s18 = sphi 0, %s25
    %s19 = sphi 0, %s17
    %s20 = sphi 0, %s18
    %s21 = sphi 0, %s19
    %s22 = sphi 0, %s20
    %s34 = sphi 0, %s36
    %s37 = sphi 0, %s34
    %s38 = sphi 0, %s37
    %s54 = sphi 0, %s38
    %s60 = sphi 0, %s62
    %s63 = sphi 0, %s60
    %s64 = sphi 0, %s63
    %s80 = sphi 0, %s64
    %s86 = sphi 0, %s88
    %s89 = sphi 0, %s86
    %s90 = sphi 0, %s89
    %s106 = sphi 0, %s90
    %s112 = sphi 0, %s114
    %s115 = sphi 0, %s112
    %s116 = sphi 0, %s115
    %s132 = sphi 0, %s116
    %s140 = sphi 0, %s142
    %s143 = sphi 0, %s140
    %s144 = sphi 0, %s143
    %s160 = sphi 0, %s144
  $region4: #{node_update_forward.13} parent=0 // loop_header_branch
    %13 = sbr.rel (%p11) target = $region8
  $region5: #{node_update_forward.13} parent=0 // loop_body
    %s15 = ssub.s32 %s10, 1
    %s16 = ssub.s32 %s10, 2
    %s23 = sadd.s32 1, %s18
    %p24 = scmp.ge.s32.totalorder %s23, 1
    %s25 = scalar_select %p24, 0, %s23
    %s26 = sadd.s32 1, %s17
    %s27 = scalar_select %p24, %s26, %s17
    %p28 = scmp.ge.s32.totalorder %s27, 2
    %s29 = scalar_select %p28, 0, %s27
    %s30 = ssub.s32 %s17, %s29
    %s31 = ssub.s32 %s18, %s25
    %s32 = sor.u32 %s30, %s31
    %p33 = scmp.eq.s32.totalorder %s32, 0
    %s35 = sadd.s32 %s34, 1
    %s36 = scalar_select %p33, %s34, %s35
    %p39 = pneg %p33
    %p40 = scmp.eq.s32.totalorder %s10, 1
    %p41 = por %p39, %p40
    %p42 = scmp.ne.s32.totalorder %s34, %s37
    %p43 = scmp.eq.s32.totalorder %s10, 0
    %p44 = por %p42, %p43
    %p45 = scmp.ne.s32.totalorder %s34, %s37
    %p46 = scmp.eq.s32.totalorder %s15, 1
    %p47 = por %p45, %p46
    %p48 = scmp.ne.s32.totalorder %s37, %s38
    %p49 = scmp.eq.s32.totalorder %s15, 0
    %p50 = por %p48, %p49
    %p51 = scmp.ne.s32.totalorder %s37, %s38
    %p52 = scmp.eq.s32.totalorder %s16, 1
    %p53 = por %p51, %p52
    %p55 = scmp.ne.s32.totalorder %s38, %s54
    %p56 = scmp.eq.s32.totalorder %s16, 0
    %p57 = por %p55, %p56
    %s58 = ssub.s32 %s17, %s29
    %p59 = scmp.eq.s32.totalorder %s58, 0
    %s61 = sadd.s32 %s60, 1
    %s62 = scalar_select %p59, %s60, %s61
    %p65 = pneg %p59
    %p66 = scmp.eq.s32.totalorder %s10, 1
    %p67 = por %p65, %p66
    %p68 = scmp.ne.s32.totalorder %s60, %s63
    %p69 = scmp.eq.s32.totalorder %s10, 0
    %p70 = por %p68, %p69
    %p71 = scmp.ne.s32.totalorder %s60, %s63
    %p72 = scmp.eq.s32.totalorder %s15, 1
    %p73 = por %p71, %p72
    %p74 = scmp.ne.s32.totalorder %s63, %s64
    %p75 = scmp.eq.s32.totalorder %s15, 0
    %p76 = por %p74, %p75
    %p77 = scmp.ne.s32.totalorder %s63, %s64
    %p78 = scmp.eq.s32.totalorder %s16, 1
    %p79 = por %p77, %p78
    %p81 = scmp.ne.s32.totalorder %s64, %s80
    %p82 = scmp.eq.s32.totalorder %s16, 0
    %p83 = por %p81, %p82
    %s84 = ssub.s32 %s17, %s29
    %p85 = scmp.eq.s32.totalorder %s84, 0
    %s87 = sadd.s32 %s86, 1
    %s88 = scalar_select %p85, %s86, %s87
    %p91 = pneg %p85
    %p92 = scmp.eq.s32.totalorder %s10, 1
    %p93 = por %p91, %p92
    %p94 = scmp.ne.s32.totalorder %s86, %s89
    %p95 = scmp.eq.s32.totalorder %s10, 0
    %p96 = por %p94, %p95
    %p97 = scmp.ne.s32.totalorder %s86, %s89
    %p98 = scmp.eq.s32.totalorder %s15, 1
    %p99 = por %p97, %p98
    %p100 = scmp.ne.s32.totalorder %s89, %s90
    %p101 = scmp.eq.s32.totalorder %s15, 0
    %p102 = por %p100, %p101
    %p103 = scmp.ne.s32.totalorder %s89, %s90
    %p104 = scmp.eq.s32.totalorder %s16, 1
    %p105 = por %p103, %p104
    %p107 = scmp.ne.s32.totalorder %s90, %s106
    %p108 = scmp.eq.s32.totalorder %s16, 0
    %p109 = por %p107, %p108
    %s110 = ssub.s32 %s17, %s29
    %p111 = scmp.eq.s32.totalorder %s110, 0
    %s113 = sadd.s32 %s112, 1
    %s114 = scalar_select %p111, %s112, %s113
    %p117 = pneg %p111
    %p118 = scmp.eq.s32.totalorder %s10, 1
    %p119 = por %p117, %p118
    %p120 = scmp.ne.s32.totalorder %s112, %s115
    %p121 = scmp.eq.s32.totalorder %s10, 0
    %p122 = por %p120, %p121
    %p123 = scmp.ne.s32.totalorder %s112, %s115
    %p124 = scmp.eq.s32.totalorder %s15, 1
    %p125 = por %p123, %p124
    %p126 = scmp.ne.s32.totalorder %s115, %s116
    %p127 = scmp.eq.s32.totalorder %s15, 0
    %p128 = por %p126, %p127
    %p129 = scmp.ne.s32.totalorder %s115, %s116
    %p130 = scmp.eq.s32.totalorder %s16, 1
    %p131 = por %p129, %p130
    %p133 = scmp.ne.s32.totalorder %s116, %s132
    %p134 = scmp.eq.s32.totalorder %s16, 0
    %p135 = por %p133, %p134
    %s136 = ssub.s32 %s17, %s29
    %s137 = ssub.s32 %s18, %s25
    %s138 = sor.u32 %s136, %s137
    %p139 = scmp.eq.s32.totalorder %s138, 0
    %s141 = sadd.s32 %s140, 1
    %s142 = scalar_select %p139, %s140, %s141
    %p145 = pneg %p139
    %p146 = scmp.eq.s32.totalorder %s10, 1
    %p147 = por %p145, %p146
    %p148 = scmp.ne.s32.totalorder %s140, %s143
    %p149 = scmp.eq.s32.totalorder %s10, 0
    %p150 = por %p148, %p149
    %p151 = scmp.ne.s32.totalorder %s140, %s143
    %p152 = scmp.eq.s32.totalorder %s15, 1
    %p153 = por %p151, %p152
    %p154 = scmp.ne.s32.totalorder %s143, %s144
    %p155 = scmp.eq.s32.totalorder %s15, 0
    %p156 = por %p154, %p155
    %p157 = scmp.ne.s32.totalorder %s143, %s144
    %p158 = scmp.eq.s32.totalorder %s16, 1
    %p159 = por %p157, %p158
    %p161 = scmp.ne.s32.totalorder %s144, %s160
    %p162 = scmp.eq.s32.totalorder %s16, 0
    %p163 = por %p161, %p162
    %p164 = scmp.le.s32.totalorder 1, %s10
    %p165 = scmp.lt.s32.totalorder %s10, 3
    %p166 = pnand %p164, %p165
    %p167 = pneg %p166
    // Predicated region
    $region9: #{node_update_forward.13} parent=5 // pred_check
      _
    $region10: #{node_update_forward.13} parent=5 // pred_check_branch
      %169 = sbr.rel (%p166) target = $region12
    $region11: #{node_update_forward.13} parent=5 // pred_region
      %s170 = ssub.s32 %s10, 1
    $region12: #{node_update_forward.13} parent=5 // pred_fallthru
      _
    %p171 = scmp.lt.s32.totalorder %s10, 2
    // Predicated region
    $region13: #{node_update_forward.13} parent=5 // pred_check
      %p172 = pneg %p171
    $region14: #{node_update_forward.13} parent=5 // pred_check_branch
      %174 = sbr.rel (%p172) target = $region16
    $region15: #{node_update_forward.13} parent=5 // pred_region
      // Predicated region
      $region17: #{node_update_forward.13} parent=15 // pred_check
        %p175 = pneg %p44
      $region18: #{node_update_forward.13} parent=15 // pred_check_branch
        %177 = sbr.rel (%p175) target = $region20
      $region19: #{node_update_forward.13} parent=15 // pred_region
        %p178 = scmp.lt.s32.totalorder %s17, 1
        %s179 = scalar_select %p178, %s17, 1
        %p180 = scmp.lt.s32.totalorder %s18, 0
        %s181 = scalar_select %p180, %s18, 0
        %s182 = smul.addr %s181, 8
        %s183 = smul.addr %s179, 8
        %s184 = sadd.s32 %s182, %s183
        %s185 = smul.addr %s184, 8
        %s186 = scalar_lea.vmem %s0, %s185
      $region20: #{node_update_forward.13} parent=15 // pred_fallthru
        _
      // Predicated region
      $region21: #{node_update_forward.13} parent=15 // pred_check
        %p187 = pneg %p70
      $region22: #{node_update_forward.13} parent=15 // pred_check_branch
        %189 = sbr.rel (%p187) target = $region24
      $region23: #{node_update_forward.13} parent=15 // pred_region
        %p190 = scmp.lt.s32.totalorder %s17, 1
        %s191 = scalar_select %p190, %s17, 1
        %s192 = smul.addr %s191, 8
        %s193 = sadd.s32 2, %s192
        %s194 = smul.addr %s193, 8
        %s195 = scalar_lea.vmem %s1, %s194
      $region24: #{node_update_forward.13} parent=15 // pred_fallthru
        _
      // Predicated region
      $region25: #{node_update_forward.13} parent=15 // pred_check
        %p196 = pneg %p96
      $region26: #{node_update_forward.13} parent=15 // pred_check_branch
        %198 = sbr.rel (%p196) target = $region28
      $region27: #{node_update_forward.13} parent=15 // pred_region
        %p199 = scmp.lt.s32.totalorder %s17, 1
        %s200 = scalar_select %p199, %s17, 1
        %s201 = smul.addr %s200, 8
        %s202 = sadd.s32 4, %s201
        %s203 = smul.addr %s202, 8
        %s204 = scalar_lea.vmem %s2, %s203
      $region28: #{node_update_forward.13} parent=15 // pred_fallthru
        _
      // Predicated region
      $region29: #{node_update_forward.13} parent=15 // pred_check
        %p205 = pneg %p122
      $region30: #{node_update_forward.13} parent=15 // pred_check_branch
        %207 = sbr.rel (%p205) target = $region32
      $region31: #{node_update_forward.13} parent=15 // pred_region
        %p208 = scmp.lt.s32.totalorder %s17, 1
        %s209 = scalar_select %p208, %s17, 1
        %s210 = scalar_lea.vmem %s3, %s209
      $region32: #{node_update_forward.13} parent=15 // pred_fallthru
        _
    $region16: #{node_update_forward.13} parent=5 // pred_fallthru
      _
    %p211 = scmp.le.s32.totalorder 1, %s10
    %p212 = scmp.lt.s32.totalorder %s10, 3
    %p213 = pnand %p211, %p212
    %p214 = pneg %p213
    // Predicated region
    $region33: #{node_update_forward.13} parent=5 // pred_check
      _
    $region34: #{node_update_forward.13} parent=5 // pred_check_branch
      %216 = sbr.rel (%p213) target = $region36
    $region35: #{node_update_forward.13} parent=5 // pred_region
      %s217 = ssub.s32 %s10, 1
      %p218 = scmp.lt.s32.totalorder %s19, 1
      %s219 = scalar_select %p218, %s19, 1
      %p220 = scmp.lt.s32.totalorder %s20, 0
      %s221 = scalar_select %p220, %s20, 0
      %s222 = smul.addr %s221, 8
      %s223 = smul.addr %s219, 8
      %s224 = sadd.s32 %s222, %s223
      %s225 = smul.addr %s224, 8
      %s226 = scalar_lea.vmem %s0, %s225
      %p227 = pneg %p50
      %p228 = pneg %p47
      %p229 = scmp.lt.s32.totalorder %s19, 1
      %s230 = scalar_select %p229, %s19, 1
      %s231 = smul.addr %s230, 8
      %s232 = sadd.s32 2, %s231
      %s233 = smul.addr %s232, 8
      %s234 = scalar_lea.vmem %s1, %s233
      %p235 = pneg %p76
      %p236 = pneg %p73
      %p237 = scmp.lt.s32.totalorder %s19, 1
      %s238 = scalar_select %p237, %s19, 1
      %s239 = smul.addr %s238, 8
      %s240 = sadd.s32 4, %s239
      %s241 = smul.addr %s240, 8
      %s242 = scalar_lea.vmem %s2, %s241
      %p243 = pneg %p102
      %p244 = pneg %p99
      %p245 = scmp.lt.s32.totalorder %s19, 1
      %s246 = scalar_select %p245, %s19, 1
      %s247 = scalar_lea.vmem %s3, %s246
      %p248 = pneg %p128
      %p249 = pneg %p125
      %p250 = pneg %p156
      %p251 = pneg %p153
      %p252 = scmp.lt.s32.totalorder %s19, 1
      %s253 = scalar_select %p252, %s19, 1
      %p254 = scmp.lt.s32.totalorder %s20, 0
      %s255 = scalar_select %p254, %s20, 0
      %s256 = smul.addr %s255, 2
      %s257 = smul.addr %s253, 2
      %s258 = sadd.s32 %s256, %s257
      %s259 = smul.addr %s258, 8
      %s260 = scalar_lea.vmem %s4, %s259
      %p261 = scmp.lt.s32.totalorder %s19, 1
      %s262 = scalar_select %p261, %s19, 1
      %p263 = scmp.lt.s32.totalorder %s20, 0
      %s264 = scalar_select %p263, %s20, 0
      %s265 = smul.addr %s264, 8
      %s266 = smul.addr %s262, 8
      %s267 = sadd.s32 %s265, %s266
      %s268 = smul.addr %s267, 8
      %s269 = scalar_lea.vmem %s0, %s268
      %p270 = scmp.lt.s32.totalorder %s19, 1
      %s271 = scalar_select %p270, %s19, 1
      %s272 = smul.addr %s271, 8
      %s273 = sadd.s32 2, %s272
      %s274 = smul.addr %s273, 8
      %s275 = scalar_lea.vmem %s1, %s274
      %p276 = scmp.lt.s32.totalorder %s19, 1
      %s277 = scalar_select %p276, %s19, 1
      %s278 = smul.addr %s277, 8
      %s279 = sadd.s32 4, %s278
      %s280 = smul.addr %s279, 8
      %s281 = scalar_lea.vmem %s2, %s280
      %p282 = scmp.lt.s32.totalorder %s19, 1
      %s283 = scalar_select %p282, %s19, 1
      %s284 = scalar_lea.vmem %s3, %s283
      %p285 = scmp.lt.s32.totalorder %s19, 1
      %s286 = scalar_select %p285, %s19, 1
      %p287 = scmp.lt.s32.totalorder %s20, 0
      %s288 = scalar_select %p287, %s20, 0
      %s289 = smul.addr %s288, 2
      %s290 = smul.addr %s286, 2
      %s291 = sadd.s32 %s289, %s290
      %s292 = smul.addr %s291, 8
      %s293 = scalar_lea.vmem %s4, %s292
      %v295 = vld [vmem:[%s269] sm:$0xff]
      %v296 = vld [vmem:[%s269 + $0x8] sm:$0xff]
      %v297 = vld [vmem:[%s275] sm:$0xff]
      %v298 = vld [vmem:[%s275 + $0x8] sm:$0xff]
      %v299 = vld [vmem:[%s281] sm:$0xff]
      %v300 = vld [vmem:[%s281 + $0x8] sm:$0xff]
      %v301 = vld [vmem:[%s284] sm:$0x1]
      %v302 = vsub.f32 %v301, 1.0
      %v303 = vmul.f32 %v302, 1e+09
      %v304 = vpack.c.bf16 %v295, %v295
      %v305 = vpack.c.bf16 %v297, %v297
      %v307 = vlaneseq
      %v308 = vshrl.u32 %v307, 7
      %v309 = vsub.s32 0, %v308
      %v310 = vrot.slane %v303, %v309
      %vm312 = vcmask 261120
      %v314 = vsel %vm312, %v304, 0
      %v317 = vsel %vm312, %v305, 0
      %319 = vmatprep.subr.bf16.mxu0 0
      %320 = vmatpush1.bf16.xpose.msra.mxu0 0
      %321 = vmatprep.subr.bf16.mxu0 0
      %322 = vmatpush1.bf16.xpose.msra.mxu0 0
      %323 = vmatprep.subr.bf16.mxu0 0
      %324 = vmatpush1.bf16.xpose.msra.mxu0 0
      %325 = vmatprep.subr.bf16.mxu0 0
      %326 = vmatpush1.bf16.xpose.msra.mxu0 0
      %327 = vmatprep.subr.bf16.mxu0 0
      %328 = vmatpush1.bf16.xpose.msra.mxu0 0
      %329 = vmatprep.subr.bf16.mxu0 0
      %330 = vmatpush1.bf16.xpose.msra.mxu0 0
      %331 = vmatprep.subr.bf16.mxu0 0
      %332 = vmatpush1.bf16.xpose.msra.mxu0 0
      %333 = vmatprep.subr.bf16.mxu0 0
      %334 = vmatpush1.bf16.xpose.msra.mxu0 %v317
      %335 = vmatprep.subr.bf16.mxu0 0
      %336 = vmatpush2.bf16.xpose.msra.mxu0 0
      %337 = vmatprep.subr.bf16.mxu0 0
      %338 = vmatpush2.bf16.xpose.msra.mxu0 0
      %339 = vmatprep.subr.bf16.mxu0 0
      %340 = vmatpush2.bf16.xpose.msra.mxu0 0
      %341 = vmatprep.subr.bf16.mxu0 0
      %342 = vmatpush2.bf16.xpose.msra.mxu0 0
      %343 = vmatprep.subr.bf16.mxu0 0
      %344 = vmatpush2.bf16.xpose.msra.mxu0 0
      %345 = vmatprep.subr.bf16.mxu0 0
      %346 = vmatpush2.bf16.xpose.msra.mxu0 0
      %347 = vmatprep.subr.bf16.mxu0 0
      %348 = vmatpush2.bf16.xpose.msra.mxu0 0
      %349 = vmatprep.subr.bf16.mxu0 0
      %350 = vmatpush2.bf16.xpose.msra.mxu0 0
      %351 = vmatprep.mubr.bf16.mxu0 0
      %352 = vmatmul.mubr.bf16.gmra.mxu0 %v314
      %v353 = vpop.f32.mrf.mxu0
      %v354 = vadd.f32 %v310, %v353
      %v355 = vpop.f32.mrf.mxu0
      %v356 = vpop.f32.mrf.mxu0
      %v357 = vpop.f32.mrf.mxu0
      %358 = vdwg.mxu0
      %vm359 = vcmask 64512
      %v360 = vsel %vm359, %v354, -inf
      %361 = vmax.xlane.f32.xlu0 %v360
      %v362 = vpop.xlane.xlu0 %361
      %v363 = vsub.f32 %v354, %v362
      %v364 = vmul.f32 %v363, 1.442695
      %v365 = vpow.pop %v364
      %v366 = vsel %vm359, %v365, 0.0
      %367 = vadd.xlane.f32.xlu0 %v366
      %v368 = vpop.xlane.xlu0 %367
      %v369 = vrcp.pop %v368
      %v370 = vmul.f32 %v365, %v369
      %v371 = vpack.c.bf16 %v370, %v370
      %v372 = vpack.c.bf16 %v299, %v299
      %v374 = vsel %vm359, %v371, 0
      %vm376 = vcmask 1043456
      %v378 = vsel %vm376, %v372, 0
      %380 = vmatprep.subr.bf16.mxu0 0
      %381 = vmatpush1.bf16.msra.mxu0 0
      %382 = vmatprep.subr.bf16.mxu0 0
      %383 = vmatpush1.bf16.msra.mxu0 0
      %384 = vmatprep.subr.bf16.mxu0 0
      %385 = vmatpush1.bf16.msra.mxu0 0
      %386 = vmatprep.subr.bf16.mxu0 0
      %387 = vmatpush1.bf16.msra.mxu0 0
      %388 = vmatprep.subr.bf16.mxu0 0
      %389 = vmatpush1.bf16.msra.mxu0 0
      %390 = vmatprep.subr.bf16.mxu0 0
      %391 = vmatpush1.bf16.msra.mxu0 0
      %392 = vmatprep.subr.bf16.mxu0 0
      %393 = vmatpush1.bf16.msra.mxu0 0
      %394 = vmatprep.subr.bf16.mxu0 0
      %395 = vmatpush1.bf16.msra.mxu0 %v378
      %396 = vmatprep.subr.bf16.mxu0 0
      %397 = vmatpush2.bf16.msra.mxu0 0
      %398 = vmatprep.subr.bf16.mxu0 0
      %399 = vmatpush2.bf16.msra.mxu0 0
      %400 = vmatprep.subr.bf16.mxu0 0
      %401 = vmatpush2.bf16.msra.mxu0 0
      %402 = vmatprep.subr.bf16.mxu0 0
      %403 = vmatpush2.bf16.msra.mxu0 0
      %404 = vmatprep.subr.bf16.mxu0 0
      %405 = vmatpush2.bf16.msra.mxu0 0
      %406 = vmatprep.subr.bf16.mxu0 0
      %407 = vmatpush2.bf16.msra.mxu0 0
      %408 = vmatprep.subr.bf16.mxu0 0
      %409 = vmatpush2.bf16.msra.mxu0 0
      %410 = vmatprep.subr.bf16.mxu0 0
      %411 = vmatpush2.bf16.msra.mxu0 0
      %412 = vmatprep.mubr.bf16.mxu0 0
      %413 = vmatmul.mubr.bf16.gmra.mxu0 %v374
      %v414 = vpop.f32.mrf.mxu0
      %v415 = vadd.f32 0.0, %v414
      %v416 = vpop.f32.mrf.mxu0
      %v417 = vpop.f32.mrf.mxu0
      %v418 = vpop.f32.mrf.mxu0
      %419 = vdwg.mxu0
      %421 = vrot.lane.b32.xlu0 %v304, 96
      %v422 = vpop.permute.xlu0 %421
      %424 = vrot.lane.b32.xlu0 %v305, 96
      %v425 = vpop.permute.xlu0 %424
      %v427 = vsel %vm312, %v422, 0
      %v430 = vsel %vm312, %v425, 0
      %432 = vmatprep.subr.bf16.mxu0 0
      %433 = vmatpush1.bf16.xpose.msra.mxu0 0
      %434 = vmatprep.subr.bf16.mxu0 0
      %435 = vmatpush1.bf16.xpose.msra.mxu0 0
      %436 = vmatprep.subr.bf16.mxu0 0
      %437 = vmatpush1.bf16.xpose.msra.mxu0 0
      %438 = vmatprep.subr.bf16.mxu0 0
      %439 = vmatpush1.bf16.xpose.msra.mxu0 0
      %440 = vmatprep.subr.bf16.mxu0 0
      %441 = vmatpush1.bf16.xpose.msra.mxu0 0
      %442 = vmatprep.subr.bf16.mxu0 0
      %443 = vmatpush1.bf16.xpose.msra.mxu0 0
      %444 = vmatprep.subr.bf16.mxu0 0
      %445 = vmatpush1.bf16.xpose.msra.mxu0 0
      %446 = vmatprep.subr.bf16.mxu0 0
      %447 = vmatpush1.bf16.xpose.msra.mxu0 %v430
      %448 = vmatprep.subr.bf16.mxu0 0
      %449 = vmatpush2.bf16.xpose.msra.mxu0 0
      %450 = vmatprep.subr.bf16.mxu0 0
      %451 = vmatpush2.bf16.xpose.msra.mxu0 0
      %452 = vmatprep.subr.bf16.mxu0 0
      %453 = vmatpush2.bf16.xpose.msra.mxu0 0
      %454 = vmatprep.subr.bf16.mxu0 0
      %455 = vmatpush2.bf16.xpose.msra.mxu0 0
      %456 = vmatprep.subr.bf16.mxu0 0
      %457 = vmatpush2.bf16.xpose.msra.mxu0 0
      %458 = vmatprep.subr.bf16.mxu0 0
      %459 = vmatpush2.bf16.xpose.msra.mxu0 0
      %460 = vmatprep.subr.bf16.mxu0 0
      %461 = vmatpush2.bf16.xpose.msra.mxu0 0
      %462 = vmatprep.subr.bf16.mxu0 0
      %463 = vmatpush2.bf16.xpose.msra.mxu0 0
      %464 = vmatprep.mubr.bf16.mxu0 0
      %465 = vmatmul.mubr.bf16.gmra.mxu0 %v427
      %v466 = vpop.f32.mrf.mxu0
      %v467 = vadd.f32 %v310, %v466
      %v468 = vpop.f32.mrf.mxu0
      %v469 = vpop.f32.mrf.mxu0
      %v470 = vpop.f32.mrf.mxu0
      %471 = vdwg.mxu0
      %v472 = vsel %vm359, %v467, -inf
      %473 = vmax.xlane.f32.xlu0 %v472
      %v474 = vpop.xlane.xlu0 %473
      %v475 = vsub.f32 %v467, %v474
      %v476 = vmul.f32 %v475, 1.442695
      %v477 = vpow.pop %v476
      %v478 = vsel %vm359, %v477, 0.0
      %479 = vadd.xlane.f32.xlu0 %v478
      %v480 = vpop.xlane.xlu0 %479
      %v481 = vrcp.pop %v480
      %v482 = vmul.f32 %v477, %v481
      %v483 = vpack.c.bf16 %v482, %v482
      %485 = vrot.lane.b32.xlu0 %v372, 96
      %v486 = vpop.permute.xlu0 %485
      %v488 = vsel %vm359, %v483, 0
      %v491 = vsel %vm376, %v486, 0
      %493 = vmatprep.subr.bf16.mxu0 0
      %494 = vmatpush1.bf16.msra.mxu0 0
      %495 = vmatprep.subr.bf16.mxu0 0
      %496 = vmatpush1.bf16.msra.mxu0 0
      %497 = vmatprep.subr.bf16.mxu0 0
      %498 = vmatpush1.bf16.msra.mxu0 0
      %499 = vmatprep.subr.bf16.mxu0 0
      %500 = vmatpush1.bf16.msra.mxu0 0
      %501 = vmatprep.subr.bf16.mxu0 0
      %502 = vmatpush1.bf16.msra.mxu0 0
      %503 = vmatprep.subr.bf16.mxu0 0
      %504 = vmatpush1.bf16.msra.mxu0 0
      %505 = vmatprep.subr.bf16.mxu0 0
      %506 = vmatpush1.bf16.msra.mxu0 0
      %507 = vmatprep.subr.bf16.mxu0 0
      %508 = vmatpush1.bf16.msra.mxu0 %v491
      %509 = vmatprep.subr.bf16.mxu0 0
      %510 = vmatpush2.bf16.msra.mxu0 0
      %511 = vmatprep.subr.bf16.mxu0 0
      %512 = vmatpush2.bf16.msra.mxu0 0
      %513 = vmatprep.subr.bf16.mxu0 0
      %514 = vmatpush2.bf16.msra.mxu0 0
      %515 = vmatprep.subr.bf16.mxu0 0
      %516 = vmatpush2.bf16.msra.mxu0 0
      %517 = vmatprep.subr.bf16.mxu0 0
      %518 = vmatpush2.bf16.msra.mxu0 0
      %519 = vmatprep.subr.bf16.mxu0 0
      %520 = vmatpush2.bf16.msra.mxu0 0
      %521 = vmatprep.subr.bf16.mxu0 0
      %522 = vmatpush2.bf16.msra.mxu0 0
      %523 = vmatprep.subr.bf16.mxu0 0
      %524 = vmatpush2.bf16.msra.mxu0 0
      %525 = vmatprep.mubr.bf16.mxu0 0
      %526 = vmatmul.mubr.bf16.gmra.mxu0 %v488
      %v527 = vpop.f32.mrf.mxu0
      %v528 = vadd.f32 0.0, %v527
      %v529 = vpop.f32.mrf.mxu0
      %v530 = vpop.f32.mrf.mxu0
      %v531 = vpop.f32.mrf.mxu0
      %532 = vdwg.mxu0
      %533 = vrot.lane.b32.xlu0 %v304, 64
      %v534 = vpop.permute.xlu0 %533
      %535 = vrot.lane.b32.xlu0 %v305, 64
      %v536 = vpop.permute.xlu0 %535
      %v538 = vsel %vm312, %v534, 0
      %v541 = vsel %vm312, %v536, 0
      %543 = vmatprep.subr.bf16.mxu0 0
      %544 = vmatpush1.bf16.xpose.msra.mxu0 0
      %545 = vmatprep.subr.bf16.mxu0 0
      %546 = vmatpush1.bf16.xpose.msra.mxu0 0
      %547 = vmatprep.subr.bf16.mxu0 0
      %548 = vmatpush1.bf16.xpose.msra.mxu0 0
      %549 = vmatprep.subr.bf16.mxu0 0
      %550 = vmatpush1.bf16.xpose.msra.mxu0 0
      %551 = vmatprep.subr.bf16.mxu0 0
      %552 = vmatpush1.bf16.xpose.msra.mxu0 0
      %553 = vmatprep.subr.bf16.mxu0 0
      %554 = vmatpush1.bf16.xpose.msra.mxu0 0
      %555 = vmatprep.subr.bf16.mxu0 0
      %556 = vmatpush1.bf16.xpose.msra.mxu0 0
      %557 = vmatprep.subr.bf16.mxu0 0
      %558 = vmatpush1.bf16.xpose.msra.mxu0 %v541
      %559 = vmatprep.subr.bf16.mxu0 0
      %560 = vmatpush2.bf16.xpose.msra.mxu0 0
      %561 = vmatprep.subr.bf16.mxu0 0
      %562 = vmatpush2.bf16.xpose.msra.mxu0 0
      %563 = vmatprep.subr.bf16.mxu0 0
      %564 = vmatpush2.bf16.xpose.msra.mxu0 0
      %565 = vmatprep.subr.bf16.mxu0 0
      %566 = vmatpush2.bf16.xpose.msra.mxu0 0
      %567 = vmatprep.subr.bf16.mxu0 0
      %568 = vmatpush2.bf16.xpose.msra.mxu0 0
      %569 = vmatprep.subr.bf16.mxu0 0
      %570 = vmatpush2.bf16.xpose.msra.mxu0 0
      %571 = vmatprep.subr.bf16.mxu0 0
      %572 = vmatpush2.bf16.xpose.msra.mxu0 0
      %573 = vmatprep.subr.bf16.mxu0 0
      %574 = vmatpush2.bf16.xpose.msra.mxu0 0
      %575 = vmatprep.mubr.bf16.mxu0 0
      %576 = vmatmul.mubr.bf16.gmra.mxu0 %v538
      %v577 = vpop.f32.mrf.mxu0
      %v578 = vadd.f32 %v310, %v577
      %v579 = vpop.f32.mrf.mxu0
      %v580 = vpop.f32.mrf.mxu0
      %v581 = vpop.f32.mrf.mxu0
      %582 = vdwg.mxu0
      %v583 = vsel %vm359, %v578, -inf
      %584 = vmax.xlane.f32.xlu0 %v583
      %v585 = vpop.xlane.xlu0 %584
      %v586 = vsub.f32 %v578, %v585
      %v587 = vmul.f32 %v586, 1.442695
      %v588 = vpow.pop %v587
      %v589 = vsel %vm359, %v588, 0.0
      %590 = vadd.xlane.f32.xlu0 %v589
      %v591 = vpop.xlane.xlu0 %590
      %v592 = vrcp.pop %v591
      %v593 = vmul.f32 %v588, %v592
      %v594 = vpack.c.bf16 %v593, %v593
      %595 = vrot.lane.b32.xlu0 %v372, 64
      %v596 = vpop.permute.xlu0 %595
      %v598 = vsel %vm359, %v594, 0
      %v601 = vsel %vm376, %v596, 0
      %603 = vmatprep.subr.bf16.mxu0 0
      %604 = vmatpush1.bf16.msra.mxu0 0
      %605 = vmatprep.subr.bf16.mxu0 0
      %606 = vmatpush1.bf16.msra.mxu0 0
      %607 = vmatprep.subr.bf16.mxu0 0
      %608 = vmatpush1.bf16.msra.mxu0 0
      %609 = vmatprep.subr.bf16.mxu0 0
      %610 = vmatpush1.bf16.msra.mxu0 0
      %611 = vmatprep.subr.bf16.mxu0 0
      %612 = vmatpush1.bf16.msra.mxu0 0
      %613 = vmatprep.subr.bf16.mxu0 0
      %614 = vmatpush1.bf16.msra.mxu0 0
      %615 = vmatprep.subr.bf16.mxu0 0
      %616 = vmatpush1.bf16.msra.mxu0 0
      %617 = vmatprep.subr.bf16.mxu0 0
      %618 = vmatpush1.bf16.msra.mxu0 %v601
      %619 = vmatprep.subr.bf16.mxu0 0
      %620 = vmatpush2.bf16.msra.mxu0 0
      %621 = vmatprep.subr.bf16.mxu0 0
      %622 = vmatpush2.bf16.msra.mxu0 0
      %623 = vmatprep.subr.bf16.mxu0 0
      %624 = vmatpush2.bf16.msra.mxu0 0
      %625 = vmatprep.subr.bf16.mxu0 0
      %626 = vmatpush2.bf16.msra.mxu0 0
      %627 = vmatprep.subr.bf16.mxu0 0
      %628 = vmatpush2.bf16.msra.mxu0 0
      %629 = vmatprep.subr.bf16.mxu0 0
      %630 = vmatpush2.bf16.msra.mxu0 0
      %631 = vmatprep.subr.bf16.mxu0 0
      %632 = vmatpush2.bf16.msra.mxu0 0
      %633 = vmatprep.subr.bf16.mxu0 0
      %634 = vmatpush2.bf16.msra.mxu0 0
      %635 = vmatprep.mubr.bf16.mxu0 0
      %636 = vmatmul.mubr.bf16.gmra.mxu0 %v598
      %v637 = vpop.f32.mrf.mxu0
      %v638 = vadd.f32 0.0, %v637
      %v639 = vpop.f32.mrf.mxu0
      %v640 = vpop.f32.mrf.mxu0
      %v641 = vpop.f32.mrf.mxu0
      %642 = vdwg.mxu0
      %643 = vrot.lane.b32.xlu0 %v304, 32
      %v644 = vpop.permute.xlu0 %643
      %645 = vrot.lane.b32.xlu0 %v305, 32
      %v646 = vpop.permute.xlu0 %645
      %v648 = vsel %vm312, %v644, 0
      %v651 = vsel %vm312, %v646, 0
      %653 = vmatprep.subr.bf16.mxu0 0
      %654 = vmatpush1.bf16.xpose.msra.mxu0 0
      %655 = vmatprep.subr.bf16.mxu0 0
      %656 = vmatpush1.bf16.xpose.msra.mxu0 0
      %657 = vmatprep.subr.bf16.mxu0 0
      %658 = vmatpush1.bf16.xpose.msra.mxu0 0
      %659 = vmatprep.subr.bf16.mxu0 0
      %660 = vmatpush1.bf16.xpose.msra.mxu0 0
      %661 = vmatprep.subr.bf16.mxu0 0
      %662 = vmatpush1.bf16.xpose.msra.mxu0 0
      %663 = vmatprep.subr.bf16.mxu0 0
      %664 = vmatpush1.bf16.xpose.msra.mxu0 0
      %665 = vmatprep.subr.bf16.mxu0 0
      %666 = vmatpush1.bf16.xpose.msra.mxu0 0
      %667 = vmatprep.subr.bf16.mxu0 0
      %668 = vmatpush1.bf16.xpose.msra.mxu0 %v651
      %669 = vmatprep.subr.bf16.mxu0 0
      %670 = vmatpush2.bf16.xpose.msra.mxu0 0
      %671 = vmatprep.subr.bf16.mxu0 0
      %672 = vmatpush2.bf16.xpose.msra.mxu0 0
      %673 = vmatprep.subr.bf16.mxu0 0
      %674 = vmatpush2.bf16.xpose.msra.mxu0 0
      %675 = vmatprep.subr.bf16.mxu0 0
      %676 = vmatpush2.bf16.xpose.msra.mxu0 0
      %677 = vmatprep.subr.bf16.mxu0 0
      %678 = vmatpush2.bf16.xpose.msra.mxu0 0
      %679 = vmatprep.subr.bf16.mxu0 0
      %680 = vmatpush2.bf16.xpose.msra.mxu0 0
      %681 = vmatprep.subr.bf16.mxu0 0
      %682 = vmatpush2.bf16.xpose.msra.mxu0 0
      %683 = vmatprep.subr.bf16.mxu0 0
      %684 = vmatpush2.bf16.xpose.msra.mxu0 0
      %685 = vmatprep.mubr.bf16.mxu0 0
      %686 = vmatmul.mubr.bf16.gmra.mxu0 %v648
      %v687 = vpop.f32.mrf.mxu0
      %v688 = vadd.f32 %v310, %v687
      %v689 = vpop.f32.mrf.mxu0
      %v690 = vpop.f32.mrf.mxu0
      %v691 = vpop.f32.mrf.mxu0
      %692 = vdwg.mxu0
      %v693 = vsel %vm359, %v688, -inf
      %694 = vmax.xlane.f32.xlu0 %v693
      %v695 = vpop.xlane.xlu0 %694
      %v696 = vsub.f32 %v688, %v695
      %v697 = vmul.f32 %v696, 1.442695
      %v698 = vpow.pop %v697
      %v699 = vsel %vm359, %v698, 0.0
      %700 = vadd.xlane.f32.xlu0 %v699
      %v701 = vpop.xlane.xlu0 %700
      %v702 = vrcp.pop %v701
      %v703 = vmul.f32 %v698, %v702
      %v704 = vpack.c.bf16 %v703, %v703
      %705 = vrot.lane.b32.xlu0 %v372, 32
      %v706 = vpop.permute.xlu0 %705
      %v708 = vsel %vm359, %v704, 0
      %v711 = vsel %vm376, %v706, 0
      %713 = vmatprep.subr.bf16.mxu0 0
      %714 = vmatpush1.bf16.msra.mxu0 0
      %715 = vmatprep.subr.bf16.mxu0 0
      %716 = vmatpush1.bf16.msra.mxu0 0
      %717 = vmatprep.subr.bf16.mxu0 0
      %718 = vmatpush1.bf16.msra.mxu0 0
      %719 = vmatprep.subr.bf16.mxu0 0
      %720 = vmatpush1.bf16.msra.mxu0 0
      %721 = vmatprep.subr.bf16.mxu0 0
      %722 = vmatpush1.bf16.msra.mxu0 0
      %723 = vmatprep.subr.bf16.mxu0 0
      %724 = vmatpush1.bf16.msra.mxu0 0
      %725 = vmatprep.subr.bf16.mxu0 0
      %726 = vmatpush1.bf16.msra.mxu0 0
      %727 = vmatprep.subr.bf16.mxu0 0
      %728 = vmatpush1.bf16.msra.mxu0 %v711
      %729 = vmatprep.subr.bf16.mxu0 0
      %730 = vmatpush2.bf16.msra.mxu0 0
      %731 = vmatprep.subr.bf16.mxu0 0
      %732 = vmatpush2.bf16.msra.mxu0 0
      %733 = vmatprep.subr.bf16.mxu0 0
      %734 = vmatpush2.bf16.msra.mxu0 0
      %735 = vmatprep.subr.bf16.mxu0 0
      %736 = vmatpush2.bf16.msra.mxu0 0
      %737 = vmatprep.subr.bf16.mxu0 0
      %738 = vmatpush2.bf16.msra.mxu0 0
      %739 = vmatprep.subr.bf16.mxu0 0
      %740 = vmatpush2.bf16.msra.mxu0 0
      %741 = vmatprep.subr.bf16.mxu0 0
      %742 = vmatpush2.bf16.msra.mxu0 0
      %743 = vmatprep.subr.bf16.mxu0 0
      %744 = vmatpush2.bf16.msra.mxu0 0
      %745 = vmatprep.mubr.bf16.mxu0 0
      %746 = vmatmul.mubr.bf16.gmra.mxu0 %v708
      %v747 = vpop.f32.mrf.mxu0
      %v748 = vadd.f32 0.0, %v747
      %v749 = vpop.f32.mrf.mxu0
      %v750 = vpop.f32.mrf.mxu0
      %v751 = vpop.f32.mrf.mxu0
      %752 = vdwg.mxu0
      %v753 = vpack.c.bf16 %v296, %v296
      %v754 = vpack.c.bf16 %v298, %v298
      %v756 = vsel %vm312, %v753, 0
      %v759 = vsel %vm312, %v754, 0
      %761 = vmatprep.subr.bf16.mxu0 0
      %762 = vmatpush1.bf16.xpose.msra.mxu0 0
      %763 = vmatprep.subr.bf16.mxu0 0
      %764 = vmatpush1.bf16.xpose.msra.mxu0 0
      %765 = vmatprep.subr.bf16.mxu0 0
      %766 = vmatpush1.bf16.xpose.msra.mxu0 0
      %767 = vmatprep.subr.bf16.mxu0 0
      %768 = vmatpush1.bf16.xpose.msra.mxu0 0
      %769 = vmatprep.subr.bf16.mxu0 0
      %770 = vmatpush1.bf16.xpose.msra.mxu0 0
      %771 = vmatprep.subr.bf16.mxu0 0
      %772 = vmatpush1.bf16.xpose.msra.mxu0 0
      %773 = vmatprep.subr.bf16.mxu0 0
      %774 = vmatpush1.bf16.xpose.msra.mxu0 0
      %775 = vmatprep.subr.bf16.mxu0 0
      %776 = vmatpush1.bf16.xpose.msra.mxu0 %v759
      %777 = vmatprep.subr.bf16.mxu0 0
      %778 = vmatpush2.bf16.xpose.msra.mxu0 0
      %779 = vmatprep.subr.bf16.mxu0 0
      %780 = vmatpush2.bf16.xpose.msra.mxu0 0
      %781 = vmatprep.subr.bf16.mxu0 0
      %782 = vmatpush2.bf16.xpose.msra.mxu0 0
      %783 = vmatprep.subr.bf16.mxu0 0
      %784 = vmatpush2.bf16.xpose.msra.mxu0 0
      %785 = vmatprep.subr.bf16.mxu0 0
      %786 = vmatpush2.bf16.xpose.msra.mxu0 0
      %787 = vmatprep.subr.bf16.mxu0 0
      %788 = vmatpush2.bf16.xpose.msra.mxu0 0
      %789 = vmatprep.subr.bf16.mxu0 0
      %790 = vmatpush2.bf16.xpose.msra.mxu0 0
      %791 = vmatprep.subr.bf16.mxu0 0
      %792 = vmatpush2.bf16.xpose.msra.mxu0 0
      %793 = vmatprep.mubr.bf16.mxu0 0
      %794 = vmatmul.mubr.bf16.gmra.mxu0 %v756
      %v795 = vpop.f32.mrf.mxu0
      %v796 = vadd.f32 %v310, %v795
      %v797 = vpop.f32.mrf.mxu0
      %v798 = vpop.f32.mrf.mxu0
      %v799 = vpop.f32.mrf.mxu0
      %800 = vdwg.mxu0
      %v801 = vsel %vm359, %v796, -inf
      %802 = vmax.xlane.f32.xlu0 %v801
      %v803 = vpop.xlane.xlu0 %802
      %v804 = vsub.f32 %v796, %v803
      %v805 = vmul.f32 %v804, 1.442695
      %v806 = vpow.pop %v805
      %v807 = vsel %vm359, %v806, 0.0
      %808 = vadd.xlane.f32.xlu0 %v807
      %v809 = vpop.xlane.xlu0 %808
      %v810 = vrcp.pop %v809
      %v811 = vmul.f32 %v806, %v810
      %v812 = vpack.c.bf16 %v811, %v811
      %v813 = vpack.c.bf16 %v300, %v300
      %v815 = vsel %vm359, %v812, 0
      %v818 = vsel %vm376, %v813, 0
      %820 = vmatprep.subr.bf16.mxu0 0
      %821 = vmatpush1.bf16.msra.mxu0 0
      %822 = vmatprep.subr.bf16.mxu0 0
      %823 = vmatpush1.bf16.msra.mxu0 0
      %824 = vmatprep.subr.bf16.mxu0 0
      %825 = vmatpush1.bf16.msra.mxu0 0
      %826 = vmatprep.subr.bf16.mxu0 0
      %827 = vmatpush1.bf16.msra.mxu0 0
      %828 = vmatprep.subr.bf16.mxu0 0
      %829 = vmatpush1.bf16.msra.mxu0 0
      %830 = vmatprep.subr.bf16.mxu0 0
      %831 = vmatpush1.bf16.msra.mxu0 0
      %832 = vmatprep.subr.bf16.mxu0 0
      %833 = vmatpush1.bf16.msra.mxu0 0
      %834 = vmatprep.subr.bf16.mxu0 0
      %835 = vmatpush1.bf16.msra.mxu0 %v818
      %836 = vmatprep.subr.bf16.mxu0 0
      %837 = vmatpush2.bf16.msra.mxu0 0
      %838 = vmatprep.subr.bf16.mxu0 0
      %839 = vmatpush2.bf16.msra.mxu0 0
      %840 = vmatprep.subr.bf16.mxu0 0
      %841 = vmatpush2.bf16.msra.mxu0 0
      %842 = vmatprep.subr.bf16.mxu0 0
      %843 = vmatpush2.bf16.msra.mxu0 0
      %844 = vmatprep.subr.bf16.mxu0 0
      %845 = vmatpush2.bf16.msra.mxu0 0
      %846 = vmatprep.subr.bf16.mxu0 0
      %847 = vmatpush2.bf16.msra.mxu0 0
      %848 = vmatprep.subr.bf16.mxu0 0
      %849 = vmatpush2.bf16.msra.mxu0 0
      %850 = vmatprep.subr.bf16.mxu0 0
      %851 = vmatpush2.bf16.msra.mxu0 0
      %852 = vmatprep.mubr.bf16.mxu0 0
      %853 = vmatmul.mubr.bf16.gmra.mxu0 %v815
      %v854 = vpop.f32.mrf.mxu0
      %v855 = vadd.f32 0.0, %v854
      %v856 = vpop.f32.mrf.mxu0
      %v857 = vpop.f32.mrf.mxu0
      %v858 = vpop.f32.mrf.mxu0
      %859 = vdwg.mxu0
      %861 = vrot.lane.b32.xlu0 %v753, 96
      %v862 = vpop.permute.xlu0 %861
      %864 = vrot.lane.b32.xlu0 %v754, 96
      %v865 = vpop.permute.xlu0 %864
      %v867 = vsel %vm312, %v862, 0
      %v870 = vsel %vm312, %v865, 0
      %872 = vmatprep.subr.bf16.mxu0 0
      %873 = vmatpush1.bf16.xpose.msra.mxu0 0
      %874 = vmatprep.subr.bf16.mxu0 0
      %875 = vmatpush1.bf16.xpose.msra.mxu0 0
      %876 = vmatprep.subr.bf16.mxu0 0
      %877 = vmatpush1.bf16.xpose.msra.mxu0 0
      %878 = vmatprep.subr.bf16.mxu0 0
      %879 = vmatpush1.bf16.xpose.msra.mxu0 0
      %880 = vmatprep.subr.bf16.mxu0 0
      %881 = vmatpush1.bf16.xpose.msra.mxu0 0
      %882 = vmatprep.subr.bf16.mxu0 0
      %883 = vmatpush1.bf16.xpose.msra.mxu0 0
      %884 = vmatprep.subr.bf16.mxu0 0
      %885 = vmatpush1.bf16.xpose.msra.mxu0 0
      %886 = vmatprep.subr.bf16.mxu0 0
      %887 = vmatpush1.bf16.xpose.msra.mxu0 %v870
      %888 = vmatprep.subr.bf16.mxu0 0
      %889 = vmatpush2.bf16.xpose.msra.mxu0 0
      %890 = vmatprep.subr.bf16.mxu0 0
      %891 = vmatpush2.bf16.xpose.msra.mxu0 0
      %892 = vmatprep.subr.bf16.mxu0 0
      %893 = vmatpush2.bf16.xpose.msra.mxu0 0
      %894 = vmatprep.subr.bf16.mxu0 0
      %895 = vmatpush2.bf16.xpose.msra.mxu0 0
      %896 = vmatprep.subr.bf16.mxu0 0
      %897 = vmatpush2.bf16.xpose.msra.mxu0 0
      %898 = vmatprep.subr.bf16.mxu0 0
      %899 = vmatpush2.bf16.xpose.msra.mxu0 0
      %900 = vmatprep.subr.bf16.mxu0 0
      %901 = vmatpush2.bf16.xpose.msra.mxu0 0
      %902 = vmatprep.subr.bf16.mxu0 0
      %903 = vmatpush2.bf16.xpose.msra.mxu0 0
      %904 = vmatprep.mubr.bf16.mxu0 0
      %905 = vmatmul.mubr.bf16.gmra.mxu0 %v867
      %v906 = vpop.f32.mrf.mxu0
      %v907 = vadd.f32 %v310, %v906
      %v908 = vpop.f32.mrf.mxu0
      %v909 = vpop.f32.mrf.mxu0
      %v910 = vpop.f32.mrf.mxu0
      %911 = vdwg.mxu0
      %v912 = vsel %vm359, %v907, -inf
      %913 = vmax.xlane.f32.xlu0 %v912
      %v914 = vpop.xlane.xlu0 %913
      %v915 = vsub.f32 %v907, %v914
      %v916 = vmul.f32 %v915, 1.442695
      %v917 = vpow.pop %v916
      %v918 = vsel %vm359, %v917, 0.0
      %919 = vadd.xlane.f32.xlu0 %v918
      %v920 = vpop.xlane.xlu0 %919
      %v921 = vrcp.pop %v920
      %v922 = vmul.f32 %v917, %v921
      %v923 = vpack.c.bf16 %v922, %v922
      %925 = vrot.lane.b32.xlu0 %v813, 96
      %v926 = vpop.permute.xlu0 %925
      %v928 = vsel %vm359, %v923, 0
      %v931 = vsel %vm376, %v926, 0
      %933 = vmatprep.subr.bf16.mxu0 0
      %934 = vmatpush1.bf16.msra.mxu0 0
      %935 = vmatprep.subr.bf16.mxu0 0
      %936 = vmatpush1.bf16.msra.mxu0 0
      %937 = vmatprep.subr.bf16.mxu0 0
      %938 = vmatpush1.bf16.msra.mxu0 0
      %939 = vmatprep.subr.bf16.mxu0 0
      %940 = vmatpush1.bf16.msra.mxu0 0
      %941 = vmatprep.subr.bf16.mxu0 0
      %942 = vmatpush1.bf16.msra.mxu0 0
      %943 = vmatprep.subr.bf16.mxu0 0
      %944 = vmatpush1.bf16.msra.mxu0 0
      %945 = vmatprep.subr.bf16.mxu0 0
      %946 = vmatpush1.bf16.msra.mxu0 0
      %947 = vmatprep.subr.bf16.mxu0 0
      %948 = vmatpush1.bf16.msra.mxu0 %v931
      %949 = vmatprep.subr.bf16.mxu0 0
      %950 = vmatpush2.bf16.msra.mxu0 0
      %951 = vmatprep.subr.bf16.mxu0 0
      %952 = vmatpush2.bf16.msra.mxu0 0
      %953 = vmatprep.subr.bf16.mxu0 0
      %954 = vmatpush2.bf16.msra.mxu0 0
      %955 = vmatprep.subr.bf16.mxu0 0
      %956 = vmatpush2.bf16.msra.mxu0 0
      %957 = vmatprep.subr.bf16.mxu0 0
      %958 = vmatpush2.bf16.msra.mxu0 0
      %959 = vmatprep.subr.bf16.mxu0 0
      %960 = vmatpush2.bf16.msra.mxu0 0
      %961 = vmatprep.subr.bf16.mxu0 0
      %962 = vmatpush2.bf16.msra.mxu0 0
      %963 = vmatprep.subr.bf16.mxu0 0
      %964 = vmatpush2.bf16.msra.mxu0 0
      %965 = vmatprep.mubr.bf16.mxu0 0
      %966 = vmatmul.mubr.bf16.gmra.mxu0 %v928
      %v967 = vpop.f32.mrf.mxu0
      %v968 = vadd.f32 0.0, %v967
      %v969 = vpop.f32.mrf.mxu0
      %v970 = vpop.f32.mrf.mxu0
      %v971 = vpop.f32.mrf.mxu0
      %972 = vdwg.mxu0
      %973 = vrot.lane.b32.xlu0 %v753, 64
      %v974 = vpop.permute.xlu0 %973
      %975 = vrot.lane.b32.xlu0 %v754, 64
      %v976 = vpop.permute.xlu0 %975
      %v978 = vsel %vm312, %v974, 0
      %v981 = vsel %vm312, %v976, 0
      %983 = vmatprep.subr.bf16.mxu0 0
      %984 = vmatpush1.bf16.xpose.msra.mxu0 0
      %985 = vmatprep.subr.bf16.mxu0 0
      %986 = vmatpush1.bf16.xpose.msra.mxu0 0
      %987 = vmatprep.subr.bf16.mxu0 0
      %988 = vmatpush1.bf16.xpose.msra.mxu0 0
      %989 = vmatprep.subr.bf16.mxu0 0
      %990 = vmatpush1.bf16.xpose.msra.mxu0 0
      %991 = vmatprep.subr.bf16.mxu0 0
      %992 = vmatpush1.bf16.xpose.msra.mxu0 0
      %993 = vmatprep.subr.bf16.mxu0 0
      %994 = vmatpush1.bf16.xpose.msra.mxu0 0
      %995 = vmatprep.subr.bf16.mxu0 0
      %996 = vmatpush1.bf16.xpose.msra.mxu0 0
      %997 = vmatprep.subr.bf16.mxu0 0
      %998 = vmatpush1.bf16.xpose.msra.mxu0 %v981
      %999 = vmatprep.subr.bf16.mxu0 0
      %1000 = vmatpush2.bf16.xpose.msra.mxu0 0
      %1001 = vmatprep.subr.bf16.mxu0 0
      %1002 = vmatpush2.bf16.xpose.msra.mxu0 0
      %1003 = vmatprep.subr.bf16.mxu0 0
      %1004 = vmatpush2.bf16.xpose.msra.mxu0 0
      %1005 = vmatprep.subr.bf16.mxu0 0
      %1006 = vmatpush2.bf16.xpose.msra.mxu0 0
      %1007 = vmatprep.subr.bf16.mxu0 0
      %1008 = vmatpush2.bf16.xpose.msra.mxu0 0
      %1009 = vmatprep.subr.bf16.mxu0 0
      %1010 = vmatpush2.bf16.xpose.msra.mxu0 0
      %1011 = vmatprep.subr.bf16.mxu0 0
      %1012 = vmatpush2.bf16.xpose.msra.mxu0 0
      %1013 = vmatprep.subr.bf16.mxu0 0
      %1014 = vmatpush2.bf16.xpose.msra.mxu0 0
      %1015 = vmatprep.mubr.bf16.mxu0 0
      %1016 = vmatmul.mubr.bf16.gmra.mxu0 %v978
      %v1017 = vpop.f32.mrf.mxu0
      %v1018 = vadd.f32 %v310, %v1017
      %v1019 = vpop.f32.mrf.mxu0
      %v1020 = vpop.f32.mrf.mxu0
      %v1021 = vpop.f32.mrf.mxu0
      %1022 = vdwg.mxu0
      %v1023 = vsel %vm359, %v1018, -inf
      %1024 = vmax.xlane.f32.xlu0 %v1023
      %v1025 = vpop.xlane.xlu0 %1024
      %v1026 = vsub.f32 %v1018, %v1025
      %v1027 = vmul.f32 %v1026, 1.442695
      %v1028 = vpow.pop %v1027
      %v1029 = vsel %vm359, %v1028, 0.0
      %1030 = vadd.xlane.f32.xlu0 %v1029
      %v1031 = vpop.xlane.xlu0 %1030
      %v1032 = vrcp.pop %v1031
      %v1033 = vmul.f32 %v1028, %v1032
      %v1034 = vpack.c.bf16 %v1033, %v1033
      %1035 = vrot.lane.b32.xlu0 %v813, 64
      %v1036 = vpop.permute.xlu0 %1035
      %v1038 = vsel %vm359, %v1034, 0
      %v1041 = vsel %vm376, %v1036, 0
      %1043 = vmatprep.subr.bf16.mxu0 0
      %1044 = vmatpush1.bf16.msra.mxu0 0
      %1045 = vmatprep.subr.bf16.mxu0 0
      %1046 = vmatpush1.bf16.msra.mxu0 0
      %1047 = vmatprep.subr.bf16.mxu0 0
      %1048 = vmatpush1.bf16.msra.mxu0 0
      %1049 = vmatprep.subr.bf16.mxu0 0
      %1050 = vmatpush1.bf16.msra.mxu0 0
      %1051 = vmatprep.subr.bf16.mxu0 0
      %1052 = vmatpush1.bf16.msra.mxu0 0
      %1053 = vmatprep.subr.bf16.mxu0 0
      %1054 = vmatpush1.bf16.msra.mxu0 0
      %1055 = vmatprep.subr.bf16.mxu0 0
      %1056 = vmatpush1.bf16.msra.mxu0 0
      %1057 = vmatprep.subr.bf16.mxu0 0
      %1058 = vmatpush1.bf16.msra.mxu0 %v1041
      %1059 = vmatprep.subr.bf16.mxu0 0
      %1060 = vmatpush2.bf16.msra.mxu0 0
      %1061 = vmatprep.subr.bf16.mxu0 0
      %1062 = vmatpush2.bf16.msra.mxu0 0
      %1063 = vmatprep.subr.bf16.mxu0 0
      %1064 = vmatpush2.bf16.msra.mxu0 0
      %1065 = vmatprep.subr.bf16.mxu0 0
      %1066 = vmatpush2.bf16.msra.mxu0 0
      %1067 = vmatprep.subr.bf16.mxu0 0
      %1068 = vmatpush2.bf16.msra.mxu0 0
      %1069 = vmatprep.subr.bf16.mxu0 0
      %1070 = vmatpush2.bf16.msra.mxu0 0
      %1071 = vmatprep.subr.bf16.mxu0 0
      %1072 = vmatpush2.bf16.msra.mxu0 0
      %1073 = vmatprep.subr.bf16.mxu0 0
      %1074 = vmatpush2.bf16.msra.mxu0 0
      %1075 = vmatprep.mubr.bf16.mxu0 0
      %1076 = vmatmul.mubr.bf16.gmra.mxu0 %v1038
      %v1077 = vpop.f32.mrf.mxu0
      %v1078 = vadd.f32 0.0, %v1077
      %v1079 = vpop.f32.mrf.mxu0
      %v1080 = vpop.f32.mrf.mxu0
      %v1081 = vpop.f32.mrf.mxu0
      %1082 = vdwg.mxu0
      %1083 = vrot.lane.b32.xlu0 %v753, 32
      %v1084 = vpop.permute.xlu0 %1083
      %1085 = vrot.lane.b32.xlu0 %v754, 32
      %v1086 = vpop.permute.xlu0 %1085
      %v1088 = vsel %vm312, %v1084, 0
      %v1091 = vsel %vm312, %v1086, 0
      %1093 = vmatprep.subr.bf16.mxu0 0
      %1094 = vmatpush1.bf16.xpose.msra.mxu0 0
      %1095 = vmatprep.subr.bf16.mxu0 0
      %1096 = vmatpush1.bf16.xpose.msra.mxu0 0
      %1097 = vmatprep.subr.bf16.mxu0 0
      %1098 = vmatpush1.bf16.xpose.msra.mxu0 0
      %1099 = vmatprep.subr.bf16.mxu0 0
      %1100 = vmatpush1.bf16.xpose.msra.mxu0 0
      %1101 = vmatprep.subr.bf16.mxu0 0
      %1102 = vmatpush1.bf16.xpose.msra.mxu0 0
      %1103 = vmatprep.subr.bf16.mxu0 0
      %1104 = vmatpush1.bf16.xpose.msra.mxu0 0
      %1105 = vmatprep.subr.bf16.mxu0 0
      %1106 = vmatpush1.bf16.xpose.msra.mxu0 0
      %1107 = vmatprep.subr.bf16.mxu0 0
      %1108 = vmatpush1.bf16.xpose.msra.mxu0 %v1091
      %1109 = vmatprep.subr.bf16.mxu0 0
      %1110 = vmatpush2.bf16.xpose.msra.mxu0 0
      %1111 = vmatprep.subr.bf16.mxu0 0
      %1112 = vmatpush2.bf16.xpose.msra.mxu0 0
      %1113 = vmatprep.subr.bf16.mxu0 0
      %1114 = vmatpush2.bf16.xpose.msra.mxu0 0
      %1115 = vmatprep.subr.bf16.mxu0 0
      %1116 = vmatpush2.bf16.xpose.msra.mxu0 0
      %1117 = vmatprep.subr.bf16.mxu0 0
      %1118 = vmatpush2.bf16.xpose.msra.mxu0 0
      %1119 = vmatprep.subr.bf16.mxu0 0
      %1120 = vmatpush2.bf16.xpose.msra.mxu0 0
      %1121 = vmatprep.subr.bf16.mxu0 0
      %1122 = vmatpush2.bf16.xpose.msra.mxu0 0
      %1123 = vmatprep.subr.bf16.mxu0 0
      %1124 = vmatpush2.bf16.xpose.msra.mxu0 0
      %1125 = vmatprep.mubr.bf16.mxu0 0
      %1126 = vmatmul.mubr.bf16.gmra.mxu0 %v1088
      %v1127 = vpop.f32.mrf.mxu0
      %v1128 = vadd.f32 %v310, %v1127
      %v1129 = vpop.f32.mrf.mxu0
      %v1130 = vpop.f32.mrf.mxu0
      %v1131 = vpop.f32.mrf.mxu0
      %1132 = vdwg.mxu0
      %v1133 = vsel %vm359, %v1128, -inf
      %1134 = vmax.xlane.f32.xlu0 %v1133
      %v1135 = vpop.xlane.xlu0 %1134
      %v1136 = vsub.f32 %v1128, %v1135
      %v1137 = vmul.f32 %v1136, 1.442695
      %v1138 = vpow.pop %v1137
      %v1139 = vsel %vm359, %v1138, 0.0
      %1140 = vadd.xlane.f32.xlu0 %v1139
      %v1141 = vpop.xlane.xlu0 %1140
      %v1142 = vrcp.pop %v1141
      %v1143 = vmul.f32 %v1138, %v1142
      %v1144 = vpack.c.bf16 %v1143, %v1143
      %1145 = vrot.lane.b32.xlu0 %v813, 32
      %v1146 = vpop.permute.xlu0 %1145
      %v1148 = vsel %vm359, %v1144, 0
      %v1151 = vsel %vm376, %v1146, 0
      %1153 = vmatprep.subr.bf16.mxu0 0
      %1154 = vmatpush1.bf16.msra.mxu0 0
      %1155 = vmatprep.subr.bf16.mxu0 0
      %1156 = vmatpush1.bf16.msra.mxu0 0
      %1157 = vmatprep.subr.bf16.mxu0 0
      %1158 = vmatpush1.bf16.msra.mxu0 0
      %1159 = vmatprep.subr.bf16.mxu0 0
      %1160 = vmatpush1.bf16.msra.mxu0 0
      %1161 = vmatprep.subr.bf16.mxu0 0
      %1162 = vmatpush1.bf16.msra.mxu0 0
      %1163 = vmatprep.subr.bf16.mxu0 0
      %1164 = vmatpush1.bf16.msra.mxu0 0
      %1165 = vmatprep.subr.bf16.mxu0 0
      %1166 = vmatpush1.bf16.msra.mxu0 0
      %1167 = vmatprep.subr.bf16.mxu0 0
      %1168 = vmatpush1.bf16.msra.mxu0 %v1151
      %1169 = vmatprep.subr.bf16.mxu0 0
      %1170 = vmatpush2.bf16.msra.mxu0 0
      %1171 = vmatprep.subr.bf16.mxu0 0
      %1172 = vmatpush2.bf16.msra.mxu0 0
      %1173 = vmatprep.subr.bf16.mxu0 0
      %1174 = vmatpush2.bf16.msra.mxu0 0
      %1175 = vmatprep.subr.bf16.mxu0 0
      %1176 = vmatpush2.bf16.msra.mxu0 0
      %1177 = vmatprep.subr.bf16.mxu0 0
      %1178 = vmatpush2.bf16.msra.mxu0 0
      %1179 = vmatprep.subr.bf16.mxu0 0
      %1180 = vmatpush2.bf16.msra.mxu0 0
      %1181 = vmatprep.subr.bf16.mxu0 0
      %1182 = vmatpush2.bf16.msra.mxu0 0
      %1183 = vmatprep.subr.bf16.mxu0 0
      %1184 = vmatpush2.bf16.msra.mxu0 0
      %1185 = vmatprep.mubr.bf16.mxu0 0
      %1186 = vmatmul.mubr.bf16.gmra.mxu0 %v1148
      %v1187 = vpop.f32.mrf.mxu0
      %v1188 = vadd.f32 0.0, %v1187
      %v1189 = vpop.f32.mrf.mxu0
      %v1190 = vpop.f32.mrf.mxu0
      %v1191 = vpop.f32.mrf.mxu0
      %1192 = vdwg.mxu0
      %1194 = vrot.lane.b32.xlu0 %v528, 32
      %v1195 = vpop.permute.xlu0 %1194
      %1198 = vrot.lane.b32.xlu0 %v638, 64
      %v1199 = vpop.permute.xlu0 %1198
      %1202 = vrot.lane.b32.xlu0 %v748, 96
      %v1203 = vpop.permute.xlu0 %1202
      %1206 = vrot.lane.b32.xlu0 %v968, 32
      %v1207 = vpop.permute.xlu0 %1206
      %1210 = vrot.lane.b32.xlu0 %v1078, 64
      %v1211 = vpop.permute.xlu0 %1210
      %1214 = vrot.lane.b32.xlu0 %v1188, 96
      %v1215 = vpop.permute.xlu0 %1214
      %v1217 = vsel %vm312, %v415, %v1195
      %vm1218 = vcmask 523264
      %v1219 = vsel %vm1218, %v1217, %v1199
      %vm1220 = vcmask 785408
      %v1221 = vsel %vm1220, %v1219, %v1203
      %v1222 = vsel %vm312, %v855, %v1207
      %v1223 = vsel %vm1218, %v1222, %v1211
      %v1224 = vsel %vm1220, %v1223, %v1215
      %1225 = vst [vmem:[%s293] sm:$0xff] %v1221
      %1226 = vst [vmem:[%s293 + $0x8] sm:$0xff] %v1224
      %p1227 = scmp.lt.s32.totalorder %s19, 1
      %s1228 = scalar_select %p1227, %s19, 1
      %p1229 = scmp.lt.s32.totalorder %s20, 0
      %s1230 = scalar_select %p1229, %s20, 0
      %s1231 = smul.addr %s1230, 2
      %s1232 = smul.addr %s1228, 2
      %s1233 = sadd.s32 %s1231, %s1232
      %s1234 = smul.addr %s1233, 8
      %s1235 = scalar_lea.vmem %s4, %s1234
      // Predicated region
      $region37: #{node_update_forward.13} parent=35 // pred_check
        %p1236 = pneg %p153
      $region38: #{node_update_forward.13} parent=35 // pred_check_branch
        %1238 = sbr.rel (%p1236) target = $region40
      $region39: #{node_update_forward.13} parent=35 // pred_region
        _
      $region40: #{node_update_forward.13} parent=35 // pred_fallthru
        _
    $region36: #{node_update_forward.13} parent=5 // pred_fallthru
      _
    %p1239 = scmp.le.s32.totalorder 2, %s10
    // Predicated region
    $region41: #{node_update_forward.13} parent=5 // pred_check
      %p1240 = pneg %p1239
    $region42: #{node_update_forward.13} parent=5 // pred_check_branch
      %1242 = sbr.rel (%p1240) target = $region44
    $region43: #{node_update_forward.13} parent=5 // pred_region
      %s1243 = ssub.s32 %s10, 2
      // Predicated region
      $region45: #{node_update_forward.13} parent=43 // pred_check
        %p1244 = pneg %p159
      $region46: #{node_update_forward.13} parent=43 // pred_check_branch
        %1246 = sbr.rel (%p1244) target = $region48
      $region47: #{node_update_forward.13} parent=43 // pred_region
        %p1247 = scmp.lt.s32.totalorder %s21, 1
        %s1248 = scalar_select %p1247, %s21, 1
        %p1249 = scmp.lt.s32.totalorder %s22, 0
        %s1250 = scalar_select %p1249, %s22, 0
        %s1251 = smul.addr %s1250, 2
        %s1252 = smul.addr %s1248, 2
        %s1253 = sadd.s32 %s1251, %s1252
        %s1254 = smul.addr %s1253, 8
        %s1255 = scalar_lea.vmem %s4, %s1254
      $region48: #{node_update_forward.13} parent=43 // pred_fallthru
        _
    $region44: #{node_update_forward.13} parent=5 // pred_fallthru
      _
  $region6: #{node_update_forward.13} parent=0 // loop_footer
    %s14 = sadd.s32 1, %s10
  $region7: #{node_update_forward.13} parent=0 // loop_footer_branch
    %9 = sbr.rel target = $region3
  $region8: #{node_update_forward.13} parent=0 // loop_exit
    _

// kernel: node_update_forward.15
$region0: #{node_update_forward.15}
  #allocation0 [shape = 'u32[]', space=smem, size = 0x4, offset = 0x4, fixed_abs, tag = 'smem constant byte address 0x4 - core index']
  #allocation1 [shape = 'u32[144,128]{1,0:T(1,128)}', space=vmem, size = 0x12000, scoped, tag = 'internal scratch']
  %s0 = inlined_call_operand.vmem [shape: f32[16,256], index: 0, kind: input, shape index: {}]
  %s1 = inlined_call_operand.vmem [shape: f32[256,256], index: 1, kind: input, shape index: {}]
  %s2 = inlined_call_operand.vmem [shape: f32[1,256], index: 2, kind: input, shape index: {}]
  %s3 = inlined_call_operand.vmem [shape: f32[256,256], index: 3, kind: input, shape index: {}]
  %s4 = inlined_call_operand.vmem [shape: f32[1,256], index: 4, kind: input, shape index: {}]
  %s5 = inlined_call_operand.hbm [shape: f32[16,256], index: 5, kind: output, shape index: {}]
  %s6 = sld [smem:[#allocation0]]
  $region30: #{node_update_forward.15} parent=0
    _
  %s8 = ssub.s32 1, %s6
  %s9 = scalar_select 0, %s8, %s6
  $region1: #{node_update_forward.15} parent=0
    #allocation2 [shape = 'u8[16384]{0}', space=vmem, size = 0x4000, scoped, tag = 'output window, operand 0, single buffered']
    #allocation3 [shape = 's32[1]{0}', space=sflag, size = 0x4, scoped, tag = 'scoped memory for node_update_forward.15']
    %10 = vsyncpa [#allocation3], 0
    // Predicated region
    $region2: #{node_update_forward.15} parent=1 // pred_check
      _
    $region3: #{node_update_forward.15} parent=1 // pred_check_branch
      %12 = sbr.rel (0) target = $region5
    $region4: #{node_update_forward.15} parent=1 // pred_region
      _
    $region5: #{node_update_forward.15} parent=1 // pred_fallthru
      _
    // Predicated region
    $region6: #{node_update_forward.15} parent=1 // pred_check
      _
    $region7: #{node_update_forward.15} parent=1 // pred_check_branch
      %14 = sbr.rel (0) target = $region9
    $region8: #{node_update_forward.15} parent=1 // pred_region
      _
    $region9: #{node_update_forward.15} parent=1 // pred_fallthru
      _
    // Predicated region
    $region10: #{node_update_forward.15} parent=1 // pred_check
      _
    $region11: #{node_update_forward.15} parent=1 // pred_check_branch
      %16 = sbr.rel (0) target = $region13
    $region12: #{node_update_forward.15} parent=1 // pred_region
      _
    $region13: #{node_update_forward.15} parent=1 // pred_fallthru
      _
    // Predicated region
    $region14: #{node_update_forward.15} parent=1 // pred_check
      _
    $region15: #{node_update_forward.15} parent=1 // pred_check_branch
      %18 = sbr.rel (0) target = $region17
    $region16: #{node_update_forward.15} parent=1 // pred_region
      _
    $region17: #{node_update_forward.15} parent=1 // pred_fallthru
      _
    // Predicated region
    $region18: #{node_update_forward.15} parent=1 // pred_check
      _
    $region19: #{node_update_forward.15} parent=1 // pred_check_branch
      %20 = sbr.rel (0) target = $region21
    $region20: #{node_update_forward.15} parent=1 // pred_region
      _
    $region21: #{node_update_forward.15} parent=1 // pred_fallthru
      _
    %v21 = vld [vmem:[%s0] sm:$0xff]
    %v22 = vld [vmem:[%s0 + $0x8] sm:$0xff]
    %v23 = vld [vmem:[%s0 + $0x10] sm:$0xff]
    %v24 = vld [vmem:[%s0 + $0x18] sm:$0xff]
    %v25 = vld [vmem:[%s1] sm:$0xff]
    %v26 = vld [vmem:[%s1 + $0x8] sm:$0xff]
    %v27 = vld [vmem:[%s1 + $0x10] sm:$0xff]
    %v28 = vld [vmem:[%s1 + $0x18] sm:$0xff]
    %v29 = vld [vmem:[%s1 + $0x20] sm:$0xff]
    %v30 = vld [vmem:[%s1 + $0x28] sm:$0xff]
    %v31 = vld [vmem:[%s1 + $0x30] sm:$0xff]
    %v32 = vld [vmem:[%s1 + $0x38] sm:$0xff]
    %v33 = vld [vmem:[%s1 + $0x40] sm:$0xff]
    %v34 = vld [vmem:[%s1 + $0x48] sm:$0xff]
    %v35 = vld [vmem:[%s1 + $0x50] sm:$0xff]
    %v36 = vld [vmem:[%s1 + $0x58] sm:$0xff]
    %v37 = vld [vmem:[%s1 + $0x60] sm:$0xff]
    %v38 = vld [vmem:[%s1 + $0x68] sm:$0xff]
    %v39 = vld [vmem:[%s1 + $0x70] sm:$0xff]
    %v40 = vld [vmem:[%s1 + $0x78] sm:$0xff]
    %v41 = vld [vmem:[%s1 + $0x80] sm:$0xff]
    %v42 = vld [vmem:[%s1 + $0x88] sm:$0xff]
    %v43 = vld [vmem:[%s1 + $0x90] sm:$0xff]
    %v44 = vld [vmem:[%s1 + $0x98] sm:$0xff]
    %v45 = vld [vmem:[%s1 + $0xa0] sm:$0xff]
    %v46 = vld [vmem:[%s1 + $0xa8] sm:$0xff]
    %v47 = vld [vmem:[%s1 + $0xb0] sm:$0xff]
    %v48 = vld [vmem:[%s1 + $0xb8] sm:$0xff]
    %v49 = vld [vmem:[%s1 + $0xc0] sm:$0xff]
    %v50 = vld [vmem:[%s1 + $0xc8] sm:$0xff]
    %v51 = vld [vmem:[%s1 + $0xd0] sm:$0xff]
    %v52 = vld [vmem:[%s1 + $0xd8] sm:$0xff]
    %v53 = vld [vmem:[%s1 + $0xe0] sm:$0xff]
    %v54 = vld [vmem:[%s1 + $0xe8] sm:$0xff]
    %v55 = vld [vmem:[%s1 + $0xf0] sm:$0xff]
    %v56 = vld [vmem:[%s1 + $0xf8] sm:$0xff]
    %v57 = vld [vmem:[%s1 + $0x100] sm:$0xff]
    %v58 = vld [vmem:[%s1 + $0x108] sm:$0xff]
    %v59 = vld [vmem:[%s1 + $0x110] sm:$0xff]
    %v60 = vld [vmem:[%s1 + $0x118] sm:$0xff]
    %v61 = vld [vmem:[%s1 + $0x120] sm:$0xff]
    %v62 = vld [vmem:[%s1 + $0x128] sm:$0xff]
    %v63 = vld [vmem:[%s1 + $0x130] sm:$0xff]
    %v64 = vld [vmem:[%s1 + $0x138] sm:$0xff]
    %v65 = vld [vmem:[%s1 + $0x140] sm:$0xff]
    %v66 = vld [vmem:[%s1 + $0x148] sm:$0xff]
    %v67 = vld [vmem:[%s1 + $0x150] sm:$0xff]
    %v68 = vld [vmem:[%s1 + $0x158] sm:$0xff]
    %v69 = vld [vmem:[%s1 + $0x160] sm:$0xff]
    %v70 = vld [vmem:[%s1 + $0x168] sm:$0xff]
    %v71 = vld [vmem:[%s1 + $0x170] sm:$0xff]
    %v72 = vld [vmem:[%s1 + $0x178] sm:$0xff]
    %v73 = vld [vmem:[%s1 + $0x180] sm:$0xff]
    %v74 = vld [vmem:[%s1 + $0x188] sm:$0xff]
    %v75 = vld [vmem:[%s1 + $0x190] sm:$0xff]
    %v76 = vld [vmem:[%s1 + $0x198] sm:$0xff]
    %v77 = vld [vmem:[%s1 + $0x1a0] sm:$0xff]
    %v78 = vld [vmem:[%s1 + $0x1a8] sm:$0xff]
    %v79 = vld [vmem:[%s1 + $0x1b0] sm:$0xff]
    %v80 = vld [vmem:[%s1 + $0x1b8] sm:$0xff]
    %v81 = vld [vmem:[%s1 + $0x1c0] sm:$0xff]
    %v82 = vld [vmem:[%s1 + $0x1c8] sm:$0xff]
    %v83 = vld [vmem:[%s1 + $0x1d0] sm:$0xff]
    %v84 = vld [vmem:[%s1 + $0x1d8] sm:$0xff]
    %v85 = vld [vmem:[%s1 + $0x1e0] sm:$0xff]
    %v86 = vld [vmem:[%s1 + $0x1e8] sm:$0xff]
    %v87 = vld [vmem:[%s1 + $0x1f0] sm:$0xff]
    %v88 = vld [vmem:[%s1 + $0x1f8] sm:$0xff]
    %v89 = vpack.c.bf16 %v23, %v21
    %v90 = vpack.c.bf16 %v24, %v22
    %v91 = vpack.c.bf16 %v27, %v25
    %v92 = vpack.c.bf16 %v28, %v26
    %v93 = vpack.c.bf16 %v31, %v29
    %v94 = vpack.c.bf16 %v32, %v30
    %v95 = vpack.c.bf16 %v35, %v33
    %v96 = vpack.c.bf16 %v36, %v34
    %v97 = vpack.c.bf16 %v39, %v37
    %v98 = vpack.c.bf16 %v40, %v38
    %v99 = vpack.c.bf16 %v43, %v41
    %v100 = vpack.c.bf16 %v44, %v42
    %v101 = vpack.c.bf16 %v47, %v45
    %v102 = vpack.c.bf16 %v48, %v46
    %v103 = vpack.c.bf16 %v51, %v49
    %v104 = vpack.c.bf16 %v52, %v50
    %v105 = vpack.c.bf16 %v55, %v53
    %v106 = vpack.c.bf16 %v56, %v54
    %v107 = vpack.c.bf16 %v59, %v57
    %v108 = vpack.c.bf16 %v60, %v58
    %v109 = vpack.c.bf16 %v63, %v61
    %v110 = vpack.c.bf16 %v64, %v62
    %v111 = vpack.c.bf16 %v67, %v65
    %v112 = vpack.c.bf16 %v68, %v66
    %v113 = vpack.c.bf16 %v71, %v69
    %v114 = vpack.c.bf16 %v72, %v70
    %v115 = vpack.c.bf16 %v75, %v73
    %v116 = vpack.c.bf16 %v76, %v74
    %v117 = vpack.c.bf16 %v79, %v77
    %v118 = vpack.c.bf16 %v80, %v78
    %v119 = vpack.c.bf16 %v83, %v81
    %v120 = vpack.c.bf16 %v84, %v82
    %v121 = vpack.c.bf16 %v87, %v85
    %v122 = vpack.c.bf16 %v88, %v86
    %v123 = vld [vmem:[%s2] sm:$0x3]
    %v125 = vlaneseq
    %v126 = vshrl.u32 %v125, 7
    %v127 = vsub.s32 0, %v126
    %v128 = vrot.slane %v123, %v127
    %v129 = vlaneseq
    %v130 = vshrl.u32 %v129, 7
    %v131 = vsub.s32 1, %v130
    %v132 = vrot.slane %v123, %v131
    %135 = vmatprep.subr.bf16.mxu0 %v106
    %136 = vmatpush1.bf16.msra.mxu0 %v105
    %137 = vmatprep.subr.bf16.mxu0 %v104
    %138 = vmatpush1.bf16.msra.mxu0 %v103
    %139 = vmatprep.subr.bf16.mxu0 %v102
    %140 = vmatpush1.bf16.msra.mxu0 %v101
    %141 = vmatprep.subr.bf16.mxu0 %v100
    %142 = vmatpush1.bf16.msra.mxu0 %v99
    %143 = vmatprep.subr.bf16.mxu0 %v98
    %144 = vmatpush1.bf16.msra.mxu0 %v97
    %145 = vmatprep.subr.bf16.mxu0 %v96
    %146 = vmatpush1.bf16.msra.mxu0 %v95
    %147 = vmatprep.subr.bf16.mxu0 %v94
    %148 = vmatpush1.bf16.msra.mxu0 %v93
    %149 = vmatprep.subr.bf16.mxu0 %v92
    %150 = vmatpush1.bf16.msra.mxu0 %v91
    %151 = vmatprep.subr.bf16.mxu0 %v122
    %152 = vmatpush2.bf16.msra.mxu0 %v121
    %153 = vmatprep.subr.bf16.mxu0 %v120
    %154 = vmatpush2.bf16.msra.mxu0 %v119
    %155 = vmatprep.subr.bf16.mxu0 %v118
    %156 = vmatpush2.bf16.msra.mxu0 %v117
    %157 = vmatprep.subr.bf16.mxu0 %v116
    %158 = vmatpush2.bf16.msra.mxu0 %v115
    %159 = vmatprep.subr.bf16.mxu0 %v114
    %160 = vmatpush2.bf16.msra.mxu0 %v113
    %161 = vmatprep.subr.bf16.mxu0 %v112
    %162 = vmatpush2.bf16.msra.mxu0 %v111
    %163 = vmatprep.subr.bf16.mxu0 %v110
    %164 = vmatpush2.bf16.msra.mxu0 %v109
    %165 = vmatprep.subr.bf16.mxu0 %v108
    %166 = vmatpush2.bf16.msra.mxu0 %v107
    %167 = vmatprep.mubr.bf16.mxu0 %v90
    %168 = vmatmul.mubr.bf16.gmra.mxu0 %v89
    %v169 = vpop.f32.mrf.mxu0
    %v170 = vadd.f32 %v128, %v169
    %v171 = vpop.f32.mrf.mxu0
    %v172 = vadd.f32 %v132, %v171
    %v173 = vpop.f32.mrf.mxu0
    %v174 = vadd.f32 %v128, %v173
    %v175 = vpop.f32.mrf.mxu0
    %v176 = vadd.f32 %v132, %v175
    %177 = vdwg.mxu0
    %v178 = vmax.f32 %v170, 0.0
    %v179 = vmax.f32 %v172, 0.0
    %v180 = vmax.f32 %v174, 0.0
    %v181 = vmax.f32 %v176, 0.0
    %v182 = vld [vmem:[%s3] sm:$0xff]
    %v183 = vld [vmem:[%s3 + $0x8] sm:$0xff]
    %v184 = vld [vmem:[%s3 + $0x10] sm:$0xff]
    %v185 = vld [vmem:[%s3 + $0x18] sm:$0xff]
    %v186 = vld [vmem:[%s3 + $0x20] sm:$0xff]
    %v187 = vld [vmem:[%s3 + $0x28] sm:$0xff]
    %v188 = vld [vmem:[%s3 + $0x30] sm:$0xff]
    %v189 = vld [vmem:[%s3 + $0x38] sm:$0xff]
    %v190 = vld [vmem:[%s3 + $0x40] sm:$0xff]
    %v191 = vld [vmem:[%s3 + $0x48] sm:$0xff]
    %v192 = vld [vmem:[%s3 + $0x50] sm:$0xff]
    %v193 = vld [vmem:[%s3 + $0x58] sm:$0xff]
    %v194 = vld [vmem:[%s3 + $0x60] sm:$0xff]
    %v195 = vld [vmem:[%s3 + $0x68] sm:$0xff]
    %v196 = vld [vmem:[%s3 + $0x70] sm:$0xff]
    %v197 = vld [vmem:[%s3 + $0x78] sm:$0xff]
    %v198 = vld [vmem:[%s3 + $0x80] sm:$0xff]
    %v199 = vld [vmem:[%s3 + $0x88] sm:$0xff]
    %v200 = vld [vmem:[%s3 + $0x90] sm:$0xff]
    %v201 = vld [vmem:[%s3 + $0x98] sm:$0xff]
    %v202 = vld [vmem:[%s3 + $0xa0] sm:$0xff]
    %v203 = vld [vmem:[%s3 + $0xa8] sm:$0xff]
    %v204 = vld [vmem:[%s3 + $0xb0] sm:$0xff]
    %v205 = vld [vmem:[%s3 + $0xb8] sm:$0xff]
    %v206 = vld [vmem:[%s3 + $0xc0] sm:$0xff]
    %v207 = vld [vmem:[%s3 + $0xc8] sm:$0xff]
    %v208 = vld [vmem:[%s3 + $0xd0] sm:$0xff]
    %v209 = vld [vmem:[%s3 + $0xd8] sm:$0xff]
    %v210 = vld [vmem:[%s3 + $0xe0] sm:$0xff]
    %v211 = vld [vmem:[%s3 + $0xe8] sm:$0xff]
    %v212 = vld [vmem:[%s3 + $0xf0] sm:$0xff]
    %v213 = vld [vmem:[%s3 + $0xf8] sm:$0xff]
    %v214 = vld [vmem:[%s3 + $0x100] sm:$0xff]
    %v215 = vld [vmem:[%s3 + $0x108] sm:$0xff]
    %v216 = vld [vmem:[%s3 + $0x110] sm:$0xff]
    %v217 = vld [vmem:[%s3 + $0x118] sm:$0xff]
    %v218 = vld [vmem:[%s3 + $0x120] sm:$0xff]
    %v219 = vld [vmem:[%s3 + $0x128] sm:$0xff]
    %v220 = vld [vmem:[%s3 + $0x130] sm:$0xff]
    %v221 = vld [vmem:[%s3 + $0x138] sm:$0xff]
    %v222 = vld [vmem:[%s3 + $0x140] sm:$0xff]
    %v223 = vld [vmem:[%s3 + $0x148] sm:$0xff]
    %v224 = vld [vmem:[%s3 + $0x150] sm:$0xff]
    %v225 = vld [vmem:[%s3 + $0x158] sm:$0xff]
    %v226 = vld [vmem:[%s3 + $0x160] sm:$0xff]
    %v227 = vld [vmem:[%s3 + $0x168] sm:$0xff]
    %v228 = vld [vmem:[%s3 + $0x170] sm:$0xff]
    %v229 = vld [vmem:[%s3 + $0x178] sm:$0xff]
    %v230 = vld [vmem:[%s3 + $0x180] sm:$0xff]
    %v231 = vld [vmem:[%s3 + $0x188] sm:$0xff]
    %v232 = vld [vmem:[%s3 + $0x190] sm:$0xff]
    %v233 = vld [vmem:[%s3 + $0x198] sm:$0xff]
    %v234 = vld [vmem:[%s3 + $0x1a0] sm:$0xff]
    %v235 = vld [vmem:[%s3 + $0x1a8] sm:$0xff]
    %v236 = vld [vmem:[%s3 + $0x1b0] sm:$0xff]
    %v237 = vld [vmem:[%s3 + $0x1b8] sm:$0xff]
    %v238 = vld [vmem:[%s3 + $0x1c0] sm:$0xff]
    %v239 = vld [vmem:[%s3 + $0x1c8] sm:$0xff]
    %v240 = vld [vmem:[%s3 + $0x1d0] sm:$0xff]
    %v241 = vld [vmem:[%s3 + $0x1d8] sm:$0xff]
    %v242 = vld [vmem:[%s3 + $0x1e0] sm:$0xff]
    %v243 = vld [vmem:[%s3 + $0x1e8] sm:$0xff]
    %v244 = vld [vmem:[%s3 + $0x1f0] sm:$0xff]
    %v245 = vld [vmem:[%s3 + $0x1f8] sm:$0xff]
    %v246 = vpack.c.bf16 %v180, %v178
    %v247 = vpack.c.bf16 %v181, %v179
    %v248 = vpack.c.bf16 %v184, %v182
    %v249 = vpack.c.bf16 %v185, %v183
    %v250 = vpack.c.bf16 %v188, %v186
    %v251 = vpack.c.bf16 %v189, %v187
    %v252 = vpack.c.bf16 %v192, %v190
    %v253 = vpack.c.bf16 %v193, %v191
    %v254 = vpack.c.bf16 %v196, %v194
    %v255 = vpack.c.bf16 %v197, %v195
    %v256 = vpack.c.bf16 %v200, %v198
    %v257 = vpack.c.bf16 %v201, %v199
    %v258 = vpack.c.bf16 %v204, %v202
    %v259 = vpack.c.bf16 %v205, %v203
    %v260 = vpack.c.bf16 %v208, %v206
    %v261 = vpack.c.bf16 %v209, %v207
    %v262 = vpack.c.bf16 %v212, %v210
    %v263 = vpack.c.bf16 %v213, %v211
    %v264 = vpack.c.bf16 %v216, %v214
    %v265 = vpack.c.bf16 %v217, %v215
    %v266 = vpack.c.bf16 %v220, %v218
    %v267 = vpack.c.bf16 %v221, %v219
    %v268 = vpack.c.bf16 %v224, %v222
    %v269 = vpack.c.bf16 %v225, %v223
    %v270 = vpack.c.bf16 %v228, %v226
    %v271 = vpack.c.bf16 %v229, %v227
    %v272 = vpack.c.bf16 %v232, %v230
    %v273 = vpack.c.bf16 %v233, %v231
    %v274 = vpack.c.bf16 %v236, %v234
    %v275 = vpack.c.bf16 %v237, %v235
    %v276 = vpack.c.bf16 %v240, %v238
    %v277 = vpack.c.bf16 %v241, %v239
    %v278 = vpack.c.bf16 %v244, %v242
    %v279 = vpack.c.bf16 %v245, %v243
    %280 = vmatprep.subr.bf16.mxu0 %v263
    %281 = vmatpush1.bf16.msra.mxu0 %v262
    %282 = vmatprep.subr.bf16.mxu0 %v261
    %283 = vmatpush1.bf16.msra.mxu0 %v260
    %284 = vmatprep.subr.bf16.mxu0 %v259
    %285 = vmatpush1.bf16.msra.mxu0 %v258
    %286 = vmatprep.subr.bf16.mxu0 %v257
    %287 = vmatpush1.bf16.msra.mxu0 %v256
    %288 = vmatprep.subr.bf16.mxu0 %v255
    %289 = vmatpush1.bf16.msra.mxu0 %v254
    %290 = vmatprep.subr.bf16.mxu0 %v253
    %291 = vmatpush1.bf16.msra.mxu0 %v252
    %292 = vmatprep.subr.bf16.mxu0 %v251
    %293 = vmatpush1.bf16.msra.mxu0 %v250
    %294 = vmatprep.subr.bf16.mxu0 %v249
    %295 = vmatpush1.bf16.msra.mxu0 %v248
    %296 = vmatprep.subr.bf16.mxu0 %v279
    %297 = vmatpush2.bf16.msra.mxu0 %v278
    %298 = vmatprep.subr.bf16.mxu0 %v277
    %299 = vmatpush2.bf16.msra.mxu0 %v276
    %300 = vmatprep.subr.bf16.mxu0 %v275
    %301 = vmatpush2.bf16.msra.mxu0 %v274
    %302 = vmatprep.subr.bf16.mxu0 %v273
    %303 = vmatpush2.bf16.msra.mxu0 %v272
    %304 = vmatprep.subr.bf16.mxu0 %v271
    %305 = vmatpush2.bf16.msra.mxu0 %v270
    %306 = vmatprep.subr.bf16.mxu0 %v269
    %307 = vmatpush2.bf16.msra.mxu0 %v268
    %308 = vmatprep.subr.bf16.mxu0 %v267
    %309 = vmatpush2.bf16.msra.mxu0 %v266
    %310 = vmatprep.subr.bf16.mxu0 %v265
    %311 = vmatpush2.bf16.msra.mxu0 %v264
    %312 = vmatprep.mubr.bf16.mxu0 %v247
    %313 = vmatmul.mubr.bf16.gmra.mxu0 %v246
    %v314 = vpop.f32.mrf.mxu0
    %v315 = vadd.f32 0.0, %v314
    %v316 = vpop.f32.mrf.mxu0
    %v317 = vadd.f32 0.0, %v316
    %v318 = vpop.f32.mrf.mxu0
    %v319 = vadd.f32 0.0, %v318
    %v320 = vpop.f32.mrf.mxu0
    %v321 = vadd.f32 0.0, %v320
    %322 = vdwg.mxu0
    %v323 = vadd.f32 %v21, %v315
    %v324 = vadd.f32 %v22, %v317
    %v325 = vadd.f32 %v23, %v319
    %v326 = vadd.f32 %v24, %v321
    %v327 = vld [vmem:[%s4] sm:$0x3]
    %v329 = vlaneseq
    %v330 = vshrl.u32 %v329, 7
    %v331 = vsub.s32 0, %v330
    %v332 = vrot.slane %v327, %v331
    %v333 = vlaneseq
    %v334 = vshrl.u32 %v333, 7
    %v335 = vsub.s32 1, %v334
    %v336 = vrot.slane %v327, %v335
    %v339 = vadd.f32 %v323, %v332
    %v340 = vadd.f32 %v324, %v336
    %v341 = vadd.f32 %v325, %v332
    %v342 = vadd.f32 %v326, %v336
    %343 = vst [vmem:[#allocation2] sm:$0xff] %v339
    %344 = vst [vmem:[#allocation2 + $0x8] sm:$0xff] %v340
    %345 = vst [vmem:[#allocation2 + $0x10] sm:$0xff] %v341
    %346 = vst [vmem:[#allocation2 + $0x18] sm:$0xff] %v342
    // Predicated region
    $region22: #{node_update_forward.15} parent=1 // pred_check
      _
    $region23: #{node_update_forward.15} parent=1 // pred_check_branch
      %348 = sbr.rel (0) target = $region25
    $region24: #{node_update_forward.15} parent=1 // pred_region
      %s350 = ssub.s32 512, 512
      %351 = vsyncadd [#allocation3], %s350
      %s352 = sshll.u32 [#allocation2], 4
      %s353 = int_to_ptr.vmem [resolvable:$true] %s352
      %358 = dma.vmem_to_hbm [thread:$0]  %s353, 512, %s5, [#allocation3], 256, 256, 16
    $region25: #{node_update_forward.15} parent=1 // pred_fallthru
      _
    // Predicated region
    $region26: #{node_update_forward.15} parent=1 // pred_check
      _
    $region27: #{node_update_forward.15} parent=1 // pred_check_branch
      %360 = sbr.rel (0) target = $region29
    $region28: #{node_update_forward.15} parent=1 // pred_region
      %361 = dma.done [#allocation3], 512
    $region29: #{node_update_forward.15} parent=1 // pred_fallthru
      _
    %362 = vsyncpa [#allocation3], 1

// kernel: node_update_forward.12
$region0: #{node_update_forward.12}
  #allocation0 [shape = 'u32[]', space=smem, size = 0x4, offset = 0x4, fixed_abs, tag = 'smem constant byte address 0x4 - core index']
  #allocation1 [shape = 'u32[144,128]{1,0:T(1,128)}', space=vmem, size = 0x12000, scoped, tag = 'internal scratch']
  %s0 = inlined_call_operand.vmem [shape: f32[16,256], index: 0, kind: input, shape index: {}]
  %s1 = inlined_call_operand.vmem [shape: f32[256,1024], index: 1, kind: input, shape index: {}]
  %s2 = inlined_call_operand.vmem [shape: f32[1,1024], index: 2, kind: input, shape index: {}]
  %s3 = inlined_call_operand.vmem [shape: f32[16,1024], index: 3, kind: output, shape index: {}]
  %s4 = sld [smem:[#allocation0]]
  $region22: #{node_update_forward.12} parent=0
    _
  %s6 = ssub.s32 1, %s4
  %s7 = scalar_select 0, %s6, %s4
  // Predicated region
  $region2: #{node_update_forward.12} parent=0 // pred_check
    _
  $region3: #{node_update_forward.12} parent=0 // pred_check_branch
    %9 = sbr.rel (0) target = $region5
  $region4: #{node_update_forward.12} parent=0 // pred_region
    _
  $region5: #{node_update_forward.12} parent=0 // pred_fallthru
    _
  // Predicated region
  $region6: #{node_update_forward.12} parent=0 // pred_check
    _
  $region7: #{node_update_forward.12} parent=0 // pred_check_branch
    %11 = sbr.rel (0) target = $region9
  $region8: #{node_update_forward.12} parent=0 // pred_region
    _
  $region9: #{node_update_forward.12} parent=0 // pred_fallthru
    _
  // Predicated region
  $region10: #{node_update_forward.12} parent=0 // pred_check
    _
  $region11: #{node_update_forward.12} parent=0 // pred_check_branch
    %13 = sbr.rel (0) target = $region13
  $region12: #{node_update_forward.12} parent=0 // pred_region
    _
  $region13: #{node_update_forward.12} parent=0 // pred_fallthru
    _
  %v14 = vld [vmem:[%s0] sm:$0xff]
  %v15 = vld [vmem:[%s0 + $0x8] sm:$0xff]
  %v16 = vld [vmem:[%s0 + $0x10] sm:$0xff]
  %v17 = vld [vmem:[%s0 + $0x18] sm:$0xff]
  %v18 = vld [vmem:[%s1] sm:$0xff]
  %v19 = vld [vmem:[%s1 + $0x8] sm:$0xff]
  %v20 = vld [vmem:[%s1 + $0x10] sm:$0xff]
  %v21 = vld [vmem:[%s1 + $0x18] sm:$0xff]
  %v22 = vld [vmem:[%s1 + $0x20] sm:$0xff]
  %v23 = vld [vmem:[%s1 + $0x28] sm:$0xff]
  %v24 = vld [vmem:[%s1 + $0x30] sm:$0xff]
  %v25 = vld [vmem:[%s1 + $0x38] sm:$0xff]
  %v26 = vld [vmem:[%s1 + $0x40] sm:$0xff]
  %v27 = vld [vmem:[%s1 + $0x48] sm:$0xff]
  %v28 = vld [vmem:[%s1 + $0x50] sm:$0xff]
  %v29 = vld [vmem:[%s1 + $0x58] sm:$0xff]
  %v30 = vld [vmem:[%s1 + $0x60] sm:$0xff]
  %v31 = vld [vmem:[%s1 + $0x68] sm:$0xff]
  %v32 = vld [vmem:[%s1 + $0x70] sm:$0xff]
  %v33 = vld [vmem:[%s1 + $0x78] sm:$0xff]
  %v34 = vld [vmem:[%s1 + $0x80] sm:$0xff]
  %v35 = vld [vmem:[%s1 + $0x88] sm:$0xff]
  %v36 = vld [vmem:[%s1 + $0x90] sm:$0xff]
  %v37 = vld [vmem:[%s1 + $0x98] sm:$0xff]
  %v38 = vld [vmem:[%s1 + $0xa0] sm:$0xff]
  %v39 = vld [vmem:[%s1 + $0xa8] sm:$0xff]
  %v40 = vld [vmem:[%s1 + $0xb0] sm:$0xff]
  %v41 = vld [vmem:[%s1 + $0xb8] sm:$0xff]
  %v42 = vld [vmem:[%s1 + $0xc0] sm:$0xff]
  %v43 = vld [vmem:[%s1 + $0xc8] sm:$0xff]
  %v44 = vld [vmem:[%s1 + $0xd0] sm:$0xff]
  %v45 = vld [vmem:[%s1 + $0xd8] sm:$0xff]
  %v46 = vld [vmem:[%s1 + $0xe0] sm:$0xff]
  %v47 = vld [vmem:[%s1 + $0xe8] sm:$0xff]
  %v48 = vld [vmem:[%s1 + $0xf0] sm:$0xff]
  %v49 = vld [vmem:[%s1 + $0xf8] sm:$0xff]
  %v50 = vld [vmem:[%s1 + $0x100] sm:$0xff]
  %v51 = vld [vmem:[%s1 + $0x108] sm:$0xff]
  %v52 = vld [vmem:[%s1 + $0x110] sm:$0xff]
  %v53 = vld [vmem:[%s1 + $0x118] sm:$0xff]
  %v54 = vld [vmem:[%s1 + $0x120] sm:$0xff]
  %v55 = vld [vmem:[%s1 + $0x128] sm:$0xff]
  %v56 = vld [vmem:[%s1 + $0x130] sm:$0xff]
  %v57 = vld [vmem:[%s1 + $0x138] sm:$0xff]
  %v58 = vld [vmem:[%s1 + $0x140] sm:$0xff]
  %v59 = vld [vmem:[%s1 + $0x148] sm:$0xff]
  %v60 = vld [vmem:[%s1 + $0x150] sm:$0xff]
  %v61 = vld [vmem:[%s1 + $0x158] sm:$0xff]
  %v62 = vld [vmem:[%s1 + $0x160] sm:$0xff]
  %v63 = vld [vmem:[%s1 + $0x168] sm:$0xff]
  %v64 = vld [vmem:[%s1 + $0x170] sm:$0xff]
  %v65 = vld [vmem:[%s1 + $0x178] sm:$0xff]
  %v66 = vld [vmem:[%s1 + $0x180] sm:$0xff]
  %v67 = vld [vmem:[%s1 + $0x188] sm:$0xff]
  %v68 = vld [vmem:[%s1 + $0x190] sm:$0xff]
  %v69 = vld [vmem:[%s1 + $0x198] sm:$0xff]
  %v70 = vld [vmem:[%s1 + $0x1a0] sm:$0xff]
  %v71 = vld [vmem:[%s1 + $0x1a8] sm:$0xff]
  %v72 = vld [vmem:[%s1 + $0x1b0] sm:$0xff]
  %v73 = vld [vmem:[%s1 + $0x1b8] sm:$0xff]
  %v74 = vld [vmem:[%s1 + $0x1c0] sm:$0xff]
  %v75 = vld [vmem:[%s1 + $0x1c8] sm:$0xff]
  %v76 = vld [vmem:[%s1 + $0x1d0] sm:$0xff]
  %v77 = vld [vmem:[%s1 + $0x1d8] sm:$0xff]
  %v78 = vld [vmem:[%s1 + $0x1e0] sm:$0xff]
  %v79 = vld [vmem:[%s1 + $0x1e8] sm:$0xff]
  %v80 = vld [vmem:[%s1 + $0x1f0] sm:$0xff]
  %v81 = vld [vmem:[%s1 + $0x1f8] sm:$0xff]
  %v82 = vld [vmem:[%s1 + $0x200] sm:$0xff]
  %v83 = vld [vmem:[%s1 + $0x208] sm:$0xff]
  %v84 = vld [vmem:[%s1 + $0x210] sm:$0xff]
  %v85 = vld [vmem:[%s1 + $0x218] sm:$0xff]
  %v86 = vld [vmem:[%s1 + $0x220] sm:$0xff]
  %v87 = vld [vmem:[%s1 + $0x228] sm:$0xff]
  %v88 = vld [vmem:[%s1 + $0x230] sm:$0xff]
  %v89 = vld [vmem:[%s1 + $0x238] sm:$0xff]
  %v90 = vld [vmem:[%s1 + $0x240] sm:$0xff]
  %v91 = vld [vmem:[%s1 + $0x248] sm:$0xff]
  %v92 = vld [vmem:[%s1 + $0x250] sm:$0xff]
  %v93 = vld [vmem:[%s1 + $0x258] sm:$0xff]
  %v94 = vld [vmem:[%s1 + $0x260] sm:$0xff]
  %v95 = vld [vmem:[%s1 + $0x268] sm:$0xff]
  %v96 = vld [vmem:[%s1 + $0x270] sm:$0xff]
  %v97 = vld [vmem:[%s1 + $0x278] sm:$0xff]
  %v98 = vld [vmem:[%s1 + $0x280] sm:$0xff]
  %v99 = vld [vmem:[%s1 + $0x288] sm:$0xff]
  %v100 = vld [vmem:[%s1 + $0x290] sm:$0xff]
  %v101 = vld [vmem:[%s1 + $0x298] sm:$0xff]
  %v102 = vld [vmem:[%s1 + $0x2a0] sm:$0xff]
  %v103 = vld [vmem:[%s1 + $0x2a8] sm:$0xff]
  %v104 = vld [vmem:[%s1 + $0x2b0] sm:$0xff]
  %v105 = vld [vmem:[%s1 + $0x2b8] sm:$0xff]
  %v106 = vld [vmem:[%s1 + $0x2c0] sm:$0xff]
  %v107 = vld [vmem:[%s1 + $0x2c8] sm:$0xff]
  %v108 = vld [vmem:[%s1 + $0x2d0] sm:$0xff]
  %v109 = vld [vmem:[%s1 + $0x2d8] sm:$0xff]
  %v110 = vld [vmem:[%s1 + $0x2e0] sm:$0xff]
  %v111 = vld [vmem:[%s1 + $0x2e8] sm:$0xff]
  %v112 = vld [vmem:[%s1 + $0x2f0] sm:$0xff]
  %v113 = vld [vmem:[%s1 + $0x2f8] sm:$0xff]
  %v114 = vld [vmem:[%s1 + $0x300] sm:$0xff]
  %v115 = vld [vmem:[%s1 + $0x308] sm:$0xff]
  %v116 = vld [vmem:[%s1 + $0x310] sm:$0xff]
  %v117 = vld [vmem:[%s1 + $0x318] sm:$0xff]
  %v118 = vld [vmem:[%s1 + $0x320] sm:$0xff]
  %v119 = vld [vmem:[%s1 + $0x328] sm:$0xff]
  %v120 = vld [vmem:[%s1 + $0x330] sm:$0xff]
  %v121 = vld [vmem:[%s1 + $0x338] sm:$0xff]
  %v122 = vld [vmem:[%s1 + $0x340] sm:$0xff]
  %v123 = vld [vmem:[%s1 + $0x348] sm:$0xff]
  %v124 = vld [vmem:[%s1 + $0x350] sm:$0xff]
  %v125 = vld [vmem:[%s1 + $0x358] sm:$0xff]
  %v126 = vld [vmem:[%s1 + $0x360] sm:$0xff]
  %v127 = vld [vmem:[%s1 + $0x368] sm:$0xff]
  %v128 = vld [vmem:[%s1 + $0x370] sm:$0xff]
  %v129 = vld [vmem:[%s1 + $0x378] sm:$0xff]
  %v130 = vld [vmem:[%s1 + $0x380] sm:$0xff]
  %v131 = vld [vmem:[%s1 + $0x388] sm:$0xff]
  %v132 = vld [vmem:[%s1 + $0x390] sm:$0xff]
  %v133 = vld [vmem:[%s1 + $0x398] sm:$0xff]
  %v134 = vld [vmem:[%s1 + $0x3a0] sm:$0xff]
  %v135 = vld [vmem:[%s1 + $0x3a8] sm:$0xff]
  %v136 = vld [vmem:[%s1 + $0x3b0] sm:$0xff]
  %v137 = vld [vmem:[%s1 + $0x3b8] sm:$0xff]
  %v138 = vld [vmem:[%s1 + $0x3c0] sm:$0xff]
  %v139 = vld [vmem:[%s1 + $0x3c8] sm:$0xff]
  %v140 = vld [vmem:[%s1 + $0x3d0] sm:$0xff]
  %v141 = vld [vmem:[%s1 + $0x3d8] sm:$0xff]
  %v142 = vld [vmem:[%s1 + $0x3e0] sm:$0xff]
  %v143 = vld [vmem:[%s1 + $0x3e8] sm:$0xff]
  %v144 = vld [vmem:[%s1 + $0x3f0] sm:$0xff]
  %v145 = vld [vmem:[%s1 + $0x3f8] sm:$0xff]
  %v146 = vld [vmem:[%s1 + $0x400] sm:$0xff]
  %v147 = vld [vmem:[%s1 + $0x408] sm:$0xff]
  %v148 = vld [vmem:[%s1 + $0x410] sm:$0xff]
  %v149 = vld [vmem:[%s1 + $0x418] sm:$0xff]
  %v150 = vld [vmem:[%s1 + $0x420] sm:$0xff]
  %v151 = vld [vmem:[%s1 + $0x428] sm:$0xff]
  %v152 = vld [vmem:[%s1 + $0x430] sm:$0xff]
  %v153 = vld [vmem:[%s1 + $0x438] sm:$0xff]
  %v154 = vld [vmem:[%s1 + $0x440] sm:$0xff]
  %v155 = vld [vmem:[%s1 + $0x448] sm:$0xff]
  %v156 = vld [vmem:[%s1 + $0x450] sm:$0xff]
  %v157 = vld [vmem:[%s1 + $0x458] sm:$0xff]
  %v158 = vld [vmem:[%s1 + $0x460] sm:$0xff]
  %v159 = vld [vmem:[%s1 + $0x468] sm:$0xff]
  %v160 = vld [vmem:[%s1 + $0x470] sm:$0xff]
  %v161 = vld [vmem:[%s1 + $0x478] sm:$0xff]
  %v162 = vld [vmem:[%s1 + $0x480] sm:$0xff]
  %v163 = vld [vmem:[%s1 + $0x488] sm:$0xff]
  %v164 = vld [vmem:[%s1 + $0x490] sm:$0xff]
  %v165 = vld [vmem:[%s1 + $0x498] sm:$0xff]
  %v166 = vld [vmem:[%s1 + $0x4a0] sm:$0xff]
  %v167 = vld [vmem:[%s1 + $0x4a8] sm:$0xff]
  %v168 = vld [vmem:[%s1 + $0x4b0] sm:$0xff]
  %v169 = vld [vmem:[%s1 + $0x4b8] sm:$0xff]
  %v170 = vld [vmem:[%s1 + $0x4c0] sm:$0xff]
  %v171 = vld [vmem:[%s1 + $0x4c8] sm:$0xff]
  %v172 = vld [vmem:[%s1 + $0x4d0] sm:$0xff]
  %v173 = vld [vmem:[%s1 + $0x4d8] sm:$0xff]
  %v174 = vld [vmem:[%s1 + $0x4e0] sm:$0xff]
  %v175 = vld [vmem:[%s1 + $0x4e8] sm:$0xff]
  %v176 = vld [vmem:[%s1 + $0x4f0] sm:$0xff]
  %v177 = vld [vmem:[%s1 + $0x4f8] sm:$0xff]
  %v178 = vld [vmem:[%s1 + $0x500] sm:$0xff]
  %v179 = vld [vmem:[%s1 + $0x508] sm:$0xff]
  %v180 = vld [vmem:[%s1 + $0x510] sm:$0xff]
  %v181 = vld [vmem:[%s1 + $0x518] sm:$0xff]
  %v182 = vld [vmem:[%s1 + $0x520] sm:$0xff]
  %v183 = vld [vmem:[%s1 + $0x528] sm:$0xff]
  %v184 = vld [vmem:[%s1 + $0x530] sm:$0xff]
  %v185 = vld [vmem:[%s1 + $0x538] sm:$0xff]
  %v186 = vld [vmem:[%s1 + $0x540] sm:$0xff]
  %v187 = vld [vmem:[%s1 + $0x548] sm:$0xff]
  %v188 = vld [vmem:[%s1 + $0x550] sm:$0xff]
  %v189 = vld [vmem:[%s1 + $0x558] sm:$0xff]
  %v190 = vld [vmem:[%s1 + $0x560] sm:$0xff]
  %v191 = vld [vmem:[%s1 + $0x568] sm:$0xff]
  %v192 = vld [vmem:[%s1 + $0x570] sm:$0xff]
  %v193 = vld [vmem:[%s1 + $0x578] sm:$0xff]
  %v194 = vld [vmem:[%s1 + $0x580] sm:$0xff]
  %v195 = vld [vmem:[%s1 + $0x588] sm:$0xff]
  %v196 = vld [vmem:[%s1 + $0x590] sm:$0xff]
  %v197 = vld [vmem:[%s1 + $0x598] sm:$0xff]
  %v198 = vld [vmem:[%s1 + $0x5a0] sm:$0xff]
  %v199 = vld [vmem:[%s1 + $0x5a8] sm:$0xff]
  %v200 = vld [vmem:[%s1 + $0x5b0] sm:$0xff]
  %v201 = vld [vmem:[%s1 + $0x5b8] sm:$0xff]
  %v202 = vld [vmem:[%s1 + $0x5c0] sm:$0xff]
  %v203 = vld [vmem:[%s1 + $0x5c8] sm:$0xff]
  %v204 = vld [vmem:[%s1 + $0x5d0] sm:$0xff]
  %v205 = vld [vmem:[%s1 + $0x5d8] sm:$0xff]
  %v206 = vld [vmem:[%s1 + $0x5e0] sm:$0xff]
  %v207 = vld [vmem:[%s1 + $0x5e8] sm:$0xff]
  %v208 = vld [vmem:[%s1 + $0x5f0] sm:$0xff]
  %v209 = vld [vmem:[%s1 + $0x5f8] sm:$0xff]
  %v210 = vld [vmem:[%s1 + $0x600] sm:$0xff]
  %v211 = vld [vmem:[%s1 + $0x608] sm:$0xff]
  %v212 = vld [vmem:[%s1 + $0x610] sm:$0xff]
  %v213 = vld [vmem:[%s1 + $0x618] sm:$0xff]
  %v214 = vld [vmem:[%s1 + $0x620] sm:$0xff]
  %v215 = vld [vmem:[%s1 + $0x628] sm:$0xff]
  %v216 = vld [vmem:[%s1 + $0x630] sm:$0xff]
  %v217 = vld [vmem:[%s1 + $0x638] sm:$0xff]
  %v218 = vld [vmem:[%s1 + $0x640] sm:$0xff]
  %v219 = vld [vmem:[%s1 + $0x648] sm:$0xff]
  %v220 = vld [vmem:[%s1 + $0x650] sm:$0xff]
  %v221 = vld [vmem:[%s1 + $0x658] sm:$0xff]
  %v222 = vld [vmem:[%s1 + $0x660] sm:$0xff]
  %v223 = vld [vmem:[%s1 + $0x668] sm:$0xff]
  %v224 = vld [vmem:[%s1 + $0x670] sm:$0xff]
  %v225 = vld [vmem:[%s1 + $0x678] sm:$0xff]
  %v226 = vld [vmem:[%s1 + $0x680] sm:$0xff]
  %v227 = vld [vmem:[%s1 + $0x688] sm:$0xff]
  %v228 = vld [vmem:[%s1 + $0x690] sm:$0xff]
  %v229 = vld [vmem:[%s1 + $0x698] sm:$0xff]
  %v230 = vld [vmem:[%s1 + $0x6a0] sm:$0xff]
  %v231 = vld [vmem:[%s1 + $0x6a8] sm:$0xff]
  %v232 = vld [vmem:[%s1 + $0x6b0] sm:$0xff]
  %v233 = vld [vmem:[%s1 + $0x6b8] sm:$0xff]
  %v234 = vld [vmem:[%s1 + $0x6c0] sm:$0xff]
  %v235 = vld [vmem:[%s1 + $0x6c8] sm:$0xff]
  %v236 = vld [vmem:[%s1 + $0x6d0] sm:$0xff]
  %v237 = vld [vmem:[%s1 + $0x6d8] sm:$0xff]
  %v238 = vld [vmem:[%s1 + $0x6e0] sm:$0xff]
  %v239 = vld [vmem:[%s1 + $0x6e8] sm:$0xff]
  %v240 = vld [vmem:[%s1 + $0x6f0] sm:$0xff]
  %v241 = vld [vmem:[%s1 + $0x6f8] sm:$0xff]
  %v242 = vld [vmem:[%s1 + $0x700] sm:$0xff]
  %v243 = vld [vmem:[%s1 + $0x708] sm:$0xff]
  %v244 = vld [vmem:[%s1 + $0x710] sm:$0xff]
  %v245 = vld [vmem:[%s1 + $0x718] sm:$0xff]
  %v246 = vld [vmem:[%s1 + $0x720] sm:$0xff]
  %v247 = vld [vmem:[%s1 + $0x728] sm:$0xff]
  %v248 = vld [vmem:[%s1 + $0x730] sm:$0xff]
  %v249 = vld [vmem:[%s1 + $0x738] sm:$0xff]
  %v250 = vld [vmem:[%s1 + $0x740] sm:$0xff]
  %v251 = vld [vmem:[%s1 + $0x748] sm:$0xff]
  %v252 = vld [vmem:[%s1 + $0x750] sm:$0xff]
  %v253 = vld [vmem:[%s1 + $0x758] sm:$0xff]
  %v254 = vld [vmem:[%s1 + $0x760] sm:$0xff]
  %v255 = vld [vmem:[%s1 + $0x768] sm:$0xff]
  %v256 = vld [vmem:[%s1 + $0x770] sm:$0xff]
  %v257 = vld [vmem:[%s1 + $0x778] sm:$0xff]
  %v258 = vld [vmem:[%s1 + $0x780] sm:$0xff]
  %v259 = vld [vmem:[%s1 + $0x788] sm:$0xff]
  %v260 = vld [vmem:[%s1 + $0x790] sm:$0xff]
  %v261 = vld [vmem:[%s1 + $0x798] sm:$0xff]
  %v262 = vld [vmem:[%s1 + $0x7a0] sm:$0xff]
  %v263 = vld [vmem:[%s1 + $0x7a8] sm:$0xff]
  %v264 = vld [vmem:[%s1 + $0x7b0] sm:$0xff]
  %v265 = vld [vmem:[%s1 + $0x7b8] sm:$0xff]
  %v266 = vld [vmem:[%s1 + $0x7c0] sm:$0xff]
  %v267 = vld [vmem:[%s1 + $0x7c8] sm:$0xff]
  %v268 = vld [vmem:[%s1 + $0x7d0] sm:$0xff]
  %v269 = vld [vmem:[%s1 + $0x7d8] sm:$0xff]
  %v270 = vld [vmem:[%s1 + $0x7e0] sm:$0xff]
  %v271 = vld [vmem:[%s1 + $0x7e8] sm:$0xff]
  %v272 = vld [vmem:[%s1 + $0x7f0] sm:$0xff]
  %v273 = vld [vmem:[%s1 + $0x7f8] sm:$0xff]
  %v274 = vpack.c.bf16 %v16, %v14
  %v275 = vpack.c.bf16 %v17, %v15
  %v276 = vpack.c.bf16 %v26, %v18
  %v277 = vpack.c.bf16 %v27, %v19
  %v278 = vpack.c.bf16 %v28, %v20
  %v279 = vpack.c.bf16 %v29, %v21
  %v280 = vpack.c.bf16 %v30, %v22
  %v281 = vpack.c.bf16 %v31, %v23
  %v282 = vpack.c.bf16 %v32, %v24
  %v283 = vpack.c.bf16 %v33, %v25
  %v284 = vpack.c.bf16 %v42, %v34
  %v285 = vpack.c.bf16 %v43, %v35
  %v286 = vpack.c.bf16 %v44, %v36
  %v287 = vpack.c.bf16 %v45, %v37
  %v288 = vpack.c.bf16 %v46, %v38
  %v289 = vpack.c.bf16 %v47, %v39
  %v290 = vpack.c.bf16 %v48, %v40
  %v291 = vpack.c.bf16 %v49, %v41
  %v292 = vpack.c.bf16 %v58, %v50
  %v293 = vpack.c.bf16 %v59, %v51
  %v294 = vpack.c.bf16 %v60, %v52
  %v295 = vpack.c.bf16 %v61, %v53
  %v296 = vpack.c.bf16 %v62, %v54
  %v297 = vpack.c.bf16 %v63, %v55
  %v298 = vpack.c.bf16 %v64, %v56
  %v299 = vpack.c.bf16 %v65, %v57
  %v300 = vpack.c.bf16 %v74, %v66
  %v301 = vpack.c.bf16 %v75, %v67
  %v302 = vpack.c.bf16 %v76, %v68
  %v303 = vpack.c.bf16 %v77, %v69
  %v304 = vpack.c.bf16 %v78, %v70
  %v305 = vpack.c.bf16 %v79, %v71
  %v306 = vpack.c.bf16 %v80, %v72
  %v307 = vpack.c.bf16 %v81, %v73
  %v308 = vpack.c.bf16 %v90, %v82
  %v309 = vpack.c.bf16 %v91, %v83
  %v310 = vpack.c.bf16 %v92, %v84
  %v311 = vpack.c.bf16 %v93, %v85
  %v312 = vpack.c.bf16 %v94, %v86
  %v313 = vpack.c.bf16 %v95, %v87
  %v314 = vpack.c.bf16 %v96, %v88
  %v315 = vpack.c.bf16 %v97, %v89
  %v316 = vpack.c.bf16 %v106, %v98
  %v317 = vpack.c.bf16 %v107, %v99
  %v318 = vpack.c.bf16 %v108, %v100
  %v319 = vpack.c.bf16 %v109, %v101
  %v320 = vpack.c.bf16 %v110, %v102
  %v321 = vpack.c.bf16 %v111, %v103
  %v322 = vpack.c.bf16 %v112, %v104
  %v323 = vpack.c.bf16 %v113, %v105
  %v324 = vpack.c.bf16 %v122, %v114
  %v325 = vpack.c.bf16 %v123, %v115
  %v326 = vpack.c.bf16 %v124, %v116
  %v327 = vpack.c.bf16 %v125, %v117
  %v328 = vpack.c.bf16 %v126, %v118
  %v329 = vpack.c.bf16 %v127, %v119
  %v330 = vpack.c.bf16 %v128, %v120
  %v331 = vpack.c.bf16 %v129, %v121
  %v332 = vpack.c.bf16 %v138, %v130
  %v333 = vpack.c.bf16 %v139, %v131
  %v334 = vpack.c.bf16 %v140, %v132
  %v335 = vpack.c.bf16 %v141, %v133
  %v336 = vpack.c.bf16 %v142, %v134
  %v337 = vpack.c.bf16 %v143, %v135
  %v338 = vpack.c.bf16 %v144, %v136
  %v339 = vpack.c.bf16 %v145, %v137
  %v340 = vpack.c.bf16 %v154, %v146
  %v341 = vpack.c.bf16 %v155, %v147
  %v342 = vpack.c.bf16 %v156, %v148
  %v343 = vpack.c.bf16 %v157, %v149
  %v344 = vpack.c.bf16 %v158, %v150
  %v345 = vpack.c.bf16 %v159, %v151
  %v346 = vpack.c.bf16 %v160, %v152
  %v347 = vpack.c.bf16 %v161, %v153
  %v348 = vpack.c.bf16 %v170, %v162
  %v349 = vpack.c.bf16 %v171, %v163
  %v350 = vpack.c.bf16 %v172, %v164
  %v351 = vpack.c.bf16 %v173, %v165
  %v352 = vpack.c.bf16 %v174, %v166
  %v353 = vpack.c.bf16 %v175, %v167
  %v354 = vpack.c.bf16 %v176, %v168
  %v355 = vpack.c.bf16 %v177, %v169
  %v356 = vpack.c.bf16 %v186, %v178
  %v357 = vpack.c.bf16 %v187, %v179
  %v358 = vpack.c.bf16 %v188, %v180
  %v359 = vpack.c.bf16 %v189, %v181
  %v360 = vpack.c.bf16 %v190, %v182
  %v361 = vpack.c.bf16 %v191, %v183
  %v362 = vpack.c.bf16 %v192, %v184
  %v363 = vpack.c.bf16 %v193, %v185
  %v364 = vpack.c.bf16 %v202, %v194
  %v365 = vpack.c.bf16 %v203, %v195
  %v366 = vpack.c.bf16 %v204, %v196
  %v367 = vpack.c.bf16 %v205, %v197
  %v368 = vpack.c.bf16 %v206, %v198
  %v369 = vpack.c.bf16 %v207, %v199
  %v370 = vpack.c.bf16 %v208, %v200
  %v371 = vpack.c.bf16 %v209, %v201
  %v372 = vpack.c.bf16 %v218, %v210
  %v373 = vpack.c.bf16 %v219, %v211
  %v374 = vpack.c.bf16 %v220, %v212
  %v375 = vpack.c.bf16 %v221, %v213
  %v376 = vpack.c.bf16 %v222, %v214
  %v377 = vpack.c.bf16 %v223, %v215
  %v378 = vpack.c.bf16 %v224, %v216
  %v379 = vpack.c.bf16 %v225, %v217
  %v380 = vpack.c.bf16 %v234, %v226
  %v381 = vpack.c.bf16 %v235, %v227
  %v382 = vpack.c.bf16 %v236, %v228
  %v383 = vpack.c.bf16 %v237, %v229
  %v384 = vpack.c.bf16 %v238, %v230
  %v385 = vpack.c.bf16 %v239, %v231
  %v386 = vpack.c.bf16 %v240, %v232
  %v387 = vpack.c.bf16 %v241, %v233
  %v388 = vpack.c.bf16 %v250, %v242
  %v389 = vpack.c.bf16 %v251, %v243
  %v390 = vpack.c.bf16 %v252, %v244
  %v391 = vpack.c.bf16 %v253, %v245
  %v392 = vpack.c.bf16 %v254, %v246
  %v393 = vpack.c.bf16 %v255, %v247
  %v394 = vpack.c.bf16 %v256, %v248
  %v395 = vpack.c.bf16 %v257, %v249
  %v396 = vpack.c.bf16 %v266, %v258
  %v397 = vpack.c.bf16 %v267, %v259
  %v398 = vpack.c.bf16 %v268, %v260
  %v399 = vpack.c.bf16 %v269, %v261
  %v400 = vpack.c.bf16 %v270, %v262
  %v401 = vpack.c.bf16 %v271, %v263
  %v402 = vpack.c.bf16 %v272, %v264
  %v403 = vpack.c.bf16 %v273, %v265
  %v404 = vld [vmem:[%s2] sm:$0xff]
  %v406 = vlaneseq
  %v407 = vshrl.u32 %v406, 7
  %v408 = vsub.s32 0, %v407
  %v409 = vrot.slane %v404, %v408
  %v410 = vlaneseq
  %v411 = vshrl.u32 %v410, 7
  %v412 = vsub.s32 1, %v411
  %v413 = vrot.slane %v404, %v412
  %v414 = vlaneseq
  %v415 = vshrl.u32 %v414, 7
  %v416 = vsub.s32 2, %v415
  %v417 = vrot.slane %v404, %v416
  %v418 = vlaneseq
  %v419 = vshrl.u32 %v418, 7
  %v420 = vsub.s32 3, %v419
  %v421 = vrot.slane %v404, %v420
  %v422 = vlaneseq
  %v423 = vshrl.u32 %v422, 7
  %v424 = vsub.s32 4, %v423
  %v425 = vrot.slane %v404, %v424
  %v426 = vlaneseq
  %v427 = vshrl.u32 %v426, 7
  %v428 = vsub.s32 5, %v427
  %v429 = vrot.slane %v404, %v428
  %v430 = vlaneseq
  %v431 = vshrl.u32 %v430, 7
  %v432 = vsub.s32 6, %v431
  %v433 = vrot.slane %v404, %v432
  %v434 = vlaneseq
  %v435 = vshrl.u32 %v434, 7
  %v436 = vsub.s32 7, %v435
  %v437 = vrot.slane %v404, %v436
  %446 = vmatprep.subr.bf16.mxu0 %v333
  %447 = vmatpush1.bf16.msra.mxu0 %v332
  %448 = vmatprep.subr.bf16.mxu0 %v325
  %449 = vmatpush1.bf16.msra.mxu0 %v324
  %450 = vmatprep.subr.bf16.mxu0 %v317
  %451 = vmatpush1.bf16.msra.mxu0 %v316
  %452 = vmatprep.subr.bf16.mxu0 %v309
  %453 = vmatpush1.bf16.msra.mxu0 %v308
  %454 = vmatprep.subr.bf16.mxu0 %v301
  %455 = vmatpush1.bf16.msra.mxu0 %v300
  %456 = vmatprep.subr.bf16.mxu0 %v293
  %457 = vmatpush1.bf16.msra.mxu0 %v292
  %458 = vmatprep.subr.bf16.mxu0 %v285
  %459 = vmatpush1.bf16.msra.mxu0 %v284
  %460 = vmatprep.subr.bf16.mxu0 %v277
  %461 = vmatpush1.bf16.msra.mxu0 %v276
  %462 = vmatprep.subr.bf16.mxu0 %v397
  %463 = vmatpush2.bf16.msra.mxu0 %v396
  %464 = vmatprep.subr.bf16.mxu0 %v389
  %465 = vmatpush2.bf16.msra.mxu0 %v388
  %466 = vmatprep.subr.bf16.mxu0 %v381
  %467 = vmatpush2.bf16.msra.mxu0 %v380
  %468 = vmatprep.subr.bf16.mxu0 %v373
  %469 = vmatpush2.bf16.msra.mxu0 %v372
  %470 = vmatprep.subr.bf16.mxu0 %v365
  %471 = vmatpush2.bf16.msra.mxu0 %v364
  %472 = vmatprep.subr.bf16.mxu0 %v357
  %473 = vmatpush2.bf16.msra.mxu0 %v356
  %474 = vmatprep.subr.bf16.mxu0 %v349
  %475 = vmatpush2.bf16.msra.mxu0 %v348
  %476 = vmatprep.subr.bf16.mxu0 %v341
  %477 = vmatpush2.bf16.msra.mxu0 %v340
  %478 = vmatprep.mubr.bf16.mxu0 %v275
  %479 = vmatmul.mubr.bf16.gmra.mxu0 %v274
  %v480 = vpop.f32.mrf.mxu0
  %v481 = vadd.f32 %v409, %v480
  %v482 = vpop.f32.mrf.mxu0
  %v483 = vadd.f32 %v413, %v482
  %v484 = vpop.f32.mrf.mxu0
  %v485 = vadd.f32 %v409, %v484
  %v486 = vpop.f32.mrf.mxu0
  %v487 = vadd.f32 %v413, %v486
  %488 = vdwg.mxu0
  %489 = vmatprep.subr.bf16.mxu0 %v335
  %490 = vmatpush1.bf16.msra.mxu0 %v334
  %491 = vmatprep.subr.bf16.mxu0 %v327
  %492 = vmatpush1.bf16.msra.mxu0 %v326
  %493 = vmatprep.subr.bf16.mxu0 %v319
  %494 = vmatpush1.bf16.msra.mxu0 %v318
  %495 = vmatprep.subr.bf16.mxu0 %v311
  %496 = vmatpush1.bf16.msra.mxu0 %v310
  %497 = vmatprep.subr.bf16.mxu0 %v303
  %498 = vmatpush1.bf16.msra.mxu0 %v302
  %499 = vmatprep.subr.bf16.mxu0 %v295
  %500 = vmatpush1.bf16.msra.mxu0 %v294
  %501 = vmatprep.subr.bf16.mxu0 %v287
  %502 = vmatpush1.bf16.msra.mxu0 %v286
  %503 = vmatprep.subr.bf16.mxu0 %v279
  %504 = vmatpush1.bf16.msra.mxu0 %v278
  %505 = vmatprep.subr.bf16.mxu0 %v399
  %506 = vmatpush2.bf16.msra.mxu0 %v398
  %507 = vmatprep.subr.bf16.mxu0 %v391
  %508 = vmatpush2.bf16.msra.mxu0 %v390
  %509 = vmatprep.subr.bf16.mxu0 %v383
  %510 = vmatpush2.bf16.msra.mxu0 %v382
  %511 = vmatprep.subr.bf16.mxu0 %v375
  %512 = vmatpush2.bf16.msra.mxu0 %v374
  %513 = vmatprep.subr.bf16.mxu0 %v367
  %514 = vmatpush2.bf16.msra.mxu0 %v366
  %515 = vmatprep.subr.bf16.mxu0 %v359
  %516 = vmatpush2.bf16.msra.mxu0 %v358
  %517 = vmatprep.subr.bf16.mxu0 %v351
  %518 = vmatpush2.bf16.msra.mxu0 %v350
  %519 = vmatprep.subr.bf16.mxu0 %v343
  %520 = vmatpush2.bf16.msra.mxu0 %v342
  %521 = vmatprep.mubr.bf16.mxu0 %v275
  %522 = vmatmul.mubr.bf16.gmra.mxu0 %v274
  %v523 = vpop.f32.mrf.mxu0
  %v524 = vadd.f32 %v417, %v523
  %v525 = vpop.f32.mrf.mxu0
  %v526 = vadd.f32 %v421, %v525
  %v527 = vpop.f32.mrf.mxu0
  %v528 = vadd.f32 %v417, %v527
  %v529 = vpop.f32.mrf.mxu0
  %v530 = vadd.f32 %v421, %v529
  %531 = vdwg.mxu0
  %532 = vmatprep.subr.bf16.mxu0 %v337
  %533 = vmatpush1.bf16.msra.mxu0 %v336
  %534 = vmatprep.subr.bf16.mxu0 %v329
  %535 = vmatpush1.bf16.msra.mxu0 %v328
  %536 = vmatprep.subr.bf16.mxu0 %v321
  %537 = vmatpush1.bf16.msra.mxu0 %v320
  %538 = vmatprep.subr.bf16.mxu0 %v313
  %539 = vmatpush1.bf16.msra.mxu0 %v312
  %540 = vmatprep.subr.bf16.mxu0 %v305
  %541 = vmatpush1.bf16.msra.mxu0 %v304
  %542 = vmatprep.subr.bf16.mxu0 %v297
  %543 = vmatpush1.bf16.msra.mxu0 %v296
  %544 = vmatprep.subr.bf16.mxu0 %v289
  %545 = vmatpush1.bf16.msra.mxu0 %v288
  %546 = vmatprep.subr.bf16.mxu0 %v281
  %547 = vmatpush1.bf16.msra.mxu0 %v280
  %548 = vmatprep.subr.bf16.mxu0 %v401
  %549 = vmatpush2.bf16.msra.mxu0 %v400
  %550 = vmatprep.subr.bf16.mxu0 %v393
  %551 = vmatpush2.bf16.msra.mxu0 %v392
  %552 = vmatprep.subr.bf16.mxu0 %v385
  %553 = vmatpush2.bf16.msra.mxu0 %v384
  %554 = vmatprep.subr.bf16.mxu0 %v377
  %555 = vmatpush2.bf16.msra.mxu0 %v376
  %556 = vmatprep.subr.bf16.mxu0 %v369
  %557 = vmatpush2.bf16.msra.mxu0 %v368
  %558 = vmatprep.subr.bf16.mxu0 %v361
  %559 = vmatpush2.bf16.msra.mxu0 %v360
  %560 = vmatprep.subr.bf16.mxu0 %v353
  %561 = vmatpush2.bf16.msra.mxu0 %v352
  %562 = vmatprep.subr.bf16.mxu0 %v345
  %563 = vmatpush2.bf16.msra.mxu0 %v344
  %564 = vmatprep.mubr.bf16.mxu0 %v275
  %565 = vmatmul.mubr.bf16.gmra.mxu0 %v274
  %v566 = vpop.f32.mrf.mxu0
  %v567 = vadd.f32 %v425, %v566
  %v568 = vpop.f32.mrf.mxu0
  %v569 = vadd.f32 %v429, %v568
  %v570 = vpop.f32.mrf.mxu0
  %v571 = vadd.f32 %v425, %v570
  %v572 = vpop.f32.mrf.mxu0
  %v573 = vadd.f32 %v429, %v572
  %574 = vdwg.mxu0
  %575 = vmatprep.subr.bf16.mxu0 %v339
  %576 = vmatpush1.bf16.msra.mxu0 %v338
  %577 = vmatprep.subr.bf16.mxu0 %v331
  %578 = vmatpush1.bf16.msra.mxu0 %v330
  %579 = vmatprep.subr.bf16.mxu0 %v323
  %580 = vmatpush1.bf16.msra.mxu0 %v322
  %581 = vmatprep.subr.bf16.mxu0 %v315
  %582 = vmatpush1.bf16.msra.mxu0 %v314
  %583 = vmatprep.subr.bf16.mxu0 %v307
  %584 = vmatpush1.bf16.msra.mxu0 %v306
  %585 = vmatprep.subr.bf16.mxu0 %v299
  %586 = vmatpush1.bf16.msra.mxu0 %v298
  %587 = vmatprep.subr.bf16.mxu0 %v291
  %588 = vmatpush1.bf16.msra.mxu0 %v290
  %589 = vmatprep.subr.bf16.mxu0 %v283
  %590 = vmatpush1.bf16.msra.mxu0 %v282
  %591 = vmatprep.subr.bf16.mxu0 %v403
  %592 = vmatpush2.bf16.msra.mxu0 %v402
  %593 = vmatprep.subr.bf16.mxu0 %v395
  %594 = vmatpush2.bf16.msra.mxu0 %v394
  %595 = vmatprep.subr.bf16.mxu0 %v387
  %596 = vmatpush2.bf16.msra.mxu0 %v386
  %597 = vmatprep.subr.bf16.mxu0 %v379
  %598 = vmatpush2.bf16.msra.mxu0 %v378
  %599 = vmatprep.subr.bf16.mxu0 %v371
  %600 = vmatpush2.bf16.msra.mxu0 %v370
  %601 = vmatprep.subr.bf16.mxu0 %v363
  %602 = vmatpush2.bf16.msra.mxu0 %v362
  %603 = vmatprep.subr.bf16.mxu0 %v355
  %604 = vmatpush2.bf16.msra.mxu0 %v354
  %605 = vmatprep.subr.bf16.mxu0 %v347
  %606 = vmatpush2.bf16.msra.mxu0 %v346
  %607 = vmatprep.mubr.bf16.mxu0 %v275
  %608 = vmatmul.mubr.bf16.gmra.mxu0 %v274
  %v609 = vpop.f32.mrf.mxu0
  %v610 = vadd.f32 %v433, %v609
  %v611 = vpop.f32.mrf.mxu0
  %v612 = vadd.f32 %v437, %v611
  %v613 = vpop.f32.mrf.mxu0
  %v614 = vadd.f32 %v433, %v613
  %v615 = vpop.f32.mrf.mxu0
  %v616 = vadd.f32 %v437, %v615
  %617 = vdwg.mxu0
  %618 = vst [vmem:[%s3] sm:$0xff] %v481
  %619 = vst [vmem:[%s3 + $0x8] sm:$0xff] %v483
  %620 = vst [vmem:[%s3 + $0x10] sm:$0xff] %v524
  %621 = vst [vmem:[%s3 + $0x18] sm:$0xff] %v526
  %622 = vst [vmem:[%s3 + $0x20] sm:$0xff] %v567
  %623 = vst [vmem:[%s3 + $0x28] sm:$0xff] %v569
  %624 = vst [vmem:[%s3 + $0x30] sm:$0xff] %v610
  %625 = vst [vmem:[%s3 + $0x38] sm:$0xff] %v612
  %626 = vst [vmem:[%s3 + $0x40] sm:$0xff] %v485
  %627 = vst [vmem:[%s3 + $0x48] sm:$0xff] %v487
  %628 = vst [vmem:[%s3 + $0x50] sm:$0xff] %v528
  %629 = vst [vmem:[%s3 + $0x58] sm:$0xff] %v530
  %630 = vst [vmem:[%s3 + $0x60] sm:$0xff] %v571
  %631 = vst [vmem:[%s3 + $0x68] sm:$0xff] %v573
  %632 = vst [vmem:[%s3 + $0x70] sm:$0xff] %v614
  %633 = vst [vmem:[%s3 + $0x78] sm:$0xff] %v616
  // Predicated region
  $region14: #{node_update_forward.12} parent=0 // pred_check
    _
  $region15: #{node_update_forward.12} parent=0 // pred_check_branch
    %635 = sbr.rel (0) target = $region17
  $region16: #{node_update_forward.12} parent=0 // pred_region
    _
  $region17: #{node_update_forward.12} parent=0 // pred_fallthru
    _
  // Predicated region
  $region18: #{node_update_forward.12} parent=0 // pred_check
    _
  $region19: #{node_update_forward.12} parent=0 // pred_check_branch
    %637 = sbr.rel (0) target = $region21
  $region20: #{node_update_forward.12} parent=0 // pred_region
    _
  $region21: #{node_update_forward.12} parent=0 // pred_fallthru
    _

</llo_original>
